<compile_context>
chip_gen: v6e
topology: v6e:2x2x1
jax: 0.10.0
libtpu: 0.0.40
codegen_flags: <defaults>
</compile_context>

<pallas_src>
import jax
import jax.numpy as jnp
from jax import lax
from jax.experimental import pallas as pl
from jax.experimental.pallas import tpu as pltpu

IN_DIM = 3
HIDDEN = 128
EPS = 1e-5
NEG_SLOPE = 0.01


def _leaky_relu(x):
    # slope < 1  =>  max(x, slope*x) == LeakyReLU(x); works in f32 or bf16.
    return jnp.maximum(x, NEG_SLOPE * x)


def edge_mlp_kernel(x_ref, vec_ref, w_ref, o_ref):
    # x_ref:   (TM, 3)        f32   edge features (zero-padded rows allowed)
    # vec_ref: (9, 128)       f32   rows 0-2: w1, 3-6: b1..b4, 7: gamma, 8: beta
    # w_ref:   (3, 128, 128)  bf16  w2, w3, w4
    # o_ref:   (TM, 128)      f32 or bf16
    x = x_ref[...]                                    # (TM, 3) f32

    w1 = vec_ref[0:3, :]                              # (3, 128)
    b1 = vec_ref[3:4, :]
    b2 = vec_ref[4:5, :]
    b3 = vec_ref[5:6, :]
    b4 = vec_ref[6:7, :]
    gamma = vec_ref[7:8, :]
    beta = vec_ref[8:9, :]

    # ---- Layer 1 on the VPU: (TM,3) @ (3,128) as 3 broadcast mul-adds (f32),
    #      then cast once to bf16 and apply LeakyReLU in bf16 (feeds the MXU).
    h = (x[:, 0:1] * w1[0:1, :]
         + x[:, 1:2] * w1[1:2, :]
         + x[:, 2:3] * w1[2:3, :]
         + b1)
    h = _leaky_relu(h.astype(jnp.bfloat16))           # (TM,128) bf16

    # ---- Layers 2-3: MXU bf16 x bf16 -> f32 accum, bias in f32,
    #      single cast to bf16 + LeakyReLU in bf16 between layers.
    h = jnp.dot(h, w_ref[0], preferred_element_type=jnp.float32) + b2
    h = _leaky_relu(h.astype(jnp.bfloat16))
    h = jnp.dot(h, w_ref[1], preferred_element_type=jnp.float32) + b3
    h = _leaky_relu(h.astype(jnp.bfloat16))

    # ---- Layer 4: keep f32 for the LayerNorm statistics.
    h = jnp.dot(h, w_ref[2], preferred_element_type=jnp.float32) + b4

    # ---- LayerNorm over last dim (one-pass stats, biased variance, f32) ----
    mean = jnp.mean(h, axis=-1, keepdims=True)
    meansq = jnp.mean(h * h, axis=-1, keepdims=True)
    var = jnp.maximum(meansq - mean * mean, 0.0)
    h = (h - mean) * lax.rsqrt(var + EPS)
    o_ref[...] = (h * gamma + beta).astype(o_ref.dtype)


def init_params(key):
    """Deterministic parameter init; weights stored as (in_dim, out_dim)."""
    ks = jax.random.split(key, 8)
    return {
        "w1": jax.random.normal(ks[0], (IN_DIM, HIDDEN), jnp.float32) * 0.1,
        "b1": jax.random.normal(ks[1], (HIDDEN,), jnp.float32) * 0.1,
        "w2": jax.random.normal(ks[2], (HIDDEN, HIDDEN), jnp.float32) * 0.05,
        "b2": jax.random.normal(ks[3], (HIDDEN,), jnp.float32) * 0.1,
        "w3": jax.random.normal(ks[4], (HIDDEN, HIDDEN), jnp.float32) * 0.05,
        "b3": jax.random.normal(ks[5], (HIDDEN,), jnp.float32) * 0.1,
        "w4": jax.random.normal(ks[6], (HIDDEN, HIDDEN), jnp.float32) * 0.05,
        "b4": jax.random.normal(ks[7], (HIDDEN,), jnp.float32) * 0.1,
        "gamma": jnp.ones((HIDDEN,), jnp.float32),
        "beta": jnp.zeros((HIDDEN,), jnp.float32),
    }


def prepare_params(p):
    """One-time packing / dtype conversion (hoisted out of the per-call path)."""
    row = lambda a: a.reshape(1, HIDDEN).astype(jnp.float32)
    vecs = jnp.concatenate(
        [p["w1"].astype(jnp.float32),                 # rows 0..2
         row(p["b1"]), row(p["b2"]), row(p["b3"]), row(p["b4"]),
         row(p["gamma"]), row(p["beta"])], axis=0)     # (9, 128) f32
    w_stack = jnp.stack([p["w2"], p["w3"], p["w4"]]).astype(jnp.bfloat16)  # (3,128,128)
    return vecs, w_stack


def _round_up(x, m):
    return ((x + m - 1) // m) * m


def _choose_tm(n, *, max_tm=2048, min_grid=4, small_n=1024):
    """Row-tile size (multiple of 8). Big tiles amortize the ~0.35us/step
    overhead and the 3 per-step MXU weight loads; for N > small_n we keep
    >= min_grid steps so both v7x TensorCores get >= 2 steps each."""
    if n <= small_n:
        return max(8, _round_up(n, 8))        # single tile, <= 7 padded rows
    tm = pl.cdiv(n, min_grid)
    return min(_round_up(tm, 8), max_tm)


def encode_edge_mlp(x, prepared, *, tm=None, out_dtype=jnp.float32):
    """x: [N, 3] float32. prepared = prepare_params(params).
    Returns [N, 128] in out_dtype (f32 default; bf16 halves HBM writeback)."""
    vecs, w_stack = prepared
    N, d = x.shape
    assert d == IN_DIM

    if tm is None:
        tm = _choose_tm(N)
    else:
        tm = max(8, _round_up(int(tm), 8))

    n_pad = _round_up(N, tm)
    if n_pad != N:
        x = jnp.pad(x, ((0, n_pad - N), (0, 0)))      # zero rows; sliced off below
    grid_len = n_pad // tm

    out_bytes = jnp.dtype(out_dtype).itemsize
    cost = pl.CostEstimate(
        flops=int(3 * 2 * n_pad * HIDDEN * HIDDEN
                  + n_pad * HIDDEN * (2 * IN_DIM + 10)),
        transcendentals=int(n_pad),
        bytes_accessed=int(n_pad * IN_DIM * 4 + n_pad * HIDDEN * out_bytes
                           + vecs.size * 4 + w_stack.size * 2),
    )

    out = pl.pallas_call(
        edge_mlp_kernel,
        out_shape=jax.ShapeDtypeStruct((n_pad, HIDDEN), out_dtype),
        grid_spec=pltpu.PrefetchScalarGridSpec(
            num_scalar_prefetch=0,
            grid=(grid_len,),
            in_specs=[
                pl.BlockSpec((tm, IN_DIM), lambda i: (i, 0)),            # x tile
                pl.BlockSpec((9, HIDDEN), lambda i: (0, 0)),             # packed vecs
                pl.BlockSpec((3, HIDDEN, HIDDEN), lambda i: (0, 0, 0)),  # w2..w4 bf16
            ],
            out_specs=pl.BlockSpec((tm, HIDDEN), lambda i: (i, 0)),
        ),
        compiler_params=pltpu.CompilerParams(
            dimension_semantics=("parallel",),
            vmem_limit_bytes=32 * 1024 * 1024),
        cost_estimate=cost,
    )(x, vecs, w_stack)

    return out[:N] if n_pad != N else out


def reference(x, p, *, matmul_dtype=jnp.float32):
    """Pure-JAX reference. matmul_dtype=bf16 mimics the kernel's bf16 MXU /
    bf16 LeakyReLU path; matmul_dtype=f32 is the exact PyTorch-style forward."""
    def lrelu(v):
        return jnp.where(v >= 0, v, NEG_SLOPE * v)

    h = (x @ p["w1"] + p["b1"]).astype(matmul_dtype)
    h = lrelu(h)
    h = jnp.dot(h, p["w2"].astype(matmul_dtype),
                preferred_element_type=jnp.float32) + p["b2"]
    h = lrelu(h.astype(matmul_dtype))
    h = jnp.dot(h, p["w3"].astype(matmul_dtype),
                preferred_element_type=jnp.float32) + p["b3"]
    h = lrelu(h.astype(matmul_dtype))
    h = jnp.dot(h, p["w4"].astype(matmul_dtype),
                preferred_element_type=jnp.float32) + p["b4"]
    mean = jnp.mean(h, axis=-1, keepdims=True)
    var = jnp.mean((h - mean) ** 2, axis=-1, keepdims=True)
    return (h - mean) / jnp.sqrt(var + EPS) * p["gamma"] + p["beta"]


if __name__ == "__main__":
    key = jax.random.PRNGKey(0)
    kx, kp = jax.random.split(key)
    params = init_params(kp)
    prepared = prepare_params(params)

    # N=1003: padding path, single tile (tm=1008, grid=1).
    # N=2500: padding + multi-tile parallel path (tm=632, grid=4).
    for n in (1003, 2500):
        x = jax.random.normal(jax.random.fold_in(kx, n), (n, IN_DIM), jnp.float32)
        out = jax.block_until_ready(encode_edge_mlp(x, prepared))
        assert out.shape == (n, HIDDEN) and out.dtype == jnp.float32

        # Tight check vs. a bf16-matmul / bf16-LeakyReLU matched reference.
        ref_bf16 = reference(x, params, matmul_dtype=jnp.bfloat16)
        assert jnp.allclose(out, ref_bf16, atol=5e-3, rtol=5e-3), \
            f"N={n}: mismatch vs bf16-matched reference"

        # Looser check vs. the full-f32 reference (bf16 matmul rounding budget).
        ref_f32 = reference(x, params, matmul_dtype=jnp.float32)
        assert jnp.allclose(out, ref_f32, atol=6e-2, rtol=6e-2), \
            f"N={n}: mismatch vs f32 reference"

    # Optional bf16 output path (halves HBM writeback on mem-bound v5e/v6e).
    x = jax.random.normal(jax.random.fold_in(kx, 2500), (2500, IN_DIM), jnp.float32)
    out_bf = jax.block_until_ready(
        encode_edge_mlp(x, prepared, out_dtype=jnp.bfloat16))
    assert out_bf.dtype == jnp.bfloat16
    assert jnp.allclose(out_bf.astype(jnp.float32),
                        reference(x, params, matmul_dtype=jnp.bfloat16),
                        atol=3e-2, rtol=3e-2), "bf16-output mismatch"

    print("KERNEL_OK")
</pallas_src>

<mosaic_0001>
module attributes {stable_mosaic.version = 11 : i64} {
  func.func @edge_mlp_kernel(%arg0: i32, %arg1: memref<1008x3xf32, #tpu.memory_space<vmem>>, %arg2: memref<9x128xf32, #tpu.memory_space<vmem>>, %arg3: memref<3x128x128xbf16, #tpu.memory_space<vmem>>, %arg4: memref<1008x128xf32, #tpu.memory_space<vmem>>) attributes {dimension_semantics = [#tpu.dimension_semantics<parallel>], iteration_bounds = array<i64: 1>, scalar_prefetch = 0 : i64, scratch_operands = 0 : i64, tpu.core_type = #tpu.core_type<tc>, window_params = [{transform_indices = @transform_0, window_bounds = array<i64: 1008, 3>}, {pipeline_mode = #tpu.pipeline_mode<synchronous>, transform_indices = @transform_1, window_bounds = array<i64: 9, 128>}, {pipeline_mode = #tpu.pipeline_mode<synchronous>, transform_indices = @transform_2, window_bounds = array<i64: 3, 128, 128>}, {transform_indices = @transform_3, window_bounds = array<i64: 1008, 128>}]} {
    %c0 = arith.constant 0 : index
    %c0_0 = arith.constant 0 : index
    %0 = vector.load %arg1[%c0, %c0_0] : memref<1008x3xf32, #tpu.memory_space<vmem>>, vector<1008x3xf32>
    %c0_1 = arith.constant 0 : index
    %c0_2 = arith.constant 0 : index
    %1 = vector.load %arg2[%c0_1, %c0_2] : memref<9x128xf32, #tpu.memory_space<vmem>>, vector<3x128xf32>
    %c3 = arith.constant 3 : index
    %c0_3 = arith.constant 0 : index
    %2 = vector.load %arg2[%c3, %c0_3] : memref<9x128xf32, #tpu.memory_space<vmem>>, vector<1x128xf32>
    %c4 = arith.constant 4 : index
    %c0_4 = arith.constant 0 : index
    %3 = vector.load %arg2[%c4, %c0_4] : memref<9x128xf32, #tpu.memory_space<vmem>>, vector<1x128xf32>
    %c5 = arith.constant 5 : index
    %c0_5 = arith.constant 0 : index
    %4 = vector.load %arg2[%c5, %c0_5] : memref<9x128xf32, #tpu.memory_space<vmem>>, vector<1x128xf32>
    %c6 = arith.constant 6 : index
    %c0_6 = arith.constant 0 : index
    %5 = vector.load %arg2[%c6, %c0_6] : memref<9x128xf32, #tpu.memory_space<vmem>>, vector<1x128xf32>
    %c7 = arith.constant 7 : index
    %c0_7 = arith.constant 0 : index
    %6 = vector.load %arg2[%c7, %c0_7] : memref<9x128xf32, #tpu.memory_space<vmem>>, vector<1x128xf32>
    %c8 = arith.constant 8 : index
    %c0_8 = arith.constant 0 : index
    %7 = vector.load %arg2[%c8, %c0_8] : memref<9x128xf32, #tpu.memory_space<vmem>>, vector<1x128xf32>
    %8 = vector.extract_strided_slice %0 {offsets = [0, 0], sizes = [1008, 1], strides = [1, 1]} : vector<1008x3xf32> to vector<1008x1xf32>
    %9 = vector.extract_strided_slice %1 {offsets = [0, 0], sizes = [1, 128], strides = [1, 1]} : vector<3x128xf32> to vector<1x128xf32>
    %10 = vector.broadcast %8 : vector<1008x1xf32> to vector<1008x128xf32>
    %11 = vector.broadcast %9 : vector<1x128xf32> to vector<1008x128xf32>
    %12 = arith.mulf %10, %11 : vector<1008x128xf32>
    %13 = vector.extract_strided_slice %0 {offsets = [0, 1], sizes = [1008, 1], strides = [1, 1]} : vector<1008x3xf32> to vector<1008x1xf32>
    %14 = vector.extract_strided_slice %1 {offsets = [1, 0], sizes = [1, 128], strides = [1, 1]} : vector<3x128xf32> to vector<1x128xf32>
    %15 = vector.broadcast %13 : vector<1008x1xf32> to vector<1008x128xf32>
    %16 = vector.broadcast %14 : vector<1x128xf32> to vector<1008x128xf32>
    %17 = arith.mulf %15, %16 : vector<1008x128xf32>
    %18 = arith.addf %12, %17 : vector<1008x128xf32>
    %19 = vector.extract_strided_slice %0 {offsets = [0, 2], sizes = [1008, 1], strides = [1, 1]} : vector<1008x3xf32> to vector<1008x1xf32>
    %20 = vector.extract_strided_slice %1 {offsets = [2, 0], sizes = [1, 128], strides = [1, 1]} : vector<3x128xf32> to vector<1x128xf32>
    %21 = vector.broadcast %19 : vector<1008x1xf32> to vector<1008x128xf32>
    %22 = vector.broadcast %20 : vector<1x128xf32> to vector<1008x128xf32>
    %23 = arith.mulf %21, %22 : vector<1008x128xf32>
    %24 = arith.addf %18, %23 : vector<1008x128xf32>
    %25 = vector.broadcast %2 : vector<1x128xf32> to vector<1008x128xf32>
    %26 = arith.addf %24, %25 : vector<1008x128xf32>
    %27 = arith.truncf %26 : vector<1008x128xf32> to vector<1008x128xbf16>
    %cst = arith.constant 1.000980e-02 : bf16
    %28 = vector.broadcast %cst : bf16 to vector<1008x128xbf16>
    %29 = arith.mulf %28, %27 : vector<1008x128xbf16>
    %30 = arith.maximumf %27, %29 : vector<1008x128xbf16>
    %c0_9 = arith.constant 0 : index
    %c0_10 = arith.constant 0 : index
    %c0_11 = arith.constant 0 : index
    %31 = vector.load %arg3[%c0_9, %c0_10, %c0_11] : memref<3x128x128xbf16, #tpu.memory_space<vmem>>, vector<1x128x128xbf16>
    %32 = vector.shape_cast %31 : vector<1x128x128xbf16> to vector<128x128xbf16>
    %cst_12 = arith.constant dense<0.000000e+00> : vector<1008x128xf32>
    %33 = tpu.matmul %30, %32, %cst_12 {dimension_numbers = #tpu.dot_dimension_numbers<[1], [0], [0], [1], [0, 0, 1, 1], [], []>} : vector<1008x128xbf16>, vector<128x128xbf16>, vector<1008x128xf32> -> vector<1008x128xf32>
    %34 = vector.broadcast %3 : vector<1x128xf32> to vector<1008x128xf32>
    %35 = arith.addf %33, %34 : vector<1008x128xf32>
    %36 = arith.truncf %35 : vector<1008x128xf32> to vector<1008x128xbf16>
    %cst_13 = arith.constant 1.000980e-02 : bf16
    %37 = vector.broadcast %cst_13 : bf16 to vector<1008x128xbf16>
    %38 = arith.mulf %37, %36 : vector<1008x128xbf16>
    %39 = arith.maximumf %36, %38 : vector<1008x128xbf16>
    %c1 = arith.constant 1 : index
    %c0_14 = arith.constant 0 : index
    %c0_15 = arith.constant 0 : index
    %40 = vector.load %arg3[%c1, %c0_14, %c0_15] : memref<3x128x128xbf16, #tpu.memory_space<vmem>>, vector<1x128x128xbf16>
    %41 = vector.shape_cast %40 : vector<1x128x128xbf16> to vector<128x128xbf16>
    %cst_16 = arith.constant dense<0.000000e+00> : vector<1008x128xf32>
    %42 = tpu.matmul %39, %41, %cst_16 {dimension_numbers = #tpu.dot_dimension_numbers<[1], [0], [0], [1], [0, 0, 1, 1], [], []>} : vector<1008x128xbf16>, vector<128x128xbf16>, vector<1008x128xf32> -> vector<1008x128xf32>
    %43 = vector.broadcast %4 : vector<1x128xf32> to vector<1008x128xf32>
    %44 = arith.addf %42, %43 : vector<1008x128xf32>
    %45 = arith.truncf %44 : vector<1008x128xf32> to vector<1008x128xbf16>
    %cst_17 = arith.constant 1.000980e-02 : bf16
    %46 = vector.broadcast %cst_17 : bf16 to vector<1008x128xbf16>
    %47 = arith.mulf %46, %45 : vector<1008x128xbf16>
    %48 = arith.maximumf %45, %47 : vector<1008x128xbf16>
    %c2 = arith.constant 2 : index
    %c0_18 = arith.constant 0 : index
    %c0_19 = arith.constant 0 : index
    %49 = vector.load %arg3[%c2, %c0_18, %c0_19] : memref<3x128x128xbf16, #tpu.memory_space<vmem>>, vector<1x128x128xbf16>
    %50 = vector.shape_cast %49 : vector<1x128x128xbf16> to vector<128x128xbf16>
    %cst_20 = arith.constant dense<0.000000e+00> : vector<1008x128xf32>
    %51 = tpu.matmul %48, %50, %cst_20 {dimension_numbers = #tpu.dot_dimension_numbers<[1], [0], [0], [1], [0, 0, 1, 1], [], []>} : vector<1008x128xbf16>, vector<128x128xbf16>, vector<1008x128xf32> -> vector<1008x128xf32>
    %52 = vector.broadcast %5 : vector<1x128xf32> to vector<1008x128xf32>
    %53 = arith.addf %51, %52 : vector<1008x128xf32>
    %cst_21 = arith.constant dense<0.000000e+00> : vector<1008xf32>
    %54 = vector.multi_reduction <add>, %53, %cst_21 [1] : vector<1008x128xf32> to vector<1008xf32>
    %55 = vector.shape_cast %54 : vector<1008xf32> to vector<1008x1xf32>
    %cst_22 = arith.constant 1.280000e+02 : f32
    %56 = vector.broadcast %cst_22 : f32 to vector<1008x1xf32>
    %57 = arith.divf %55, %56 : vector<1008x1xf32>
    %58 = arith.mulf %53, %53 : vector<1008x128xf32>
    %cst_23 = arith.constant dense<0.000000e+00> : vector<1008xf32>
    %59 = vector.multi_reduction <add>, %58, %cst_23 [1] : vector<1008x128xf32> to vector<1008xf32>
    %60 = vector.shape_cast %59 : vector<1008xf32> to vector<1008x1xf32>
    %cst_24 = arith.constant 1.280000e+02 : f32
    %61 = vector.broadcast %cst_24 : f32 to vector<1008x1xf32>
    %62 = arith.divf %60, %61 : vector<1008x1xf32>
    %63 = arith.mulf %57, %57 : vector<1008x1xf32>
    %64 = arith.subf %62, %63 : vector<1008x1xf32>
    %cst_25 = arith.constant 0.000000e+00 : f32
    %65 = vector.broadcast %cst_25 : f32 to vector<1008x1xf32>
    %66 = arith.maximumf %64, %65 : vector<1008x1xf32>
    %67 = vector.broadcast %57 : vector<1008x1xf32> to vector<1008x128xf32>
    %68 = arith.subf %53, %67 : vector<1008x128xf32>
    %cst_26 = arith.constant 9.99999974E-6 : f32
    %69 = vector.broadcast %cst_26 : f32 to vector<1008x1xf32>
    %70 = arith.addf %66, %69 : vector<1008x1xf32>
    %71 = math.rsqrt %70 : vector<1008x1xf32>
    %72 = vector.broadcast %71 : vector<1008x1xf32> to vector<1008x128xf32>
    %73 = arith.mulf %68, %72 : vector<1008x128xf32>
    %74 = vector.broadcast %6 : vector<1x128xf32> to vector<1008x128xf32>
    %75 = arith.mulf %73, %74 : vector<1008x128xf32>
    %76 = vector.broadcast %7 : vector<1x128xf32> to vector<1008x128xf32>
    %77 = arith.addf %75, %76 : vector<1008x128xf32>
    %c0_27 = arith.constant 0 : index
    %c0_28 = arith.constant 0 : index
    %78 = vector.load %arg4[%c0_27, %c0_28] : memref<1008x128xf32, #tpu.memory_space<vmem>>, vector<1008x128xf32>
    tpu.vector_store %arg4[%c0_27, %c0_28], %77 {strides = array<i32>} : memref<1008x128xf32, #tpu.memory_space<vmem>>, vector<1008x128xf32>,
    return
  }
  func.func @transform_0(%arg0: i32) -> (i32, i32) {
    %c0_i32 = arith.constant 0 : i32
    %c0_i32_0 = arith.constant 0 : i32
    return %arg0, %c0_i32 : i32, i32
  }
  func.func @transform_1(%arg0: i32) -> (i32, i32) {
    %c0_i32 = arith.constant 0 : i32
    %c0_i32_0 = arith.constant 0 : i32
    %c0_i32_1 = arith.constant 0 : i32
    return %c0_i32, %c0_i32_0 : i32, i32
  }
  func.func @transform_2(%arg0: i32) -> (i32, i32, i32) {
    %c0_i32 = arith.constant 0 : i32
    %c0_i32_0 = arith.constant 0 : i32
    %c0_i32_1 = arith.constant 0 : i32
    %c0_i32_2 = arith.constant 0 : i32
    return %c0_i32, %c0_i32_0, %c0_i32_1 : i32, i32, i32
  }
  func.func @transform_3(%arg0: i32) -> (i32, i32) {
    %c0_i32 = arith.constant 0 : i32
    %c0_i32_0 = arith.constant 0 : i32
    return %arg0, %c0_i32 : i32, i32
  }
}

</mosaic_0001>

<llo_original>
// kernel: tpu_custom_call.1
$region0: #{tpu_custom_call.1}
  #allocation0 [shape = 'u32[]', space=smem, size = 0x4, offset = 0x4, fixed_abs, tag = 'smem constant byte address 0x4 - core index']
  #allocation1 [shape = 'u32[144,128]{1,0:T(1,128)}', space=vmem, size = 0x12000, scoped, tag = 'internal scratch']
  %s0 = inlined_call_operand.vmem [shape: f32[1008,3], index: 0, kind: input, shape index: {}]
  %s1 = inlined_call_operand.vmem [shape: f32[9,128], index: 1, kind: input, shape index: {}]
  %s2 = inlined_call_operand.vmem [shape: bf16[3,128,128], index: 2, kind: input, shape index: {}]
  %s3 = inlined_call_operand.hbm [shape: f32[1008,128], index: 3, kind: output, shape index: {}]
  %s4 = sld [smem:[#allocation0]]
  $region22: #{tpu_custom_call.1} parent=0
    _
  %s6 = ssub.s32 1, %s4
  %s7 = scalar_select 0, %s6, %s4
  $region1: #{tpu_custom_call.1} parent=0
    #allocation2 [shape = 'u8[516096]{0}', space=vmem, size = 0x7e000, scoped, tag = 'output window, operand 0, single buffered']
    #allocation3 [shape = 's32[1]{0}', space=sflag, size = 0x4, scoped, tag = 'scoped memory for tpu_custom_call.1']
    %8 = vsyncpa [#allocation3], 0
    // Predicated region
    $region2: #{tpu_custom_call.1} parent=1 // pred_check
      _
    $region3: #{tpu_custom_call.1} parent=1 // pred_check_branch
      %10 = sbr.rel (0) target = $region5
    $region4: #{tpu_custom_call.1} parent=1 // pred_region
      _
    $region5: #{tpu_custom_call.1} parent=1 // pred_fallthru
      _
    // Predicated region
    $region6: #{tpu_custom_call.1} parent=1 // pred_check
      _
    $region7: #{tpu_custom_call.1} parent=1 // pred_check_branch
      %12 = sbr.rel (0) target = $region9
    $region8: #{tpu_custom_call.1} parent=1 // pred_region
      _
    $region9: #{tpu_custom_call.1} parent=1 // pred_fallthru
      _
    // Predicated region
    $region10: #{tpu_custom_call.1} parent=1 // pred_check
      _
    $region11: #{tpu_custom_call.1} parent=1 // pred_check_branch
      %14 = sbr.rel (0) target = $region13
    $region12: #{tpu_custom_call.1} parent=1 // pred_region
      _
    $region13: #{tpu_custom_call.1} parent=1 // pred_fallthru
      _
    %v17 = vld [vmem:[%s0] sm:$0xff]
    %v18 = vld [vmem:[%s0 + $0x8] sm:$0xff]
    %v19 = vld [vmem:[%s0 + $0x10] sm:$0xff]
    %v20 = vld [vmem:[%s0 + $0x18] sm:$0xff]
    %v21 = vld [vmem:[%s0 + $0x20] sm:$0xff]
    %v22 = vld [vmem:[%s0 + $0x28] sm:$0xff]
    %v23 = vld [vmem:[%s0 + $0x30] sm:$0xff]
    %v24 = vld [vmem:[%s0 + $0x38] sm:$0xff]
    %v25 = vld [vmem:[%s0 + $0x40] sm:$0xff]
    %v26 = vld [vmem:[%s0 + $0x48] sm:$0xff]
    %v27 = vld [vmem:[%s0 + $0x50] sm:$0xff]
    %v28 = vld [vmem:[%s0 + $0x58] sm:$0xff]
    %v29 = vld [vmem:[%s0 + $0x60] sm:$0xff]
    %v30 = vld [vmem:[%s0 + $0x68] sm:$0xff]
    %v31 = vld [vmem:[%s0 + $0x70] sm:$0xff]
    %v32 = vld [vmem:[%s0 + $0x78] sm:$0xff]
    %v33 = vld [vmem:[%s0 + $0x80] sm:$0xff]
    %v34 = vld [vmem:[%s0 + $0x88] sm:$0xff]
    %v35 = vld [vmem:[%s0 + $0x90] sm:$0xff]
    %v36 = vld [vmem:[%s0 + $0x98] sm:$0xff]
    %v37 = vld [vmem:[%s0 + $0xa0] sm:$0xff]
    %v38 = vld [vmem:[%s0 + $0xa8] sm:$0xff]
    %v39 = vld [vmem:[%s0 + $0xb0] sm:$0xff]
    %v40 = vld [vmem:[%s0 + $0xb8] sm:$0xff]
    %v41 = vld [vmem:[%s0 + $0xc0] sm:$0xff]
    %v42 = vld [vmem:[%s0 + $0xc8] sm:$0xff]
    %v43 = vld [vmem:[%s0 + $0xd0] sm:$0xff]
    %v44 = vld [vmem:[%s0 + $0xd8] sm:$0xff]
    %v45 = vld [vmem:[%s0 + $0xe0] sm:$0xff]
    %v46 = vld [vmem:[%s0 + $0xe8] sm:$0xff]
    %v47 = vld [vmem:[%s0 + $0xf0] sm:$0xff]
    %v48 = vld [vmem:[%s0 + $0xf8] sm:$0xff]
    %v49 = vld [vmem:[%s0 + $0x100] sm:$0xff]
    %v50 = vld [vmem:[%s0 + $0x108] sm:$0xff]
    %v51 = vld [vmem:[%s0 + $0x110] sm:$0xff]
    %v52 = vld [vmem:[%s0 + $0x118] sm:$0xff]
    %v53 = vld [vmem:[%s0 + $0x120] sm:$0xff]
    %v54 = vld [vmem:[%s0 + $0x128] sm:$0xff]
    %v55 = vld [vmem:[%s0 + $0x130] sm:$0xff]
    %v56 = vld [vmem:[%s0 + $0x138] sm:$0xff]
    %v57 = vld [vmem:[%s0 + $0x140] sm:$0xff]
    %v58 = vld [vmem:[%s0 + $0x148] sm:$0xff]
    %v59 = vld [vmem:[%s0 + $0x150] sm:$0xff]
    %v60 = vld [vmem:[%s0 + $0x158] sm:$0xff]
    %v61 = vld [vmem:[%s0 + $0x160] sm:$0xff]
    %v62 = vld [vmem:[%s0 + $0x168] sm:$0xff]
    %v63 = vld [vmem:[%s0 + $0x170] sm:$0xff]
    %v64 = vld [vmem:[%s0 + $0x178] sm:$0xff]
    %v65 = vld [vmem:[%s0 + $0x180] sm:$0xff]
    %v66 = vld [vmem:[%s0 + $0x188] sm:$0xff]
    %v67 = vld [vmem:[%s0 + $0x190] sm:$0xff]
    %v68 = vld [vmem:[%s0 + $0x198] sm:$0xff]
    %v69 = vld [vmem:[%s0 + $0x1a0] sm:$0xff]
    %v70 = vld [vmem:[%s0 + $0x1a8] sm:$0xff]
    %v71 = vld [vmem:[%s0 + $0x1b0] sm:$0xff]
    %v72 = vld [vmem:[%s0 + $0x1b8] sm:$0xff]
    %v73 = vld [vmem:[%s0 + $0x1c0] sm:$0xff]
    %v74 = vld [vmem:[%s0 + $0x1c8] sm:$0xff]
    %v75 = vld [vmem:[%s0 + $0x1d0] sm:$0xff]
    %v76 = vld [vmem:[%s0 + $0x1d8] sm:$0xff]
    %v77 = vld [vmem:[%s0 + $0x1e0] sm:$0xff]
    %v78 = vld [vmem:[%s0 + $0x1e8] sm:$0xff]
    %v79 = vld [vmem:[%s0 + $0x1f0] sm:$0xff]
    %v80 = vld [vmem:[%s0 + $0x1f8] sm:$0xff]
    %v81 = vld [vmem:[%s0 + $0x200] sm:$0xff]
    %v82 = vld [vmem:[%s0 + $0x208] sm:$0xff]
    %v83 = vld [vmem:[%s0 + $0x210] sm:$0xff]
    %v84 = vld [vmem:[%s0 + $0x218] sm:$0xff]
    %v85 = vld [vmem:[%s0 + $0x220] sm:$0xff]
    %v86 = vld [vmem:[%s0 + $0x228] sm:$0xff]
    %v87 = vld [vmem:[%s0 + $0x230] sm:$0xff]
    %v88 = vld [vmem:[%s0 + $0x238] sm:$0xff]
    %v89 = vld [vmem:[%s0 + $0x240] sm:$0xff]
    %v90 = vld [vmem:[%s0 + $0x248] sm:$0xff]
    %v91 = vld [vmem:[%s0 + $0x250] sm:$0xff]
    %v92 = vld [vmem:[%s0 + $0x258] sm:$0xff]
    %v93 = vld [vmem:[%s0 + $0x260] sm:$0xff]
    %v94 = vld [vmem:[%s0 + $0x268] sm:$0xff]
    %v95 = vld [vmem:[%s0 + $0x270] sm:$0xff]
    %v96 = vld [vmem:[%s0 + $0x278] sm:$0xff]
    %v97 = vld [vmem:[%s0 + $0x280] sm:$0xff]
    %v98 = vld [vmem:[%s0 + $0x288] sm:$0xff]
    %v99 = vld [vmem:[%s0 + $0x290] sm:$0xff]
    %v100 = vld [vmem:[%s0 + $0x298] sm:$0xff]
    %v101 = vld [vmem:[%s0 + $0x2a0] sm:$0xff]
    %v102 = vld [vmem:[%s0 + $0x2a8] sm:$0xff]
    %v103 = vld [vmem:[%s0 + $0x2b0] sm:$0xff]
    %v104 = vld [vmem:[%s0 + $0x2b8] sm:$0xff]
    %v105 = vld [vmem:[%s0 + $0x2c0] sm:$0xff]
    %v106 = vld [vmem:[%s0 + $0x2c8] sm:$0xff]
    %v107 = vld [vmem:[%s0 + $0x2d0] sm:$0xff]
    %v108 = vld [vmem:[%s0 + $0x2d8] sm:$0xff]
    %v109 = vld [vmem:[%s0 + $0x2e0] sm:$0xff]
    %v110 = vld [vmem:[%s0 + $0x2e8] sm:$0xff]
    %v111 = vld [vmem:[%s0 + $0x2f0] sm:$0xff]
    %v112 = vld [vmem:[%s0 + $0x2f8] sm:$0xff]
    %v113 = vld [vmem:[%s0 + $0x300] sm:$0xff]
    %v114 = vld [vmem:[%s0 + $0x308] sm:$0xff]
    %v115 = vld [vmem:[%s0 + $0x310] sm:$0xff]
    %v116 = vld [vmem:[%s0 + $0x318] sm:$0xff]
    %v117 = vld [vmem:[%s0 + $0x320] sm:$0xff]
    %v118 = vld [vmem:[%s0 + $0x328] sm:$0xff]
    %v119 = vld [vmem:[%s0 + $0x330] sm:$0xff]
    %v120 = vld [vmem:[%s0 + $0x338] sm:$0xff]
    %v121 = vld [vmem:[%s0 + $0x340] sm:$0xff]
    %v122 = vld [vmem:[%s0 + $0x348] sm:$0xff]
    %v123 = vld [vmem:[%s0 + $0x350] sm:$0xff]
    %v124 = vld [vmem:[%s0 + $0x358] sm:$0xff]
    %v125 = vld [vmem:[%s0 + $0x360] sm:$0xff]
    %v126 = vld [vmem:[%s0 + $0x368] sm:$0xff]
    %v127 = vld [vmem:[%s0 + $0x370] sm:$0xff]
    %v128 = vld [vmem:[%s0 + $0x378] sm:$0xff]
    %v129 = vld [vmem:[%s0 + $0x380] sm:$0xff]
    %v130 = vld [vmem:[%s0 + $0x388] sm:$0xff]
    %v131 = vld [vmem:[%s0 + $0x390] sm:$0xff]
    %v132 = vld [vmem:[%s0 + $0x398] sm:$0xff]
    %v133 = vld [vmem:[%s0 + $0x3a0] sm:$0xff]
    %v134 = vld [vmem:[%s0 + $0x3a8] sm:$0xff]
    %v135 = vld [vmem:[%s0 + $0x3b0] sm:$0xff]
    %v136 = vld [vmem:[%s0 + $0x3b8] sm:$0xff]
    %v137 = vld [vmem:[%s0 + $0x3c0] sm:$0xff]
    %v138 = vld [vmem:[%s0 + $0x3c8] sm:$0xff]
    %v139 = vld [vmem:[%s0 + $0x3d0] sm:$0xff]
    %v140 = vld [vmem:[%s0 + $0x3d8] sm:$0xff]
    %v141 = vld [vmem:[%s0 + $0x3e0] sm:$0xff]
    %v142 = vld [vmem:[%s0 + $0x3e8] sm:$0xff]
    %v143 = vld [vmem:[%s1] sm:$0x7]
    %v144 = vld [vmem:[%s1 + $0x3] sm:$0x1]
    %v145 = vld [vmem:[%s1 + $0x4] sm:$0x1]
    %v146 = vld [vmem:[%s1 + $0x5] sm:$0x1]
    %v147 = vld [vmem:[%s1 + $0x6] sm:$0x1]
    %v148 = vld [vmem:[%s1 + $0x7] sm:$0x1]
    %v149 = vld [vmem:[%s1 + $0x8] sm:$0x1]
    %151 = vset.pattern.permute.xlu0 0
    %152 = vperm.xlu0 %151, %v17
    %v153 = vpop.permute.xlu0 %152
    %156 = vset.pattern.permute.xlu0 0
    %157 = vperm.xlu0 %156, %v18
    %v158 = vpop.permute.xlu0 %157
    %161 = vset.pattern.permute.xlu0 0
    %162 = vperm.xlu0 %161, %v19
    %v163 = vpop.permute.xlu0 %162
    %166 = vset.pattern.permute.xlu0 0
    %167 = vperm.xlu0 %166, %v20
    %v168 = vpop.permute.xlu0 %167
    %171 = vset.pattern.permute.xlu0 0
    %172 = vperm.xlu0 %171, %v21
    %v173 = vpop.permute.xlu0 %172
    %176 = vset.pattern.permute.xlu0 0
    %177 = vperm.xlu0 %176, %v22
    %v178 = vpop.permute.xlu0 %177
    %181 = vset.pattern.permute.xlu0 0
    %182 = vperm.xlu0 %181, %v23
    %v183 = vpop.permute.xlu0 %182
    %186 = vset.pattern.permute.xlu0 0
    %187 = vperm.xlu0 %186, %v24
    %v188 = vpop.permute.xlu0 %187
    %191 = vset.pattern.permute.xlu0 0
    %192 = vperm.xlu0 %191, %v25
    %v193 = vpop.permute.xlu0 %192
    %196 = vset.pattern.permute.xlu0 0
    %197 = vperm.xlu0 %196, %v26
    %v198 = vpop.permute.xlu0 %197
    %201 = vset.pattern.permute.xlu0 0
    %202 = vperm.xlu0 %201, %v27
    %v203 = vpop.permute.xlu0 %202
    %206 = vset.pattern.permute.xlu0 0
    %207 = vperm.xlu0 %206, %v28
    %v208 = vpop.permute.xlu0 %207
    %211 = vset.pattern.permute.xlu0 0
    %212 = vperm.xlu0 %211, %v29
    %v213 = vpop.permute.xlu0 %212
    %216 = vset.pattern.permute.xlu0 0
    %217 = vperm.xlu0 %216, %v30
    %v218 = vpop.permute.xlu0 %217
    %221 = vset.pattern.permute.xlu0 0
    %222 = vperm.xlu0 %221, %v31
    %v223 = vpop.permute.xlu0 %222
    %226 = vset.pattern.permute.xlu0 0
    %227 = vperm.xlu0 %226, %v32
    %v228 = vpop.permute.xlu0 %227
    %231 = vset.pattern.permute.xlu0 0
    %232 = vperm.xlu0 %231, %v33
    %v233 = vpop.permute.xlu0 %232
    %236 = vset.pattern.permute.xlu0 0
    %237 = vperm.xlu0 %236, %v34
    %v238 = vpop.permute.xlu0 %237
    %241 = vset.pattern.permute.xlu0 0
    %242 = vperm.xlu0 %241, %v35
    %v243 = vpop.permute.xlu0 %242
    %246 = vset.pattern.permute.xlu0 0
    %247 = vperm.xlu0 %246, %v36
    %v248 = vpop.permute.xlu0 %247
    %251 = vset.pattern.permute.xlu0 0
    %252 = vperm.xlu0 %251, %v37
    %v253 = vpop.permute.xlu0 %252
    %256 = vset.pattern.permute.xlu0 0
    %257 = vperm.xlu0 %256, %v38
    %v258 = vpop.permute.xlu0 %257
    %261 = vset.pattern.permute.xlu0 0
    %262 = vperm.xlu0 %261, %v39
    %v263 = vpop.permute.xlu0 %262
    %266 = vset.pattern.permute.xlu0 0
    %267 = vperm.xlu0 %266, %v40
    %v268 = vpop.permute.xlu0 %267
    %271 = vset.pattern.permute.xlu0 0
    %272 = vperm.xlu0 %271, %v41
    %v273 = vpop.permute.xlu0 %272
    %276 = vset.pattern.permute.xlu0 0
    %277 = vperm.xlu0 %276, %v42
    %v278 = vpop.permute.xlu0 %277
    %281 = vset.pattern.permute.xlu0 0
    %282 = vperm.xlu0 %281, %v43
    %v283 = vpop.permute.xlu0 %282
    %286 = vset.pattern.permute.xlu0 0
    %287 = vperm.xlu0 %286, %v44
    %v288 = vpop.permute.xlu0 %287
    %291 = vset.pattern.permute.xlu0 0
    %292 = vperm.xlu0 %291, %v45
    %v293 = vpop.permute.xlu0 %292
    %296 = vset.pattern.permute.xlu0 0
    %297 = vperm.xlu0 %296, %v46
    %v298 = vpop.permute.xlu0 %297
    %301 = vset.pattern.permute.xlu0 0
    %302 = vperm.xlu0 %301, %v47
    %v303 = vpop.permute.xlu0 %302
    %306 = vset.pattern.permute.xlu0 0
    %307 = vperm.xlu0 %306, %v48
    %v308 = vpop.permute.xlu0 %307
    %311 = vset.pattern.permute.xlu0 0
    %312 = vperm.xlu0 %311, %v49
    %v313 = vpop.permute.xlu0 %312
    %316 = vset.pattern.permute.xlu0 0
    %317 = vperm.xlu0 %316, %v50
    %v318 = vpop.permute.xlu0 %317
    %321 = vset.pattern.permute.xlu0 0
    %322 = vperm.xlu0 %321, %v51
    %v323 = vpop.permute.xlu0 %322
    %326 = vset.pattern.permute.xlu0 0
    %327 = vperm.xlu0 %326, %v52
    %v328 = vpop.permute.xlu0 %327
    %331 = vset.pattern.permute.xlu0 0
    %332 = vperm.xlu0 %331, %v53
    %v333 = vpop.permute.xlu0 %332
    %336 = vset.pattern.permute.xlu0 0
    %337 = vperm.xlu0 %336, %v54
    %v338 = vpop.permute.xlu0 %337
    %341 = vset.pattern.permute.xlu0 0
    %342 = vperm.xlu0 %341, %v55
    %v343 = vpop.permute.xlu0 %342
    %346 = vset.pattern.permute.xlu0 0
    %347 = vperm.xlu0 %346, %v56
    %v348 = vpop.permute.xlu0 %347
    %351 = vset.pattern.permute.xlu0 0
    %352 = vperm.xlu0 %351, %v57
    %v353 = vpop.permute.xlu0 %352
    %356 = vset.pattern.permute.xlu0 0
    %357 = vperm.xlu0 %356, %v58
    %v358 = vpop.permute.xlu0 %357
    %361 = vset.pattern.permute.xlu0 0
    %362 = vperm.xlu0 %361, %v59
    %v363 = vpop.permute.xlu0 %362
    %366 = vset.pattern.permute.xlu0 0
    %367 = vperm.xlu0 %366, %v60
    %v368 = vpop.permute.xlu0 %367
    %371 = vset.pattern.permute.xlu0 0
    %372 = vperm.xlu0 %371, %v61
    %v373 = vpop.permute.xlu0 %372
    %376 = vset.pattern.permute.xlu0 0
    %377 = vperm.xlu0 %376, %v62
    %v378 = vpop.permute.xlu0 %377
    %381 = vset.pattern.permute.xlu0 0
    %382 = vperm.xlu0 %381, %v63
    %v383 = vpop.permute.xlu0 %382
    %386 = vset.pattern.permute.xlu0 0
    %387 = vperm.xlu0 %386, %v64
    %v388 = vpop.permute.xlu0 %387
    %391 = vset.pattern.permute.xlu0 0
    %392 = vperm.xlu0 %391, %v65
    %v393 = vpop.permute.xlu0 %392
    %396 = vset.pattern.permute.xlu0 0
    %397 = vperm.xlu0 %396, %v66
    %v398 = vpop.permute.xlu0 %397
    %401 = vset.pattern.permute.xlu0 0
    %402 = vperm.xlu0 %401, %v67
    %v403 = vpop.permute.xlu0 %402
    %406 = vset.pattern.permute.xlu0 0
    %407 = vperm.xlu0 %406, %v68
    %v408 = vpop.permute.xlu0 %407
    %411 = vset.pattern.permute.xlu0 0
    %412 = vperm.xlu0 %411, %v69
    %v413 = vpop.permute.xlu0 %412
    %416 = vset.pattern.permute.xlu0 0
    %417 = vperm.xlu0 %416, %v70
    %v418 = vpop.permute.xlu0 %417
    %421 = vset.pattern.permute.xlu0 0
    %422 = vperm.xlu0 %421, %v71
    %v423 = vpop.permute.xlu0 %422
    %426 = vset.pattern.permute.xlu0 0
    %427 = vperm.xlu0 %426, %v72
    %v428 = vpop.permute.xlu0 %427
    %431 = vset.pattern.permute.xlu0 0
    %432 = vperm.xlu0 %431, %v73
    %v433 = vpop.permute.xlu0 %432
    %436 = vset.pattern.permute.xlu0 0
    %437 = vperm.xlu0 %436, %v74
    %v438 = vpop.permute.xlu0 %437
    %441 = vset.pattern.permute.xlu0 0
    %442 = vperm.xlu0 %441, %v75
    %v443 = vpop.permute.xlu0 %442
    %446 = vset.pattern.permute.xlu0 0
    %447 = vperm.xlu0 %446, %v76
    %v448 = vpop.permute.xlu0 %447
    %451 = vset.pattern.permute.xlu0 0
    %452 = vperm.xlu0 %451, %v77
    %v453 = vpop.permute.xlu0 %452
    %456 = vset.pattern.permute.xlu0 0
    %457 = vperm.xlu0 %456, %v78
    %v458 = vpop.permute.xlu0 %457
    %461 = vset.pattern.permute.xlu0 0
    %462 = vperm.xlu0 %461, %v79
    %v463 = vpop.permute.xlu0 %462
    %466 = vset.pattern.permute.xlu0 0
    %467 = vperm.xlu0 %466, %v80
    %v468 = vpop.permute.xlu0 %467
    %471 = vset.pattern.permute.xlu0 0
    %472 = vperm.xlu0 %471, %v81
    %v473 = vpop.permute.xlu0 %472
    %476 = vset.pattern.permute.xlu0 0
    %477 = vperm.xlu0 %476, %v82
    %v478 = vpop.permute.xlu0 %477
    %481 = vset.pattern.permute.xlu0 0
    %482 = vperm.xlu0 %481, %v83
    %v483 = vpop.permute.xlu0 %482
    %486 = vset.pattern.permute.xlu0 0
    %487 = vperm.xlu0 %486, %v84
    %v488 = vpop.permute.xlu0 %487
    %491 = vset.pattern.permute.xlu0 0
    %492 = vperm.xlu0 %491, %v85
    %v493 = vpop.permute.xlu0 %492
    %496 = vset.pattern.permute.xlu0 0
    %497 = vperm.xlu0 %496, %v86
    %v498 = vpop.permute.xlu0 %497
    %501 = vset.pattern.permute.xlu0 0
    %502 = vperm.xlu0 %501, %v87
    %v503 = vpop.permute.xlu0 %502
    %506 = vset.pattern.permute.xlu0 0
    %507 = vperm.xlu0 %506, %v88
    %v508 = vpop.permute.xlu0 %507
    %511 = vset.pattern.permute.xlu0 0
    %512 = vperm.xlu0 %511, %v89
    %v513 = vpop.permute.xlu0 %512
    %516 = vset.pattern.permute.xlu0 0
    %517 = vperm.xlu0 %516, %v90
    %v518 = vpop.permute.xlu0 %517
    %521 = vset.pattern.permute.xlu0 0
    %522 = vperm.xlu0 %521, %v91
    %v523 = vpop.permute.xlu0 %522
    %526 = vset.pattern.permute.xlu0 0
    %527 = vperm.xlu0 %526, %v92
    %v528 = vpop.permute.xlu0 %527
    %531 = vset.pattern.permute.xlu0 0
    %532 = vperm.xlu0 %531, %v93
    %v533 = vpop.permute.xlu0 %532
    %536 = vset.pattern.permute.xlu0 0
    %537 = vperm.xlu0 %536, %v94
    %v538 = vpop.permute.xlu0 %537
    %541 = vset.pattern.permute.xlu0 0
    %542 = vperm.xlu0 %541, %v95
    %v543 = vpop.permute.xlu0 %542
    %546 = vset.pattern.permute.xlu0 0
    %547 = vperm.xlu0 %546, %v96
    %v548 = vpop.permute.xlu0 %547
    %551 = vset.pattern.permute.xlu0 0
    %552 = vperm.xlu0 %551, %v97
    %v553 = vpop.permute.xlu0 %552
    %556 = vset.pattern.permute.xlu0 0
    %557 = vperm.xlu0 %556, %v98
    %v558 = vpop.permute.xlu0 %557
    %561 = vset.pattern.permute.xlu0 0
    %562 = vperm.xlu0 %561, %v99
    %v563 = vpop.permute.xlu0 %562
    %566 = vset.pattern.permute.xlu0 0
    %567 = vperm.xlu0 %566, %v100
    %v568 = vpop.permute.xlu0 %567
    %571 = vset.pattern.permute.xlu0 0
    %572 = vperm.xlu0 %571, %v101
    %v573 = vpop.permute.xlu0 %572
    %576 = vset.pattern.permute.xlu0 0
    %577 = vperm.xlu0 %576, %v102
    %v578 = vpop.permute.xlu0 %577
    %581 = vset.pattern.permute.xlu0 0
    %582 = vperm.xlu0 %581, %v103
    %v583 = vpop.permute.xlu0 %582
    %586 = vset.pattern.permute.xlu0 0
    %587 = vperm.xlu0 %586, %v104
    %v588 = vpop.permute.xlu0 %587
    %591 = vset.pattern.permute.xlu0 0
    %592 = vperm.xlu0 %591, %v105
    %v593 = vpop.permute.xlu0 %592
    %596 = vset.pattern.permute.xlu0 0
    %597 = vperm.xlu0 %596, %v106
    %v598 = vpop.permute.xlu0 %597
    %601 = vset.pattern.permute.xlu0 0
    %602 = vperm.xlu0 %601, %v107
    %v603 = vpop.permute.xlu0 %602
    %606 = vset.pattern.permute.xlu0 0
    %607 = vperm.xlu0 %606, %v108
    %v608 = vpop.permute.xlu0 %607
    %611 = vset.pattern.permute.xlu0 0
    %612 = vperm.xlu0 %611, %v109
    %v613 = vpop.permute.xlu0 %612
    %616 = vset.pattern.permute.xlu0 0
    %617 = vperm.xlu0 %616, %v110
    %v618 = vpop.permute.xlu0 %617
    %621 = vset.pattern.permute.xlu0 0
    %622 = vperm.xlu0 %621, %v111
    %v623 = vpop.permute.xlu0 %622
    %626 = vset.pattern.permute.xlu0 0
    %627 = vperm.xlu0 %626, %v112
    %v628 = vpop.permute.xlu0 %627
    %631 = vset.pattern.permute.xlu0 0
    %632 = vperm.xlu0 %631, %v113
    %v633 = vpop.permute.xlu0 %632
    %636 = vset.pattern.permute.xlu0 0
    %637 = vperm.xlu0 %636, %v114
    %v638 = vpop.permute.xlu0 %637
    %641 = vset.pattern.permute.xlu0 0
    %642 = vperm.xlu0 %641, %v115
    %v643 = vpop.permute.xlu0 %642
    %646 = vset.pattern.permute.xlu0 0
    %647 = vperm.xlu0 %646, %v116
    %v648 = vpop.permute.xlu0 %647
    %651 = vset.pattern.permute.xlu0 0
    %652 = vperm.xlu0 %651, %v117
    %v653 = vpop.permute.xlu0 %652
    %656 = vset.pattern.permute.xlu0 0
    %657 = vperm.xlu0 %656, %v118
    %v658 = vpop.permute.xlu0 %657
    %661 = vset.pattern.permute.xlu0 0
    %662 = vperm.xlu0 %661, %v119
    %v663 = vpop.permute.xlu0 %662
    %666 = vset.pattern.permute.xlu0 0
    %667 = vperm.xlu0 %666, %v120
    %v668 = vpop.permute.xlu0 %667
    %671 = vset.pattern.permute.xlu0 0
    %672 = vperm.xlu0 %671, %v121
    %v673 = vpop.permute.xlu0 %672
    %676 = vset.pattern.permute.xlu0 0
    %677 = vperm.xlu0 %676, %v122
    %v678 = vpop.permute.xlu0 %677
    %681 = vset.pattern.permute.xlu0 0
    %682 = vperm.xlu0 %681, %v123
    %v683 = vpop.permute.xlu0 %682
    %686 = vset.pattern.permute.xlu0 0
    %687 = vperm.xlu0 %686, %v124
    %v688 = vpop.permute.xlu0 %687
    %691 = vset.pattern.permute.xlu0 0
    %692 = vperm.xlu0 %691, %v125
    %v693 = vpop.permute.xlu0 %692
    %696 = vset.pattern.permute.xlu0 0
    %697 = vperm.xlu0 %696, %v126
    %v698 = vpop.permute.xlu0 %697
    %701 = vset.pattern.permute.xlu0 0
    %702 = vperm.xlu0 %701, %v127
    %v703 = vpop.permute.xlu0 %702
    %706 = vset.pattern.permute.xlu0 0
    %707 = vperm.xlu0 %706, %v128
    %v708 = vpop.permute.xlu0 %707
    %711 = vset.pattern.permute.xlu0 0
    %712 = vperm.xlu0 %711, %v129
    %v713 = vpop.permute.xlu0 %712
    %716 = vset.pattern.permute.xlu0 0
    %717 = vperm.xlu0 %716, %v130
    %v718 = vpop.permute.xlu0 %717
    %721 = vset.pattern.permute.xlu0 0
    %722 = vperm.xlu0 %721, %v131
    %v723 = vpop.permute.xlu0 %722
    %726 = vset.pattern.permute.xlu0 0
    %727 = vperm.xlu0 %726, %v132
    %v728 = vpop.permute.xlu0 %727
    %731 = vset.pattern.permute.xlu0 0
    %732 = vperm.xlu0 %731, %v133
    %v733 = vpop.permute.xlu0 %732
    %736 = vset.pattern.permute.xlu0 0
    %737 = vperm.xlu0 %736, %v134
    %v738 = vpop.permute.xlu0 %737
    %741 = vset.pattern.permute.xlu0 0
    %742 = vperm.xlu0 %741, %v135
    %v743 = vpop.permute.xlu0 %742
    %746 = vset.pattern.permute.xlu0 0
    %747 = vperm.xlu0 %746, %v136
    %v748 = vpop.permute.xlu0 %747
    %751 = vset.pattern.permute.xlu0 0
    %752 = vperm.xlu0 %751, %v137
    %v753 = vpop.permute.xlu0 %752
    %756 = vset.pattern.permute.xlu0 0
    %757 = vperm.xlu0 %756, %v138
    %v758 = vpop.permute.xlu0 %757
    %761 = vset.pattern.permute.xlu0 0
    %762 = vperm.xlu0 %761, %v139
    %v763 = vpop.permute.xlu0 %762
    %766 = vset.pattern.permute.xlu0 0
    %767 = vperm.xlu0 %766, %v140
    %v768 = vpop.permute.xlu0 %767
    %771 = vset.pattern.permute.xlu0 0
    %772 = vperm.xlu0 %771, %v141
    %v773 = vpop.permute.xlu0 %772
    %776 = vset.pattern.permute.xlu0 0
    %777 = vperm.xlu0 %776, %v142
    %v778 = vpop.permute.xlu0 %777
    %v780 = vlaneseq
    %v781 = vshrl.u32 %v780, 7
    %v782 = vsub.s32 0, %v781
    %v783 = vrot.slane %v143, %v782
    %v784 = vmul.f32 %v153, %v783
    %v785 = vmul.f32 %v158, %v783
    %v786 = vmul.f32 %v163, %v783
    %v787 = vmul.f32 %v168, %v783
    %v788 = vmul.f32 %v173, %v783
    %v789 = vmul.f32 %v178, %v783
    %v790 = vmul.f32 %v183, %v783
    %v791 = vmul.f32 %v188, %v783
    %v792 = vmul.f32 %v193, %v783
    %v793 = vmul.f32 %v198, %v783
    %v794 = vmul.f32 %v203, %v783
    %v795 = vmul.f32 %v208, %v783
    %v796 = vmul.f32 %v213, %v783
    %v797 = vmul.f32 %v218, %v783
    %v798 = vmul.f32 %v223, %v783
    %v799 = vmul.f32 %v228, %v783
    %v800 = vmul.f32 %v233, %v783
    %v801 = vmul.f32 %v238, %v783
    %v802 = vmul.f32 %v243, %v783
    %v803 = vmul.f32 %v248, %v783
    %v804 = vmul.f32 %v253, %v783
    %v805 = vmul.f32 %v258, %v783
    %v806 = vmul.f32 %v263, %v783
    %v807 = vmul.f32 %v268, %v783
    %v808 = vmul.f32 %v273, %v783
    %v809 = vmul.f32 %v278, %v783
    %v810 = vmul.f32 %v283, %v783
    %v811 = vmul.f32 %v288, %v783
    %v812 = vmul.f32 %v293, %v783
    %v813 = vmul.f32 %v298, %v783
    %v814 = vmul.f32 %v303, %v783
    %v815 = vmul.f32 %v308, %v783
    %v816 = vmul.f32 %v313, %v783
    %v817 = vmul.f32 %v318, %v783
    %v818 = vmul.f32 %v323, %v783
    %v819 = vmul.f32 %v328, %v783
    %v820 = vmul.f32 %v333, %v783
    %v821 = vmul.f32 %v338, %v783
    %v822 = vmul.f32 %v343, %v783
    %v823 = vmul.f32 %v348, %v783
    %v824 = vmul.f32 %v353, %v783
    %v825 = vmul.f32 %v358, %v783
    %v826 = vmul.f32 %v363, %v783
    %v827 = vmul.f32 %v368, %v783
    %v828 = vmul.f32 %v373, %v783
    %v829 = vmul.f32 %v378, %v783
    %v830 = vmul.f32 %v383, %v783
    %v831 = vmul.f32 %v388, %v783
    %v832 = vmul.f32 %v393, %v783
    %v833 = vmul.f32 %v398, %v783
    %v834 = vmul.f32 %v403, %v783
    %v835 = vmul.f32 %v408, %v783
    %v836 = vmul.f32 %v413, %v783
    %v837 = vmul.f32 %v418, %v783
    %v838 = vmul.f32 %v423, %v783
    %v839 = vmul.f32 %v428, %v783
    %v840 = vmul.f32 %v433, %v783
    %v841 = vmul.f32 %v438, %v783
    %v842 = vmul.f32 %v443, %v783
    %v843 = vmul.f32 %v448, %v783
    %v844 = vmul.f32 %v453, %v783
    %v845 = vmul.f32 %v458, %v783
    %v846 = vmul.f32 %v463, %v783
    %v847 = vmul.f32 %v468, %v783
    %v848 = vmul.f32 %v473, %v783
    %v849 = vmul.f32 %v478, %v783
    %v850 = vmul.f32 %v483, %v783
    %v851 = vmul.f32 %v488, %v783
    %v852 = vmul.f32 %v493, %v783
    %v853 = vmul.f32 %v498, %v783
    %v854 = vmul.f32 %v503, %v783
    %v855 = vmul.f32 %v508, %v783
    %v856 = vmul.f32 %v513, %v783
    %v857 = vmul.f32 %v518, %v783
    %v858 = vmul.f32 %v523, %v783
    %v859 = vmul.f32 %v528, %v783
    %v860 = vmul.f32 %v533, %v783
    %v861 = vmul.f32 %v538, %v783
    %v862 = vmul.f32 %v543, %v783
    %v863 = vmul.f32 %v548, %v783
    %v864 = vmul.f32 %v553, %v783
    %v865 = vmul.f32 %v558, %v783
    %v866 = vmul.f32 %v563, %v783
    %v867 = vmul.f32 %v568, %v783
    %v868 = vmul.f32 %v573, %v783
    %v869 = vmul.f32 %v578, %v783
    %v870 = vmul.f32 %v583, %v783
    %v871 = vmul.f32 %v588, %v783
    %v872 = vmul.f32 %v593, %v783
    %v873 = vmul.f32 %v598, %v783
    %v874 = vmul.f32 %v603, %v783
    %v875 = vmul.f32 %v608, %v783
    %v876 = vmul.f32 %v613, %v783
    %v877 = vmul.f32 %v618, %v783
    %v878 = vmul.f32 %v623, %v783
    %v879 = vmul.f32 %v628, %v783
    %v880 = vmul.f32 %v633, %v783
    %v881 = vmul.f32 %v638, %v783
    %v882 = vmul.f32 %v643, %v783
    %v883 = vmul.f32 %v648, %v783
    %v884 = vmul.f32 %v653, %v783
    %v885 = vmul.f32 %v658, %v783
    %v886 = vmul.f32 %v663, %v783
    %v887 = vmul.f32 %v668, %v783
    %v888 = vmul.f32 %v673, %v783
    %v889 = vmul.f32 %v678, %v783
    %v890 = vmul.f32 %v683, %v783
    %v891 = vmul.f32 %v688, %v783
    %v892 = vmul.f32 %v693, %v783
    %v893 = vmul.f32 %v698, %v783
    %v894 = vmul.f32 %v703, %v783
    %v895 = vmul.f32 %v708, %v783
    %v896 = vmul.f32 %v713, %v783
    %v897 = vmul.f32 %v718, %v783
    %v898 = vmul.f32 %v723, %v783
    %v899 = vmul.f32 %v728, %v783
    %v900 = vmul.f32 %v733, %v783
    %v901 = vmul.f32 %v738, %v783
    %v902 = vmul.f32 %v743, %v783
    %v903 = vmul.f32 %v748, %v783
    %v904 = vmul.f32 %v753, %v783
    %v905 = vmul.f32 %v758, %v783
    %v906 = vmul.f32 %v763, %v783
    %v907 = vmul.f32 %v768, %v783
    %v908 = vmul.f32 %v773, %v783
    %v909 = vmul.f32 %v778, %v783
    %910 = vset.pattern.permute.xlu0 1
    %911 = vperm.xlu0 %910, %v17
    %v912 = vpop.permute.xlu0 %911
    %914 = vset.pattern.permute.xlu0 1
    %915 = vperm.xlu0 %914, %v18
    %v916 = vpop.permute.xlu0 %915
    %918 = vset.pattern.permute.xlu0 1
    %919 = vperm.xlu0 %918, %v19
    %v920 = vpop.permute.xlu0 %919
    %922 = vset.pattern.permute.xlu0 1
    %923 = vperm.xlu0 %922, %v20
    %v924 = vpop.permute.xlu0 %923
    %926 = vset.pattern.permute.xlu0 1
    %927 = vperm.xlu0 %926, %v21
    %v928 = vpop.permute.xlu0 %927
    %930 = vset.pattern.permute.xlu0 1
    %931 = vperm.xlu0 %930, %v22
    %v932 = vpop.permute.xlu0 %931
    %934 = vset.pattern.permute.xlu0 1
    %935 = vperm.xlu0 %934, %v23
    %v936 = vpop.permute.xlu0 %935
    %938 = vset.pattern.permute.xlu0 1
    %939 = vperm.xlu0 %938, %v24
    %v940 = vpop.permute.xlu0 %939
    %942 = vset.pattern.permute.xlu0 1
    %943 = vperm.xlu0 %942, %v25
    %v944 = vpop.permute.xlu0 %943
    %946 = vset.pattern.permute.xlu0 1
    %947 = vperm.xlu0 %946, %v26
    %v948 = vpop.permute.xlu0 %947
    %950 = vset.pattern.permute.xlu0 1
    %951 = vperm.xlu0 %950, %v27
    %v952 = vpop.permute.xlu0 %951
    %954 = vset.pattern.permute.xlu0 1
    %955 = vperm.xlu0 %954, %v28
    %v956 = vpop.permute.xlu0 %955
    %958 = vset.pattern.permute.xlu0 1
    %959 = vperm.xlu0 %958, %v29
    %v960 = vpop.permute.xlu0 %959
    %962 = vset.pattern.permute.xlu0 1
    %963 = vperm.xlu0 %962, %v30
    %v964 = vpop.permute.xlu0 %963
    %966 = vset.pattern.permute.xlu0 1
    %967 = vperm.xlu0 %966, %v31
    %v968 = vpop.permute.xlu0 %967
    %970 = vset.pattern.permute.xlu0 1
    %971 = vperm.xlu0 %970, %v32
    %v972 = vpop.permute.xlu0 %971
    %974 = vset.pattern.permute.xlu0 1
    %975 = vperm.xlu0 %974, %v33
    %v976 = vpop.permute.xlu0 %975
    %978 = vset.pattern.permute.xlu0 1
    %979 = vperm.xlu0 %978, %v34
    %v980 = vpop.permute.xlu0 %979
    %982 = vset.pattern.permute.xlu0 1
    %983 = vperm.xlu0 %982, %v35
    %v984 = vpop.permute.xlu0 %983
    %986 = vset.pattern.permute.xlu0 1
    %987 = vperm.xlu0 %986, %v36
    %v988 = vpop.permute.xlu0 %987
    %990 = vset.pattern.permute.xlu0 1
    %991 = vperm.xlu0 %990, %v37
    %v992 = vpop.permute.xlu0 %991
    %994 = vset.pattern.permute.xlu0 1
    %995 = vperm.xlu0 %994, %v38
    %v996 = vpop.permute.xlu0 %995
    %998 = vset.pattern.permute.xlu0 1
    %999 = vperm.xlu0 %998, %v39
    %v1000 = vpop.permute.xlu0 %999
    %1002 = vset.pattern.permute.xlu0 1
    %1003 = vperm.xlu0 %1002, %v40
    %v1004 = vpop.permute.xlu0 %1003
    %1006 = vset.pattern.permute.xlu0 1
    %1007 = vperm.xlu0 %1006, %v41
    %v1008 = vpop.permute.xlu0 %1007
    %1010 = vset.pattern.permute.xlu0 1
    %1011 = vperm.xlu0 %1010, %v42
    %v1012 = vpop.permute.xlu0 %1011
    %1014 = vset.pattern.permute.xlu0 1
    %1015 = vperm.xlu0 %1014, %v43
    %v1016 = vpop.permute.xlu0 %1015
    %1018 = vset.pattern.permute.xlu0 1
    %1019 = vperm.xlu0 %1018, %v44
    %v1020 = vpop.permute.xlu0 %1019
    %1022 = vset.pattern.permute.xlu0 1
    %1023 = vperm.xlu0 %1022, %v45
    %v1024 = vpop.permute.xlu0 %1023
    %1026 = vset.pattern.permute.xlu0 1
    %1027 = vperm.xlu0 %1026, %v46
    %v1028 = vpop.permute.xlu0 %1027
    %1030 = vset.pattern.permute.xlu0 1
    %1031 = vperm.xlu0 %1030, %v47
    %v1032 = vpop.permute.xlu0 %1031
    %1034 = vset.pattern.permute.xlu0 1
    %1035 = vperm.xlu0 %1034, %v48
    %v1036 = vpop.permute.xlu0 %1035
    %1038 = vset.pattern.permute.xlu0 1
    %1039 = vperm.xlu0 %1038, %v49
    %v1040 = vpop.permute.xlu0 %1039
    %1042 = vset.pattern.permute.xlu0 1
    %1043 = vperm.xlu0 %1042, %v50
    %v1044 = vpop.permute.xlu0 %1043
    %1046 = vset.pattern.permute.xlu0 1
    %1047 = vperm.xlu0 %1046, %v51
    %v1048 = vpop.permute.xlu0 %1047
    %1050 = vset.pattern.permute.xlu0 1
    %1051 = vperm.xlu0 %1050, %v52
    %v1052 = vpop.permute.xlu0 %1051
    %1054 = vset.pattern.permute.xlu0 1
    %1055 = vperm.xlu0 %1054, %v53
    %v1056 = vpop.permute.xlu0 %1055
    %1058 = vset.pattern.permute.xlu0 1
    %1059 = vperm.xlu0 %1058, %v54
    %v1060 = vpop.permute.xlu0 %1059
    %1062 = vset.pattern.permute.xlu0 1
    %1063 = vperm.xlu0 %1062, %v55
    %v1064 = vpop.permute.xlu0 %1063
    %1066 = vset.pattern.permute.xlu0 1
    %1067 = vperm.xlu0 %1066, %v56
    %v1068 = vpop.permute.xlu0 %1067
    %1070 = vset.pattern.permute.xlu0 1
    %1071 = vperm.xlu0 %1070, %v57
    %v1072 = vpop.permute.xlu0 %1071
    %1074 = vset.pattern.permute.xlu0 1
    %1075 = vperm.xlu0 %1074, %v58
    %v1076 = vpop.permute.xlu0 %1075
    %1078 = vset.pattern.permute.xlu0 1
    %1079 = vperm.xlu0 %1078, %v59
    %v1080 = vpop.permute.xlu0 %1079
    %1082 = vset.pattern.permute.xlu0 1
    %1083 = vperm.xlu0 %1082, %v60
    %v1084 = vpop.permute.xlu0 %1083
    %1086 = vset.pattern.permute.xlu0 1
    %1087 = vperm.xlu0 %1086, %v61
    %v1088 = vpop.permute.xlu0 %1087
    %1090 = vset.pattern.permute.xlu0 1
    %1091 = vperm.xlu0 %1090, %v62
    %v1092 = vpop.permute.xlu0 %1091
    %1094 = vset.pattern.permute.xlu0 1
    %1095 = vperm.xlu0 %1094, %v63
    %v1096 = vpop.permute.xlu0 %1095
    %1098 = vset.pattern.permute.xlu0 1
    %1099 = vperm.xlu0 %1098, %v64
    %v1100 = vpop.permute.xlu0 %1099
    %1102 = vset.pattern.permute.xlu0 1
    %1103 = vperm.xlu0 %1102, %v65
    %v1104 = vpop.permute.xlu0 %1103
    %1106 = vset.pattern.permute.xlu0 1
    %1107 = vperm.xlu0 %1106, %v66
    %v1108 = vpop.permute.xlu0 %1107
    %1110 = vset.pattern.permute.xlu0 1
    %1111 = vperm.xlu0 %1110, %v67
    %v1112 = vpop.permute.xlu0 %1111
    %1114 = vset.pattern.permute.xlu0 1
    %1115 = vperm.xlu0 %1114, %v68
    %v1116 = vpop.permute.xlu0 %1115
    %1118 = vset.pattern.permute.xlu0 1
    %1119 = vperm.xlu0 %1118, %v69
    %v1120 = vpop.permute.xlu0 %1119
    %1122 = vset.pattern.permute.xlu0 1
    %1123 = vperm.xlu0 %1122, %v70
    %v1124 = vpop.permute.xlu0 %1123
    %1126 = vset.pattern.permute.xlu0 1
    %1127 = vperm.xlu0 %1126, %v71
    %v1128 = vpop.permute.xlu0 %1127
    %1130 = vset.pattern.permute.xlu0 1
    %1131 = vperm.xlu0 %1130, %v72
    %v1132 = vpop.permute.xlu0 %1131
    %1134 = vset.pattern.permute.xlu0 1
    %1135 = vperm.xlu0 %1134, %v73
    %v1136 = vpop.permute.xlu0 %1135
    %1138 = vset.pattern.permute.xlu0 1
    %1139 = vperm.xlu0 %1138, %v74
    %v1140 = vpop.permute.xlu0 %1139
    %1142 = vset.pattern.permute.xlu0 1
    %1143 = vperm.xlu0 %1142, %v75
    %v1144 = vpop.permute.xlu0 %1143
    %1146 = vset.pattern.permute.xlu0 1
    %1147 = vperm.xlu0 %1146, %v76
    %v1148 = vpop.permute.xlu0 %1147
    %1150 = vset.pattern.permute.xlu0 1
    %1151 = vperm.xlu0 %1150, %v77
    %v1152 = vpop.permute.xlu0 %1151
    %1154 = vset.pattern.permute.xlu0 1
    %1155 = vperm.xlu0 %1154, %v78
    %v1156 = vpop.permute.xlu0 %1155
    %1158 = vset.pattern.permute.xlu0 1
    %1159 = vperm.xlu0 %1158, %v79
    %v1160 = vpop.permute.xlu0 %1159
    %1162 = vset.pattern.permute.xlu0 1
    %1163 = vperm.xlu0 %1162, %v80
    %v1164 = vpop.permute.xlu0 %1163
    %1166 = vset.pattern.permute.xlu0 1
    %1167 = vperm.xlu0 %1166, %v81
    %v1168 = vpop.permute.xlu0 %1167
    %1170 = vset.pattern.permute.xlu0 1
    %1171 = vperm.xlu0 %1170, %v82
    %v1172 = vpop.permute.xlu0 %1171
    %1174 = vset.pattern.permute.xlu0 1
    %1175 = vperm.xlu0 %1174, %v83
    %v1176 = vpop.permute.xlu0 %1175
    %1178 = vset.pattern.permute.xlu0 1
    %1179 = vperm.xlu0 %1178, %v84
    %v1180 = vpop.permute.xlu0 %1179
    %1182 = vset.pattern.permute.xlu0 1
    %1183 = vperm.xlu0 %1182, %v85
    %v1184 = vpop.permute.xlu0 %1183
    %1186 = vset.pattern.permute.xlu0 1
    %1187 = vperm.xlu0 %1186, %v86
    %v1188 = vpop.permute.xlu0 %1187
    %1190 = vset.pattern.permute.xlu0 1
    %1191 = vperm.xlu0 %1190, %v87
    %v1192 = vpop.permute.xlu0 %1191
    %1194 = vset.pattern.permute.xlu0 1
    %1195 = vperm.xlu0 %1194, %v88
    %v1196 = vpop.permute.xlu0 %1195
    %1198 = vset.pattern.permute.xlu0 1
    %1199 = vperm.xlu0 %1198, %v89
    %v1200 = vpop.permute.xlu0 %1199
    %1202 = vset.pattern.permute.xlu0 1
    %1203 = vperm.xlu0 %1202, %v90
    %v1204 = vpop.permute.xlu0 %1203
    %1206 = vset.pattern.permute.xlu0 1
    %1207 = vperm.xlu0 %1206, %v91
    %v1208 = vpop.permute.xlu0 %1207
    %1210 = vset.pattern.permute.xlu0 1
    %1211 = vperm.xlu0 %1210, %v92
    %v1212 = vpop.permute.xlu0 %1211
    %1214 = vset.pattern.permute.xlu0 1
    %1215 = vperm.xlu0 %1214, %v93
    %v1216 = vpop.permute.xlu0 %1215
    %1218 = vset.pattern.permute.xlu0 1
    %1219 = vperm.xlu0 %1218, %v94
    %v1220 = vpop.permute.xlu0 %1219
    %1222 = vset.pattern.permute.xlu0 1
    %1223 = vperm.xlu0 %1222, %v95
    %v1224 = vpop.permute.xlu0 %1223
    %1226 = vset.pattern.permute.xlu0 1
    %1227 = vperm.xlu0 %1226, %v96
    %v1228 = vpop.permute.xlu0 %1227
    %1230 = vset.pattern.permute.xlu0 1
    %1231 = vperm.xlu0 %1230, %v97
    %v1232 = vpop.permute.xlu0 %1231
    %1234 = vset.pattern.permute.xlu0 1
    %1235 = vperm.xlu0 %1234, %v98
    %v1236 = vpop.permute.xlu0 %1235
    %1238 = vset.pattern.permute.xlu0 1
    %1239 = vperm.xlu0 %1238, %v99
    %v1240 = vpop.permute.xlu0 %1239
    %1242 = vset.pattern.permute.xlu0 1
    %1243 = vperm.xlu0 %1242, %v100
    %v1244 = vpop.permute.xlu0 %1243
    %1246 = vset.pattern.permute.xlu0 1
    %1247 = vperm.xlu0 %1246, %v101
    %v1248 = vpop.permute.xlu0 %1247
    %1250 = vset.pattern.permute.xlu0 1
    %1251 = vperm.xlu0 %1250, %v102
    %v1252 = vpop.permute.xlu0 %1251
    %1254 = vset.pattern.permute.xlu0 1
    %1255 = vperm.xlu0 %1254, %v103
    %v1256 = vpop.permute.xlu0 %1255
    %1258 = vset.pattern.permute.xlu0 1
    %1259 = vperm.xlu0 %1258, %v104
    %v1260 = vpop.permute.xlu0 %1259
    %1262 = vset.pattern.permute.xlu0 1
    %1263 = vperm.xlu0 %1262, %v105
    %v1264 = vpop.permute.xlu0 %1263
    %1266 = vset.pattern.permute.xlu0 1
    %1267 = vperm.xlu0 %1266, %v106
    %v1268 = vpop.permute.xlu0 %1267
    %1270 = vset.pattern.permute.xlu0 1
    %1271 = vperm.xlu0 %1270, %v107
    %v1272 = vpop.permute.xlu0 %1271
    %1274 = vset.pattern.permute.xlu0 1
    %1275 = vperm.xlu0 %1274, %v108
    %v1276 = vpop.permute.xlu0 %1275
    %1278 = vset.pattern.permute.xlu0 1
    %1279 = vperm.xlu0 %1278, %v109
    %v1280 = vpop.permute.xlu0 %1279
    %1282 = vset.pattern.permute.xlu0 1
    %1283 = vperm.xlu0 %1282, %v110
    %v1284 = vpop.permute.xlu0 %1283
    %1286 = vset.pattern.permute.xlu0 1
    %1287 = vperm.xlu0 %1286, %v111
    %v1288 = vpop.permute.xlu0 %1287
    %1290 = vset.pattern.permute.xlu0 1
    %1291 = vperm.xlu0 %1290, %v112
    %v1292 = vpop.permute.xlu0 %1291
    %1294 = vset.pattern.permute.xlu0 1
    %1295 = vperm.xlu0 %1294, %v113
    %v1296 = vpop.permute.xlu0 %1295
    %1298 = vset.pattern.permute.xlu0 1
    %1299 = vperm.xlu0 %1298, %v114
    %v1300 = vpop.permute.xlu0 %1299
    %1302 = vset.pattern.permute.xlu0 1
    %1303 = vperm.xlu0 %1302, %v115
    %v1304 = vpop.permute.xlu0 %1303
    %1306 = vset.pattern.permute.xlu0 1
    %1307 = vperm.xlu0 %1306, %v116
    %v1308 = vpop.permute.xlu0 %1307
    %1310 = vset.pattern.permute.xlu0 1
    %1311 = vperm.xlu0 %1310, %v117
    %v1312 = vpop.permute.xlu0 %1311
    %1314 = vset.pattern.permute.xlu0 1
    %1315 = vperm.xlu0 %1314, %v118
    %v1316 = vpop.permute.xlu0 %1315
    %1318 = vset.pattern.permute.xlu0 1
    %1319 = vperm.xlu0 %1318, %v119
    %v1320 = vpop.permute.xlu0 %1319
    %1322 = vset.pattern.permute.xlu0 1
    %1323 = vperm.xlu0 %1322, %v120
    %v1324 = vpop.permute.xlu0 %1323
    %1326 = vset.pattern.permute.xlu0 1
    %1327 = vperm.xlu0 %1326, %v121
    %v1328 = vpop.permute.xlu0 %1327
    %1330 = vset.pattern.permute.xlu0 1
    %1331 = vperm.xlu0 %1330, %v122
    %v1332 = vpop.permute.xlu0 %1331
    %1334 = vset.pattern.permute.xlu0 1
    %1335 = vperm.xlu0 %1334, %v123
    %v1336 = vpop.permute.xlu0 %1335
    %1338 = vset.pattern.permute.xlu0 1
    %1339 = vperm.xlu0 %1338, %v124
    %v1340 = vpop.permute.xlu0 %1339
    %1342 = vset.pattern.permute.xlu0 1
    %1343 = vperm.xlu0 %1342, %v125
    %v1344 = vpop.permute.xlu0 %1343
    %1346 = vset.pattern.permute.xlu0 1
    %1347 = vperm.xlu0 %1346, %v126
    %v1348 = vpop.permute.xlu0 %1347
    %1350 = vset.pattern.permute.xlu0 1
    %1351 = vperm.xlu0 %1350, %v127
    %v1352 = vpop.permute.xlu0 %1351
    %1354 = vset.pattern.permute.xlu0 1
    %1355 = vperm.xlu0 %1354, %v128
    %v1356 = vpop.permute.xlu0 %1355
    %1358 = vset.pattern.permute.xlu0 1
    %1359 = vperm.xlu0 %1358, %v129
    %v1360 = vpop.permute.xlu0 %1359
    %1362 = vset.pattern.permute.xlu0 1
    %1363 = vperm.xlu0 %1362, %v130
    %v1364 = vpop.permute.xlu0 %1363
    %1366 = vset.pattern.permute.xlu0 1
    %1367 = vperm.xlu0 %1366, %v131
    %v1368 = vpop.permute.xlu0 %1367
    %1370 = vset.pattern.permute.xlu0 1
    %1371 = vperm.xlu0 %1370, %v132
    %v1372 = vpop.permute.xlu0 %1371
    %1374 = vset.pattern.permute.xlu0 1
    %1375 = vperm.xlu0 %1374, %v133
    %v1376 = vpop.permute.xlu0 %1375
    %1378 = vset.pattern.permute.xlu0 1
    %1379 = vperm.xlu0 %1378, %v134
    %v1380 = vpop.permute.xlu0 %1379
    %1382 = vset.pattern.permute.xlu0 1
    %1383 = vperm.xlu0 %1382, %v135
    %v1384 = vpop.permute.xlu0 %1383
    %1386 = vset.pattern.permute.xlu0 1
    %1387 = vperm.xlu0 %1386, %v136
    %v1388 = vpop.permute.xlu0 %1387
    %1390 = vset.pattern.permute.xlu0 1
    %1391 = vperm.xlu0 %1390, %v137
    %v1392 = vpop.permute.xlu0 %1391
    %1394 = vset.pattern.permute.xlu0 1
    %1395 = vperm.xlu0 %1394, %v138
    %v1396 = vpop.permute.xlu0 %1395
    %1398 = vset.pattern.permute.xlu0 1
    %1399 = vperm.xlu0 %1398, %v139
    %v1400 = vpop.permute.xlu0 %1399
    %1402 = vset.pattern.permute.xlu0 1
    %1403 = vperm.xlu0 %1402, %v140
    %v1404 = vpop.permute.xlu0 %1403
    %1406 = vset.pattern.permute.xlu0 1
    %1407 = vperm.xlu0 %1406, %v141
    %v1408 = vpop.permute.xlu0 %1407
    %1410 = vset.pattern.permute.xlu0 1
    %1411 = vperm.xlu0 %1410, %v142
    %v1412 = vpop.permute.xlu0 %1411
    %v1414 = vlaneseq
    %v1415 = vshrl.u32 %v1414, 7
    %v1416 = vsub.s32 1, %v1415
    %v1417 = vrot.slane %v143, %v1416
    %v1418 = vmul.f32 %v912, %v1417
    %v1419 = vmul.f32 %v916, %v1417
    %v1420 = vmul.f32 %v920, %v1417
    %v1421 = vmul.f32 %v924, %v1417
    %v1422 = vmul.f32 %v928, %v1417
    %v1423 = vmul.f32 %v932, %v1417
    %v1424 = vmul.f32 %v936, %v1417
    %v1425 = vmul.f32 %v940, %v1417
    %v1426 = vmul.f32 %v944, %v1417
    %v1427 = vmul.f32 %v948, %v1417
    %v1428 = vmul.f32 %v952, %v1417
    %v1429 = vmul.f32 %v956, %v1417
    %v1430 = vmul.f32 %v960, %v1417
    %v1431 = vmul.f32 %v964, %v1417
    %v1432 = vmul.f32 %v968, %v1417
    %v1433 = vmul.f32 %v972, %v1417
    %v1434 = vmul.f32 %v976, %v1417
    %v1435 = vmul.f32 %v980, %v1417
    %v1436 = vmul.f32 %v984, %v1417
    %v1437 = vmul.f32 %v988, %v1417
    %v1438 = vmul.f32 %v992, %v1417
    %v1439 = vmul.f32 %v996, %v1417
    %v1440 = vmul.f32 %v1000, %v1417
    %v1441 = vmul.f32 %v1004, %v1417
    %v1442 = vmul.f32 %v1008, %v1417
    %v1443 = vmul.f32 %v1012, %v1417
    %v1444 = vmul.f32 %v1016, %v1417
    %v1445 = vmul.f32 %v1020, %v1417
    %v1446 = vmul.f32 %v1024, %v1417
    %v1447 = vmul.f32 %v1028, %v1417
    %v1448 = vmul.f32 %v1032, %v1417
    %v1449 = vmul.f32 %v1036, %v1417
    %v1450 = vmul.f32 %v1040, %v1417
    %v1451 = vmul.f32 %v1044, %v1417
    %v1452 = vmul.f32 %v1048, %v1417
    %v1453 = vmul.f32 %v1052, %v1417
    %v1454 = vmul.f32 %v1056, %v1417
    %v1455 = vmul.f32 %v1060, %v1417
    %v1456 = vmul.f32 %v1064, %v1417
    %v1457 = vmul.f32 %v1068, %v1417
    %v1458 = vmul.f32 %v1072, %v1417
    %v1459 = vmul.f32 %v1076, %v1417
    %v1460 = vmul.f32 %v1080, %v1417
    %v1461 = vmul.f32 %v1084, %v1417
    %v1462 = vmul.f32 %v1088, %v1417
    %v1463 = vmul.f32 %v1092, %v1417
    %v1464 = vmul.f32 %v1096, %v1417
    %v1465 = vmul.f32 %v1100, %v1417
    %v1466 = vmul.f32 %v1104, %v1417
    %v1467 = vmul.f32 %v1108, %v1417
    %v1468 = vmul.f32 %v1112, %v1417
    %v1469 = vmul.f32 %v1116, %v1417
    %v1470 = vmul.f32 %v1120, %v1417
    %v1471 = vmul.f32 %v1124, %v1417
    %v1472 = vmul.f32 %v1128, %v1417
    %v1473 = vmul.f32 %v1132, %v1417
    %v1474 = vmul.f32 %v1136, %v1417
    %v1475 = vmul.f32 %v1140, %v1417
    %v1476 = vmul.f32 %v1144, %v1417
    %v1477 = vmul.f32 %v1148, %v1417
    %v1478 = vmul.f32 %v1152, %v1417
    %v1479 = vmul.f32 %v1156, %v1417
    %v1480 = vmul.f32 %v1160, %v1417
    %v1481 = vmul.f32 %v1164, %v1417
    %v1482 = vmul.f32 %v1168, %v1417
    %v1483 = vmul.f32 %v1172, %v1417
    %v1484 = vmul.f32 %v1176, %v1417
    %v1485 = vmul.f32 %v1180, %v1417
    %v1486 = vmul.f32 %v1184, %v1417
    %v1487 = vmul.f32 %v1188, %v1417
    %v1488 = vmul.f32 %v1192, %v1417
    %v1489 = vmul.f32 %v1196, %v1417
    %v1490 = vmul.f32 %v1200, %v1417
    %v1491 = vmul.f32 %v1204, %v1417
    %v1492 = vmul.f32 %v1208, %v1417
    %v1493 = vmul.f32 %v1212, %v1417
    %v1494 = vmul.f32 %v1216, %v1417
    %v1495 = vmul.f32 %v1220, %v1417
    %v1496 = vmul.f32 %v1224, %v1417
    %v1497 = vmul.f32 %v1228, %v1417
    %v1498 = vmul.f32 %v1232, %v1417
    %v1499 = vmul.f32 %v1236, %v1417
    %v1500 = vmul.f32 %v1240, %v1417
    %v1501 = vmul.f32 %v1244, %v1417
    %v1502 = vmul.f32 %v1248, %v1417
    %v1503 = vmul.f32 %v1252, %v1417
    %v1504 = vmul.f32 %v1256, %v1417
    %v1505 = vmul.f32 %v1260, %v1417
    %v1506 = vmul.f32 %v1264, %v1417
    %v1507 = vmul.f32 %v1268, %v1417
    %v1508 = vmul.f32 %v1272, %v1417
    %v1509 = vmul.f32 %v1276, %v1417
    %v1510 = vmul.f32 %v1280, %v1417
    %v1511 = vmul.f32 %v1284, %v1417
    %v1512 = vmul.f32 %v1288, %v1417
    %v1513 = vmul.f32 %v1292, %v1417
    %v1514 = vmul.f32 %v1296, %v1417
    %v1515 = vmul.f32 %v1300, %v1417
    %v1516 = vmul.f32 %v1304, %v1417
    %v1517 = vmul.f32 %v1308, %v1417
    %v1518 = vmul.f32 %v1312, %v1417
    %v1519 = vmul.f32 %v1316, %v1417
    %v1520 = vmul.f32 %v1320, %v1417
    %v1521 = vmul.f32 %v1324, %v1417
    %v1522 = vmul.f32 %v1328, %v1417
    %v1523 = vmul.f32 %v1332, %v1417
    %v1524 = vmul.f32 %v1336, %v1417
    %v1525 = vmul.f32 %v1340, %v1417
    %v1526 = vmul.f32 %v1344, %v1417
    %v1527 = vmul.f32 %v1348, %v1417
    %v1528 = vmul.f32 %v1352, %v1417
    %v1529 = vmul.f32 %v1356, %v1417
    %v1530 = vmul.f32 %v1360, %v1417
    %v1531 = vmul.f32 %v1364, %v1417
    %v1532 = vmul.f32 %v1368, %v1417
    %v1533 = vmul.f32 %v1372, %v1417
    %v1534 = vmul.f32 %v1376, %v1417
    %v1535 = vmul.f32 %v1380, %v1417
    %v1536 = vmul.f32 %v1384, %v1417
    %v1537 = vmul.f32 %v1388, %v1417
    %v1538 = vmul.f32 %v1392, %v1417
    %v1539 = vmul.f32 %v1396, %v1417
    %v1540 = vmul.f32 %v1400, %v1417
    %v1541 = vmul.f32 %v1404, %v1417
    %v1542 = vmul.f32 %v1408, %v1417
    %v1543 = vmul.f32 %v1412, %v1417
    %v1544 = vadd.f32 %v784, %v1418
    %v1545 = vadd.f32 %v785, %v1419
    %v1546 = vadd.f32 %v786, %v1420
    %v1547 = vadd.f32 %v787, %v1421
    %v1548 = vadd.f32 %v788, %v1422
    %v1549 = vadd.f32 %v789, %v1423
    %v1550 = vadd.f32 %v790, %v1424
    %v1551 = vadd.f32 %v791, %v1425
    %v1552 = vadd.f32 %v792, %v1426
    %v1553 = vadd.f32 %v793, %v1427
    %v1554 = vadd.f32 %v794, %v1428
    %v1555 = vadd.f32 %v795, %v1429
    %v1556 = vadd.f32 %v796, %v1430
    %v1557 = vadd.f32 %v797, %v1431
    %v1558 = vadd.f32 %v798, %v1432
    %v1559 = vadd.f32 %v799, %v1433
    %v1560 = vadd.f32 %v800, %v1434
    %v1561 = vadd.f32 %v801, %v1435
    %v1562 = vadd.f32 %v802, %v1436
    %v1563 = vadd.f32 %v803, %v1437
    %v1564 = vadd.f32 %v804, %v1438
    %v1565 = vadd.f32 %v805, %v1439
    %v1566 = vadd.f32 %v806, %v1440
    %v1567 = vadd.f32 %v807, %v1441
    %v1568 = vadd.f32 %v808, %v1442
    %v1569 = vadd.f32 %v809, %v1443
    %v1570 = vadd.f32 %v810, %v1444
    %v1571 = vadd.f32 %v811, %v1445
    %v1572 = vadd.f32 %v812, %v1446
    %v1573 = vadd.f32 %v813, %v1447
    %v1574 = vadd.f32 %v814, %v1448
    %v1575 = vadd.f32 %v815, %v1449
    %v1576 = vadd.f32 %v816, %v1450
    %v1577 = vadd.f32 %v817, %v1451
    %v1578 = vadd.f32 %v818, %v1452
    %v1579 = vadd.f32 %v819, %v1453
    %v1580 = vadd.f32 %v820, %v1454
    %v1581 = vadd.f32 %v821, %v1455
    %v1582 = vadd.f32 %v822, %v1456
    %v1583 = vadd.f32 %v823, %v1457
    %v1584 = vadd.f32 %v824, %v1458
    %v1585 = vadd.f32 %v825, %v1459
    %v1586 = vadd.f32 %v826, %v1460
    %v1587 = vadd.f32 %v827, %v1461
    %v1588 = vadd.f32 %v828, %v1462
    %v1589 = vadd.f32 %v829, %v1463
    %v1590 = vadd.f32 %v830, %v1464
    %v1591 = vadd.f32 %v831, %v1465
    %v1592 = vadd.f32 %v832, %v1466
    %v1593 = vadd.f32 %v833, %v1467
    %v1594 = vadd.f32 %v834, %v1468
    %v1595 = vadd.f32 %v835, %v1469
    %v1596 = vadd.f32 %v836, %v1470
    %v1597 = vadd.f32 %v837, %v1471
    %v1598 = vadd.f32 %v838, %v1472
    %v1599 = vadd.f32 %v839, %v1473
    %v1600 = vadd.f32 %v840, %v1474
    %v1601 = vadd.f32 %v841, %v1475
    %v1602 = vadd.f32 %v842, %v1476
    %v1603 = vadd.f32 %v843, %v1477
    %v1604 = vadd.f32 %v844, %v1478
    %v1605 = vadd.f32 %v845, %v1479
    %v1606 = vadd.f32 %v846, %v1480
    %v1607 = vadd.f32 %v847, %v1481
    %v1608 = vadd.f32 %v848, %v1482
    %v1609 = vadd.f32 %v849, %v1483
    %v1610 = vadd.f32 %v850, %v1484
    %v1611 = vadd.f32 %v851, %v1485
    %v1612 = vadd.f32 %v852, %v1486
    %v1613 = vadd.f32 %v853, %v1487
    %v1614 = vadd.f32 %v854, %v1488
    %v1615 = vadd.f32 %v855, %v1489
    %v1616 = vadd.f32 %v856, %v1490
    %v1617 = vadd.f32 %v857, %v1491
    %v1618 = vadd.f32 %v858, %v1492
    %v1619 = vadd.f32 %v859, %v1493
    %v1620 = vadd.f32 %v860, %v1494
    %v1621 = vadd.f32 %v861, %v1495
    %v1622 = vadd.f32 %v862, %v1496
    %v1623 = vadd.f32 %v863, %v1497
    %v1624 = vadd.f32 %v864, %v1498
    %v1625 = vadd.f32 %v865, %v1499
    %v1626 = vadd.f32 %v866, %v1500
    %v1627 = vadd.f32 %v867, %v1501
    %v1628 = vadd.f32 %v868, %v1502
    %v1629 = vadd.f32 %v869, %v1503
    %v1630 = vadd.f32 %v870, %v1504
    %v1631 = vadd.f32 %v871, %v1505
    %v1632 = vadd.f32 %v872, %v1506
    %v1633 = vadd.f32 %v873, %v1507
    %v1634 = vadd.f32 %v874, %v1508
    %v1635 = vadd.f32 %v875, %v1509
    %v1636 = vadd.f32 %v876, %v1510
    %v1637 = vadd.f32 %v877, %v1511
    %v1638 = vadd.f32 %v878, %v1512
    %v1639 = vadd.f32 %v879, %v1513
    %v1640 = vadd.f32 %v880, %v1514
    %v1641 = vadd.f32 %v881, %v1515
    %v1642 = vadd.f32 %v882, %v1516
    %v1643 = vadd.f32 %v883, %v1517
    %v1644 = vadd.f32 %v884, %v1518
    %v1645 = vadd.f32 %v885, %v1519
    %v1646 = vadd.f32 %v886, %v1520
    %v1647 = vadd.f32 %v887, %v1521
    %v1648 = vadd.f32 %v888, %v1522
    %v1649 = vadd.f32 %v889, %v1523
    %v1650 = vadd.f32 %v890, %v1524
    %v1651 = vadd.f32 %v891, %v1525
    %v1652 = vadd.f32 %v892, %v1526
    %v1653 = vadd.f32 %v893, %v1527
    %v1654 = vadd.f32 %v894, %v1528
    %v1655 = vadd.f32 %v895, %v1529
    %v1656 = vadd.f32 %v896, %v1530
    %v1657 = vadd.f32 %v897, %v1531
    %v1658 = vadd.f32 %v898, %v1532
    %v1659 = vadd.f32 %v899, %v1533
    %v1660 = vadd.f32 %v900, %v1534
    %v1661 = vadd.f32 %v901, %v1535
    %v1662 = vadd.f32 %v902, %v1536
    %v1663 = vadd.f32 %v903, %v1537
    %v1664 = vadd.f32 %v904, %v1538
    %v1665 = vadd.f32 %v905, %v1539
    %v1666 = vadd.f32 %v906, %v1540
    %v1667 = vadd.f32 %v907, %v1541
    %v1668 = vadd.f32 %v908, %v1542
    %v1669 = vadd.f32 %v909, %v1543
    %1670 = vset.pattern.permute.xlu0 2
    %1671 = vperm.xlu0 %1670, %v17
    %v1672 = vpop.permute.xlu0 %1671
    %1674 = vset.pattern.permute.xlu0 2
    %1675 = vperm.xlu0 %1674, %v18
    %v1676 = vpop.permute.xlu0 %1675
    %1678 = vset.pattern.permute.xlu0 2
    %1679 = vperm.xlu0 %1678, %v19
    %v1680 = vpop.permute.xlu0 %1679
    %1682 = vset.pattern.permute.xlu0 2
    %1683 = vperm.xlu0 %1682, %v20
    %v1684 = vpop.permute.xlu0 %1683
    %1686 = vset.pattern.permute.xlu0 2
    %1687 = vperm.xlu0 %1686, %v21
    %v1688 = vpop.permute.xlu0 %1687
    %1690 = vset.pattern.permute.xlu0 2
    %1691 = vperm.xlu0 %1690, %v22
    %v1692 = vpop.permute.xlu0 %1691
    %1694 = vset.pattern.permute.xlu0 2
    %1695 = vperm.xlu0 %1694, %v23
    %v1696 = vpop.permute.xlu0 %1695
    %1698 = vset.pattern.permute.xlu0 2
    %1699 = vperm.xlu0 %1698, %v24
    %v1700 = vpop.permute.xlu0 %1699
    %1702 = vset.pattern.permute.xlu0 2
    %1703 = vperm.xlu0 %1702, %v25
    %v1704 = vpop.permute.xlu0 %1703
    %1706 = vset.pattern.permute.xlu0 2
    %1707 = vperm.xlu0 %1706, %v26
    %v1708 = vpop.permute.xlu0 %1707
    %1710 = vset.pattern.permute.xlu0 2
    %1711 = vperm.xlu0 %1710, %v27
    %v1712 = vpop.permute.xlu0 %1711
    %1714 = vset.pattern.permute.xlu0 2
    %1715 = vperm.xlu0 %1714, %v28
    %v1716 = vpop.permute.xlu0 %1715
    %1718 = vset.pattern.permute.xlu0 2
    %1719 = vperm.xlu0 %1718, %v29
    %v1720 = vpop.permute.xlu0 %1719
    %1722 = vset.pattern.permute.xlu0 2
    %1723 = vperm.xlu0 %1722, %v30
    %v1724 = vpop.permute.xlu0 %1723
    %1726 = vset.pattern.permute.xlu0 2
    %1727 = vperm.xlu0 %1726, %v31
    %v1728 = vpop.permute.xlu0 %1727
    %1730 = vset.pattern.permute.xlu0 2
    %1731 = vperm.xlu0 %1730, %v32
    %v1732 = vpop.permute.xlu0 %1731
    %1734 = vset.pattern.permute.xlu0 2
    %1735 = vperm.xlu0 %1734, %v33
    %v1736 = vpop.permute.xlu0 %1735
    %1738 = vset.pattern.permute.xlu0 2
    %1739 = vperm.xlu0 %1738, %v34
    %v1740 = vpop.permute.xlu0 %1739
    %1742 = vset.pattern.permute.xlu0 2
    %1743 = vperm.xlu0 %1742, %v35
    %v1744 = vpop.permute.xlu0 %1743
    %1746 = vset.pattern.permute.xlu0 2
    %1747 = vperm.xlu0 %1746, %v36
    %v1748 = vpop.permute.xlu0 %1747
    %1750 = vset.pattern.permute.xlu0 2
    %1751 = vperm.xlu0 %1750, %v37
    %v1752 = vpop.permute.xlu0 %1751
    %1754 = vset.pattern.permute.xlu0 2
    %1755 = vperm.xlu0 %1754, %v38
    %v1756 = vpop.permute.xlu0 %1755
    %1758 = vset.pattern.permute.xlu0 2
    %1759 = vperm.xlu0 %1758, %v39
    %v1760 = vpop.permute.xlu0 %1759
    %1762 = vset.pattern.permute.xlu0 2
    %1763 = vperm.xlu0 %1762, %v40
    %v1764 = vpop.permute.xlu0 %1763
    %1766 = vset.pattern.permute.xlu0 2
    %1767 = vperm.xlu0 %1766, %v41
    %v1768 = vpop.permute.xlu0 %1767
    %1770 = vset.pattern.permute.xlu0 2
    %1771 = vperm.xlu0 %1770, %v42
    %v1772 = vpop.permute.xlu0 %1771
    %1774 = vset.pattern.permute.xlu0 2
    %1775 = vperm.xlu0 %1774, %v43
    %v1776 = vpop.permute.xlu0 %1775
    %1778 = vset.pattern.permute.xlu0 2
    %1779 = vperm.xlu0 %1778, %v44
    %v1780 = vpop.permute.xlu0 %1779
    %1782 = vset.pattern.permute.xlu0 2
    %1783 = vperm.xlu0 %1782, %v45
    %v1784 = vpop.permute.xlu0 %1783
    %1786 = vset.pattern.permute.xlu0 2
    %1787 = vperm.xlu0 %1786, %v46
    %v1788 = vpop.permute.xlu0 %1787
    %1790 = vset.pattern.permute.xlu0 2
    %1791 = vperm.xlu0 %1790, %v47
    %v1792 = vpop.permute.xlu0 %1791
    %1794 = vset.pattern.permute.xlu0 2
    %1795 = vperm.xlu0 %1794, %v48
    %v1796 = vpop.permute.xlu0 %1795
    %1798 = vset.pattern.permute.xlu0 2
    %1799 = vperm.xlu0 %1798, %v49
    %v1800 = vpop.permute.xlu0 %1799
    %1802 = vset.pattern.permute.xlu0 2
    %1803 = vperm.xlu0 %1802, %v50
    %v1804 = vpop.permute.xlu0 %1803
    %1806 = vset.pattern.permute.xlu0 2
    %1807 = vperm.xlu0 %1806, %v51
    %v1808 = vpop.permute.xlu0 %1807
    %1810 = vset.pattern.permute.xlu0 2
    %1811 = vperm.xlu0 %1810, %v52
    %v1812 = vpop.permute.xlu0 %1811
    %1814 = vset.pattern.permute.xlu0 2
    %1815 = vperm.xlu0 %1814, %v53
    %v1816 = vpop.permute.xlu0 %1815
    %1818 = vset.pattern.permute.xlu0 2
    %1819 = vperm.xlu0 %1818, %v54
    %v1820 = vpop.permute.xlu0 %1819
    %1822 = vset.pattern.permute.xlu0 2
    %1823 = vperm.xlu0 %1822, %v55
    %v1824 = vpop.permute.xlu0 %1823
    %1826 = vset.pattern.permute.xlu0 2
    %1827 = vperm.xlu0 %1826, %v56
    %v1828 = vpop.permute.xlu0 %1827
    %1830 = vset.pattern.permute.xlu0 2
    %1831 = vperm.xlu0 %1830, %v57
    %v1832 = vpop.permute.xlu0 %1831
    %1834 = vset.pattern.permute.xlu0 2
    %1835 = vperm.xlu0 %1834, %v58
    %v1836 = vpop.permute.xlu0 %1835
    %1838 = vset.pattern.permute.xlu0 2
    %1839 = vperm.xlu0 %1838, %v59
    %v1840 = vpop.permute.xlu0 %1839
    %1842 = vset.pattern.permute.xlu0 2
    %1843 = vperm.xlu0 %1842, %v60
    %v1844 = vpop.permute.xlu0 %1843
    %1846 = vset.pattern.permute.xlu0 2
    %1847 = vperm.xlu0 %1846, %v61
    %v1848 = vpop.permute.xlu0 %1847
    %1850 = vset.pattern.permute.xlu0 2
    %1851 = vperm.xlu0 %1850, %v62
    %v1852 = vpop.permute.xlu0 %1851
    %1854 = vset.pattern.permute.xlu0 2
    %1855 = vperm.xlu0 %1854, %v63
    %v1856 = vpop.permute.xlu0 %1855
    %1858 = vset.pattern.permute.xlu0 2
    %1859 = vperm.xlu0 %1858, %v64
    %v1860 = vpop.permute.xlu0 %1859
    %1862 = vset.pattern.permute.xlu0 2
    %1863 = vperm.xlu0 %1862, %v65
    %v1864 = vpop.permute.xlu0 %1863
    %1866 = vset.pattern.permute.xlu0 2
    %1867 = vperm.xlu0 %1866, %v66
    %v1868 = vpop.permute.xlu0 %1867
    %1870 = vset.pattern.permute.xlu0 2
    %1871 = vperm.xlu0 %1870, %v67
    %v1872 = vpop.permute.xlu0 %1871
    %1874 = vset.pattern.permute.xlu0 2
    %1875 = vperm.xlu0 %1874, %v68
    %v1876 = vpop.permute.xlu0 %1875
    %1878 = vset.pattern.permute.xlu0 2
    %1879 = vperm.xlu0 %1878, %v69
    %v1880 = vpop.permute.xlu0 %1879
    %1882 = vset.pattern.permute.xlu0 2
    %1883 = vperm.xlu0 %1882, %v70
    %v1884 = vpop.permute.xlu0 %1883
    %1886 = vset.pattern.permute.xlu0 2
    %1887 = vperm.xlu0 %1886, %v71
    %v1888 = vpop.permute.xlu0 %1887
    %1890 = vset.pattern.permute.xlu0 2
    %1891 = vperm.xlu0 %1890, %v72
    %v1892 = vpop.permute.xlu0 %1891
    %1894 = vset.pattern.permute.xlu0 2
    %1895 = vperm.xlu0 %1894, %v73
    %v1896 = vpop.permute.xlu0 %1895
    %1898 = vset.pattern.permute.xlu0 2
    %1899 = vperm.xlu0 %1898, %v74
    %v1900 = vpop.permute.xlu0 %1899
    %1902 = vset.pattern.permute.xlu0 2
    %1903 = vperm.xlu0 %1902, %v75
    %v1904 = vpop.permute.xlu0 %1903
    %1906 = vset.pattern.permute.xlu0 2
    %1907 = vperm.xlu0 %1906, %v76
    %v1908 = vpop.permute.xlu0 %1907
    %1910 = vset.pattern.permute.xlu0 2
    %1911 = vperm.xlu0 %1910, %v77
    %v1912 = vpop.permute.xlu0 %1911
    %1914 = vset.pattern.permute.xlu0 2
    %1915 = vperm.xlu0 %1914, %v78
    %v1916 = vpop.permute.xlu0 %1915
    %1918 = vset.pattern.permute.xlu0 2
    %1919 = vperm.xlu0 %1918, %v79
    %v1920 = vpop.permute.xlu0 %1919
    %1922 = vset.pattern.permute.xlu0 2
    %1923 = vperm.xlu0 %1922, %v80
    %v1924 = vpop.permute.xlu0 %1923
    %1926 = vset.pattern.permute.xlu0 2
    %1927 = vperm.xlu0 %1926, %v81
    %v1928 = vpop.permute.xlu0 %1927
    %1930 = vset.pattern.permute.xlu0 2
    %1931 = vperm.xlu0 %1930, %v82
    %v1932 = vpop.permute.xlu0 %1931
    %1934 = vset.pattern.permute.xlu0 2
    %1935 = vperm.xlu0 %1934, %v83
    %v1936 = vpop.permute.xlu0 %1935
    %1938 = vset.pattern.permute.xlu0 2
    %1939 = vperm.xlu0 %1938, %v84
    %v1940 = vpop.permute.xlu0 %1939
    %1942 = vset.pattern.permute.xlu0 2
    %1943 = vperm.xlu0 %1942, %v85
    %v1944 = vpop.permute.xlu0 %1943
    %1946 = vset.pattern.permute.xlu0 2
    %1947 = vperm.xlu0 %1946, %v86
    %v1948 = vpop.permute.xlu0 %1947
    %1950 = vset.pattern.permute.xlu0 2
    %1951 = vperm.xlu0 %1950, %v87
    %v1952 = vpop.permute.xlu0 %1951
    %1954 = vset.pattern.permute.xlu0 2
    %1955 = vperm.xlu0 %1954, %v88
    %v1956 = vpop.permute.xlu0 %1955
    %1958 = vset.pattern.permute.xlu0 2
    %1959 = vperm.xlu0 %1958, %v89
    %v1960 = vpop.permute.xlu0 %1959
    %1962 = vset.pattern.permute.xlu0 2
    %1963 = vperm.xlu0 %1962, %v90
    %v1964 = vpop.permute.xlu0 %1963
    %1966 = vset.pattern.permute.xlu0 2
    %1967 = vperm.xlu0 %1966, %v91
    %v1968 = vpop.permute.xlu0 %1967
    %1970 = vset.pattern.permute.xlu0 2
    %1971 = vperm.xlu0 %1970, %v92
    %v1972 = vpop.permute.xlu0 %1971
    %1974 = vset.pattern.permute.xlu0 2
    %1975 = vperm.xlu0 %1974, %v93
    %v1976 = vpop.permute.xlu0 %1975
    %1978 = vset.pattern.permute.xlu0 2
    %1979 = vperm.xlu0 %1978, %v94
    %v1980 = vpop.permute.xlu0 %1979
    %1982 = vset.pattern.permute.xlu0 2
    %1983 = vperm.xlu0 %1982, %v95
    %v1984 = vpop.permute.xlu0 %1983
    %1986 = vset.pattern.permute.xlu0 2
    %1987 = vperm.xlu0 %1986, %v96
    %v1988 = vpop.permute.xlu0 %1987
    %1990 = vset.pattern.permute.xlu0 2
    %1991 = vperm.xlu0 %1990, %v97
    %v1992 = vpop.permute.xlu0 %1991
    %1994 = vset.pattern.permute.xlu0 2
    %1995 = vperm.xlu0 %1994, %v98
    %v1996 = vpop.permute.xlu0 %1995
    %1998 = vset.pattern.permute.xlu0 2
    %1999 = vperm.xlu0 %1998, %v99
    %v2000 = vpop.permute.xlu0 %1999
    %2002 = vset.pattern.permute.xlu0 2
    %2003 = vperm.xlu0 %2002, %v100
    %v2004 = vpop.permute.xlu0 %2003
    %2006 = vset.pattern.permute.xlu0 2
    %2007 = vperm.xlu0 %2006, %v101
    %v2008 = vpop.permute.xlu0 %2007
    %2010 = vset.pattern.permute.xlu0 2
    %2011 = vperm.xlu0 %2010, %v102
    %v2012 = vpop.permute.xlu0 %2011
    %2014 = vset.pattern.permute.xlu0 2
    %2015 = vperm.xlu0 %2014, %v103
    %v2016 = vpop.permute.xlu0 %2015
    %2018 = vset.pattern.permute.xlu0 2
    %2019 = vperm.xlu0 %2018, %v104
    %v2020 = vpop.permute.xlu0 %2019
    %2022 = vset.pattern.permute.xlu0 2
    %2023 = vperm.xlu0 %2022, %v105
    %v2024 = vpop.permute.xlu0 %2023
    %2026 = vset.pattern.permute.xlu0 2
    %2027 = vperm.xlu0 %2026, %v106
    %v2028 = vpop.permute.xlu0 %2027
    %2030 = vset.pattern.permute.xlu0 2
    %2031 = vperm.xlu0 %2030, %v107
    %v2032 = vpop.permute.xlu0 %2031
    %2034 = vset.pattern.permute.xlu0 2
    %2035 = vperm.xlu0 %2034, %v108
    %v2036 = vpop.permute.xlu0 %2035
    %2038 = vset.pattern.permute.xlu0 2
    %2039 = vperm.xlu0 %2038, %v109
    %v2040 = vpop.permute.xlu0 %2039
    %2042 = vset.pattern.permute.xlu0 2
    %2043 = vperm.xlu0 %2042, %v110
    %v2044 = vpop.permute.xlu0 %2043
    %2046 = vset.pattern.permute.xlu0 2
    %2047 = vperm.xlu0 %2046, %v111
    %v2048 = vpop.permute.xlu0 %2047
    %2050 = vset.pattern.permute.xlu0 2
    %2051 = vperm.xlu0 %2050, %v112
    %v2052 = vpop.permute.xlu0 %2051
    %2054 = vset.pattern.permute.xlu0 2
    %2055 = vperm.xlu0 %2054, %v113
    %v2056 = vpop.permute.xlu0 %2055
    %2058 = vset.pattern.permute.xlu0 2
    %2059 = vperm.xlu0 %2058, %v114
    %v2060 = vpop.permute.xlu0 %2059
    %2062 = vset.pattern.permute.xlu0 2
    %2063 = vperm.xlu0 %2062, %v115
    %v2064 = vpop.permute.xlu0 %2063
    %2066 = vset.pattern.permute.xlu0 2
    %2067 = vperm.xlu0 %2066, %v116
    %v2068 = vpop.permute.xlu0 %2067
    %2070 = vset.pattern.permute.xlu0 2
    %2071 = vperm.xlu0 %2070, %v117
    %v2072 = vpop.permute.xlu0 %2071
    %2074 = vset.pattern.permute.xlu0 2
    %2075 = vperm.xlu0 %2074, %v118
    %v2076 = vpop.permute.xlu0 %2075
    %2078 = vset.pattern.permute.xlu0 2
    %2079 = vperm.xlu0 %2078, %v119
    %v2080 = vpop.permute.xlu0 %2079
    %2082 = vset.pattern.permute.xlu0 2
    %2083 = vperm.xlu0 %2082, %v120
    %v2084 = vpop.permute.xlu0 %2083
    %2086 = vset.pattern.permute.xlu0 2
    %2087 = vperm.xlu0 %2086, %v121
    %v2088 = vpop.permute.xlu0 %2087
    %2090 = vset.pattern.permute.xlu0 2
    %2091 = vperm.xlu0 %2090, %v122
    %v2092 = vpop.permute.xlu0 %2091
    %2094 = vset.pattern.permute.xlu0 2
    %2095 = vperm.xlu0 %2094, %v123
    %v2096 = vpop.permute.xlu0 %2095
    %2098 = vset.pattern.permute.xlu0 2
    %2099 = vperm.xlu0 %2098, %v124
    %v2100 = vpop.permute.xlu0 %2099
    %2102 = vset.pattern.permute.xlu0 2
    %2103 = vperm.xlu0 %2102, %v125
    %v2104 = vpop.permute.xlu0 %2103
    %2106 = vset.pattern.permute.xlu0 2
    %2107 = vperm.xlu0 %2106, %v126
    %v2108 = vpop.permute.xlu0 %2107
    %2110 = vset.pattern.permute.xlu0 2
    %2111 = vperm.xlu0 %2110, %v127
    %v2112 = vpop.permute.xlu0 %2111
    %2114 = vset.pattern.permute.xlu0 2
    %2115 = vperm.xlu0 %2114, %v128
    %v2116 = vpop.permute.xlu0 %2115
    %2118 = vset.pattern.permute.xlu0 2
    %2119 = vperm.xlu0 %2118, %v129
    %v2120 = vpop.permute.xlu0 %2119
    %2122 = vset.pattern.permute.xlu0 2
    %2123 = vperm.xlu0 %2122, %v130
    %v2124 = vpop.permute.xlu0 %2123
    %2126 = vset.pattern.permute.xlu0 2
    %2127 = vperm.xlu0 %2126, %v131
    %v2128 = vpop.permute.xlu0 %2127
    %2130 = vset.pattern.permute.xlu0 2
    %2131 = vperm.xlu0 %2130, %v132
    %v2132 = vpop.permute.xlu0 %2131
    %2134 = vset.pattern.permute.xlu0 2
    %2135 = vperm.xlu0 %2134, %v133
    %v2136 = vpop.permute.xlu0 %2135
    %2138 = vset.pattern.permute.xlu0 2
    %2139 = vperm.xlu0 %2138, %v134
    %v2140 = vpop.permute.xlu0 %2139
    %2142 = vset.pattern.permute.xlu0 2
    %2143 = vperm.xlu0 %2142, %v135
    %v2144 = vpop.permute.xlu0 %2143
    %2146 = vset.pattern.permute.xlu0 2
    %2147 = vperm.xlu0 %2146, %v136
    %v2148 = vpop.permute.xlu0 %2147
    %2150 = vset.pattern.permute.xlu0 2
    %2151 = vperm.xlu0 %2150, %v137
    %v2152 = vpop.permute.xlu0 %2151
    %2154 = vset.pattern.permute.xlu0 2
    %2155 = vperm.xlu0 %2154, %v138
    %v2156 = vpop.permute.xlu0 %2155
    %2158 = vset.pattern.permute.xlu0 2
    %2159 = vperm.xlu0 %2158, %v139
    %v2160 = vpop.permute.xlu0 %2159
    %2162 = vset.pattern.permute.xlu0 2
    %2163 = vperm.xlu0 %2162, %v140
    %v2164 = vpop.permute.xlu0 %2163
    %2166 = vset.pattern.permute.xlu0 2
    %2167 = vperm.xlu0 %2166, %v141
    %v2168 = vpop.permute.xlu0 %2167
    %2170 = vset.pattern.permute.xlu0 2
    %2171 = vperm.xlu0 %2170, %v142
    %v2172 = vpop.permute.xlu0 %2171
    %v2174 = vlaneseq
    %v2175 = vshrl.u32 %v2174, 7
    %v2176 = vsub.s32 2, %v2175
    %v2177 = vrot.slane %v143, %v2176
    %v2178 = vmul.f32 %v1672, %v2177
    %v2179 = vmul.f32 %v1676, %v2177
    %v2180 = vmul.f32 %v1680, %v2177
    %v2181 = vmul.f32 %v1684, %v2177
    %v2182 = vmul.f32 %v1688, %v2177
    %v2183 = vmul.f32 %v1692, %v2177
    %v2184 = vmul.f32 %v1696, %v2177
    %v2185 = vmul.f32 %v1700, %v2177
    %v2186 = vmul.f32 %v1704, %v2177
    %v2187 = vmul.f32 %v1708, %v2177
    %v2188 = vmul.f32 %v1712, %v2177
    %v2189 = vmul.f32 %v1716, %v2177
    %v2190 = vmul.f32 %v1720, %v2177
    %v2191 = vmul.f32 %v1724, %v2177
    %v2192 = vmul.f32 %v1728, %v2177
    %v2193 = vmul.f32 %v1732, %v2177
    %v2194 = vmul.f32 %v1736, %v2177
    %v2195 = vmul.f32 %v1740, %v2177
    %v2196 = vmul.f32 %v1744, %v2177
    %v2197 = vmul.f32 %v1748, %v2177
    %v2198 = vmul.f32 %v1752, %v2177
    %v2199 = vmul.f32 %v1756, %v2177
    %v2200 = vmul.f32 %v1760, %v2177
    %v2201 = vmul.f32 %v1764, %v2177
    %v2202 = vmul.f32 %v1768, %v2177
    %v2203 = vmul.f32 %v1772, %v2177
    %v2204 = vmul.f32 %v1776, %v2177
    %v2205 = vmul.f32 %v1780, %v2177
    %v2206 = vmul.f32 %v1784, %v2177
    %v2207 = vmul.f32 %v1788, %v2177
    %v2208 = vmul.f32 %v1792, %v2177
    %v2209 = vmul.f32 %v1796, %v2177
    %v2210 = vmul.f32 %v1800, %v2177
    %v2211 = vmul.f32 %v1804, %v2177
    %v2212 = vmul.f32 %v1808, %v2177
    %v2213 = vmul.f32 %v1812, %v2177
    %v2214 = vmul.f32 %v1816, %v2177
    %v2215 = vmul.f32 %v1820, %v2177
    %v2216 = vmul.f32 %v1824, %v2177
    %v2217 = vmul.f32 %v1828, %v2177
    %v2218 = vmul.f32 %v1832, %v2177
    %v2219 = vmul.f32 %v1836, %v2177
    %v2220 = vmul.f32 %v1840, %v2177
    %v2221 = vmul.f32 %v1844, %v2177
    %v2222 = vmul.f32 %v1848, %v2177
    %v2223 = vmul.f32 %v1852, %v2177
    %v2224 = vmul.f32 %v1856, %v2177
    %v2225 = vmul.f32 %v1860, %v2177
    %v2226 = vmul.f32 %v1864, %v2177
    %v2227 = vmul.f32 %v1868, %v2177
    %v2228 = vmul.f32 %v1872, %v2177
    %v2229 = vmul.f32 %v1876, %v2177
    %v2230 = vmul.f32 %v1880, %v2177
    %v2231 = vmul.f32 %v1884, %v2177
    %v2232 = vmul.f32 %v1888, %v2177
    %v2233 = vmul.f32 %v1892, %v2177
    %v2234 = vmul.f32 %v1896, %v2177
    %v2235 = vmul.f32 %v1900, %v2177
    %v2236 = vmul.f32 %v1904, %v2177
    %v2237 = vmul.f32 %v1908, %v2177
    %v2238 = vmul.f32 %v1912, %v2177
    %v2239 = vmul.f32 %v1916, %v2177
    %v2240 = vmul.f32 %v1920, %v2177
    %v2241 = vmul.f32 %v1924, %v2177
    %v2242 = vmul.f32 %v1928, %v2177
    %v2243 = vmul.f32 %v1932, %v2177
    %v2244 = vmul.f32 %v1936, %v2177
    %v2245 = vmul.f32 %v1940, %v2177
    %v2246 = vmul.f32 %v1944, %v2177
    %v2247 = vmul.f32 %v1948, %v2177
    %v2248 = vmul.f32 %v1952, %v2177
    %v2249 = vmul.f32 %v1956, %v2177
    %v2250 = vmul.f32 %v1960, %v2177
    %v2251 = vmul.f32 %v1964, %v2177
    %v2252 = vmul.f32 %v1968, %v2177
    %v2253 = vmul.f32 %v1972, %v2177
    %v2254 = vmul.f32 %v1976, %v2177
    %v2255 = vmul.f32 %v1980, %v2177
    %v2256 = vmul.f32 %v1984, %v2177
    %v2257 = vmul.f32 %v1988, %v2177
    %v2258 = vmul.f32 %v1992, %v2177
    %v2259 = vmul.f32 %v1996, %v2177
    %v2260 = vmul.f32 %v2000, %v2177
    %v2261 = vmul.f32 %v2004, %v2177
    %v2262 = vmul.f32 %v2008, %v2177
    %v2263 = vmul.f32 %v2012, %v2177
    %v2264 = vmul.f32 %v2016, %v2177
    %v2265 = vmul.f32 %v2020, %v2177
    %v2266 = vmul.f32 %v2024, %v2177
    %v2267 = vmul.f32 %v2028, %v2177
    %v2268 = vmul.f32 %v2032, %v2177
    %v2269 = vmul.f32 %v2036, %v2177
    %v2270 = vmul.f32 %v2040, %v2177
    %v2271 = vmul.f32 %v2044, %v2177
    %v2272 = vmul.f32 %v2048, %v2177
    %v2273 = vmul.f32 %v2052, %v2177
    %v2274 = vmul.f32 %v2056, %v2177
    %v2275 = vmul.f32 %v2060, %v2177
    %v2276 = vmul.f32 %v2064, %v2177
    %v2277 = vmul.f32 %v2068, %v2177
    %v2278 = vmul.f32 %v2072, %v2177
    %v2279 = vmul.f32 %v2076, %v2177
    %v2280 = vmul.f32 %v2080, %v2177
    %v2281 = vmul.f32 %v2084, %v2177
    %v2282 = vmul.f32 %v2088, %v2177
    %v2283 = vmul.f32 %v2092, %v2177
    %v2284 = vmul.f32 %v2096, %v2177
    %v2285 = vmul.f32 %v2100, %v2177
    %v2286 = vmul.f32 %v2104, %v2177
    %v2287 = vmul.f32 %v2108, %v2177
    %v2288 = vmul.f32 %v2112, %v2177
    %v2289 = vmul.f32 %v2116, %v2177
    %v2290 = vmul.f32 %v2120, %v2177
    %v2291 = vmul.f32 %v2124, %v2177
    %v2292 = vmul.f32 %v2128, %v2177
    %v2293 = vmul.f32 %v2132, %v2177
    %v2294 = vmul.f32 %v2136, %v2177
    %v2295 = vmul.f32 %v2140, %v2177
    %v2296 = vmul.f32 %v2144, %v2177
    %v2297 = vmul.f32 %v2148, %v2177
    %v2298 = vmul.f32 %v2152, %v2177
    %v2299 = vmul.f32 %v2156, %v2177
    %v2300 = vmul.f32 %v2160, %v2177
    %v2301 = vmul.f32 %v2164, %v2177
    %v2302 = vmul.f32 %v2168, %v2177
    %v2303 = vmul.f32 %v2172, %v2177
    %v2304 = vadd.f32 %v1544, %v2178
    %v2305 = vadd.f32 %v1545, %v2179
    %v2306 = vadd.f32 %v1546, %v2180
    %v2307 = vadd.f32 %v1547, %v2181
    %v2308 = vadd.f32 %v1548, %v2182
    %v2309 = vadd.f32 %v1549, %v2183
    %v2310 = vadd.f32 %v1550, %v2184
    %v2311 = vadd.f32 %v1551, %v2185
    %v2312 = vadd.f32 %v1552, %v2186
    %v2313 = vadd.f32 %v1553, %v2187
    %v2314 = vadd.f32 %v1554, %v2188
    %v2315 = vadd.f32 %v1555, %v2189
    %v2316 = vadd.f32 %v1556, %v2190
    %v2317 = vadd.f32 %v1557, %v2191
    %v2318 = vadd.f32 %v1558, %v2192
    %v2319 = vadd.f32 %v1559, %v2193
    %v2320 = vadd.f32 %v1560, %v2194
    %v2321 = vadd.f32 %v1561, %v2195
    %v2322 = vadd.f32 %v1562, %v2196
    %v2323 = vadd.f32 %v1563, %v2197
    %v2324 = vadd.f32 %v1564, %v2198
    %v2325 = vadd.f32 %v1565, %v2199
    %v2326 = vadd.f32 %v1566, %v2200
    %v2327 = vadd.f32 %v1567, %v2201
    %v2328 = vadd.f32 %v1568, %v2202
    %v2329 = vadd.f32 %v1569, %v2203
    %v2330 = vadd.f32 %v1570, %v2204
    %v2331 = vadd.f32 %v1571, %v2205
    %v2332 = vadd.f32 %v1572, %v2206
    %v2333 = vadd.f32 %v1573, %v2207
    %v2334 = vadd.f32 %v1574, %v2208
    %v2335 = vadd.f32 %v1575, %v2209
    %v2336 = vadd.f32 %v1576, %v2210
    %v2337 = vadd.f32 %v1577, %v2211
    %v2338 = vadd.f32 %v1578, %v2212
    %v2339 = vadd.f32 %v1579, %v2213
    %v2340 = vadd.f32 %v1580, %v2214
    %v2341 = vadd.f32 %v1581, %v2215
    %v2342 = vadd.f32 %v1582, %v2216
    %v2343 = vadd.f32 %v1583, %v2217
    %v2344 = vadd.f32 %v1584, %v2218
    %v2345 = vadd.f32 %v1585, %v2219
    %v2346 = vadd.f32 %v1586, %v2220
    %v2347 = vadd.f32 %v1587, %v2221
    %v2348 = vadd.f32 %v1588, %v2222
    %v2349 = vadd.f32 %v1589, %v2223
    %v2350 = vadd.f32 %v1590, %v2224
    %v2351 = vadd.f32 %v1591, %v2225
    %v2352 = vadd.f32 %v1592, %v2226
    %v2353 = vadd.f32 %v1593, %v2227
    %v2354 = vadd.f32 %v1594, %v2228
    %v2355 = vadd.f32 %v1595, %v2229
    %v2356 = vadd.f32 %v1596, %v2230
    %v2357 = vadd.f32 %v1597, %v2231
    %v2358 = vadd.f32 %v1598, %v2232
    %v2359 = vadd.f32 %v1599, %v2233
    %v2360 = vadd.f32 %v1600, %v2234
    %v2361 = vadd.f32 %v1601, %v2235
    %v2362 = vadd.f32 %v1602, %v2236
    %v2363 = vadd.f32 %v1603, %v2237
    %v2364 = vadd.f32 %v1604, %v2238
    %v2365 = vadd.f32 %v1605, %v2239
    %v2366 = vadd.f32 %v1606, %v2240
    %v2367 = vadd.f32 %v1607, %v2241
    %v2368 = vadd.f32 %v1608, %v2242
    %v2369 = vadd.f32 %v1609, %v2243
    %v2370 = vadd.f32 %v1610, %v2244
    %v2371 = vadd.f32 %v1611, %v2245
    %v2372 = vadd.f32 %v1612, %v2246
    %v2373 = vadd.f32 %v1613, %v2247
    %v2374 = vadd.f32 %v1614, %v2248
    %v2375 = vadd.f32 %v1615, %v2249
    %v2376 = vadd.f32 %v1616, %v2250
    %v2377 = vadd.f32 %v1617, %v2251
    %v2378 = vadd.f32 %v1618, %v2252
    %v2379 = vadd.f32 %v1619, %v2253
    %v2380 = vadd.f32 %v1620, %v2254
    %v2381 = vadd.f32 %v1621, %v2255
    %v2382 = vadd.f32 %v1622, %v2256
    %v2383 = vadd.f32 %v1623, %v2257
    %v2384 = vadd.f32 %v1624, %v2258
    %v2385 = vadd.f32 %v1625, %v2259
    %v2386 = vadd.f32 %v1626, %v2260
    %v2387 = vadd.f32 %v1627, %v2261
    %v2388 = vadd.f32 %v1628, %v2262
    %v2389 = vadd.f32 %v1629, %v2263
    %v2390 = vadd.f32 %v1630, %v2264
    %v2391 = vadd.f32 %v1631, %v2265
    %v2392 = vadd.f32 %v1632, %v2266
    %v2393 = vadd.f32 %v1633, %v2267
    %v2394 = vadd.f32 %v1634, %v2268
    %v2395 = vadd.f32 %v1635, %v2269
    %v2396 = vadd.f32 %v1636, %v2270
    %v2397 = vadd.f32 %v1637, %v2271
    %v2398 = vadd.f32 %v1638, %v2272
    %v2399 = vadd.f32 %v1639, %v2273
    %v2400 = vadd.f32 %v1640, %v2274
    %v2401 = vadd.f32 %v1641, %v2275
    %v2402 = vadd.f32 %v1642, %v2276
    %v2403 = vadd.f32 %v1643, %v2277
    %v2404 = vadd.f32 %v1644, %v2278
    %v2405 = vadd.f32 %v1645, %v2279
    %v2406 = vadd.f32 %v1646, %v2280
    %v2407 = vadd.f32 %v1647, %v2281
    %v2408 = vadd.f32 %v1648, %v2282
    %v2409 = vadd.f32 %v1649, %v2283
    %v2410 = vadd.f32 %v1650, %v2284
    %v2411 = vadd.f32 %v1651, %v2285
    %v2412 = vadd.f32 %v1652, %v2286
    %v2413 = vadd.f32 %v1653, %v2287
    %v2414 = vadd.f32 %v1654, %v2288
    %v2415 = vadd.f32 %v1655, %v2289
    %v2416 = vadd.f32 %v1656, %v2290
    %v2417 = vadd.f32 %v1657, %v2291
    %v2418 = vadd.f32 %v1658, %v2292
    %v2419 = vadd.f32 %v1659, %v2293
    %v2420 = vadd.f32 %v1660, %v2294
    %v2421 = vadd.f32 %v1661, %v2295
    %v2422 = vadd.f32 %v1662, %v2296
    %v2423 = vadd.f32 %v1663, %v2297
    %v2424 = vadd.f32 %v1664, %v2298
    %v2425 = vadd.f32 %v1665, %v2299
    %v2426 = vadd.f32 %v1666, %v2300
    %v2427 = vadd.f32 %v1667, %v2301
    %v2428 = vadd.f32 %v1668, %v2302
    %v2429 = vadd.f32 %v1669, %v2303
    %v2430 = vlaneseq
    %v2431 = vshrl.u32 %v2430, 7
    %v2432 = vsub.s32 0, %v2431
    %v2433 = vrot.slane %v144, %v2432
    %v2434 = vadd.f32 %v2304, %v2433
    %v2435 = vadd.f32 %v2305, %v2433
    %v2436 = vadd.f32 %v2306, %v2433
    %v2437 = vadd.f32 %v2307, %v2433
    %v2438 = vadd.f32 %v2308, %v2433
    %v2439 = vadd.f32 %v2309, %v2433
    %v2440 = vadd.f32 %v2310, %v2433
    %v2441 = vadd.f32 %v2311, %v2433
    %v2442 = vadd.f32 %v2312, %v2433
    %v2443 = vadd.f32 %v2313, %v2433
    %v2444 = vadd.f32 %v2314, %v2433
    %v2445 = vadd.f32 %v2315, %v2433
    %v2446 = vadd.f32 %v2316, %v2433
    %v2447 = vadd.f32 %v2317, %v2433
    %v2448 = vadd.f32 %v2318, %v2433
    %v2449 = vadd.f32 %v2319, %v2433
    %v2450 = vadd.f32 %v2320, %v2433
    %v2451 = vadd.f32 %v2321, %v2433
    %v2452 = vadd.f32 %v2322, %v2433
    %v2453 = vadd.f32 %v2323, %v2433
    %v2454 = vadd.f32 %v2324, %v2433
    %v2455 = vadd.f32 %v2325, %v2433
    %v2456 = vadd.f32 %v2326, %v2433
    %v2457 = vadd.f32 %v2327, %v2433
    %v2458 = vadd.f32 %v2328, %v2433
    %v2459 = vadd.f32 %v2329, %v2433
    %v2460 = vadd.f32 %v2330, %v2433
    %v2461 = vadd.f32 %v2331, %v2433
    %v2462 = vadd.f32 %v2332, %v2433
    %v2463 = vadd.f32 %v2333, %v2433
    %v2464 = vadd.f32 %v2334, %v2433
    %v2465 = vadd.f32 %v2335, %v2433
    %v2466 = vadd.f32 %v2336, %v2433
    %v2467 = vadd.f32 %v2337, %v2433
    %v2468 = vadd.f32 %v2338, %v2433
    %v2469 = vadd.f32 %v2339, %v2433
    %v2470 = vadd.f32 %v2340, %v2433
    %v2471 = vadd.f32 %v2341, %v2433
    %v2472 = vadd.f32 %v2342, %v2433
    %v2473 = vadd.f32 %v2343, %v2433
    %v2474 = vadd.f32 %v2344, %v2433
    %v2475 = vadd.f32 %v2345, %v2433
    %v2476 = vadd.f32 %v2346, %v2433
    %v2477 = vadd.f32 %v2347, %v2433
    %v2478 = vadd.f32 %v2348, %v2433
    %v2479 = vadd.f32 %v2349, %v2433
    %v2480 = vadd.f32 %v2350, %v2433
    %v2481 = vadd.f32 %v2351, %v2433
    %v2482 = vadd.f32 %v2352, %v2433
    %v2483 = vadd.f32 %v2353, %v2433
    %v2484 = vadd.f32 %v2354, %v2433
    %v2485 = vadd.f32 %v2355, %v2433
    %v2486 = vadd.f32 %v2356, %v2433
    %v2487 = vadd.f32 %v2357, %v2433
    %v2488 = vadd.f32 %v2358, %v2433
    %v2489 = vadd.f32 %v2359, %v2433
    %v2490 = vadd.f32 %v2360, %v2433
    %v2491 = vadd.f32 %v2361, %v2433
    %v2492 = vadd.f32 %v2362, %v2433
    %v2493 = vadd.f32 %v2363, %v2433
    %v2494 = vadd.f32 %v2364, %v2433
    %v2495 = vadd.f32 %v2365, %v2433
    %v2496 = vadd.f32 %v2366, %v2433
    %v2497 = vadd.f32 %v2367, %v2433
    %v2498 = vadd.f32 %v2368, %v2433
    %v2499 = vadd.f32 %v2369, %v2433
    %v2500 = vadd.f32 %v2370, %v2433
    %v2501 = vadd.f32 %v2371, %v2433
    %v2502 = vadd.f32 %v2372, %v2433
    %v2503 = vadd.f32 %v2373, %v2433
    %v2504 = vadd.f32 %v2374, %v2433
    %v2505 = vadd.f32 %v2375, %v2433
    %v2506 = vadd.f32 %v2376, %v2433
    %v2507 = vadd.f32 %v2377, %v2433
    %v2508 = vadd.f32 %v2378, %v2433
    %v2509 = vadd.f32 %v2379, %v2433
    %v2510 = vadd.f32 %v2380, %v2433
    %v2511 = vadd.f32 %v2381, %v2433
    %v2512 = vadd.f32 %v2382, %v2433
    %v2513 = vadd.f32 %v2383, %v2433
    %v2514 = vadd.f32 %v2384, %v2433
    %v2515 = vadd.f32 %v2385, %v2433
    %v2516 = vadd.f32 %v2386, %v2433
    %v2517 = vadd.f32 %v2387, %v2433
    %v2518 = vadd.f32 %v2388, %v2433
    %v2519 = vadd.f32 %v2389, %v2433
    %v2520 = vadd.f32 %v2390, %v2433
    %v2521 = vadd.f32 %v2391, %v2433
    %v2522 = vadd.f32 %v2392, %v2433
    %v2523 = vadd.f32 %v2393, %v2433
    %v2524 = vadd.f32 %v2394, %v2433
    %v2525 = vadd.f32 %v2395, %v2433
    %v2526 = vadd.f32 %v2396, %v2433
    %v2527 = vadd.f32 %v2397, %v2433
    %v2528 = vadd.f32 %v2398, %v2433
    %v2529 = vadd.f32 %v2399, %v2433
    %v2530 = vadd.f32 %v2400, %v2433
    %v2531 = vadd.f32 %v2401, %v2433
    %v2532 = vadd.f32 %v2402, %v2433
    %v2533 = vadd.f32 %v2403, %v2433
    %v2534 = vadd.f32 %v2404, %v2433
    %v2535 = vadd.f32 %v2405, %v2433
    %v2536 = vadd.f32 %v2406, %v2433
    %v2537 = vadd.f32 %v2407, %v2433
    %v2538 = vadd.f32 %v2408, %v2433
    %v2539 = vadd.f32 %v2409, %v2433
    %v2540 = vadd.f32 %v2410, %v2433
    %v2541 = vadd.f32 %v2411, %v2433
    %v2542 = vadd.f32 %v2412, %v2433
    %v2543 = vadd.f32 %v2413, %v2433
    %v2544 = vadd.f32 %v2414, %v2433
    %v2545 = vadd.f32 %v2415, %v2433
    %v2546 = vadd.f32 %v2416, %v2433
    %v2547 = vadd.f32 %v2417, %v2433
    %v2548 = vadd.f32 %v2418, %v2433
    %v2549 = vadd.f32 %v2419, %v2433
    %v2550 = vadd.f32 %v2420, %v2433
    %v2551 = vadd.f32 %v2421, %v2433
    %v2552 = vadd.f32 %v2422, %v2433
    %v2553 = vadd.f32 %v2423, %v2433
    %v2554 = vadd.f32 %v2424, %v2433
    %v2555 = vadd.f32 %v2425, %v2433
    %v2556 = vadd.f32 %v2426, %v2433
    %v2557 = vadd.f32 %v2427, %v2433
    %v2558 = vadd.f32 %v2428, %v2433
    %v2559 = vadd.f32 %v2429, %v2433
    %v2560 = vpack.c.bf16 %v2435, %v2434
    %v2561 = vpack.c.bf16 %v2437, %v2436
    %v2562 = vpack.c.bf16 %v2439, %v2438
    %v2563 = vpack.c.bf16 %v2441, %v2440
    %v2564 = vpack.c.bf16 %v2443, %v2442
    %v2565 = vpack.c.bf16 %v2445, %v2444
    %v2566 = vpack.c.bf16 %v2447, %v2446
    %v2567 = vpack.c.bf16 %v2449, %v2448
    %v2568 = vpack.c.bf16 %v2451, %v2450
    %v2569 = vpack.c.bf16 %v2453, %v2452
    %v2570 = vpack.c.bf16 %v2455, %v2454
    %v2571 = vpack.c.bf16 %v2457, %v2456
    %v2572 = vpack.c.bf16 %v2459, %v2458
    %v2573 = vpack.c.bf16 %v2461, %v2460
    %v2574 = vpack.c.bf16 %v2463, %v2462
    %v2575 = vpack.c.bf16 %v2465, %v2464
    %v2576 = vpack.c.bf16 %v2467, %v2466
    %v2577 = vpack.c.bf16 %v2469, %v2468
    %v2578 = vpack.c.bf16 %v2471, %v2470
    %v2579 = vpack.c.bf16 %v2473, %v2472
    %v2580 = vpack.c.bf16 %v2475, %v2474
    %v2581 = vpack.c.bf16 %v2477, %v2476
    %v2582 = vpack.c.bf16 %v2479, %v2478
    %v2583 = vpack.c.bf16 %v2481, %v2480
    %v2584 = vpack.c.bf16 %v2483, %v2482
    %v2585 = vpack.c.bf16 %v2485, %v2484
    %v2586 = vpack.c.bf16 %v2487, %v2486
    %v2587 = vpack.c.bf16 %v2489, %v2488
    %v2588 = vpack.c.bf16 %v2491, %v2490
    %v2589 = vpack.c.bf16 %v2493, %v2492
    %v2590 = vpack.c.bf16 %v2495, %v2494
    %v2591 = vpack.c.bf16 %v2497, %v2496
    %v2592 = vpack.c.bf16 %v2499, %v2498
    %v2593 = vpack.c.bf16 %v2501, %v2500
    %v2594 = vpack.c.bf16 %v2503, %v2502
    %v2595 = vpack.c.bf16 %v2505, %v2504
    %v2596 = vpack.c.bf16 %v2507, %v2506
    %v2597 = vpack.c.bf16 %v2509, %v2508
    %v2598 = vpack.c.bf16 %v2511, %v2510
    %v2599 = vpack.c.bf16 %v2513, %v2512
    %v2600 = vpack.c.bf16 %v2515, %v2514
    %v2601 = vpack.c.bf16 %v2517, %v2516
    %v2602 = vpack.c.bf16 %v2519, %v2518
    %v2603 = vpack.c.bf16 %v2521, %v2520
    %v2604 = vpack.c.bf16 %v2523, %v2522
    %v2605 = vpack.c.bf16 %v2525, %v2524
    %v2606 = vpack.c.bf16 %v2527, %v2526
    %v2607 = vpack.c.bf16 %v2529, %v2528
    %v2608 = vpack.c.bf16 %v2531, %v2530
    %v2609 = vpack.c.bf16 %v2533, %v2532
    %v2610 = vpack.c.bf16 %v2535, %v2534
    %v2611 = vpack.c.bf16 %v2537, %v2536
    %v2612 = vpack.c.bf16 %v2539, %v2538
    %v2613 = vpack.c.bf16 %v2541, %v2540
    %v2614 = vpack.c.bf16 %v2543, %v2542
    %v2615 = vpack.c.bf16 %v2545, %v2544
    %v2616 = vpack.c.bf16 %v2547, %v2546
    %v2617 = vpack.c.bf16 %v2549, %v2548
    %v2618 = vpack.c.bf16 %v2551, %v2550
    %v2619 = vpack.c.bf16 %v2553, %v2552
    %v2620 = vpack.c.bf16 %v2555, %v2554
    %v2621 = vpack.c.bf16 %v2557, %v2556
    %v2622 = vpack.c.bf16 %v2559, %v2558
    %v2623 = vmul.bf16 %v2560, 1009007652
    %v2624 = vmul.bf16 %v2561, 1009007652
    %v2625 = vmul.bf16 %v2562, 1009007652
    %v2626 = vmul.bf16 %v2563, 1009007652
    %v2627 = vmul.bf16 %v2564, 1009007652
    %v2628 = vmul.bf16 %v2565, 1009007652
    %v2629 = vmul.bf16 %v2566, 1009007652
    %v2630 = vmul.bf16 %v2567, 1009007652
    %v2631 = vmul.bf16 %v2568, 1009007652
    %v2632 = vmul.bf16 %v2569, 1009007652
    %v2633 = vmul.bf16 %v2570, 1009007652
    %v2634 = vmul.bf16 %v2571, 1009007652
    %v2635 = vmul.bf16 %v2572, 1009007652
    %v2636 = vmul.bf16 %v2573, 1009007652
    %v2637 = vmul.bf16 %v2574, 1009007652
    %v2638 = vmul.bf16 %v2575, 1009007652
    %v2639 = vmul.bf16 %v2576, 1009007652
    %v2640 = vmul.bf16 %v2577, 1009007652
    %v2641 = vmul.bf16 %v2578, 1009007652
    %v2642 = vmul.bf16 %v2579, 1009007652
    %v2643 = vmul.bf16 %v2580, 1009007652
    %v2644 = vmul.bf16 %v2581, 1009007652
    %v2645 = vmul.bf16 %v2582, 1009007652
    %v2646 = vmul.bf16 %v2583, 1009007652
    %v2647 = vmul.bf16 %v2584, 1009007652
    %v2648 = vmul.bf16 %v2585, 1009007652
    %v2649 = vmul.bf16 %v2586, 1009007652
    %v2650 = vmul.bf16 %v2587, 1009007652
    %v2651 = vmul.bf16 %v2588, 1009007652
    %v2652 = vmul.bf16 %v2589, 1009007652
    %v2653 = vmul.bf16 %v2590, 1009007652
    %v2654 = vmul.bf16 %v2591, 1009007652
    %v2655 = vmul.bf16 %v2592, 1009007652
    %v2656 = vmul.bf16 %v2593, 1009007652
    %v2657 = vmul.bf16 %v2594, 1009007652
    %v2658 = vmul.bf16 %v2595, 1009007652
    %v2659 = vmul.bf16 %v2596, 1009007652
    %v2660 = vmul.bf16 %v2597, 1009007652
    %v2661 = vmul.bf16 %v2598, 1009007652
    %v2662 = vmul.bf16 %v2599, 1009007652
    %v2663 = vmul.bf16 %v2600, 1009007652
    %v2664 = vmul.bf16 %v2601, 1009007652
    %v2665 = vmul.bf16 %v2602, 1009007652
    %v2666 = vmul.bf16 %v2603, 1009007652
    %v2667 = vmul.bf16 %v2604, 1009007652
    %v2668 = vmul.bf16 %v2605, 1009007652
    %v2669 = vmul.bf16 %v2606, 1009007652
    %v2670 = vmul.bf16 %v2607, 1009007652
    %v2671 = vmul.bf16 %v2608, 1009007652
    %v2672 = vmul.bf16 %v2609, 1009007652
    %v2673 = vmul.bf16 %v2610, 1009007652
    %v2674 = vmul.bf16 %v2611, 1009007652
    %v2675 = vmul.bf16 %v2612, 1009007652
    %v2676 = vmul.bf16 %v2613, 1009007652
    %v2677 = vmul.bf16 %v2614, 1009007652
    %v2678 = vmul.bf16 %v2615, 1009007652
    %v2679 = vmul.bf16 %v2616, 1009007652
    %v2680 = vmul.bf16 %v2617, 1009007652
    %v2681 = vmul.bf16 %v2618, 1009007652
    %v2682 = vmul.bf16 %v2619, 1009007652
    %v2683 = vmul.bf16 %v2620, 1009007652
    %v2684 = vmul.bf16 %v2621, 1009007652
    %v2685 = vmul.bf16 %v2622, 1009007652
    %v2686 = vmax.bf16 %v2560, %v2623
    %v2687 = vmax.bf16 %v2561, %v2624
    %v2688 = vmax.bf16 %v2562, %v2625
    %v2689 = vmax.bf16 %v2563, %v2626
    %v2690 = vmax.bf16 %v2564, %v2627
    %v2691 = vmax.bf16 %v2565, %v2628
    %v2692 = vmax.bf16 %v2566, %v2629
    %v2693 = vmax.bf16 %v2567, %v2630
    %v2694 = vmax.bf16 %v2568, %v2631
    %v2695 = vmax.bf16 %v2569, %v2632
    %v2696 = vmax.bf16 %v2570, %v2633
    %v2697 = vmax.bf16 %v2571, %v2634
    %v2698 = vmax.bf16 %v2572, %v2635
    %v2699 = vmax.bf16 %v2573, %v2636
    %v2700 = vmax.bf16 %v2574, %v2637
    %v2701 = vmax.bf16 %v2575, %v2638
    %v2702 = vmax.bf16 %v2576, %v2639
    %v2703 = vmax.bf16 %v2577, %v2640
    %v2704 = vmax.bf16 %v2578, %v2641
    %v2705 = vmax.bf16 %v2579, %v2642
    %v2706 = vmax.bf16 %v2580, %v2643
    %v2707 = vmax.bf16 %v2581, %v2644
    %v2708 = vmax.bf16 %v2582, %v2645
    %v2709 = vmax.bf16 %v2583, %v2646
    %v2710 = vmax.bf16 %v2584, %v2647
    %v2711 = vmax.bf16 %v2585, %v2648
    %v2712 = vmax.bf16 %v2586, %v2649
    %v2713 = vmax.bf16 %v2587, %v2650
    %v2714 = vmax.bf16 %v2588, %v2651
    %v2715 = vmax.bf16 %v2589, %v2652
    %v2716 = vmax.bf16 %v2590, %v2653
    %v2717 = vmax.bf16 %v2591, %v2654
    %v2718 = vmax.bf16 %v2592, %v2655
    %v2719 = vmax.bf16 %v2593, %v2656
    %v2720 = vmax.bf16 %v2594, %v2657
    %v2721 = vmax.bf16 %v2595, %v2658
    %v2722 = vmax.bf16 %v2596, %v2659
    %v2723 = vmax.bf16 %v2597, %v2660
    %v2724 = vmax.bf16 %v2598, %v2661
    %v2725 = vmax.bf16 %v2599, %v2662
    %v2726 = vmax.bf16 %v2600, %v2663
    %v2727 = vmax.bf16 %v2601, %v2664
    %v2728 = vmax.bf16 %v2602, %v2665
    %v2729 = vmax.bf16 %v2603, %v2666
    %v2730 = vmax.bf16 %v2604, %v2667
    %v2731 = vmax.bf16 %v2605, %v2668
    %v2732 = vmax.bf16 %v2606, %v2669
    %v2733 = vmax.bf16 %v2607, %v2670
    %v2734 = vmax.bf16 %v2608, %v2671
    %v2735 = vmax.bf16 %v2609, %v2672
    %v2736 = vmax.bf16 %v2610, %v2673
    %v2737 = vmax.bf16 %v2611, %v2674
    %v2738 = vmax.bf16 %v2612, %v2675
    %v2739 = vmax.bf16 %v2613, %v2676
    %v2740 = vmax.bf16 %v2614, %v2677
    %v2741 = vmax.bf16 %v2615, %v2678
    %v2742 = vmax.bf16 %v2616, %v2679
    %v2743 = vmax.bf16 %v2617, %v2680
    %v2744 = vmax.bf16 %v2618, %v2681
    %v2745 = vmax.bf16 %v2619, %v2682
    %v2746 = vmax.bf16 %v2620, %v2683
    %v2747 = vmax.bf16 %v2621, %v2684
    %v2748 = vmax.bf16 %v2622, %v2685
    %v2749 = vld [vmem:[%s2] sm:$0xf]
    %v2750 = vld [vmem:[%s2 + $0x4] sm:$0xf]
    %v2751 = vld [vmem:[%s2 + $0x8] sm:$0xf]
    %v2752 = vld [vmem:[%s2 + $0xc] sm:$0xf]
    %v2753 = vld [vmem:[%s2 + $0x10] sm:$0xf]
    %v2754 = vld [vmem:[%s2 + $0x14] sm:$0xf]
    %v2755 = vld [vmem:[%s2 + $0x18] sm:$0xf]
    %v2756 = vld [vmem:[%s2 + $0x1c] sm:$0xf]
    %v2757 = vld [vmem:[%s2 + $0x20] sm:$0xf]
    %v2758 = vld [vmem:[%s2 + $0x24] sm:$0xf]
    %v2759 = vld [vmem:[%s2 + $0x28] sm:$0xf]
    %v2760 = vld [vmem:[%s2 + $0x2c] sm:$0xf]
    %v2761 = vld [vmem:[%s2 + $0x30] sm:$0xf]
    %v2762 = vld [vmem:[%s2 + $0x34] sm:$0xf]
    %v2763 = vld [vmem:[%s2 + $0x38] sm:$0xf]
    %v2764 = vld [vmem:[%s2 + $0x3c] sm:$0xf]
    %v2765 = vlaneseq
    %v2766 = vshrl.u32 %v2765, 7
    %v2767 = vsub.s32 0, %v2766
    %v2768 = vrot.slane %v145, %v2767
    %v2785 = vunpack.c.l.b16 %v2749
    %v2786 = vunpack.c.l.b16 %v2750
    %v2787 = vunpack.c.l.b16 %v2751
    %v2788 = vunpack.c.l.b16 %v2752
    %v2789 = vunpack.c.l.b16 %v2753
    %v2790 = vunpack.c.l.b16 %v2754
    %v2791 = vunpack.c.l.b16 %v2755
    %v2792 = vunpack.c.l.b16 %v2756
    %v2793 = vunpack.c.l.b16 %v2757
    %v2794 = vunpack.c.l.b16 %v2758
    %v2795 = vunpack.c.l.b16 %v2759
    %v2796 = vunpack.c.l.b16 %v2760
    %v2797 = vunpack.c.l.b16 %v2761
    %v2798 = vunpack.c.l.b16 %v2762
    %v2799 = vunpack.c.l.b16 %v2763
    %v2800 = vunpack.c.l.b16 %v2764
    %v2801 = vpack.c.b16 %v2786, %v2785
    %v2802 = vpack.c.b16 %v2788, %v2787
    %v2803 = vpack.c.b16 %v2790, %v2789
    %v2804 = vpack.c.b16 %v2792, %v2791
    %v2805 = vpack.c.b16 %v2794, %v2793
    %v2806 = vpack.c.b16 %v2796, %v2795
    %v2807 = vpack.c.b16 %v2798, %v2797
    %v2808 = vpack.c.b16 %v2800, %v2799
    %2817 = vmatprep.subr.bf16.mxu0 0
    %2818 = vmatpush1.bf16.msra.mxu0 %v2808
    %2819 = vmatprep.subr.bf16.mxu0 0
    %2820 = vmatpush1.bf16.msra.mxu0 %v2807
    %2821 = vmatprep.subr.bf16.mxu0 0
    %2822 = vmatpush1.bf16.msra.mxu0 %v2806
    %2823 = vmatprep.subr.bf16.mxu0 0
    %2824 = vmatpush1.bf16.msra.mxu0 %v2805
    %2825 = vmatprep.subr.bf16.mxu0 0
    %2826 = vmatpush1.bf16.msra.mxu0 %v2804
    %2827 = vmatprep.subr.bf16.mxu0 0
    %2828 = vmatpush1.bf16.msra.mxu0 %v2803
    %2829 = vmatprep.subr.bf16.mxu0 0
    %2830 = vmatpush1.bf16.msra.mxu0 %v2802
    %2831 = vmatprep.subr.bf16.mxu0 0
    %2832 = vmatpush1.bf16.msra.mxu0 %v2801
    %2833 = vmatprep.subr.bf16.mxu0 0
    %2834 = vmatpush2.bf16.msra.mxu0 0
    %2835 = vmatprep.subr.bf16.mxu0 0
    %2836 = vmatpush2.bf16.msra.mxu0 0
    %2837 = vmatprep.subr.bf16.mxu0 0
    %2838 = vmatpush2.bf16.msra.mxu0 0
    %2839 = vmatprep.subr.bf16.mxu0 0
    %2840 = vmatpush2.bf16.msra.mxu0 0
    %2841 = vmatprep.subr.bf16.mxu0 0
    %2842 = vmatpush2.bf16.msra.mxu0 0
    %2843 = vmatprep.subr.bf16.mxu0 0
    %2844 = vmatpush2.bf16.msra.mxu0 0
    %2845 = vmatprep.subr.bf16.mxu0 0
    %2846 = vmatpush2.bf16.msra.mxu0 0
    %2847 = vmatprep.subr.bf16.mxu0 0
    %2848 = vmatpush2.bf16.msra.mxu0 0
    %2849 = vmatprep.mubr.bf16.mxu0 0
    %2850 = vmatmul.mubr.bf16.gmra.mxu0 %v2686
    %v2851 = vpop.f32.mrf.mxu0
    %v2852 = vadd.f32 %v2768, %v2851
    %v2853 = vpop.f32.mrf.mxu0
    %v2854 = vpop.f32.mrf.mxu0
    %v2855 = vadd.f32 %v2768, %v2854
    %v2856 = vpop.f32.mrf.mxu0
    %2857 = vmatprep.mubr.bf16.mxu0 0
    %2858 = vmatmul.mubr.bf16.gmra.mxu0 %v2687
    %v2859 = vpop.f32.mrf.mxu0
    %v2860 = vadd.f32 %v2768, %v2859
    %v2861 = vpop.f32.mrf.mxu0
    %v2862 = vpop.f32.mrf.mxu0
    %v2863 = vadd.f32 %v2768, %v2862
    %v2864 = vpop.f32.mrf.mxu0
    %2865 = vmatprep.mubr.bf16.mxu0 0
    %2866 = vmatmul.mubr.bf16.gmra.mxu0 %v2688
    %v2867 = vpop.f32.mrf.mxu0
    %v2868 = vadd.f32 %v2768, %v2867
    %v2869 = vpop.f32.mrf.mxu0
    %v2870 = vpop.f32.mrf.mxu0
    %v2871 = vadd.f32 %v2768, %v2870
    %v2872 = vpop.f32.mrf.mxu0
    %2873 = vmatprep.mubr.bf16.mxu0 0
    %2874 = vmatmul.mubr.bf16.gmra.mxu0 %v2689
    %v2875 = vpop.f32.mrf.mxu0
    %v2876 = vadd.f32 %v2768, %v2875
    %v2877 = vpop.f32.mrf.mxu0
    %v2878 = vpop.f32.mrf.mxu0
    %v2879 = vadd.f32 %v2768, %v2878
    %v2880 = vpop.f32.mrf.mxu0
    %2881 = vmatprep.mubr.bf16.mxu0 0
    %2882 = vmatmul.mubr.bf16.gmra.mxu0 %v2690
    %v2883 = vpop.f32.mrf.mxu0
    %v2884 = vadd.f32 %v2768, %v2883
    %v2885 = vpop.f32.mrf.mxu0
    %v2886 = vpop.f32.mrf.mxu0
    %v2887 = vadd.f32 %v2768, %v2886
    %v2888 = vpop.f32.mrf.mxu0
    %2889 = vmatprep.mubr.bf16.mxu0 0
    %2890 = vmatmul.mubr.bf16.gmra.mxu0 %v2691
    %v2891 = vpop.f32.mrf.mxu0
    %v2892 = vadd.f32 %v2768, %v2891
    %v2893 = vpop.f32.mrf.mxu0
    %v2894 = vpop.f32.mrf.mxu0
    %v2895 = vadd.f32 %v2768, %v2894
    %v2896 = vpop.f32.mrf.mxu0
    %2897 = vmatprep.mubr.bf16.mxu0 0
    %2898 = vmatmul.mubr.bf16.gmra.mxu0 %v2692
    %v2899 = vpop.f32.mrf.mxu0
    %v2900 = vadd.f32 %v2768, %v2899
    %v2901 = vpop.f32.mrf.mxu0
    %v2902 = vpop.f32.mrf.mxu0
    %v2903 = vadd.f32 %v2768, %v2902
    %v2904 = vpop.f32.mrf.mxu0
    %2905 = vmatprep.mubr.bf16.mxu0 0
    %2906 = vmatmul.mubr.bf16.gmra.mxu0 %v2693
    %v2907 = vpop.f32.mrf.mxu0
    %v2908 = vadd.f32 %v2768, %v2907
    %v2909 = vpop.f32.mrf.mxu0
    %v2910 = vpop.f32.mrf.mxu0
    %v2911 = vadd.f32 %v2768, %v2910
    %v2912 = vpop.f32.mrf.mxu0
    %2913 = vmatprep.mubr.bf16.mxu0 0
    %2914 = vmatmul.mubr.bf16.gmra.mxu0 %v2694
    %v2915 = vpop.f32.mrf.mxu0
    %v2916 = vadd.f32 %v2768, %v2915
    %v2917 = vpop.f32.mrf.mxu0
    %v2918 = vpop.f32.mrf.mxu0
    %v2919 = vadd.f32 %v2768, %v2918
    %v2920 = vpop.f32.mrf.mxu0
    %2921 = vmatprep.mubr.bf16.mxu0 0
    %2922 = vmatmul.mubr.bf16.gmra.mxu0 %v2695
    %v2923 = vpop.f32.mrf.mxu0
    %v2924 = vadd.f32 %v2768, %v2923
    %v2925 = vpop.f32.mrf.mxu0
    %v2926 = vpop.f32.mrf.mxu0
    %v2927 = vadd.f32 %v2768, %v2926
    %v2928 = vpop.f32.mrf.mxu0
    %2929 = vmatprep.mubr.bf16.mxu0 0
    %2930 = vmatmul.mubr.bf16.gmra.mxu0 %v2696
    %v2931 = vpop.f32.mrf.mxu0
    %v2932 = vadd.f32 %v2768, %v2931
    %v2933 = vpop.f32.mrf.mxu0
    %v2934 = vpop.f32.mrf.mxu0
    %v2935 = vadd.f32 %v2768, %v2934
    %v2936 = vpop.f32.mrf.mxu0
    %2937 = vmatprep.mubr.bf16.mxu0 0
    %2938 = vmatmul.mubr.bf16.gmra.mxu0 %v2697
    %v2939 = vpop.f32.mrf.mxu0
    %v2940 = vadd.f32 %v2768, %v2939
    %v2941 = vpop.f32.mrf.mxu0
    %v2942 = vpop.f32.mrf.mxu0
    %v2943 = vadd.f32 %v2768, %v2942
    %v2944 = vpop.f32.mrf.mxu0
    %2945 = vmatprep.mubr.bf16.mxu0 0
    %2946 = vmatmul.mubr.bf16.gmra.mxu0 %v2698
    %v2947 = vpop.f32.mrf.mxu0
    %v2948 = vadd.f32 %v2768, %v2947
    %v2949 = vpop.f32.mrf.mxu0
    %v2950 = vpop.f32.mrf.mxu0
    %v2951 = vadd.f32 %v2768, %v2950
    %v2952 = vpop.f32.mrf.mxu0
    %2953 = vmatprep.mubr.bf16.mxu0 0
    %2954 = vmatmul.mubr.bf16.gmra.mxu0 %v2699
    %v2955 = vpop.f32.mrf.mxu0
    %v2956 = vadd.f32 %v2768, %v2955
    %v2957 = vpop.f32.mrf.mxu0
    %v2958 = vpop.f32.mrf.mxu0
    %v2959 = vadd.f32 %v2768, %v2958
    %v2960 = vpop.f32.mrf.mxu0
    %2961 = vmatprep.mubr.bf16.mxu0 0
    %2962 = vmatmul.mubr.bf16.gmra.mxu0 %v2700
    %v2963 = vpop.f32.mrf.mxu0
    %v2964 = vadd.f32 %v2768, %v2963
    %v2965 = vpop.f32.mrf.mxu0
    %v2966 = vpop.f32.mrf.mxu0
    %v2967 = vadd.f32 %v2768, %v2966
    %v2968 = vpop.f32.mrf.mxu0
    %2969 = vmatprep.mubr.bf16.mxu0 0
    %2970 = vmatmul.mubr.bf16.gmra.mxu0 %v2701
    %v2971 = vpop.f32.mrf.mxu0
    %v2972 = vadd.f32 %v2768, %v2971
    %v2973 = vpop.f32.mrf.mxu0
    %v2974 = vpop.f32.mrf.mxu0
    %v2975 = vadd.f32 %v2768, %v2974
    %v2976 = vpop.f32.mrf.mxu0
    %2977 = vmatprep.mubr.bf16.mxu0 0
    %2978 = vmatmul.mubr.bf16.gmra.mxu0 %v2702
    %v2979 = vpop.f32.mrf.mxu0
    %v2980 = vadd.f32 %v2768, %v2979
    %v2981 = vpop.f32.mrf.mxu0
    %v2982 = vpop.f32.mrf.mxu0
    %v2983 = vadd.f32 %v2768, %v2982
    %v2984 = vpop.f32.mrf.mxu0
    %2985 = vmatprep.mubr.bf16.mxu0 0
    %2986 = vmatmul.mubr.bf16.gmra.mxu0 %v2703
    %v2987 = vpop.f32.mrf.mxu0
    %v2988 = vadd.f32 %v2768, %v2987
    %v2989 = vpop.f32.mrf.mxu0
    %v2990 = vpop.f32.mrf.mxu0
    %v2991 = vadd.f32 %v2768, %v2990
    %v2992 = vpop.f32.mrf.mxu0
    %2993 = vmatprep.mubr.bf16.mxu0 0
    %2994 = vmatmul.mubr.bf16.gmra.mxu0 %v2704
    %v2995 = vpop.f32.mrf.mxu0
    %v2996 = vadd.f32 %v2768, %v2995
    %v2997 = vpop.f32.mrf.mxu0
    %v2998 = vpop.f32.mrf.mxu0
    %v2999 = vadd.f32 %v2768, %v2998
    %v3000 = vpop.f32.mrf.mxu0
    %3001 = vmatprep.mubr.bf16.mxu0 0
    %3002 = vmatmul.mubr.bf16.gmra.mxu0 %v2705
    %v3003 = vpop.f32.mrf.mxu0
    %v3004 = vadd.f32 %v2768, %v3003
    %v3005 = vpop.f32.mrf.mxu0
    %v3006 = vpop.f32.mrf.mxu0
    %v3007 = vadd.f32 %v2768, %v3006
    %v3008 = vpop.f32.mrf.mxu0
    %3009 = vmatprep.mubr.bf16.mxu0 0
    %3010 = vmatmul.mubr.bf16.gmra.mxu0 %v2706
    %v3011 = vpop.f32.mrf.mxu0
    %v3012 = vadd.f32 %v2768, %v3011
    %v3013 = vpop.f32.mrf.mxu0
    %v3014 = vpop.f32.mrf.mxu0
    %v3015 = vadd.f32 %v2768, %v3014
    %v3016 = vpop.f32.mrf.mxu0
    %3017 = vmatprep.mubr.bf16.mxu0 0
    %3018 = vmatmul.mubr.bf16.gmra.mxu0 %v2707
    %v3019 = vpop.f32.mrf.mxu0
    %v3020 = vadd.f32 %v2768, %v3019
    %v3021 = vpop.f32.mrf.mxu0
    %v3022 = vpop.f32.mrf.mxu0
    %v3023 = vadd.f32 %v2768, %v3022
    %v3024 = vpop.f32.mrf.mxu0
    %3025 = vmatprep.mubr.bf16.mxu0 0
    %3026 = vmatmul.mubr.bf16.gmra.mxu0 %v2708
    %v3027 = vpop.f32.mrf.mxu0
    %v3028 = vadd.f32 %v2768, %v3027
    %v3029 = vpop.f32.mrf.mxu0
    %v3030 = vpop.f32.mrf.mxu0
    %v3031 = vadd.f32 %v2768, %v3030
    %v3032 = vpop.f32.mrf.mxu0
    %3033 = vmatprep.mubr.bf16.mxu0 0
    %3034 = vmatmul.mubr.bf16.gmra.mxu0 %v2709
    %v3035 = vpop.f32.mrf.mxu0
    %v3036 = vadd.f32 %v2768, %v3035
    %v3037 = vpop.f32.mrf.mxu0
    %v3038 = vpop.f32.mrf.mxu0
    %v3039 = vadd.f32 %v2768, %v3038
    %v3040 = vpop.f32.mrf.mxu0
    %3041 = vmatprep.mubr.bf16.mxu0 0
    %3042 = vmatmul.mubr.bf16.gmra.mxu0 %v2710
    %v3043 = vpop.f32.mrf.mxu0
    %v3044 = vadd.f32 %v2768, %v3043
    %v3045 = vpop.f32.mrf.mxu0
    %v3046 = vpop.f32.mrf.mxu0
    %v3047 = vadd.f32 %v2768, %v3046
    %v3048 = vpop.f32.mrf.mxu0
    %3049 = vmatprep.mubr.bf16.mxu0 0
    %3050 = vmatmul.mubr.bf16.gmra.mxu0 %v2711
    %v3051 = vpop.f32.mrf.mxu0
    %v3052 = vadd.f32 %v2768, %v3051
    %v3053 = vpop.f32.mrf.mxu0
    %v3054 = vpop.f32.mrf.mxu0
    %v3055 = vadd.f32 %v2768, %v3054
    %v3056 = vpop.f32.mrf.mxu0
    %3057 = vmatprep.mubr.bf16.mxu0 0
    %3058 = vmatmul.mubr.bf16.gmra.mxu0 %v2712
    %v3059 = vpop.f32.mrf.mxu0
    %v3060 = vadd.f32 %v2768, %v3059
    %v3061 = vpop.f32.mrf.mxu0
    %v3062 = vpop.f32.mrf.mxu0
    %v3063 = vadd.f32 %v2768, %v3062
    %v3064 = vpop.f32.mrf.mxu0
    %3065 = vmatprep.mubr.bf16.mxu0 0
    %3066 = vmatmul.mubr.bf16.gmra.mxu0 %v2713
    %v3067 = vpop.f32.mrf.mxu0
    %v3068 = vadd.f32 %v2768, %v3067
    %v3069 = vpop.f32.mrf.mxu0
    %v3070 = vpop.f32.mrf.mxu0
    %v3071 = vadd.f32 %v2768, %v3070
    %v3072 = vpop.f32.mrf.mxu0
    %3073 = vmatprep.mubr.bf16.mxu0 0
    %3074 = vmatmul.mubr.bf16.gmra.mxu0 %v2714
    %v3075 = vpop.f32.mrf.mxu0
    %v3076 = vadd.f32 %v2768, %v3075
    %v3077 = vpop.f32.mrf.mxu0
    %v3078 = vpop.f32.mrf.mxu0
    %v3079 = vadd.f32 %v2768, %v3078
    %v3080 = vpop.f32.mrf.mxu0
    %3081 = vmatprep.mubr.bf16.mxu0 0
    %3082 = vmatmul.mubr.bf16.gmra.mxu0 %v2715
    %v3083 = vpop.f32.mrf.mxu0
    %v3084 = vadd.f32 %v2768, %v3083
    %v3085 = vpop.f32.mrf.mxu0
    %v3086 = vpop.f32.mrf.mxu0
    %v3087 = vadd.f32 %v2768, %v3086
    %v3088 = vpop.f32.mrf.mxu0
    %3089 = vmatprep.mubr.bf16.mxu0 0
    %3090 = vmatmul.mubr.bf16.gmra.mxu0 %v2716
    %v3091 = vpop.f32.mrf.mxu0
    %v3092 = vadd.f32 %v2768, %v3091
    %v3093 = vpop.f32.mrf.mxu0
    %v3094 = vpop.f32.mrf.mxu0
    %v3095 = vadd.f32 %v2768, %v3094
    %v3096 = vpop.f32.mrf.mxu0
    %3097 = vmatprep.mubr.bf16.mxu0 0
    %3098 = vmatmul.mubr.bf16.gmra.mxu0 %v2717
    %v3099 = vpop.f32.mrf.mxu0
    %v3100 = vadd.f32 %v2768, %v3099
    %v3101 = vpop.f32.mrf.mxu0
    %v3102 = vpop.f32.mrf.mxu0
    %v3103 = vadd.f32 %v2768, %v3102
    %v3104 = vpop.f32.mrf.mxu0
    %3105 = vmatprep.mubr.bf16.mxu0 0
    %3106 = vmatmul.mubr.bf16.gmra.mxu0 %v2718
    %v3107 = vpop.f32.mrf.mxu0
    %v3108 = vadd.f32 %v2768, %v3107
    %v3109 = vpop.f32.mrf.mxu0
    %v3110 = vpop.f32.mrf.mxu0
    %v3111 = vadd.f32 %v2768, %v3110
    %v3112 = vpop.f32.mrf.mxu0
    %3113 = vmatprep.mubr.bf16.mxu0 0
    %3114 = vmatmul.mubr.bf16.gmra.mxu0 %v2719
    %v3115 = vpop.f32.mrf.mxu0
    %v3116 = vadd.f32 %v2768, %v3115
    %v3117 = vpop.f32.mrf.mxu0
    %v3118 = vpop.f32.mrf.mxu0
    %v3119 = vadd.f32 %v2768, %v3118
    %v3120 = vpop.f32.mrf.mxu0
    %3121 = vmatprep.mubr.bf16.mxu0 0
    %3122 = vmatmul.mubr.bf16.gmra.mxu0 %v2720
    %v3123 = vpop.f32.mrf.mxu0
    %v3124 = vadd.f32 %v2768, %v3123
    %v3125 = vpop.f32.mrf.mxu0
    %v3126 = vpop.f32.mrf.mxu0
    %v3127 = vadd.f32 %v2768, %v3126
    %v3128 = vpop.f32.mrf.mxu0
    %3129 = vmatprep.mubr.bf16.mxu0 0
    %3130 = vmatmul.mubr.bf16.gmra.mxu0 %v2721
    %v3131 = vpop.f32.mrf.mxu0
    %v3132 = vadd.f32 %v2768, %v3131
    %v3133 = vpop.f32.mrf.mxu0
    %v3134 = vpop.f32.mrf.mxu0
    %v3135 = vadd.f32 %v2768, %v3134
    %v3136 = vpop.f32.mrf.mxu0
    %3137 = vmatprep.mubr.bf16.mxu0 0
    %3138 = vmatmul.mubr.bf16.gmra.mxu0 %v2722
    %v3139 = vpop.f32.mrf.mxu0
    %v3140 = vadd.f32 %v2768, %v3139
    %v3141 = vpop.f32.mrf.mxu0
    %v3142 = vpop.f32.mrf.mxu0
    %v3143 = vadd.f32 %v2768, %v3142
    %v3144 = vpop.f32.mrf.mxu0
    %3145 = vmatprep.mubr.bf16.mxu0 0
    %3146 = vmatmul.mubr.bf16.gmra.mxu0 %v2723
    %v3147 = vpop.f32.mrf.mxu0
    %v3148 = vadd.f32 %v2768, %v3147
    %v3149 = vpop.f32.mrf.mxu0
    %v3150 = vpop.f32.mrf.mxu0
    %v3151 = vadd.f32 %v2768, %v3150
    %v3152 = vpop.f32.mrf.mxu0
    %3153 = vmatprep.mubr.bf16.mxu0 0
    %3154 = vmatmul.mubr.bf16.gmra.mxu0 %v2724
    %v3155 = vpop.f32.mrf.mxu0
    %v3156 = vadd.f32 %v2768, %v3155
    %v3157 = vpop.f32.mrf.mxu0
    %v3158 = vpop.f32.mrf.mxu0
    %v3159 = vadd.f32 %v2768, %v3158
    %v3160 = vpop.f32.mrf.mxu0
    %3161 = vmatprep.mubr.bf16.mxu0 0
    %3162 = vmatmul.mubr.bf16.gmra.mxu0 %v2725
    %v3163 = vpop.f32.mrf.mxu0
    %v3164 = vadd.f32 %v2768, %v3163
    %v3165 = vpop.f32.mrf.mxu0
    %v3166 = vpop.f32.mrf.mxu0
    %v3167 = vadd.f32 %v2768, %v3166
    %v3168 = vpop.f32.mrf.mxu0
    %3169 = vmatprep.mubr.bf16.mxu0 0
    %3170 = vmatmul.mubr.bf16.gmra.mxu0 %v2726
    %v3171 = vpop.f32.mrf.mxu0
    %v3172 = vadd.f32 %v2768, %v3171
    %v3173 = vpop.f32.mrf.mxu0
    %v3174 = vpop.f32.mrf.mxu0
    %v3175 = vadd.f32 %v2768, %v3174
    %v3176 = vpop.f32.mrf.mxu0
    %3177 = vmatprep.mubr.bf16.mxu0 0
    %3178 = vmatmul.mubr.bf16.gmra.mxu0 %v2727
    %v3179 = vpop.f32.mrf.mxu0
    %v3180 = vadd.f32 %v2768, %v3179
    %v3181 = vpop.f32.mrf.mxu0
    %v3182 = vpop.f32.mrf.mxu0
    %v3183 = vadd.f32 %v2768, %v3182
    %v3184 = vpop.f32.mrf.mxu0
    %3185 = vmatprep.mubr.bf16.mxu0 0
    %3186 = vmatmul.mubr.bf16.gmra.mxu0 %v2728
    %v3187 = vpop.f32.mrf.mxu0
    %v3188 = vadd.f32 %v2768, %v3187
    %v3189 = vpop.f32.mrf.mxu0
    %v3190 = vpop.f32.mrf.mxu0
    %v3191 = vadd.f32 %v2768, %v3190
    %v3192 = vpop.f32.mrf.mxu0
    %3193 = vmatprep.mubr.bf16.mxu0 0
    %3194 = vmatmul.mubr.bf16.gmra.mxu0 %v2729
    %v3195 = vpop.f32.mrf.mxu0
    %v3196 = vadd.f32 %v2768, %v3195
    %v3197 = vpop.f32.mrf.mxu0
    %v3198 = vpop.f32.mrf.mxu0
    %v3199 = vadd.f32 %v2768, %v3198
    %v3200 = vpop.f32.mrf.mxu0
    %3201 = vmatprep.mubr.bf16.mxu0 0
    %3202 = vmatmul.mubr.bf16.gmra.mxu0 %v2730
    %v3203 = vpop.f32.mrf.mxu0
    %v3204 = vadd.f32 %v2768, %v3203
    %v3205 = vpop.f32.mrf.mxu0
    %v3206 = vpop.f32.mrf.mxu0
    %v3207 = vadd.f32 %v2768, %v3206
    %v3208 = vpop.f32.mrf.mxu0
    %3209 = vmatprep.mubr.bf16.mxu0 0
    %3210 = vmatmul.mubr.bf16.gmra.mxu0 %v2731
    %v3211 = vpop.f32.mrf.mxu0
    %v3212 = vadd.f32 %v2768, %v3211
    %v3213 = vpop.f32.mrf.mxu0
    %v3214 = vpop.f32.mrf.mxu0
    %v3215 = vadd.f32 %v2768, %v3214
    %v3216 = vpop.f32.mrf.mxu0
    %3217 = vmatprep.mubr.bf16.mxu0 0
    %3218 = vmatmul.mubr.bf16.gmra.mxu0 %v2732
    %v3219 = vpop.f32.mrf.mxu0
    %v3220 = vadd.f32 %v2768, %v3219
    %v3221 = vpop.f32.mrf.mxu0
    %v3222 = vpop.f32.mrf.mxu0
    %v3223 = vadd.f32 %v2768, %v3222
    %v3224 = vpop.f32.mrf.mxu0
    %3225 = vmatprep.mubr.bf16.mxu0 0
    %3226 = vmatmul.mubr.bf16.gmra.mxu0 %v2733
    %v3227 = vpop.f32.mrf.mxu0
    %v3228 = vadd.f32 %v2768, %v3227
    %v3229 = vpop.f32.mrf.mxu0
    %v3230 = vpop.f32.mrf.mxu0
    %v3231 = vadd.f32 %v2768, %v3230
    %v3232 = vpop.f32.mrf.mxu0
    %3233 = vmatprep.mubr.bf16.mxu0 0
    %3234 = vmatmul.mubr.bf16.gmra.mxu0 %v2734
    %v3235 = vpop.f32.mrf.mxu0
    %v3236 = vadd.f32 %v2768, %v3235
    %v3237 = vpop.f32.mrf.mxu0
    %v3238 = vpop.f32.mrf.mxu0
    %v3239 = vadd.f32 %v2768, %v3238
    %v3240 = vpop.f32.mrf.mxu0
    %3241 = vmatprep.mubr.bf16.mxu0 0
    %3242 = vmatmul.mubr.bf16.gmra.mxu0 %v2735
    %v3243 = vpop.f32.mrf.mxu0
    %v3244 = vadd.f32 %v2768, %v3243
    %v3245 = vpop.f32.mrf.mxu0
    %v3246 = vpop.f32.mrf.mxu0
    %v3247 = vadd.f32 %v2768, %v3246
    %v3248 = vpop.f32.mrf.mxu0
    %3249 = vmatprep.mubr.bf16.mxu0 0
    %3250 = vmatmul.mubr.bf16.gmra.mxu0 %v2736
    %v3251 = vpop.f32.mrf.mxu0
    %v3252 = vadd.f32 %v2768, %v3251
    %v3253 = vpop.f32.mrf.mxu0
    %v3254 = vpop.f32.mrf.mxu0
    %v3255 = vadd.f32 %v2768, %v3254
    %v3256 = vpop.f32.mrf.mxu0
    %3257 = vmatprep.mubr.bf16.mxu0 0
    %3258 = vmatmul.mubr.bf16.gmra.mxu0 %v2737
    %v3259 = vpop.f32.mrf.mxu0
    %v3260 = vadd.f32 %v2768, %v3259
    %v3261 = vpop.f32.mrf.mxu0
    %v3262 = vpop.f32.mrf.mxu0
    %v3263 = vadd.f32 %v2768, %v3262
    %v3264 = vpop.f32.mrf.mxu0
    %3265 = vmatprep.mubr.bf16.mxu0 0
    %3266 = vmatmul.mubr.bf16.gmra.mxu0 %v2738
    %v3267 = vpop.f32.mrf.mxu0
    %v3268 = vadd.f32 %v2768, %v3267
    %v3269 = vpop.f32.mrf.mxu0
    %v3270 = vpop.f32.mrf.mxu0
    %v3271 = vadd.f32 %v2768, %v3270
    %v3272 = vpop.f32.mrf.mxu0
    %3273 = vmatprep.mubr.bf16.mxu0 0
    %3274 = vmatmul.mubr.bf16.gmra.mxu0 %v2739
    %v3275 = vpop.f32.mrf.mxu0
    %v3276 = vadd.f32 %v2768, %v3275
    %v3277 = vpop.f32.mrf.mxu0
    %v3278 = vpop.f32.mrf.mxu0
    %v3279 = vadd.f32 %v2768, %v3278
    %v3280 = vpop.f32.mrf.mxu0
    %3281 = vmatprep.mubr.bf16.mxu0 0
    %3282 = vmatmul.mubr.bf16.gmra.mxu0 %v2740
    %v3283 = vpop.f32.mrf.mxu0
    %v3284 = vadd.f32 %v2768, %v3283
    %v3285 = vpop.f32.mrf.mxu0
    %v3286 = vpop.f32.mrf.mxu0
    %v3287 = vadd.f32 %v2768, %v3286
    %v3288 = vpop.f32.mrf.mxu0
    %3289 = vmatprep.mubr.bf16.mxu0 0
    %3290 = vmatmul.mubr.bf16.gmra.mxu0 %v2741
    %v3291 = vpop.f32.mrf.mxu0
    %v3292 = vadd.f32 %v2768, %v3291
    %v3293 = vpop.f32.mrf.mxu0
    %v3294 = vpop.f32.mrf.mxu0
    %v3295 = vadd.f32 %v2768, %v3294
    %v3296 = vpop.f32.mrf.mxu0
    %3297 = vmatprep.mubr.bf16.mxu0 0
    %3298 = vmatmul.mubr.bf16.gmra.mxu0 %v2742
    %v3299 = vpop.f32.mrf.mxu0
    %v3300 = vadd.f32 %v2768, %v3299
    %v3301 = vpop.f32.mrf.mxu0
    %v3302 = vpop.f32.mrf.mxu0
    %v3303 = vadd.f32 %v2768, %v3302
    %v3304 = vpop.f32.mrf.mxu0
    %3305 = vmatprep.mubr.bf16.mxu0 0
    %3306 = vmatmul.mubr.bf16.gmra.mxu0 %v2743
    %v3307 = vpop.f32.mrf.mxu0
    %v3308 = vadd.f32 %v2768, %v3307
    %v3309 = vpop.f32.mrf.mxu0
    %v3310 = vpop.f32.mrf.mxu0
    %v3311 = vadd.f32 %v2768, %v3310
    %v3312 = vpop.f32.mrf.mxu0
    %3313 = vmatprep.mubr.bf16.mxu0 0
    %3314 = vmatmul.mubr.bf16.gmra.mxu0 %v2744
    %v3315 = vpop.f32.mrf.mxu0
    %v3316 = vadd.f32 %v2768, %v3315
    %v3317 = vpop.f32.mrf.mxu0
    %v3318 = vpop.f32.mrf.mxu0
    %v3319 = vadd.f32 %v2768, %v3318
    %v3320 = vpop.f32.mrf.mxu0
    %3321 = vmatprep.mubr.bf16.mxu0 0
    %3322 = vmatmul.mubr.bf16.gmra.mxu0 %v2745
    %v3323 = vpop.f32.mrf.mxu0
    %v3324 = vadd.f32 %v2768, %v3323
    %v3325 = vpop.f32.mrf.mxu0
    %v3326 = vpop.f32.mrf.mxu0
    %v3327 = vadd.f32 %v2768, %v3326
    %v3328 = vpop.f32.mrf.mxu0
    %3329 = vmatprep.mubr.bf16.mxu0 0
    %3330 = vmatmul.mubr.bf16.gmra.mxu0 %v2746
    %v3331 = vpop.f32.mrf.mxu0
    %v3332 = vadd.f32 %v2768, %v3331
    %v3333 = vpop.f32.mrf.mxu0
    %v3334 = vpop.f32.mrf.mxu0
    %v3335 = vadd.f32 %v2768, %v3334
    %v3336 = vpop.f32.mrf.mxu0
    %3337 = vmatprep.mubr.bf16.mxu0 0
    %3338 = vmatmul.mubr.bf16.gmra.mxu0 %v2747
    %v3339 = vpop.f32.mrf.mxu0
    %v3340 = vadd.f32 %v2768, %v3339
    %v3341 = vpop.f32.mrf.mxu0
    %v3342 = vpop.f32.mrf.mxu0
    %v3343 = vadd.f32 %v2768, %v3342
    %v3344 = vpop.f32.mrf.mxu0
    %3345 = vmatprep.mubr.bf16.mxu0 0
    %3346 = vmatmul.mubr.bf16.gmra.mxu0 %v2748
    %v3347 = vpop.f32.mrf.mxu0
    %v3348 = vadd.f32 %v2768, %v3347
    %v3349 = vpop.f32.mrf.mxu0
    %v3350 = vpop.f32.mrf.mxu0
    %v3351 = vadd.f32 %v2768, %v3350
    %v3352 = vpop.f32.mrf.mxu0
    %3353 = vdwg.mxu0
    %v3354 = vpack.c.bf16 %v2855, %v2852
    %v3355 = vpack.c.bf16 %v2863, %v2860
    %v3356 = vpack.c.bf16 %v2871, %v2868
    %v3357 = vpack.c.bf16 %v2879, %v2876
    %v3358 = vpack.c.bf16 %v2887, %v2884
    %v3359 = vpack.c.bf16 %v2895, %v2892
    %v3360 = vpack.c.bf16 %v2903, %v2900
    %v3361 = vpack.c.bf16 %v2911, %v2908
    %v3362 = vpack.c.bf16 %v2919, %v2916
    %v3363 = vpack.c.bf16 %v2927, %v2924
    %v3364 = vpack.c.bf16 %v2935, %v2932
    %v3365 = vpack.c.bf16 %v2943, %v2940
    %v3366 = vpack.c.bf16 %v2951, %v2948
    %v3367 = vpack.c.bf16 %v2959, %v2956
    %v3368 = vpack.c.bf16 %v2967, %v2964
    %v3369 = vpack.c.bf16 %v2975, %v2972
    %v3370 = vpack.c.bf16 %v2983, %v2980
    %v3371 = vpack.c.bf16 %v2991, %v2988
    %v3372 = vpack.c.bf16 %v2999, %v2996
    %v3373 = vpack.c.bf16 %v3007, %v3004
    %v3374 = vpack.c.bf16 %v3015, %v3012
    %v3375 = vpack.c.bf16 %v3023, %v3020
    %v3376 = vpack.c.bf16 %v3031, %v3028
    %v3377 = vpack.c.bf16 %v3039, %v3036
    %v3378 = vpack.c.bf16 %v3047, %v3044
    %v3379 = vpack.c.bf16 %v3055, %v3052
    %v3380 = vpack.c.bf16 %v3063, %v3060
    %v3381 = vpack.c.bf16 %v3071, %v3068
    %v3382 = vpack.c.bf16 %v3079, %v3076
    %v3383 = vpack.c.bf16 %v3087, %v3084
    %v3384 = vpack.c.bf16 %v3095, %v3092
    %v3385 = vpack.c.bf16 %v3103, %v3100
    %v3386 = vpack.c.bf16 %v3111, %v3108
    %v3387 = vpack.c.bf16 %v3119, %v3116
    %v3388 = vpack.c.bf16 %v3127, %v3124
    %v3389 = vpack.c.bf16 %v3135, %v3132
    %v3390 = vpack.c.bf16 %v3143, %v3140
    %v3391 = vpack.c.bf16 %v3151, %v3148
    %v3392 = vpack.c.bf16 %v3159, %v3156
    %v3393 = vpack.c.bf16 %v3167, %v3164
    %v3394 = vpack.c.bf16 %v3175, %v3172
    %v3395 = vpack.c.bf16 %v3183, %v3180
    %v3396 = vpack.c.bf16 %v3191, %v3188
    %v3397 = vpack.c.bf16 %v3199, %v3196
    %v3398 = vpack.c.bf16 %v3207, %v3204
    %v3399 = vpack.c.bf16 %v3215, %v3212
    %v3400 = vpack.c.bf16 %v3223, %v3220
    %v3401 = vpack.c.bf16 %v3231, %v3228
    %v3402 = vpack.c.bf16 %v3239, %v3236
    %v3403 = vpack.c.bf16 %v3247, %v3244
    %v3404 = vpack.c.bf16 %v3255, %v3252
    %v3405 = vpack.c.bf16 %v3263, %v3260
    %v3406 = vpack.c.bf16 %v3271, %v3268
    %v3407 = vpack.c.bf16 %v3279, %v3276
    %v3408 = vpack.c.bf16 %v3287, %v3284
    %v3409 = vpack.c.bf16 %v3295, %v3292
    %v3410 = vpack.c.bf16 %v3303, %v3300
    %v3411 = vpack.c.bf16 %v3311, %v3308
    %v3412 = vpack.c.bf16 %v3319, %v3316
    %v3413 = vpack.c.bf16 %v3327, %v3324
    %v3414 = vpack.c.bf16 %v3335, %v3332
    %v3415 = vpack.c.bf16 %v3343, %v3340
    %v3416 = vpack.c.bf16 %v3351, %v3348
    %v3417 = vmul.bf16 %v3354, 1009007652
    %v3418 = vmul.bf16 %v3355, 1009007652
    %v3419 = vmul.bf16 %v3356, 1009007652
    %v3420 = vmul.bf16 %v3357, 1009007652
    %v3421 = vmul.bf16 %v3358, 1009007652
    %v3422 = vmul.bf16 %v3359, 1009007652
    %v3423 = vmul.bf16 %v3360, 1009007652
    %v3424 = vmul.bf16 %v3361, 1009007652
    %v3425 = vmul.bf16 %v3362, 1009007652
    %v3426 = vmul.bf16 %v3363, 1009007652
    %v3427 = vmul.bf16 %v3364, 1009007652
    %v3428 = vmul.bf16 %v3365, 1009007652
    %v3429 = vmul.bf16 %v3366, 1009007652
    %v3430 = vmul.bf16 %v3367, 1009007652
    %v3431 = vmul.bf16 %v3368, 1009007652
    %v3432 = vmul.bf16 %v3369, 1009007652
    %v3433 = vmul.bf16 %v3370, 1009007652
    %v3434 = vmul.bf16 %v3371, 1009007652
    %v3435 = vmul.bf16 %v3372, 1009007652
    %v3436 = vmul.bf16 %v3373, 1009007652
    %v3437 = vmul.bf16 %v3374, 1009007652
    %v3438 = vmul.bf16 %v3375, 1009007652
    %v3439 = vmul.bf16 %v3376, 1009007652
    %v3440 = vmul.bf16 %v3377, 1009007652
    %v3441 = vmul.bf16 %v3378, 1009007652
    %v3442 = vmul.bf16 %v3379, 1009007652
    %v3443 = vmul.bf16 %v3380, 1009007652
    %v3444 = vmul.bf16 %v3381, 1009007652
    %v3445 = vmul.bf16 %v3382, 1009007652
    %v3446 = vmul.bf16 %v3383, 1009007652
    %v3447 = vmul.bf16 %v3384, 1009007652
    %v3448 = vmul.bf16 %v3385, 1009007652
    %v3449 = vmul.bf16 %v3386, 1009007652
    %v3450 = vmul.bf16 %v3387, 1009007652
    %v3451 = vmul.bf16 %v3388, 1009007652
    %v3452 = vmul.bf16 %v3389, 1009007652
    %v3453 = vmul.bf16 %v3390, 1009007652
    %v3454 = vmul.bf16 %v3391, 1009007652
    %v3455 = vmul.bf16 %v3392, 1009007652
    %v3456 = vmul.bf16 %v3393, 1009007652
    %v3457 = vmul.bf16 %v3394, 1009007652
    %v3458 = vmul.bf16 %v3395, 1009007652
    %v3459 = vmul.bf16 %v3396, 1009007652
    %v3460 = vmul.bf16 %v3397, 1009007652
    %v3461 = vmul.bf16 %v3398, 1009007652
    %v3462 = vmul.bf16 %v3399, 1009007652
    %v3463 = vmul.bf16 %v3400, 1009007652
    %v3464 = vmul.bf16 %v3401, 1009007652
    %v3465 = vmul.bf16 %v3402, 1009007652
    %v3466 = vmul.bf16 %v3403, 1009007652
    %v3467 = vmul.bf16 %v3404, 1009007652
    %v3468 = vmul.bf16 %v3405, 1009007652
    %v3469 = vmul.bf16 %v3406, 1009007652
    %v3470 = vmul.bf16 %v3407, 1009007652
    %v3471 = vmul.bf16 %v3408, 1009007652
    %v3472 = vmul.bf16 %v3409, 1009007652
    %v3473 = vmul.bf16 %v3410, 1009007652
    %v3474 = vmul.bf16 %v3411, 1009007652
    %v3475 = vmul.bf16 %v3412, 1009007652
    %v3476 = vmul.bf16 %v3413, 1009007652
    %v3477 = vmul.bf16 %v3414, 1009007652
    %v3478 = vmul.bf16 %v3415, 1009007652
    %v3479 = vmul.bf16 %v3416, 1009007652
    %v3480 = vmax.bf16 %v3354, %v3417
    %v3481 = vmax.bf16 %v3355, %v3418
    %v3482 = vmax.bf16 %v3356, %v3419
    %v3483 = vmax.bf16 %v3357, %v3420
    %v3484 = vmax.bf16 %v3358, %v3421
    %v3485 = vmax.bf16 %v3359, %v3422
    %v3486 = vmax.bf16 %v3360, %v3423
    %v3487 = vmax.bf16 %v3361, %v3424
    %v3488 = vmax.bf16 %v3362, %v3425
    %v3489 = vmax.bf16 %v3363, %v3426
    %v3490 = vmax.bf16 %v3364, %v3427
    %v3491 = vmax.bf16 %v3365, %v3428
    %v3492 = vmax.bf16 %v3366, %v3429
    %v3493 = vmax.bf16 %v3367, %v3430
    %v3494 = vmax.bf16 %v3368, %v3431
    %v3495 = vmax.bf16 %v3369, %v3432
    %v3496 = vmax.bf16 %v3370, %v3433
    %v3497 = vmax.bf16 %v3371, %v3434
    %v3498 = vmax.bf16 %v3372, %v3435
    %v3499 = vmax.bf16 %v3373, %v3436
    %v3500 = vmax.bf16 %v3374, %v3437
    %v3501 = vmax.bf16 %v3375, %v3438
    %v3502 = vmax.bf16 %v3376, %v3439
    %v3503 = vmax.bf16 %v3377, %v3440
    %v3504 = vmax.bf16 %v3378, %v3441
    %v3505 = vmax.bf16 %v3379, %v3442
    %v3506 = vmax.bf16 %v3380, %v3443
    %v3507 = vmax.bf16 %v3381, %v3444
    %v3508 = vmax.bf16 %v3382, %v3445
    %v3509 = vmax.bf16 %v3383, %v3446
    %v3510 = vmax.bf16 %v3384, %v3447
    %v3511 = vmax.bf16 %v3385, %v3448
    %v3512 = vmax.bf16 %v3386, %v3449
    %v3513 = vmax.bf16 %v3387, %v3450
    %v3514 = vmax.bf16 %v3388, %v3451
    %v3515 = vmax.bf16 %v3389, %v3452
    %v3516 = vmax.bf16 %v3390, %v3453
    %v3517 = vmax.bf16 %v3391, %v3454
    %v3518 = vmax.bf16 %v3392, %v3455
    %v3519 = vmax.bf16 %v3393, %v3456
    %v3520 = vmax.bf16 %v3394, %v3457
    %v3521 = vmax.bf16 %v3395, %v3458
    %v3522 = vmax.bf16 %v3396, %v3459
    %v3523 = vmax.bf16 %v3397, %v3460
    %v3524 = vmax.bf16 %v3398, %v3461
    %v3525 = vmax.bf16 %v3399, %v3462
    %v3526 = vmax.bf16 %v3400, %v3463
    %v3527 = vmax.bf16 %v3401, %v3464
    %v3528 = vmax.bf16 %v3402, %v3465
    %v3529 = vmax.bf16 %v3403, %v3466
    %v3530 = vmax.bf16 %v3404, %v3467
    %v3531 = vmax.bf16 %v3405, %v3468
    %v3532 = vmax.bf16 %v3406, %v3469
    %v3533 = vmax.bf16 %v3407, %v3470
    %v3534 = vmax.bf16 %v3408, %v3471
    %v3535 = vmax.bf16 %v3409, %v3472
    %v3536 = vmax.bf16 %v3410, %v3473
    %v3537 = vmax.bf16 %v3411, %v3474
    %v3538 = vmax.bf16 %v3412, %v3475
    %v3539 = vmax.bf16 %v3413, %v3476
    %v3540 = vmax.bf16 %v3414, %v3477
    %v3541 = vmax.bf16 %v3415, %v3478
    %v3542 = vmax.bf16 %v3416, %v3479
    %s3543 = scalar_lea.vmem %s2, 64
    %v3544 = vld [vmem:[%s3543] sm:$0xf]
    %v3545 = vld [vmem:[%s3543 + $0x4] sm:$0xf]
    %v3546 = vld [vmem:[%s3543 + $0x8] sm:$0xf]
    %v3547 = vld [vmem:[%s3543 + $0xc] sm:$0xf]
    %v3548 = vld [vmem:[%s3543 + $0x10] sm:$0xf]
    %v3549 = vld [vmem:[%s3543 + $0x14] sm:$0xf]
    %v3550 = vld [vmem:[%s3543 + $0x18] sm:$0xf]
    %v3551 = vld [vmem:[%s3543 + $0x1c] sm:$0xf]
    %v3552 = vld [vmem:[%s3543 + $0x20] sm:$0xf]
    %v3553 = vld [vmem:[%s3543 + $0x24] sm:$0xf]
    %v3554 = vld [vmem:[%s3543 + $0x28] sm:$0xf]
    %v3555 = vld [vmem:[%s3543 + $0x2c] sm:$0xf]
    %v3556 = vld [vmem:[%s3543 + $0x30] sm:$0xf]
    %v3557 = vld [vmem:[%s3543 + $0x34] sm:$0xf]
    %v3558 = vld [vmem:[%s3543 + $0x38] sm:$0xf]
    %v3559 = vld [vmem:[%s3543 + $0x3c] sm:$0xf]
    %v3560 = vlaneseq
    %v3561 = vshrl.u32 %v3560, 7
    %v3562 = vsub.s32 0, %v3561
    %v3563 = vrot.slane %v146, %v3562
    %v3580 = vunpack.c.l.b16 %v3544
    %v3581 = vunpack.c.l.b16 %v3545
    %v3582 = vunpack.c.l.b16 %v3546
    %v3583 = vunpack.c.l.b16 %v3547
    %v3584 = vunpack.c.l.b16 %v3548
    %v3585 = vunpack.c.l.b16 %v3549
    %v3586 = vunpack.c.l.b16 %v3550
    %v3587 = vunpack.c.l.b16 %v3551
    %v3588 = vunpack.c.l.b16 %v3552
    %v3589 = vunpack.c.l.b16 %v3553
    %v3590 = vunpack.c.l.b16 %v3554
    %v3591 = vunpack.c.l.b16 %v3555
    %v3592 = vunpack.c.l.b16 %v3556
    %v3593 = vunpack.c.l.b16 %v3557
    %v3594 = vunpack.c.l.b16 %v3558
    %v3595 = vunpack.c.l.b16 %v3559
    %v3596 = vpack.c.b16 %v3581, %v3580
    %v3597 = vpack.c.b16 %v3583, %v3582
    %v3598 = vpack.c.b16 %v3585, %v3584
    %v3599 = vpack.c.b16 %v3587, %v3586
    %v3600 = vpack.c.b16 %v3589, %v3588
    %v3601 = vpack.c.b16 %v3591, %v3590
    %v3602 = vpack.c.b16 %v3593, %v3592
    %v3603 = vpack.c.b16 %v3595, %v3594
    %3612 = vmatprep.subr.bf16.mxu0 0
    %3613 = vmatpush1.bf16.msra.mxu0 %v3603
    %3614 = vmatprep.subr.bf16.mxu0 0
    %3615 = vmatpush1.bf16.msra.mxu0 %v3602
    %3616 = vmatprep.subr.bf16.mxu0 0
    %3617 = vmatpush1.bf16.msra.mxu0 %v3601
    %3618 = vmatprep.subr.bf16.mxu0 0
    %3619 = vmatpush1.bf16.msra.mxu0 %v3600
    %3620 = vmatprep.subr.bf16.mxu0 0
    %3621 = vmatpush1.bf16.msra.mxu0 %v3599
    %3622 = vmatprep.subr.bf16.mxu0 0
    %3623 = vmatpush1.bf16.msra.mxu0 %v3598
    %3624 = vmatprep.subr.bf16.mxu0 0
    %3625 = vmatpush1.bf16.msra.mxu0 %v3597
    %3626 = vmatprep.subr.bf16.mxu0 0
    %3627 = vmatpush1.bf16.msra.mxu0 %v3596
    %3628 = vmatprep.subr.bf16.mxu0 0
    %3629 = vmatpush2.bf16.msra.mxu0 0
    %3630 = vmatprep.subr.bf16.mxu0 0
    %3631 = vmatpush2.bf16.msra.mxu0 0
    %3632 = vmatprep.subr.bf16.mxu0 0
    %3633 = vmatpush2.bf16.msra.mxu0 0
    %3634 = vmatprep.subr.bf16.mxu0 0
    %3635 = vmatpush2.bf16.msra.mxu0 0
    %3636 = vmatprep.subr.bf16.mxu0 0
    %3637 = vmatpush2.bf16.msra.mxu0 0
    %3638 = vmatprep.subr.bf16.mxu0 0
    %3639 = vmatpush2.bf16.msra.mxu0 0
    %3640 = vmatprep.subr.bf16.mxu0 0
    %3641 = vmatpush2.bf16.msra.mxu0 0
    %3642 = vmatprep.subr.bf16.mxu0 0
    %3643 = vmatpush2.bf16.msra.mxu0 0
    %3644 = vmatprep.mubr.bf16.mxu0 0
    %3645 = vmatmul.mubr.bf16.gmra.mxu0 %v3480
    %v3646 = vpop.f32.mrf.mxu0
    %v3647 = vadd.f32 %v3563, %v3646
    %v3648 = vpop.f32.mrf.mxu0
    %v3649 = vpop.f32.mrf.mxu0
    %v3650 = vadd.f32 %v3563, %v3649
    %v3651 = vpop.f32.mrf.mxu0
    %3652 = vmatprep.mubr.bf16.mxu0 0
    %3653 = vmatmul.mubr.bf16.gmra.mxu0 %v3481
    %v3654 = vpop.f32.mrf.mxu0
    %v3655 = vadd.f32 %v3563, %v3654
    %v3656 = vpop.f32.mrf.mxu0
    %v3657 = vpop.f32.mrf.mxu0
    %v3658 = vadd.f32 %v3563, %v3657
    %v3659 = vpop.f32.mrf.mxu0
    %3660 = vmatprep.mubr.bf16.mxu0 0
    %3661 = vmatmul.mubr.bf16.gmra.mxu0 %v3482
    %v3662 = vpop.f32.mrf.mxu0
    %v3663 = vadd.f32 %v3563, %v3662
    %v3664 = vpop.f32.mrf.mxu0
    %v3665 = vpop.f32.mrf.mxu0
    %v3666 = vadd.f32 %v3563, %v3665
    %v3667 = vpop.f32.mrf.mxu0
    %3668 = vmatprep.mubr.bf16.mxu0 0
    %3669 = vmatmul.mubr.bf16.gmra.mxu0 %v3483
    %v3670 = vpop.f32.mrf.mxu0
    %v3671 = vadd.f32 %v3563, %v3670
    %v3672 = vpop.f32.mrf.mxu0
    %v3673 = vpop.f32.mrf.mxu0
    %v3674 = vadd.f32 %v3563, %v3673
    %v3675 = vpop.f32.mrf.mxu0
    %3676 = vmatprep.mubr.bf16.mxu0 0
    %3677 = vmatmul.mubr.bf16.gmra.mxu0 %v3484
    %v3678 = vpop.f32.mrf.mxu0
    %v3679 = vadd.f32 %v3563, %v3678
    %v3680 = vpop.f32.mrf.mxu0
    %v3681 = vpop.f32.mrf.mxu0
    %v3682 = vadd.f32 %v3563, %v3681
    %v3683 = vpop.f32.mrf.mxu0
    %3684 = vmatprep.mubr.bf16.mxu0 0
    %3685 = vmatmul.mubr.bf16.gmra.mxu0 %v3485
    %v3686 = vpop.f32.mrf.mxu0
    %v3687 = vadd.f32 %v3563, %v3686
    %v3688 = vpop.f32.mrf.mxu0
    %v3689 = vpop.f32.mrf.mxu0
    %v3690 = vadd.f32 %v3563, %v3689
    %v3691 = vpop.f32.mrf.mxu0
    %3692 = vmatprep.mubr.bf16.mxu0 0
    %3693 = vmatmul.mubr.bf16.gmra.mxu0 %v3486
    %v3694 = vpop.f32.mrf.mxu0
    %v3695 = vadd.f32 %v3563, %v3694
    %v3696 = vpop.f32.mrf.mxu0
    %v3697 = vpop.f32.mrf.mxu0
    %v3698 = vadd.f32 %v3563, %v3697
    %v3699 = vpop.f32.mrf.mxu0
    %3700 = vmatprep.mubr.bf16.mxu0 0
    %3701 = vmatmul.mubr.bf16.gmra.mxu0 %v3487
    %v3702 = vpop.f32.mrf.mxu0
    %v3703 = vadd.f32 %v3563, %v3702
    %v3704 = vpop.f32.mrf.mxu0
    %v3705 = vpop.f32.mrf.mxu0
    %v3706 = vadd.f32 %v3563, %v3705
    %v3707 = vpop.f32.mrf.mxu0
    %3708 = vmatprep.mubr.bf16.mxu0 0
    %3709 = vmatmul.mubr.bf16.gmra.mxu0 %v3488
    %v3710 = vpop.f32.mrf.mxu0
    %v3711 = vadd.f32 %v3563, %v3710
    %v3712 = vpop.f32.mrf.mxu0
    %v3713 = vpop.f32.mrf.mxu0
    %v3714 = vadd.f32 %v3563, %v3713
    %v3715 = vpop.f32.mrf.mxu0
    %3716 = vmatprep.mubr.bf16.mxu0 0
    %3717 = vmatmul.mubr.bf16.gmra.mxu0 %v3489
    %v3718 = vpop.f32.mrf.mxu0
    %v3719 = vadd.f32 %v3563, %v3718
    %v3720 = vpop.f32.mrf.mxu0
    %v3721 = vpop.f32.mrf.mxu0
    %v3722 = vadd.f32 %v3563, %v3721
    %v3723 = vpop.f32.mrf.mxu0
    %3724 = vmatprep.mubr.bf16.mxu0 0
    %3725 = vmatmul.mubr.bf16.gmra.mxu0 %v3490
    %v3726 = vpop.f32.mrf.mxu0
    %v3727 = vadd.f32 %v3563, %v3726
    %v3728 = vpop.f32.mrf.mxu0
    %v3729 = vpop.f32.mrf.mxu0
    %v3730 = vadd.f32 %v3563, %v3729
    %v3731 = vpop.f32.mrf.mxu0
    %3732 = vmatprep.mubr.bf16.mxu0 0
    %3733 = vmatmul.mubr.bf16.gmra.mxu0 %v3491
    %v3734 = vpop.f32.mrf.mxu0
    %v3735 = vadd.f32 %v3563, %v3734
    %v3736 = vpop.f32.mrf.mxu0
    %v3737 = vpop.f32.mrf.mxu0
    %v3738 = vadd.f32 %v3563, %v3737
    %v3739 = vpop.f32.mrf.mxu0
    %3740 = vmatprep.mubr.bf16.mxu0 0
    %3741 = vmatmul.mubr.bf16.gmra.mxu0 %v3492
    %v3742 = vpop.f32.mrf.mxu0
    %v3743 = vadd.f32 %v3563, %v3742
    %v3744 = vpop.f32.mrf.mxu0
    %v3745 = vpop.f32.mrf.mxu0
    %v3746 = vadd.f32 %v3563, %v3745
    %v3747 = vpop.f32.mrf.mxu0
    %3748 = vmatprep.mubr.bf16.mxu0 0
    %3749 = vmatmul.mubr.bf16.gmra.mxu0 %v3493
    %v3750 = vpop.f32.mrf.mxu0
    %v3751 = vadd.f32 %v3563, %v3750
    %v3752 = vpop.f32.mrf.mxu0
    %v3753 = vpop.f32.mrf.mxu0
    %v3754 = vadd.f32 %v3563, %v3753
    %v3755 = vpop.f32.mrf.mxu0
    %3756 = vmatprep.mubr.bf16.mxu0 0
    %3757 = vmatmul.mubr.bf16.gmra.mxu0 %v3494
    %v3758 = vpop.f32.mrf.mxu0
    %v3759 = vadd.f32 %v3563, %v3758
    %v3760 = vpop.f32.mrf.mxu0
    %v3761 = vpop.f32.mrf.mxu0
    %v3762 = vadd.f32 %v3563, %v3761
    %v3763 = vpop.f32.mrf.mxu0
    %3764 = vmatprep.mubr.bf16.mxu0 0
    %3765 = vmatmul.mubr.bf16.gmra.mxu0 %v3495
    %v3766 = vpop.f32.mrf.mxu0
    %v3767 = vadd.f32 %v3563, %v3766
    %v3768 = vpop.f32.mrf.mxu0
    %v3769 = vpop.f32.mrf.mxu0
    %v3770 = vadd.f32 %v3563, %v3769
    %v3771 = vpop.f32.mrf.mxu0
    %3772 = vmatprep.mubr.bf16.mxu0 0
    %3773 = vmatmul.mubr.bf16.gmra.mxu0 %v3496
    %v3774 = vpop.f32.mrf.mxu0
    %v3775 = vadd.f32 %v3563, %v3774
    %v3776 = vpop.f32.mrf.mxu0
    %v3777 = vpop.f32.mrf.mxu0
    %v3778 = vadd.f32 %v3563, %v3777
    %v3779 = vpop.f32.mrf.mxu0
    %3780 = vmatprep.mubr.bf16.mxu0 0
    %3781 = vmatmul.mubr.bf16.gmra.mxu0 %v3497
    %v3782 = vpop.f32.mrf.mxu0
    %v3783 = vadd.f32 %v3563, %v3782
    %v3784 = vpop.f32.mrf.mxu0
    %v3785 = vpop.f32.mrf.mxu0
    %v3786 = vadd.f32 %v3563, %v3785
    %v3787 = vpop.f32.mrf.mxu0
    %3788 = vmatprep.mubr.bf16.mxu0 0
    %3789 = vmatmul.mubr.bf16.gmra.mxu0 %v3498
    %v3790 = vpop.f32.mrf.mxu0
    %v3791 = vadd.f32 %v3563, %v3790
    %v3792 = vpop.f32.mrf.mxu0
    %v3793 = vpop.f32.mrf.mxu0
    %v3794 = vadd.f32 %v3563, %v3793
    %v3795 = vpop.f32.mrf.mxu0
    %3796 = vmatprep.mubr.bf16.mxu0 0
    %3797 = vmatmul.mubr.bf16.gmra.mxu0 %v3499
    %v3798 = vpop.f32.mrf.mxu0
    %v3799 = vadd.f32 %v3563, %v3798
    %v3800 = vpop.f32.mrf.mxu0
    %v3801 = vpop.f32.mrf.mxu0
    %v3802 = vadd.f32 %v3563, %v3801
    %v3803 = vpop.f32.mrf.mxu0
    %3804 = vmatprep.mubr.bf16.mxu0 0
    %3805 = vmatmul.mubr.bf16.gmra.mxu0 %v3500
    %v3806 = vpop.f32.mrf.mxu0
    %v3807 = vadd.f32 %v3563, %v3806
    %v3808 = vpop.f32.mrf.mxu0
    %v3809 = vpop.f32.mrf.mxu0
    %v3810 = vadd.f32 %v3563, %v3809
    %v3811 = vpop.f32.mrf.mxu0
    %3812 = vmatprep.mubr.bf16.mxu0 0
    %3813 = vmatmul.mubr.bf16.gmra.mxu0 %v3501
    %v3814 = vpop.f32.mrf.mxu0
    %v3815 = vadd.f32 %v3563, %v3814
    %v3816 = vpop.f32.mrf.mxu0
    %v3817 = vpop.f32.mrf.mxu0
    %v3818 = vadd.f32 %v3563, %v3817
    %v3819 = vpop.f32.mrf.mxu0
    %3820 = vmatprep.mubr.bf16.mxu0 0
    %3821 = vmatmul.mubr.bf16.gmra.mxu0 %v3502
    %v3822 = vpop.f32.mrf.mxu0
    %v3823 = vadd.f32 %v3563, %v3822
    %v3824 = vpop.f32.mrf.mxu0
    %v3825 = vpop.f32.mrf.mxu0
    %v3826 = vadd.f32 %v3563, %v3825
    %v3827 = vpop.f32.mrf.mxu0
    %3828 = vmatprep.mubr.bf16.mxu0 0
    %3829 = vmatmul.mubr.bf16.gmra.mxu0 %v3503
    %v3830 = vpop.f32.mrf.mxu0
    %v3831 = vadd.f32 %v3563, %v3830
    %v3832 = vpop.f32.mrf.mxu0
    %v3833 = vpop.f32.mrf.mxu0
    %v3834 = vadd.f32 %v3563, %v3833
    %v3835 = vpop.f32.mrf.mxu0
    %3836 = vmatprep.mubr.bf16.mxu0 0
    %3837 = vmatmul.mubr.bf16.gmra.mxu0 %v3504
    %v3838 = vpop.f32.mrf.mxu0
    %v3839 = vadd.f32 %v3563, %v3838
    %v3840 = vpop.f32.mrf.mxu0
    %v3841 = vpop.f32.mrf.mxu0
    %v3842 = vadd.f32 %v3563, %v3841
    %v3843 = vpop.f32.mrf.mxu0
    %3844 = vmatprep.mubr.bf16.mxu0 0
    %3845 = vmatmul.mubr.bf16.gmra.mxu0 %v3505
    %v3846 = vpop.f32.mrf.mxu0
    %v3847 = vadd.f32 %v3563, %v3846
    %v3848 = vpop.f32.mrf.mxu0
    %v3849 = vpop.f32.mrf.mxu0
    %v3850 = vadd.f32 %v3563, %v3849
    %v3851 = vpop.f32.mrf.mxu0
    %3852 = vmatprep.mubr.bf16.mxu0 0
    %3853 = vmatmul.mubr.bf16.gmra.mxu0 %v3506
    %v3854 = vpop.f32.mrf.mxu0
    %v3855 = vadd.f32 %v3563, %v3854
    %v3856 = vpop.f32.mrf.mxu0
    %v3857 = vpop.f32.mrf.mxu0
    %v3858 = vadd.f32 %v3563, %v3857
    %v3859 = vpop.f32.mrf.mxu0
    %3860 = vmatprep.mubr.bf16.mxu0 0
    %3861 = vmatmul.mubr.bf16.gmra.mxu0 %v3507
    %v3862 = vpop.f32.mrf.mxu0
    %v3863 = vadd.f32 %v3563, %v3862
    %v3864 = vpop.f32.mrf.mxu0
    %v3865 = vpop.f32.mrf.mxu0
    %v3866 = vadd.f32 %v3563, %v3865
    %v3867 = vpop.f32.mrf.mxu0
    %3868 = vmatprep.mubr.bf16.mxu0 0
    %3869 = vmatmul.mubr.bf16.gmra.mxu0 %v3508
    %v3870 = vpop.f32.mrf.mxu0
    %v3871 = vadd.f32 %v3563, %v3870
    %v3872 = vpop.f32.mrf.mxu0
    %v3873 = vpop.f32.mrf.mxu0
    %v3874 = vadd.f32 %v3563, %v3873
    %v3875 = vpop.f32.mrf.mxu0
    %3876 = vmatprep.mubr.bf16.mxu0 0
    %3877 = vmatmul.mubr.bf16.gmra.mxu0 %v3509
    %v3878 = vpop.f32.mrf.mxu0
    %v3879 = vadd.f32 %v3563, %v3878
    %v3880 = vpop.f32.mrf.mxu0
    %v3881 = vpop.f32.mrf.mxu0
    %v3882 = vadd.f32 %v3563, %v3881
    %v3883 = vpop.f32.mrf.mxu0
    %3884 = vmatprep.mubr.bf16.mxu0 0
    %3885 = vmatmul.mubr.bf16.gmra.mxu0 %v3510
    %v3886 = vpop.f32.mrf.mxu0
    %v3887 = vadd.f32 %v3563, %v3886
    %v3888 = vpop.f32.mrf.mxu0
    %v3889 = vpop.f32.mrf.mxu0
    %v3890 = vadd.f32 %v3563, %v3889
    %v3891 = vpop.f32.mrf.mxu0
    %3892 = vmatprep.mubr.bf16.mxu0 0
    %3893 = vmatmul.mubr.bf16.gmra.mxu0 %v3511
    %v3894 = vpop.f32.mrf.mxu0
    %v3895 = vadd.f32 %v3563, %v3894
    %v3896 = vpop.f32.mrf.mxu0
    %v3897 = vpop.f32.mrf.mxu0
    %v3898 = vadd.f32 %v3563, %v3897
    %v3899 = vpop.f32.mrf.mxu0
    %3900 = vmatprep.mubr.bf16.mxu0 0
    %3901 = vmatmul.mubr.bf16.gmra.mxu0 %v3512
    %v3902 = vpop.f32.mrf.mxu0
    %v3903 = vadd.f32 %v3563, %v3902
    %v3904 = vpop.f32.mrf.mxu0
    %v3905 = vpop.f32.mrf.mxu0
    %v3906 = vadd.f32 %v3563, %v3905
    %v3907 = vpop.f32.mrf.mxu0
    %3908 = vmatprep.mubr.bf16.mxu0 0
    %3909 = vmatmul.mubr.bf16.gmra.mxu0 %v3513
    %v3910 = vpop.f32.mrf.mxu0
    %v3911 = vadd.f32 %v3563, %v3910
    %v3912 = vpop.f32.mrf.mxu0
    %v3913 = vpop.f32.mrf.mxu0
    %v3914 = vadd.f32 %v3563, %v3913
    %v3915 = vpop.f32.mrf.mxu0
    %3916 = vmatprep.mubr.bf16.mxu0 0
    %3917 = vmatmul.mubr.bf16.gmra.mxu0 %v3514
    %v3918 = vpop.f32.mrf.mxu0
    %v3919 = vadd.f32 %v3563, %v3918
    %v3920 = vpop.f32.mrf.mxu0
    %v3921 = vpop.f32.mrf.mxu0
    %v3922 = vadd.f32 %v3563, %v3921
    %v3923 = vpop.f32.mrf.mxu0
    %3924 = vmatprep.mubr.bf16.mxu0 0
    %3925 = vmatmul.mubr.bf16.gmra.mxu0 %v3515
    %v3926 = vpop.f32.mrf.mxu0
    %v3927 = vadd.f32 %v3563, %v3926
    %v3928 = vpop.f32.mrf.mxu0
    %v3929 = vpop.f32.mrf.mxu0
    %v3930 = vadd.f32 %v3563, %v3929
    %v3931 = vpop.f32.mrf.mxu0
    %3932 = vmatprep.mubr.bf16.mxu0 0
    %3933 = vmatmul.mubr.bf16.gmra.mxu0 %v3516
    %v3934 = vpop.f32.mrf.mxu0
    %v3935 = vadd.f32 %v3563, %v3934
    %v3936 = vpop.f32.mrf.mxu0
    %v3937 = vpop.f32.mrf.mxu0
    %v3938 = vadd.f32 %v3563, %v3937
    %v3939 = vpop.f32.mrf.mxu0
    %3940 = vmatprep.mubr.bf16.mxu0 0
    %3941 = vmatmul.mubr.bf16.gmra.mxu0 %v3517
    %v3942 = vpop.f32.mrf.mxu0
    %v3943 = vadd.f32 %v3563, %v3942
    %v3944 = vpop.f32.mrf.mxu0
    %v3945 = vpop.f32.mrf.mxu0
    %v3946 = vadd.f32 %v3563, %v3945
    %v3947 = vpop.f32.mrf.mxu0
    %3948 = vmatprep.mubr.bf16.mxu0 0
    %3949 = vmatmul.mubr.bf16.gmra.mxu0 %v3518
    %v3950 = vpop.f32.mrf.mxu0
    %v3951 = vadd.f32 %v3563, %v3950
    %v3952 = vpop.f32.mrf.mxu0
    %v3953 = vpop.f32.mrf.mxu0
    %v3954 = vadd.f32 %v3563, %v3953
    %v3955 = vpop.f32.mrf.mxu0
    %3956 = vmatprep.mubr.bf16.mxu0 0
    %3957 = vmatmul.mubr.bf16.gmra.mxu0 %v3519
    %v3958 = vpop.f32.mrf.mxu0
    %v3959 = vadd.f32 %v3563, %v3958
    %v3960 = vpop.f32.mrf.mxu0
    %v3961 = vpop.f32.mrf.mxu0
    %v3962 = vadd.f32 %v3563, %v3961
    %v3963 = vpop.f32.mrf.mxu0
    %3964 = vmatprep.mubr.bf16.mxu0 0
    %3965 = vmatmul.mubr.bf16.gmra.mxu0 %v3520
    %v3966 = vpop.f32.mrf.mxu0
    %v3967 = vadd.f32 %v3563, %v3966
    %v3968 = vpop.f32.mrf.mxu0
    %v3969 = vpop.f32.mrf.mxu0
    %v3970 = vadd.f32 %v3563, %v3969
    %v3971 = vpop.f32.mrf.mxu0
    %3972 = vmatprep.mubr.bf16.mxu0 0
    %3973 = vmatmul.mubr.bf16.gmra.mxu0 %v3521
    %v3974 = vpop.f32.mrf.mxu0
    %v3975 = vadd.f32 %v3563, %v3974
    %v3976 = vpop.f32.mrf.mxu0
    %v3977 = vpop.f32.mrf.mxu0
    %v3978 = vadd.f32 %v3563, %v3977
    %v3979 = vpop.f32.mrf.mxu0
    %3980 = vmatprep.mubr.bf16.mxu0 0
    %3981 = vmatmul.mubr.bf16.gmra.mxu0 %v3522
    %v3982 = vpop.f32.mrf.mxu0
    %v3983 = vadd.f32 %v3563, %v3982
    %v3984 = vpop.f32.mrf.mxu0
    %v3985 = vpop.f32.mrf.mxu0
    %v3986 = vadd.f32 %v3563, %v3985
    %v3987 = vpop.f32.mrf.mxu0
    %3988 = vmatprep.mubr.bf16.mxu0 0
    %3989 = vmatmul.mubr.bf16.gmra.mxu0 %v3523
    %v3990 = vpop.f32.mrf.mxu0
    %v3991 = vadd.f32 %v3563, %v3990
    %v3992 = vpop.f32.mrf.mxu0
    %v3993 = vpop.f32.mrf.mxu0
    %v3994 = vadd.f32 %v3563, %v3993
    %v3995 = vpop.f32.mrf.mxu0
    %3996 = vmatprep.mubr.bf16.mxu0 0
    %3997 = vmatmul.mubr.bf16.gmra.mxu0 %v3524
    %v3998 = vpop.f32.mrf.mxu0
    %v3999 = vadd.f32 %v3563, %v3998
    %v4000 = vpop.f32.mrf.mxu0
    %v4001 = vpop.f32.mrf.mxu0
    %v4002 = vadd.f32 %v3563, %v4001
    %v4003 = vpop.f32.mrf.mxu0
    %4004 = vmatprep.mubr.bf16.mxu0 0
    %4005 = vmatmul.mubr.bf16.gmra.mxu0 %v3525
    %v4006 = vpop.f32.mrf.mxu0
    %v4007 = vadd.f32 %v3563, %v4006
    %v4008 = vpop.f32.mrf.mxu0
    %v4009 = vpop.f32.mrf.mxu0
    %v4010 = vadd.f32 %v3563, %v4009
    %v4011 = vpop.f32.mrf.mxu0
    %4012 = vmatprep.mubr.bf16.mxu0 0
    %4013 = vmatmul.mubr.bf16.gmra.mxu0 %v3526
    %v4014 = vpop.f32.mrf.mxu0
    %v4015 = vadd.f32 %v3563, %v4014
    %v4016 = vpop.f32.mrf.mxu0
    %v4017 = vpop.f32.mrf.mxu0
    %v4018 = vadd.f32 %v3563, %v4017
    %v4019 = vpop.f32.mrf.mxu0
    %4020 = vmatprep.mubr.bf16.mxu0 0
    %4021 = vmatmul.mubr.bf16.gmra.mxu0 %v3527
    %v4022 = vpop.f32.mrf.mxu0
    %v4023 = vadd.f32 %v3563, %v4022
    %v4024 = vpop.f32.mrf.mxu0
    %v4025 = vpop.f32.mrf.mxu0
    %v4026 = vadd.f32 %v3563, %v4025
    %v4027 = vpop.f32.mrf.mxu0
    %4028 = vmatprep.mubr.bf16.mxu0 0
    %4029 = vmatmul.mubr.bf16.gmra.mxu0 %v3528
    %v4030 = vpop.f32.mrf.mxu0
    %v4031 = vadd.f32 %v3563, %v4030
    %v4032 = vpop.f32.mrf.mxu0
    %v4033 = vpop.f32.mrf.mxu0
    %v4034 = vadd.f32 %v3563, %v4033
    %v4035 = vpop.f32.mrf.mxu0
    %4036 = vmatprep.mubr.bf16.mxu0 0
    %4037 = vmatmul.mubr.bf16.gmra.mxu0 %v3529
    %v4038 = vpop.f32.mrf.mxu0
    %v4039 = vadd.f32 %v3563, %v4038
    %v4040 = vpop.f32.mrf.mxu0
    %v4041 = vpop.f32.mrf.mxu0
    %v4042 = vadd.f32 %v3563, %v4041
    %v4043 = vpop.f32.mrf.mxu0
    %4044 = vmatprep.mubr.bf16.mxu0 0
    %4045 = vmatmul.mubr.bf16.gmra.mxu0 %v3530
    %v4046 = vpop.f32.mrf.mxu0
    %v4047 = vadd.f32 %v3563, %v4046
    %v4048 = vpop.f32.mrf.mxu0
    %v4049 = vpop.f32.mrf.mxu0
    %v4050 = vadd.f32 %v3563, %v4049
    %v4051 = vpop.f32.mrf.mxu0
    %4052 = vmatprep.mubr.bf16.mxu0 0
    %4053 = vmatmul.mubr.bf16.gmra.mxu0 %v3531
    %v4054 = vpop.f32.mrf.mxu0
    %v4055 = vadd.f32 %v3563, %v4054
    %v4056 = vpop.f32.mrf.mxu0
    %v4057 = vpop.f32.mrf.mxu0
    %v4058 = vadd.f32 %v3563, %v4057
    %v4059 = vpop.f32.mrf.mxu0
    %4060 = vmatprep.mubr.bf16.mxu0 0
    %4061 = vmatmul.mubr.bf16.gmra.mxu0 %v3532
    %v4062 = vpop.f32.mrf.mxu0
    %v4063 = vadd.f32 %v3563, %v4062
    %v4064 = vpop.f32.mrf.mxu0
    %v4065 = vpop.f32.mrf.mxu0
    %v4066 = vadd.f32 %v3563, %v4065
    %v4067 = vpop.f32.mrf.mxu0
    %4068 = vmatprep.mubr.bf16.mxu0 0
    %4069 = vmatmul.mubr.bf16.gmra.mxu0 %v3533
    %v4070 = vpop.f32.mrf.mxu0
    %v4071 = vadd.f32 %v3563, %v4070
    %v4072 = vpop.f32.mrf.mxu0
    %v4073 = vpop.f32.mrf.mxu0
    %v4074 = vadd.f32 %v3563, %v4073
    %v4075 = vpop.f32.mrf.mxu0
    %4076 = vmatprep.mubr.bf16.mxu0 0
    %4077 = vmatmul.mubr.bf16.gmra.mxu0 %v3534
    %v4078 = vpop.f32.mrf.mxu0
    %v4079 = vadd.f32 %v3563, %v4078
    %v4080 = vpop.f32.mrf.mxu0
    %v4081 = vpop.f32.mrf.mxu0
    %v4082 = vadd.f32 %v3563, %v4081
    %v4083 = vpop.f32.mrf.mxu0
    %4084 = vmatprep.mubr.bf16.mxu0 0
    %4085 = vmatmul.mubr.bf16.gmra.mxu0 %v3535
    %v4086 = vpop.f32.mrf.mxu0
    %v4087 = vadd.f32 %v3563, %v4086
    %v4088 = vpop.f32.mrf.mxu0
    %v4089 = vpop.f32.mrf.mxu0
    %v4090 = vadd.f32 %v3563, %v4089
    %v4091 = vpop.f32.mrf.mxu0
    %4092 = vmatprep.mubr.bf16.mxu0 0
    %4093 = vmatmul.mubr.bf16.gmra.mxu0 %v3536
    %v4094 = vpop.f32.mrf.mxu0
    %v4095 = vadd.f32 %v3563, %v4094
    %v4096 = vpop.f32.mrf.mxu0
    %v4097 = vpop.f32.mrf.mxu0
    %v4098 = vadd.f32 %v3563, %v4097
    %v4099 = vpop.f32.mrf.mxu0
    %4100 = vmatprep.mubr.bf16.mxu0 0
    %4101 = vmatmul.mubr.bf16.gmra.mxu0 %v3537
    %v4102 = vpop.f32.mrf.mxu0
    %v4103 = vadd.f32 %v3563, %v4102
    %v4104 = vpop.f32.mrf.mxu0
    %v4105 = vpop.f32.mrf.mxu0
    %v4106 = vadd.f32 %v3563, %v4105
    %v4107 = vpop.f32.mrf.mxu0
    %4108 = vmatprep.mubr.bf16.mxu0 0
    %4109 = vmatmul.mubr.bf16.gmra.mxu0 %v3538
    %v4110 = vpop.f32.mrf.mxu0
    %v4111 = vadd.f32 %v3563, %v4110
    %v4112 = vpop.f32.mrf.mxu0
    %v4113 = vpop.f32.mrf.mxu0
    %v4114 = vadd.f32 %v3563, %v4113
    %v4115 = vpop.f32.mrf.mxu0
    %4116 = vmatprep.mubr.bf16.mxu0 0
    %4117 = vmatmul.mubr.bf16.gmra.mxu0 %v3539
    %v4118 = vpop.f32.mrf.mxu0
    %v4119 = vadd.f32 %v3563, %v4118
    %v4120 = vpop.f32.mrf.mxu0
    %v4121 = vpop.f32.mrf.mxu0
    %v4122 = vadd.f32 %v3563, %v4121
    %v4123 = vpop.f32.mrf.mxu0
    %4124 = vmatprep.mubr.bf16.mxu0 0
    %4125 = vmatmul.mubr.bf16.gmra.mxu0 %v3540
    %v4126 = vpop.f32.mrf.mxu0
    %v4127 = vadd.f32 %v3563, %v4126
    %v4128 = vpop.f32.mrf.mxu0
    %v4129 = vpop.f32.mrf.mxu0
    %v4130 = vadd.f32 %v3563, %v4129
    %v4131 = vpop.f32.mrf.mxu0
    %4132 = vmatprep.mubr.bf16.mxu0 0
    %4133 = vmatmul.mubr.bf16.gmra.mxu0 %v3541
    %v4134 = vpop.f32.mrf.mxu0
    %v4135 = vadd.f32 %v3563, %v4134
    %v4136 = vpop.f32.mrf.mxu0
    %v4137 = vpop.f32.mrf.mxu0
    %v4138 = vadd.f32 %v3563, %v4137
    %v4139 = vpop.f32.mrf.mxu0
    %4140 = vmatprep.mubr.bf16.mxu0 0
    %4141 = vmatmul.mubr.bf16.gmra.mxu0 %v3542
    %v4142 = vpop.f32.mrf.mxu0
    %v4143 = vadd.f32 %v3563, %v4142
    %v4144 = vpop.f32.mrf.mxu0
    %v4145 = vpop.f32.mrf.mxu0
    %v4146 = vadd.f32 %v3563, %v4145
    %v4147 = vpop.f32.mrf.mxu0
    %4148 = vdwg.mxu0
    %v4149 = vpack.c.bf16 %v3650, %v3647
    %v4150 = vpack.c.bf16 %v3658, %v3655
    %v4151 = vpack.c.bf16 %v3666, %v3663
    %v4152 = vpack.c.bf16 %v3674, %v3671
    %v4153 = vpack.c.bf16 %v3682, %v3679
    %v4154 = vpack.c.bf16 %v3690, %v3687
    %v4155 = vpack.c.bf16 %v3698, %v3695
    %v4156 = vpack.c.bf16 %v3706, %v3703
    %v4157 = vpack.c.bf16 %v3714, %v3711
    %v4158 = vpack.c.bf16 %v3722, %v3719
    %v4159 = vpack.c.bf16 %v3730, %v3727
    %v4160 = vpack.c.bf16 %v3738, %v3735
    %v4161 = vpack.c.bf16 %v3746, %v3743
    %v4162 = vpack.c.bf16 %v3754, %v3751
    %v4163 = vpack.c.bf16 %v3762, %v3759
    %v4164 = vpack.c.bf16 %v3770, %v3767
    %v4165 = vpack.c.bf16 %v3778, %v3775
    %v4166 = vpack.c.bf16 %v3786, %v3783
    %v4167 = vpack.c.bf16 %v3794, %v3791
    %v4168 = vpack.c.bf16 %v3802, %v3799
    %v4169 = vpack.c.bf16 %v3810, %v3807
    %v4170 = vpack.c.bf16 %v3818, %v3815
    %v4171 = vpack.c.bf16 %v3826, %v3823
    %v4172 = vpack.c.bf16 %v3834, %v3831
    %v4173 = vpack.c.bf16 %v3842, %v3839
    %v4174 = vpack.c.bf16 %v3850, %v3847
    %v4175 = vpack.c.bf16 %v3858, %v3855
    %v4176 = vpack.c.bf16 %v3866, %v3863
    %v4177 = vpack.c.bf16 %v3874, %v3871
    %v4178 = vpack.c.bf16 %v3882, %v3879
    %v4179 = vpack.c.bf16 %v3890, %v3887
    %v4180 = vpack.c.bf16 %v3898, %v3895
    %v4181 = vpack.c.bf16 %v3906, %v3903
    %v4182 = vpack.c.bf16 %v3914, %v3911
    %v4183 = vpack.c.bf16 %v3922, %v3919
    %v4184 = vpack.c.bf16 %v3930, %v3927
    %v4185 = vpack.c.bf16 %v3938, %v3935
    %v4186 = vpack.c.bf16 %v3946, %v3943
    %v4187 = vpack.c.bf16 %v3954, %v3951
    %v4188 = vpack.c.bf16 %v3962, %v3959
    %v4189 = vpack.c.bf16 %v3970, %v3967
    %v4190 = vpack.c.bf16 %v3978, %v3975
    %v4191 = vpack.c.bf16 %v3986, %v3983
    %v4192 = vpack.c.bf16 %v3994, %v3991
    %v4193 = vpack.c.bf16 %v4002, %v3999
    %v4194 = vpack.c.bf16 %v4010, %v4007
    %v4195 = vpack.c.bf16 %v4018, %v4015
    %v4196 = vpack.c.bf16 %v4026, %v4023
    %v4197 = vpack.c.bf16 %v4034, %v4031
    %v4198 = vpack.c.bf16 %v4042, %v4039
    %v4199 = vpack.c.bf16 %v4050, %v4047
    %v4200 = vpack.c.bf16 %v4058, %v4055
    %v4201 = vpack.c.bf16 %v4066, %v4063
    %v4202 = vpack.c.bf16 %v4074, %v4071
    %v4203 = vpack.c.bf16 %v4082, %v4079
    %v4204 = vpack.c.bf16 %v4090, %v4087
    %v4205 = vpack.c.bf16 %v4098, %v4095
    %v4206 = vpack.c.bf16 %v4106, %v4103
    %v4207 = vpack.c.bf16 %v4114, %v4111
    %v4208 = vpack.c.bf16 %v4122, %v4119
    %v4209 = vpack.c.bf16 %v4130, %v4127
    %v4210 = vpack.c.bf16 %v4138, %v4135
    %v4211 = vpack.c.bf16 %v4146, %v4143
    %v4212 = vmul.bf16 %v4149, 1009007652
    %v4213 = vmul.bf16 %v4150, 1009007652
    %v4214 = vmul.bf16 %v4151, 1009007652
    %v4215 = vmul.bf16 %v4152, 1009007652
    %v4216 = vmul.bf16 %v4153, 1009007652
    %v4217 = vmul.bf16 %v4154, 1009007652
    %v4218 = vmul.bf16 %v4155, 1009007652
    %v4219 = vmul.bf16 %v4156, 1009007652
    %v4220 = vmul.bf16 %v4157, 1009007652
    %v4221 = vmul.bf16 %v4158, 1009007652
    %v4222 = vmul.bf16 %v4159, 1009007652
    %v4223 = vmul.bf16 %v4160, 1009007652
    %v4224 = vmul.bf16 %v4161, 1009007652
    %v4225 = vmul.bf16 %v4162, 1009007652
    %v4226 = vmul.bf16 %v4163, 1009007652
    %v4227 = vmul.bf16 %v4164, 1009007652
    %v4228 = vmul.bf16 %v4165, 1009007652
    %v4229 = vmul.bf16 %v4166, 1009007652
    %v4230 = vmul.bf16 %v4167, 1009007652
    %v4231 = vmul.bf16 %v4168, 1009007652
    %v4232 = vmul.bf16 %v4169, 1009007652
    %v4233 = vmul.bf16 %v4170, 1009007652
    %v4234 = vmul.bf16 %v4171, 1009007652
    %v4235 = vmul.bf16 %v4172, 1009007652
    %v4236 = vmul.bf16 %v4173, 1009007652
    %v4237 = vmul.bf16 %v4174, 1009007652
    %v4238 = vmul.bf16 %v4175, 1009007652
    %v4239 = vmul.bf16 %v4176, 1009007652
    %v4240 = vmul.bf16 %v4177, 1009007652
    %v4241 = vmul.bf16 %v4178, 1009007652
    %v4242 = vmul.bf16 %v4179, 1009007652
    %v4243 = vmul.bf16 %v4180, 1009007652
    %v4244 = vmul.bf16 %v4181, 1009007652
    %v4245 = vmul.bf16 %v4182, 1009007652
    %v4246 = vmul.bf16 %v4183, 1009007652
    %v4247 = vmul.bf16 %v4184, 1009007652
    %v4248 = vmul.bf16 %v4185, 1009007652
    %v4249 = vmul.bf16 %v4186, 1009007652
    %v4250 = vmul.bf16 %v4187, 1009007652
    %v4251 = vmul.bf16 %v4188, 1009007652
    %v4252 = vmul.bf16 %v4189, 1009007652
    %v4253 = vmul.bf16 %v4190, 1009007652
    %v4254 = vmul.bf16 %v4191, 1009007652
    %v4255 = vmul.bf16 %v4192, 1009007652
    %v4256 = vmul.bf16 %v4193, 1009007652
    %v4257 = vmul.bf16 %v4194, 1009007652
    %v4258 = vmul.bf16 %v4195, 1009007652
    %v4259 = vmul.bf16 %v4196, 1009007652
    %v4260 = vmul.bf16 %v4197, 1009007652
    %v4261 = vmul.bf16 %v4198, 1009007652
    %v4262 = vmul.bf16 %v4199, 1009007652
    %v4263 = vmul.bf16 %v4200, 1009007652
    %v4264 = vmul.bf16 %v4201, 1009007652
    %v4265 = vmul.bf16 %v4202, 1009007652
    %v4266 = vmul.bf16 %v4203, 1009007652
    %v4267 = vmul.bf16 %v4204, 1009007652
    %v4268 = vmul.bf16 %v4205, 1009007652
    %v4269 = vmul.bf16 %v4206, 1009007652
    %v4270 = vmul.bf16 %v4207, 1009007652
    %v4271 = vmul.bf16 %v4208, 1009007652
    %v4272 = vmul.bf16 %v4209, 1009007652
    %v4273 = vmul.bf16 %v4210, 1009007652
    %v4274 = vmul.bf16 %v4211, 1009007652
    %v4275 = vmax.bf16 %v4149, %v4212
    %v4276 = vmax.bf16 %v4150, %v4213
    %v4277 = vmax.bf16 %v4151, %v4214
    %v4278 = vmax.bf16 %v4152, %v4215
    %v4279 = vmax.bf16 %v4153, %v4216
    %v4280 = vmax.bf16 %v4154, %v4217
    %v4281 = vmax.bf16 %v4155, %v4218
    %v4282 = vmax.bf16 %v4156, %v4219
    %v4283 = vmax.bf16 %v4157, %v4220
    %v4284 = vmax.bf16 %v4158, %v4221
    %v4285 = vmax.bf16 %v4159, %v4222
    %v4286 = vmax.bf16 %v4160, %v4223
    %v4287 = vmax.bf16 %v4161, %v4224
    %v4288 = vmax.bf16 %v4162, %v4225
    %v4289 = vmax.bf16 %v4163, %v4226
    %v4290 = vmax.bf16 %v4164, %v4227
    %v4291 = vmax.bf16 %v4165, %v4228
    %v4292 = vmax.bf16 %v4166, %v4229
    %v4293 = vmax.bf16 %v4167, %v4230
    %v4294 = vmax.bf16 %v4168, %v4231
    %v4295 = vmax.bf16 %v4169, %v4232
    %v4296 = vmax.bf16 %v4170, %v4233
    %v4297 = vmax.bf16 %v4171, %v4234
    %v4298 = vmax.bf16 %v4172, %v4235
    %v4299 = vmax.bf16 %v4173, %v4236
    %v4300 = vmax.bf16 %v4174, %v4237
    %v4301 = vmax.bf16 %v4175, %v4238
    %v4302 = vmax.bf16 %v4176, %v4239
    %v4303 = vmax.bf16 %v4177, %v4240
    %v4304 = vmax.bf16 %v4178, %v4241
    %v4305 = vmax.bf16 %v4179, %v4242
    %v4306 = vmax.bf16 %v4180, %v4243
    %v4307 = vmax.bf16 %v4181, %v4244
    %v4308 = vmax.bf16 %v4182, %v4245
    %v4309 = vmax.bf16 %v4183, %v4246
    %v4310 = vmax.bf16 %v4184, %v4247
    %v4311 = vmax.bf16 %v4185, %v4248
    %v4312 = vmax.bf16 %v4186, %v4249
    %v4313 = vmax.bf16 %v4187, %v4250
    %v4314 = vmax.bf16 %v4188, %v4251
    %v4315 = vmax.bf16 %v4189, %v4252
    %v4316 = vmax.bf16 %v4190, %v4253
    %v4317 = vmax.bf16 %v4191, %v4254
    %v4318 = vmax.bf16 %v4192, %v4255
    %v4319 = vmax.bf16 %v4193, %v4256
    %v4320 = vmax.bf16 %v4194, %v4257
    %v4321 = vmax.bf16 %v4195, %v4258
    %v4322 = vmax.bf16 %v4196, %v4259
    %v4323 = vmax.bf16 %v4197, %v4260
    %v4324 = vmax.bf16 %v4198, %v4261
    %v4325 = vmax.bf16 %v4199, %v4262
    %v4326 = vmax.bf16 %v4200, %v4263
    %v4327 = vmax.bf16 %v4201, %v4264
    %v4328 = vmax.bf16 %v4202, %v4265
    %v4329 = vmax.bf16 %v4203, %v4266
    %v4330 = vmax.bf16 %v4204, %v4267
    %v4331 = vmax.bf16 %v4205, %v4268
    %v4332 = vmax.bf16 %v4206, %v4269
    %v4333 = vmax.bf16 %v4207, %v4270
    %v4334 = vmax.bf16 %v4208, %v4271
    %v4335 = vmax.bf16 %v4209, %v4272
    %v4336 = vmax.bf16 %v4210, %v4273
    %v4337 = vmax.bf16 %v4211, %v4274
    %s4338 = scalar_lea.vmem %s2, 128
    %v4339 = vld [vmem:[%s4338] sm:$0xf]
    %v4340 = vld [vmem:[%s4338 + $0x4] sm:$0xf]
    %v4341 = vld [vmem:[%s4338 + $0x8] sm:$0xf]
    %v4342 = vld [vmem:[%s4338 + $0xc] sm:$0xf]
    %v4343 = vld [vmem:[%s4338 + $0x10] sm:$0xf]
    %v4344 = vld [vmem:[%s4338 + $0x14] sm:$0xf]
    %v4345 = vld [vmem:[%s4338 + $0x18] sm:$0xf]
    %v4346 = vld [vmem:[%s4338 + $0x1c] sm:$0xf]
    %v4347 = vld [vmem:[%s4338 + $0x20] sm:$0xf]
    %v4348 = vld [vmem:[%s4338 + $0x24] sm:$0xf]
    %v4349 = vld [vmem:[%s4338 + $0x28] sm:$0xf]
    %v4350 = vld [vmem:[%s4338 + $0x2c] sm:$0xf]
    %v4351 = vld [vmem:[%s4338 + $0x30] sm:$0xf]
    %v4352 = vld [vmem:[%s4338 + $0x34] sm:$0xf]
    %v4353 = vld [vmem:[%s4338 + $0x38] sm:$0xf]
    %v4354 = vld [vmem:[%s4338 + $0x3c] sm:$0xf]
    %v4355 = vlaneseq
    %v4356 = vshrl.u32 %v4355, 7
    %v4357 = vsub.s32 0, %v4356
    %v4358 = vrot.slane %v147, %v4357
    %v4375 = vunpack.c.l.b16 %v4339
    %v4376 = vunpack.c.l.b16 %v4340
    %v4377 = vunpack.c.l.b16 %v4341
    %v4378 = vunpack.c.l.b16 %v4342
    %v4379 = vunpack.c.l.b16 %v4343
    %v4380 = vunpack.c.l.b16 %v4344
    %v4381 = vunpack.c.l.b16 %v4345
    %v4382 = vunpack.c.l.b16 %v4346
    %v4383 = vunpack.c.l.b16 %v4347
    %v4384 = vunpack.c.l.b16 %v4348
    %v4385 = vunpack.c.l.b16 %v4349
    %v4386 = vunpack.c.l.b16 %v4350
    %v4387 = vunpack.c.l.b16 %v4351
    %v4388 = vunpack.c.l.b16 %v4352
    %v4389 = vunpack.c.l.b16 %v4353
    %v4390 = vunpack.c.l.b16 %v4354
    %v4391 = vpack.c.b16 %v4376, %v4375
    %v4392 = vpack.c.b16 %v4378, %v4377
    %v4393 = vpack.c.b16 %v4380, %v4379
    %v4394 = vpack.c.b16 %v4382, %v4381
    %v4395 = vpack.c.b16 %v4384, %v4383
    %v4396 = vpack.c.b16 %v4386, %v4385
    %v4397 = vpack.c.b16 %v4388, %v4387
    %v4398 = vpack.c.b16 %v4390, %v4389
    %4407 = vmatprep.subr.bf16.mxu0 0
    %4408 = vmatpush1.bf16.msra.mxu0 %v4398
    %4409 = vmatprep.subr.bf16.mxu0 0
    %4410 = vmatpush1.bf16.msra.mxu0 %v4397
    %4411 = vmatprep.subr.bf16.mxu0 0
    %4412 = vmatpush1.bf16.msra.mxu0 %v4396
    %4413 = vmatprep.subr.bf16.mxu0 0
    %4414 = vmatpush1.bf16.msra.mxu0 %v4395
    %4415 = vmatprep.subr.bf16.mxu0 0
    %4416 = vmatpush1.bf16.msra.mxu0 %v4394
    %4417 = vmatprep.subr.bf16.mxu0 0
    %4418 = vmatpush1.bf16.msra.mxu0 %v4393
    %4419 = vmatprep.subr.bf16.mxu0 0
    %4420 = vmatpush1.bf16.msra.mxu0 %v4392
    %4421 = vmatprep.subr.bf16.mxu0 0
    %4422 = vmatpush1.bf16.msra.mxu0 %v4391
    %4423 = vmatprep.subr.bf16.mxu0 0
    %4424 = vmatpush2.bf16.msra.mxu0 0
    %4425 = vmatprep.subr.bf16.mxu0 0
    %4426 = vmatpush2.bf16.msra.mxu0 0
    %4427 = vmatprep.subr.bf16.mxu0 0
    %4428 = vmatpush2.bf16.msra.mxu0 0
    %4429 = vmatprep.subr.bf16.mxu0 0
    %4430 = vmatpush2.bf16.msra.mxu0 0
    %4431 = vmatprep.subr.bf16.mxu0 0
    %4432 = vmatpush2.bf16.msra.mxu0 0
    %4433 = vmatprep.subr.bf16.mxu0 0
    %4434 = vmatpush2.bf16.msra.mxu0 0
    %4435 = vmatprep.subr.bf16.mxu0 0
    %4436 = vmatpush2.bf16.msra.mxu0 0
    %4437 = vmatprep.subr.bf16.mxu0 0
    %4438 = vmatpush2.bf16.msra.mxu0 0
    %4439 = vmatprep.mubr.bf16.mxu0 0
    %4440 = vmatmul.mubr.bf16.gmra.mxu0 %v4275
    %v4441 = vpop.f32.mrf.mxu0
    %v4442 = vadd.f32 %v4358, %v4441
    %v4443 = vpop.f32.mrf.mxu0
    %v4444 = vpop.f32.mrf.mxu0
    %v4445 = vadd.f32 %v4358, %v4444
    %v4446 = vpop.f32.mrf.mxu0
    %4447 = vmatprep.mubr.bf16.mxu0 0
    %4448 = vmatmul.mubr.bf16.gmra.mxu0 %v4276
    %v4449 = vpop.f32.mrf.mxu0
    %v4450 = vadd.f32 %v4358, %v4449
    %v4451 = vpop.f32.mrf.mxu0
    %v4452 = vpop.f32.mrf.mxu0
    %v4453 = vadd.f32 %v4358, %v4452
    %v4454 = vpop.f32.mrf.mxu0
    %4455 = vmatprep.mubr.bf16.mxu0 0
    %4456 = vmatmul.mubr.bf16.gmra.mxu0 %v4277
    %v4457 = vpop.f32.mrf.mxu0
    %v4458 = vadd.f32 %v4358, %v4457
    %v4459 = vpop.f32.mrf.mxu0
    %v4460 = vpop.f32.mrf.mxu0
    %v4461 = vadd.f32 %v4358, %v4460
    %v4462 = vpop.f32.mrf.mxu0
    %4463 = vmatprep.mubr.bf16.mxu0 0
    %4464 = vmatmul.mubr.bf16.gmra.mxu0 %v4278
    %v4465 = vpop.f32.mrf.mxu0
    %v4466 = vadd.f32 %v4358, %v4465
    %v4467 = vpop.f32.mrf.mxu0
    %v4468 = vpop.f32.mrf.mxu0
    %v4469 = vadd.f32 %v4358, %v4468
    %v4470 = vpop.f32.mrf.mxu0
    %4471 = vmatprep.mubr.bf16.mxu0 0
    %4472 = vmatmul.mubr.bf16.gmra.mxu0 %v4279
    %v4473 = vpop.f32.mrf.mxu0
    %v4474 = vadd.f32 %v4358, %v4473
    %v4475 = vpop.f32.mrf.mxu0
    %v4476 = vpop.f32.mrf.mxu0
    %v4477 = vadd.f32 %v4358, %v4476
    %v4478 = vpop.f32.mrf.mxu0
    %4479 = vmatprep.mubr.bf16.mxu0 0
    %4480 = vmatmul.mubr.bf16.gmra.mxu0 %v4280
    %v4481 = vpop.f32.mrf.mxu0
    %v4482 = vadd.f32 %v4358, %v4481
    %v4483 = vpop.f32.mrf.mxu0
    %v4484 = vpop.f32.mrf.mxu0
    %v4485 = vadd.f32 %v4358, %v4484
    %v4486 = vpop.f32.mrf.mxu0
    %4487 = vmatprep.mubr.bf16.mxu0 0
    %4488 = vmatmul.mubr.bf16.gmra.mxu0 %v4281
    %v4489 = vpop.f32.mrf.mxu0
    %v4490 = vadd.f32 %v4358, %v4489
    %v4491 = vpop.f32.mrf.mxu0
    %v4492 = vpop.f32.mrf.mxu0
    %v4493 = vadd.f32 %v4358, %v4492
    %v4494 = vpop.f32.mrf.mxu0
    %4495 = vmatprep.mubr.bf16.mxu0 0
    %4496 = vmatmul.mubr.bf16.gmra.mxu0 %v4282
    %v4497 = vpop.f32.mrf.mxu0
    %v4498 = vadd.f32 %v4358, %v4497
    %v4499 = vpop.f32.mrf.mxu0
    %v4500 = vpop.f32.mrf.mxu0
    %v4501 = vadd.f32 %v4358, %v4500
    %v4502 = vpop.f32.mrf.mxu0
    %4503 = vmatprep.mubr.bf16.mxu0 0
    %4504 = vmatmul.mubr.bf16.gmra.mxu0 %v4283
    %v4505 = vpop.f32.mrf.mxu0
    %v4506 = vadd.f32 %v4358, %v4505
    %v4507 = vpop.f32.mrf.mxu0
    %v4508 = vpop.f32.mrf.mxu0
    %v4509 = vadd.f32 %v4358, %v4508
    %v4510 = vpop.f32.mrf.mxu0
    %4511 = vmatprep.mubr.bf16.mxu0 0
    %4512 = vmatmul.mubr.bf16.gmra.mxu0 %v4284
    %v4513 = vpop.f32.mrf.mxu0
    %v4514 = vadd.f32 %v4358, %v4513
    %v4515 = vpop.f32.mrf.mxu0
    %v4516 = vpop.f32.mrf.mxu0
    %v4517 = vadd.f32 %v4358, %v4516
    %v4518 = vpop.f32.mrf.mxu0
    %4519 = vmatprep.mubr.bf16.mxu0 0
    %4520 = vmatmul.mubr.bf16.gmra.mxu0 %v4285
    %v4521 = vpop.f32.mrf.mxu0
    %v4522 = vadd.f32 %v4358, %v4521
    %v4523 = vpop.f32.mrf.mxu0
    %v4524 = vpop.f32.mrf.mxu0
    %v4525 = vadd.f32 %v4358, %v4524
    %v4526 = vpop.f32.mrf.mxu0
    %4527 = vmatprep.mubr.bf16.mxu0 0
    %4528 = vmatmul.mubr.bf16.gmra.mxu0 %v4286
    %v4529 = vpop.f32.mrf.mxu0
    %v4530 = vadd.f32 %v4358, %v4529
    %v4531 = vpop.f32.mrf.mxu0
    %v4532 = vpop.f32.mrf.mxu0
    %v4533 = vadd.f32 %v4358, %v4532
    %v4534 = vpop.f32.mrf.mxu0
    %4535 = vmatprep.mubr.bf16.mxu0 0
    %4536 = vmatmul.mubr.bf16.gmra.mxu0 %v4287
    %v4537 = vpop.f32.mrf.mxu0
    %v4538 = vadd.f32 %v4358, %v4537
    %v4539 = vpop.f32.mrf.mxu0
    %v4540 = vpop.f32.mrf.mxu0
    %v4541 = vadd.f32 %v4358, %v4540
    %v4542 = vpop.f32.mrf.mxu0
    %4543 = vmatprep.mubr.bf16.mxu0 0
    %4544 = vmatmul.mubr.bf16.gmra.mxu0 %v4288
    %v4545 = vpop.f32.mrf.mxu0
    %v4546 = vadd.f32 %v4358, %v4545
    %v4547 = vpop.f32.mrf.mxu0
    %v4548 = vpop.f32.mrf.mxu0
    %v4549 = vadd.f32 %v4358, %v4548
    %v4550 = vpop.f32.mrf.mxu0
    %4551 = vmatprep.mubr.bf16.mxu0 0
    %4552 = vmatmul.mubr.bf16.gmra.mxu0 %v4289
    %v4553 = vpop.f32.mrf.mxu0
    %v4554 = vadd.f32 %v4358, %v4553
    %v4555 = vpop.f32.mrf.mxu0
    %v4556 = vpop.f32.mrf.mxu0
    %v4557 = vadd.f32 %v4358, %v4556
    %v4558 = vpop.f32.mrf.mxu0
    %4559 = vmatprep.mubr.bf16.mxu0 0
    %4560 = vmatmul.mubr.bf16.gmra.mxu0 %v4290
    %v4561 = vpop.f32.mrf.mxu0
    %v4562 = vadd.f32 %v4358, %v4561
    %v4563 = vpop.f32.mrf.mxu0
    %v4564 = vpop.f32.mrf.mxu0
    %v4565 = vadd.f32 %v4358, %v4564
    %v4566 = vpop.f32.mrf.mxu0
    %4567 = vmatprep.mubr.bf16.mxu0 0
    %4568 = vmatmul.mubr.bf16.gmra.mxu0 %v4291
    %v4569 = vpop.f32.mrf.mxu0
    %v4570 = vadd.f32 %v4358, %v4569
    %v4571 = vpop.f32.mrf.mxu0
    %v4572 = vpop.f32.mrf.mxu0
    %v4573 = vadd.f32 %v4358, %v4572
    %v4574 = vpop.f32.mrf.mxu0
    %4575 = vmatprep.mubr.bf16.mxu0 0
    %4576 = vmatmul.mubr.bf16.gmra.mxu0 %v4292
    %v4577 = vpop.f32.mrf.mxu0
    %v4578 = vadd.f32 %v4358, %v4577
    %v4579 = vpop.f32.mrf.mxu0
    %v4580 = vpop.f32.mrf.mxu0
    %v4581 = vadd.f32 %v4358, %v4580
    %v4582 = vpop.f32.mrf.mxu0
    %4583 = vmatprep.mubr.bf16.mxu0 0
    %4584 = vmatmul.mubr.bf16.gmra.mxu0 %v4293
    %v4585 = vpop.f32.mrf.mxu0
    %v4586 = vadd.f32 %v4358, %v4585
    %v4587 = vpop.f32.mrf.mxu0
    %v4588 = vpop.f32.mrf.mxu0
    %v4589 = vadd.f32 %v4358, %v4588
    %v4590 = vpop.f32.mrf.mxu0
    %4591 = vmatprep.mubr.bf16.mxu0 0
    %4592 = vmatmul.mubr.bf16.gmra.mxu0 %v4294
    %v4593 = vpop.f32.mrf.mxu0
    %v4594 = vadd.f32 %v4358, %v4593
    %v4595 = vpop.f32.mrf.mxu0
    %v4596 = vpop.f32.mrf.mxu0
    %v4597 = vadd.f32 %v4358, %v4596
    %v4598 = vpop.f32.mrf.mxu0
    %4599 = vmatprep.mubr.bf16.mxu0 0
    %4600 = vmatmul.mubr.bf16.gmra.mxu0 %v4295
    %v4601 = vpop.f32.mrf.mxu0
    %v4602 = vadd.f32 %v4358, %v4601
    %v4603 = vpop.f32.mrf.mxu0
    %v4604 = vpop.f32.mrf.mxu0
    %v4605 = vadd.f32 %v4358, %v4604
    %v4606 = vpop.f32.mrf.mxu0
    %4607 = vmatprep.mubr.bf16.mxu0 0
    %4608 = vmatmul.mubr.bf16.gmra.mxu0 %v4296
    %v4609 = vpop.f32.mrf.mxu0
    %v4610 = vadd.f32 %v4358, %v4609
    %v4611 = vpop.f32.mrf.mxu0
    %v4612 = vpop.f32.mrf.mxu0
    %v4613 = vadd.f32 %v4358, %v4612
    %v4614 = vpop.f32.mrf.mxu0
    %4615 = vmatprep.mubr.bf16.mxu0 0
    %4616 = vmatmul.mubr.bf16.gmra.mxu0 %v4297
    %v4617 = vpop.f32.mrf.mxu0
    %v4618 = vadd.f32 %v4358, %v4617
    %v4619 = vpop.f32.mrf.mxu0
    %v4620 = vpop.f32.mrf.mxu0
    %v4621 = vadd.f32 %v4358, %v4620
    %v4622 = vpop.f32.mrf.mxu0
    %4623 = vmatprep.mubr.bf16.mxu0 0
    %4624 = vmatmul.mubr.bf16.gmra.mxu0 %v4298
    %v4625 = vpop.f32.mrf.mxu0
    %v4626 = vadd.f32 %v4358, %v4625
    %v4627 = vpop.f32.mrf.mxu0
    %v4628 = vpop.f32.mrf.mxu0
    %v4629 = vadd.f32 %v4358, %v4628
    %v4630 = vpop.f32.mrf.mxu0
    %4631 = vmatprep.mubr.bf16.mxu0 0
    %4632 = vmatmul.mubr.bf16.gmra.mxu0 %v4299
    %v4633 = vpop.f32.mrf.mxu0
    %v4634 = vadd.f32 %v4358, %v4633
    %v4635 = vpop.f32.mrf.mxu0
    %v4636 = vpop.f32.mrf.mxu0
    %v4637 = vadd.f32 %v4358, %v4636
    %v4638 = vpop.f32.mrf.mxu0
    %4639 = vmatprep.mubr.bf16.mxu0 0
    %4640 = vmatmul.mubr.bf16.gmra.mxu0 %v4300
    %v4641 = vpop.f32.mrf.mxu0
    %v4642 = vadd.f32 %v4358, %v4641
    %v4643 = vpop.f32.mrf.mxu0
    %v4644 = vpop.f32.mrf.mxu0
    %v4645 = vadd.f32 %v4358, %v4644
    %v4646 = vpop.f32.mrf.mxu0
    %4647 = vmatprep.mubr.bf16.mxu0 0
    %4648 = vmatmul.mubr.bf16.gmra.mxu0 %v4301
    %v4649 = vpop.f32.mrf.mxu0
    %v4650 = vadd.f32 %v4358, %v4649
    %v4651 = vpop.f32.mrf.mxu0
    %v4652 = vpop.f32.mrf.mxu0
    %v4653 = vadd.f32 %v4358, %v4652
    %v4654 = vpop.f32.mrf.mxu0
    %4655 = vmatprep.mubr.bf16.mxu0 0
    %4656 = vmatmul.mubr.bf16.gmra.mxu0 %v4302
    %v4657 = vpop.f32.mrf.mxu0
    %v4658 = vadd.f32 %v4358, %v4657
    %v4659 = vpop.f32.mrf.mxu0
    %v4660 = vpop.f32.mrf.mxu0
    %v4661 = vadd.f32 %v4358, %v4660
    %v4662 = vpop.f32.mrf.mxu0
    %4663 = vmatprep.mubr.bf16.mxu0 0
    %4664 = vmatmul.mubr.bf16.gmra.mxu0 %v4303
    %v4665 = vpop.f32.mrf.mxu0
    %v4666 = vadd.f32 %v4358, %v4665
    %v4667 = vpop.f32.mrf.mxu0
    %v4668 = vpop.f32.mrf.mxu0
    %v4669 = vadd.f32 %v4358, %v4668
    %v4670 = vpop.f32.mrf.mxu0
    %4671 = vmatprep.mubr.bf16.mxu0 0
    %4672 = vmatmul.mubr.bf16.gmra.mxu0 %v4304
    %v4673 = vpop.f32.mrf.mxu0
    %v4674 = vadd.f32 %v4358, %v4673
    %v4675 = vpop.f32.mrf.mxu0
    %v4676 = vpop.f32.mrf.mxu0
    %v4677 = vadd.f32 %v4358, %v4676
    %v4678 = vpop.f32.mrf.mxu0
    %4679 = vmatprep.mubr.bf16.mxu0 0
    %4680 = vmatmul.mubr.bf16.gmra.mxu0 %v4305
    %v4681 = vpop.f32.mrf.mxu0
    %v4682 = vadd.f32 %v4358, %v4681
    %v4683 = vpop.f32.mrf.mxu0
    %v4684 = vpop.f32.mrf.mxu0
    %v4685 = vadd.f32 %v4358, %v4684
    %v4686 = vpop.f32.mrf.mxu0
    %4687 = vmatprep.mubr.bf16.mxu0 0
    %4688 = vmatmul.mubr.bf16.gmra.mxu0 %v4306
    %v4689 = vpop.f32.mrf.mxu0
    %v4690 = vadd.f32 %v4358, %v4689
    %v4691 = vpop.f32.mrf.mxu0
    %v4692 = vpop.f32.mrf.mxu0
    %v4693 = vadd.f32 %v4358, %v4692
    %v4694 = vpop.f32.mrf.mxu0
    %4695 = vmatprep.mubr.bf16.mxu0 0
    %4696 = vmatmul.mubr.bf16.gmra.mxu0 %v4307
    %v4697 = vpop.f32.mrf.mxu0
    %v4698 = vadd.f32 %v4358, %v4697
    %v4699 = vpop.f32.mrf.mxu0
    %v4700 = vpop.f32.mrf.mxu0
    %v4701 = vadd.f32 %v4358, %v4700
    %v4702 = vpop.f32.mrf.mxu0
    %4703 = vmatprep.mubr.bf16.mxu0 0
    %4704 = vmatmul.mubr.bf16.gmra.mxu0 %v4308
    %v4705 = vpop.f32.mrf.mxu0
    %v4706 = vadd.f32 %v4358, %v4705
    %v4707 = vpop.f32.mrf.mxu0
    %v4708 = vpop.f32.mrf.mxu0
    %v4709 = vadd.f32 %v4358, %v4708
    %v4710 = vpop.f32.mrf.mxu0
    %4711 = vmatprep.mubr.bf16.mxu0 0
    %4712 = vmatmul.mubr.bf16.gmra.mxu0 %v4309
    %v4713 = vpop.f32.mrf.mxu0
    %v4714 = vadd.f32 %v4358, %v4713
    %v4715 = vpop.f32.mrf.mxu0
    %v4716 = vpop.f32.mrf.mxu0
    %v4717 = vadd.f32 %v4358, %v4716
    %v4718 = vpop.f32.mrf.mxu0
    %4719 = vmatprep.mubr.bf16.mxu0 0
    %4720 = vmatmul.mubr.bf16.gmra.mxu0 %v4310
    %v4721 = vpop.f32.mrf.mxu0
    %v4722 = vadd.f32 %v4358, %v4721
    %v4723 = vpop.f32.mrf.mxu0
    %v4724 = vpop.f32.mrf.mxu0
    %v4725 = vadd.f32 %v4358, %v4724
    %v4726 = vpop.f32.mrf.mxu0
    %4727 = vmatprep.mubr.bf16.mxu0 0
    %4728 = vmatmul.mubr.bf16.gmra.mxu0 %v4311
    %v4729 = vpop.f32.mrf.mxu0
    %v4730 = vadd.f32 %v4358, %v4729
    %v4731 = vpop.f32.mrf.mxu0
    %v4732 = vpop.f32.mrf.mxu0
    %v4733 = vadd.f32 %v4358, %v4732
    %v4734 = vpop.f32.mrf.mxu0
    %4735 = vmatprep.mubr.bf16.mxu0 0
    %4736 = vmatmul.mubr.bf16.gmra.mxu0 %v4312
    %v4737 = vpop.f32.mrf.mxu0
    %v4738 = vadd.f32 %v4358, %v4737
    %v4739 = vpop.f32.mrf.mxu0
    %v4740 = vpop.f32.mrf.mxu0
    %v4741 = vadd.f32 %v4358, %v4740
    %v4742 = vpop.f32.mrf.mxu0
    %4743 = vmatprep.mubr.bf16.mxu0 0
    %4744 = vmatmul.mubr.bf16.gmra.mxu0 %v4313
    %v4745 = vpop.f32.mrf.mxu0
    %v4746 = vadd.f32 %v4358, %v4745
    %v4747 = vpop.f32.mrf.mxu0
    %v4748 = vpop.f32.mrf.mxu0
    %v4749 = vadd.f32 %v4358, %v4748
    %v4750 = vpop.f32.mrf.mxu0
    %4751 = vmatprep.mubr.bf16.mxu0 0
    %4752 = vmatmul.mubr.bf16.gmra.mxu0 %v4314
    %v4753 = vpop.f32.mrf.mxu0
    %v4754 = vadd.f32 %v4358, %v4753
    %v4755 = vpop.f32.mrf.mxu0
    %v4756 = vpop.f32.mrf.mxu0
    %v4757 = vadd.f32 %v4358, %v4756
    %v4758 = vpop.f32.mrf.mxu0
    %4759 = vmatprep.mubr.bf16.mxu0 0
    %4760 = vmatmul.mubr.bf16.gmra.mxu0 %v4315
    %v4761 = vpop.f32.mrf.mxu0
    %v4762 = vadd.f32 %v4358, %v4761
    %v4763 = vpop.f32.mrf.mxu0
    %v4764 = vpop.f32.mrf.mxu0
    %v4765 = vadd.f32 %v4358, %v4764
    %v4766 = vpop.f32.mrf.mxu0
    %4767 = vmatprep.mubr.bf16.mxu0 0
    %4768 = vmatmul.mubr.bf16.gmra.mxu0 %v4316
    %v4769 = vpop.f32.mrf.mxu0
    %v4770 = vadd.f32 %v4358, %v4769
    %v4771 = vpop.f32.mrf.mxu0
    %v4772 = vpop.f32.mrf.mxu0
    %v4773 = vadd.f32 %v4358, %v4772
    %v4774 = vpop.f32.mrf.mxu0
    %4775 = vmatprep.mubr.bf16.mxu0 0
    %4776 = vmatmul.mubr.bf16.gmra.mxu0 %v4317
    %v4777 = vpop.f32.mrf.mxu0
    %v4778 = vadd.f32 %v4358, %v4777
    %v4779 = vpop.f32.mrf.mxu0
    %v4780 = vpop.f32.mrf.mxu0
    %v4781 = vadd.f32 %v4358, %v4780
    %v4782 = vpop.f32.mrf.mxu0
    %4783 = vmatprep.mubr.bf16.mxu0 0
    %4784 = vmatmul.mubr.bf16.gmra.mxu0 %v4318
    %v4785 = vpop.f32.mrf.mxu0
    %v4786 = vadd.f32 %v4358, %v4785
    %v4787 = vpop.f32.mrf.mxu0
    %v4788 = vpop.f32.mrf.mxu0
    %v4789 = vadd.f32 %v4358, %v4788
    %v4790 = vpop.f32.mrf.mxu0
    %4791 = vmatprep.mubr.bf16.mxu0 0
    %4792 = vmatmul.mubr.bf16.gmra.mxu0 %v4319
    %v4793 = vpop.f32.mrf.mxu0
    %v4794 = vadd.f32 %v4358, %v4793
    %v4795 = vpop.f32.mrf.mxu0
    %v4796 = vpop.f32.mrf.mxu0
    %v4797 = vadd.f32 %v4358, %v4796
    %v4798 = vpop.f32.mrf.mxu0
    %4799 = vmatprep.mubr.bf16.mxu0 0
    %4800 = vmatmul.mubr.bf16.gmra.mxu0 %v4320
    %v4801 = vpop.f32.mrf.mxu0
    %v4802 = vadd.f32 %v4358, %v4801
    %v4803 = vpop.f32.mrf.mxu0
    %v4804 = vpop.f32.mrf.mxu0
    %v4805 = vadd.f32 %v4358, %v4804
    %v4806 = vpop.f32.mrf.mxu0
    %4807 = vmatprep.mubr.bf16.mxu0 0
    %4808 = vmatmul.mubr.bf16.gmra.mxu0 %v4321
    %v4809 = vpop.f32.mrf.mxu0
    %v4810 = vadd.f32 %v4358, %v4809
    %v4811 = vpop.f32.mrf.mxu0
    %v4812 = vpop.f32.mrf.mxu0
    %v4813 = vadd.f32 %v4358, %v4812
    %v4814 = vpop.f32.mrf.mxu0
    %4815 = vmatprep.mubr.bf16.mxu0 0
    %4816 = vmatmul.mubr.bf16.gmra.mxu0 %v4322
    %v4817 = vpop.f32.mrf.mxu0
    %v4818 = vadd.f32 %v4358, %v4817
    %v4819 = vpop.f32.mrf.mxu0
    %v4820 = vpop.f32.mrf.mxu0
    %v4821 = vadd.f32 %v4358, %v4820
    %v4822 = vpop.f32.mrf.mxu0
    %4823 = vmatprep.mubr.bf16.mxu0 0
    %4824 = vmatmul.mubr.bf16.gmra.mxu0 %v4323
    %v4825 = vpop.f32.mrf.mxu0
    %v4826 = vadd.f32 %v4358, %v4825
    %v4827 = vpop.f32.mrf.mxu0
    %v4828 = vpop.f32.mrf.mxu0
    %v4829 = vadd.f32 %v4358, %v4828
    %v4830 = vpop.f32.mrf.mxu0
    %4831 = vmatprep.mubr.bf16.mxu0 0
    %4832 = vmatmul.mubr.bf16.gmra.mxu0 %v4324
    %v4833 = vpop.f32.mrf.mxu0
    %v4834 = vadd.f32 %v4358, %v4833
    %v4835 = vpop.f32.mrf.mxu0
    %v4836 = vpop.f32.mrf.mxu0
    %v4837 = vadd.f32 %v4358, %v4836
    %v4838 = vpop.f32.mrf.mxu0
    %4839 = vmatprep.mubr.bf16.mxu0 0
    %4840 = vmatmul.mubr.bf16.gmra.mxu0 %v4325
    %v4841 = vpop.f32.mrf.mxu0
    %v4842 = vadd.f32 %v4358, %v4841
    %v4843 = vpop.f32.mrf.mxu0
    %v4844 = vpop.f32.mrf.mxu0
    %v4845 = vadd.f32 %v4358, %v4844
    %v4846 = vpop.f32.mrf.mxu0
    %4847 = vmatprep.mubr.bf16.mxu0 0
    %4848 = vmatmul.mubr.bf16.gmra.mxu0 %v4326
    %v4849 = vpop.f32.mrf.mxu0
    %v4850 = vadd.f32 %v4358, %v4849
    %v4851 = vpop.f32.mrf.mxu0
    %v4852 = vpop.f32.mrf.mxu0
    %v4853 = vadd.f32 %v4358, %v4852
    %v4854 = vpop.f32.mrf.mxu0
    %4855 = vmatprep.mubr.bf16.mxu0 0
    %4856 = vmatmul.mubr.bf16.gmra.mxu0 %v4327
    %v4857 = vpop.f32.mrf.mxu0
    %v4858 = vadd.f32 %v4358, %v4857
    %v4859 = vpop.f32.mrf.mxu0
    %v4860 = vpop.f32.mrf.mxu0
    %v4861 = vadd.f32 %v4358, %v4860
    %v4862 = vpop.f32.mrf.mxu0
    %4863 = vmatprep.mubr.bf16.mxu0 0
    %4864 = vmatmul.mubr.bf16.gmra.mxu0 %v4328
    %v4865 = vpop.f32.mrf.mxu0
    %v4866 = vadd.f32 %v4358, %v4865
    %v4867 = vpop.f32.mrf.mxu0
    %v4868 = vpop.f32.mrf.mxu0
    %v4869 = vadd.f32 %v4358, %v4868
    %v4870 = vpop.f32.mrf.mxu0
    %4871 = vmatprep.mubr.bf16.mxu0 0
    %4872 = vmatmul.mubr.bf16.gmra.mxu0 %v4329
    %v4873 = vpop.f32.mrf.mxu0
    %v4874 = vadd.f32 %v4358, %v4873
    %v4875 = vpop.f32.mrf.mxu0
    %v4876 = vpop.f32.mrf.mxu0
    %v4877 = vadd.f32 %v4358, %v4876
    %v4878 = vpop.f32.mrf.mxu0
    %4879 = vmatprep.mubr.bf16.mxu0 0
    %4880 = vmatmul.mubr.bf16.gmra.mxu0 %v4330
    %v4881 = vpop.f32.mrf.mxu0
    %v4882 = vadd.f32 %v4358, %v4881
    %v4883 = vpop.f32.mrf.mxu0
    %v4884 = vpop.f32.mrf.mxu0
    %v4885 = vadd.f32 %v4358, %v4884
    %v4886 = vpop.f32.mrf.mxu0
    %4887 = vmatprep.mubr.bf16.mxu0 0
    %4888 = vmatmul.mubr.bf16.gmra.mxu0 %v4331
    %v4889 = vpop.f32.mrf.mxu0
    %v4890 = vadd.f32 %v4358, %v4889
    %v4891 = vpop.f32.mrf.mxu0
    %v4892 = vpop.f32.mrf.mxu0
    %v4893 = vadd.f32 %v4358, %v4892
    %v4894 = vpop.f32.mrf.mxu0
    %4895 = vmatprep.mubr.bf16.mxu0 0
    %4896 = vmatmul.mubr.bf16.gmra.mxu0 %v4332
    %v4897 = vpop.f32.mrf.mxu0
    %v4898 = vadd.f32 %v4358, %v4897
    %v4899 = vpop.f32.mrf.mxu0
    %v4900 = vpop.f32.mrf.mxu0
    %v4901 = vadd.f32 %v4358, %v4900
    %v4902 = vpop.f32.mrf.mxu0
    %4903 = vmatprep.mubr.bf16.mxu0 0
    %4904 = vmatmul.mubr.bf16.gmra.mxu0 %v4333
    %v4905 = vpop.f32.mrf.mxu0
    %v4906 = vadd.f32 %v4358, %v4905
    %v4907 = vpop.f32.mrf.mxu0
    %v4908 = vpop.f32.mrf.mxu0
    %v4909 = vadd.f32 %v4358, %v4908
    %v4910 = vpop.f32.mrf.mxu0
    %4911 = vmatprep.mubr.bf16.mxu0 0
    %4912 = vmatmul.mubr.bf16.gmra.mxu0 %v4334
    %v4913 = vpop.f32.mrf.mxu0
    %v4914 = vadd.f32 %v4358, %v4913
    %v4915 = vpop.f32.mrf.mxu0
    %v4916 = vpop.f32.mrf.mxu0
    %v4917 = vadd.f32 %v4358, %v4916
    %v4918 = vpop.f32.mrf.mxu0
    %4919 = vmatprep.mubr.bf16.mxu0 0
    %4920 = vmatmul.mubr.bf16.gmra.mxu0 %v4335
    %v4921 = vpop.f32.mrf.mxu0
    %v4922 = vadd.f32 %v4358, %v4921
    %v4923 = vpop.f32.mrf.mxu0
    %v4924 = vpop.f32.mrf.mxu0
    %v4925 = vadd.f32 %v4358, %v4924
    %v4926 = vpop.f32.mrf.mxu0
    %4927 = vmatprep.mubr.bf16.mxu0 0
    %4928 = vmatmul.mubr.bf16.gmra.mxu0 %v4336
    %v4929 = vpop.f32.mrf.mxu0
    %v4930 = vadd.f32 %v4358, %v4929
    %v4931 = vpop.f32.mrf.mxu0
    %v4932 = vpop.f32.mrf.mxu0
    %v4933 = vadd.f32 %v4358, %v4932
    %v4934 = vpop.f32.mrf.mxu0
    %4935 = vmatprep.mubr.bf16.mxu0 0
    %4936 = vmatmul.mubr.bf16.gmra.mxu0 %v4337
    %v4937 = vpop.f32.mrf.mxu0
    %v4938 = vadd.f32 %v4358, %v4937
    %v4939 = vpop.f32.mrf.mxu0
    %v4940 = vpop.f32.mrf.mxu0
    %v4941 = vadd.f32 %v4358, %v4940
    %v4942 = vpop.f32.mrf.mxu0
    %4943 = vdwg.mxu0
    %4944 = vadd.xlane.f32.xlu0 %v4442
    %v4945 = vpop.xlane.xlu0 %4944
    %4946 = vadd.xlane.f32.xlu0 %v4445
    %v4947 = vpop.xlane.xlu0 %4946
    %4948 = vadd.xlane.f32.xlu0 %v4450
    %v4949 = vpop.xlane.xlu0 %4948
    %4950 = vadd.xlane.f32.xlu0 %v4453
    %v4951 = vpop.xlane.xlu0 %4950
    %4952 = vadd.xlane.f32.xlu0 %v4458
    %v4953 = vpop.xlane.xlu0 %4952
    %4954 = vadd.xlane.f32.xlu0 %v4461
    %v4955 = vpop.xlane.xlu0 %4954
    %4956 = vadd.xlane.f32.xlu0 %v4466
    %v4957 = vpop.xlane.xlu0 %4956
    %4958 = vadd.xlane.f32.xlu0 %v4469
    %v4959 = vpop.xlane.xlu0 %4958
    %4960 = vadd.xlane.f32.xlu0 %v4474
    %v4961 = vpop.xlane.xlu0 %4960
    %4962 = vadd.xlane.f32.xlu0 %v4477
    %v4963 = vpop.xlane.xlu0 %4962
    %4964 = vadd.xlane.f32.xlu0 %v4482
    %v4965 = vpop.xlane.xlu0 %4964
    %4966 = vadd.xlane.f32.xlu0 %v4485
    %v4967 = vpop.xlane.xlu0 %4966
    %4968 = vadd.xlane.f32.xlu0 %v4490
    %v4969 = vpop.xlane.xlu0 %4968
    %4970 = vadd.xlane.f32.xlu0 %v4493
    %v4971 = vpop.xlane.xlu0 %4970
    %4972 = vadd.xlane.f32.xlu0 %v4498
    %v4973 = vpop.xlane.xlu0 %4972
    %4974 = vadd.xlane.f32.xlu0 %v4501
    %v4975 = vpop.xlane.xlu0 %4974
    %4976 = vadd.xlane.f32.xlu0 %v4506
    %v4977 = vpop.xlane.xlu0 %4976
    %4978 = vadd.xlane.f32.xlu0 %v4509
    %v4979 = vpop.xlane.xlu0 %4978
    %4980 = vadd.xlane.f32.xlu0 %v4514
    %v4981 = vpop.xlane.xlu0 %4980
    %4982 = vadd.xlane.f32.xlu0 %v4517
    %v4983 = vpop.xlane.xlu0 %4982
    %4984 = vadd.xlane.f32.xlu0 %v4522
    %v4985 = vpop.xlane.xlu0 %4984
    %4986 = vadd.xlane.f32.xlu0 %v4525
    %v4987 = vpop.xlane.xlu0 %4986
    %4988 = vadd.xlane.f32.xlu0 %v4530
    %v4989 = vpop.xlane.xlu0 %4988
    %4990 = vadd.xlane.f32.xlu0 %v4533
    %v4991 = vpop.xlane.xlu0 %4990
    %4992 = vadd.xlane.f32.xlu0 %v4538
    %v4993 = vpop.xlane.xlu0 %4992
    %4994 = vadd.xlane.f32.xlu0 %v4541
    %v4995 = vpop.xlane.xlu0 %4994
    %4996 = vadd.xlane.f32.xlu0 %v4546
    %v4997 = vpop.xlane.xlu0 %4996
    %4998 = vadd.xlane.f32.xlu0 %v4549
    %v4999 = vpop.xlane.xlu0 %4998
    %5000 = vadd.xlane.f32.xlu0 %v4554
    %v5001 = vpop.xlane.xlu0 %5000
    %5002 = vadd.xlane.f32.xlu0 %v4557
    %v5003 = vpop.xlane.xlu0 %5002
    %5004 = vadd.xlane.f32.xlu0 %v4562
    %v5005 = vpop.xlane.xlu0 %5004
    %5006 = vadd.xlane.f32.xlu0 %v4565
    %v5007 = vpop.xlane.xlu0 %5006
    %5008 = vadd.xlane.f32.xlu0 %v4570
    %v5009 = vpop.xlane.xlu0 %5008
    %5010 = vadd.xlane.f32.xlu0 %v4573
    %v5011 = vpop.xlane.xlu0 %5010
    %5012 = vadd.xlane.f32.xlu0 %v4578
    %v5013 = vpop.xlane.xlu0 %5012
    %5014 = vadd.xlane.f32.xlu0 %v4581
    %v5015 = vpop.xlane.xlu0 %5014
    %5016 = vadd.xlane.f32.xlu0 %v4586
    %v5017 = vpop.xlane.xlu0 %5016
    %5018 = vadd.xlane.f32.xlu0 %v4589
    %v5019 = vpop.xlane.xlu0 %5018
    %5020 = vadd.xlane.f32.xlu0 %v4594
    %v5021 = vpop.xlane.xlu0 %5020
    %5022 = vadd.xlane.f32.xlu0 %v4597
    %v5023 = vpop.xlane.xlu0 %5022
    %5024 = vadd.xlane.f32.xlu0 %v4602
    %v5025 = vpop.xlane.xlu0 %5024
    %5026 = vadd.xlane.f32.xlu0 %v4605
    %v5027 = vpop.xlane.xlu0 %5026
    %5028 = vadd.xlane.f32.xlu0 %v4610
    %v5029 = vpop.xlane.xlu0 %5028
    %5030 = vadd.xlane.f32.xlu0 %v4613
    %v5031 = vpop.xlane.xlu0 %5030
    %5032 = vadd.xlane.f32.xlu0 %v4618
    %v5033 = vpop.xlane.xlu0 %5032
    %5034 = vadd.xlane.f32.xlu0 %v4621
    %v5035 = vpop.xlane.xlu0 %5034
    %5036 = vadd.xlane.f32.xlu0 %v4626
    %v5037 = vpop.xlane.xlu0 %5036
    %5038 = vadd.xlane.f32.xlu0 %v4629
    %v5039 = vpop.xlane.xlu0 %5038
    %5040 = vadd.xlane.f32.xlu0 %v4634
    %v5041 = vpop.xlane.xlu0 %5040
    %5042 = vadd.xlane.f32.xlu0 %v4637
    %v5043 = vpop.xlane.xlu0 %5042
    %5044 = vadd.xlane.f32.xlu0 %v4642
    %v5045 = vpop.xlane.xlu0 %5044
    %5046 = vadd.xlane.f32.xlu0 %v4645
    %v5047 = vpop.xlane.xlu0 %5046
    %5048 = vadd.xlane.f32.xlu0 %v4650
    %v5049 = vpop.xlane.xlu0 %5048
    %5050 = vadd.xlane.f32.xlu0 %v4653
    %v5051 = vpop.xlane.xlu0 %5050
    %5052 = vadd.xlane.f32.xlu0 %v4658
    %v5053 = vpop.xlane.xlu0 %5052
    %5054 = vadd.xlane.f32.xlu0 %v4661
    %v5055 = vpop.xlane.xlu0 %5054
    %5056 = vadd.xlane.f32.xlu0 %v4666
    %v5057 = vpop.xlane.xlu0 %5056
    %5058 = vadd.xlane.f32.xlu0 %v4669
    %v5059 = vpop.xlane.xlu0 %5058
    %5060 = vadd.xlane.f32.xlu0 %v4674
    %v5061 = vpop.xlane.xlu0 %5060
    %5062 = vadd.xlane.f32.xlu0 %v4677
    %v5063 = vpop.xlane.xlu0 %5062
    %5064 = vadd.xlane.f32.xlu0 %v4682
    %v5065 = vpop.xlane.xlu0 %5064
    %5066 = vadd.xlane.f32.xlu0 %v4685
    %v5067 = vpop.xlane.xlu0 %5066
    %5068 = vadd.xlane.f32.xlu0 %v4690
    %v5069 = vpop.xlane.xlu0 %5068
    %5070 = vadd.xlane.f32.xlu0 %v4693
    %v5071 = vpop.xlane.xlu0 %5070
    %5072 = vadd.xlane.f32.xlu0 %v4698
    %v5073 = vpop.xlane.xlu0 %5072
    %5074 = vadd.xlane.f32.xlu0 %v4701
    %v5075 = vpop.xlane.xlu0 %5074
    %5076 = vadd.xlane.f32.xlu0 %v4706
    %v5077 = vpop.xlane.xlu0 %5076
    %5078 = vadd.xlane.f32.xlu0 %v4709
    %v5079 = vpop.xlane.xlu0 %5078
    %5080 = vadd.xlane.f32.xlu0 %v4714
    %v5081 = vpop.xlane.xlu0 %5080
    %5082 = vadd.xlane.f32.xlu0 %v4717
    %v5083 = vpop.xlane.xlu0 %5082
    %5084 = vadd.xlane.f32.xlu0 %v4722
    %v5085 = vpop.xlane.xlu0 %5084
    %5086 = vadd.xlane.f32.xlu0 %v4725
    %v5087 = vpop.xlane.xlu0 %5086
    %5088 = vadd.xlane.f32.xlu0 %v4730
    %v5089 = vpop.xlane.xlu0 %5088
    %5090 = vadd.xlane.f32.xlu0 %v4733
    %v5091 = vpop.xlane.xlu0 %5090
    %5092 = vadd.xlane.f32.xlu0 %v4738
    %v5093 = vpop.xlane.xlu0 %5092
    %5094 = vadd.xlane.f32.xlu0 %v4741
    %v5095 = vpop.xlane.xlu0 %5094
    %5096 = vadd.xlane.f32.xlu0 %v4746
    %v5097 = vpop.xlane.xlu0 %5096
    %5098 = vadd.xlane.f32.xlu0 %v4749
    %v5099 = vpop.xlane.xlu0 %5098
    %5100 = vadd.xlane.f32.xlu0 %v4754
    %v5101 = vpop.xlane.xlu0 %5100
    %5102 = vadd.xlane.f32.xlu0 %v4757
    %v5103 = vpop.xlane.xlu0 %5102
    %5104 = vadd.xlane.f32.xlu0 %v4762
    %v5105 = vpop.xlane.xlu0 %5104
    %5106 = vadd.xlane.f32.xlu0 %v4765
    %v5107 = vpop.xlane.xlu0 %5106
    %5108 = vadd.xlane.f32.xlu0 %v4770
    %v5109 = vpop.xlane.xlu0 %5108
    %5110 = vadd.xlane.f32.xlu0 %v4773
    %v5111 = vpop.xlane.xlu0 %5110
    %5112 = vadd.xlane.f32.xlu0 %v4778
    %v5113 = vpop.xlane.xlu0 %5112
    %5114 = vadd.xlane.f32.xlu0 %v4781
    %v5115 = vpop.xlane.xlu0 %5114
    %5116 = vadd.xlane.f32.xlu0 %v4786
    %v5117 = vpop.xlane.xlu0 %5116
    %5118 = vadd.xlane.f32.xlu0 %v4789
    %v5119 = vpop.xlane.xlu0 %5118
    %5120 = vadd.xlane.f32.xlu0 %v4794
    %v5121 = vpop.xlane.xlu0 %5120
    %5122 = vadd.xlane.f32.xlu0 %v4797
    %v5123 = vpop.xlane.xlu0 %5122
    %5124 = vadd.xlane.f32.xlu0 %v4802
    %v5125 = vpop.xlane.xlu0 %5124
    %5126 = vadd.xlane.f32.xlu0 %v4805
    %v5127 = vpop.xlane.xlu0 %5126
    %5128 = vadd.xlane.f32.xlu0 %v4810
    %v5129 = vpop.xlane.xlu0 %5128
    %5130 = vadd.xlane.f32.xlu0 %v4813
    %v5131 = vpop.xlane.xlu0 %5130
    %5132 = vadd.xlane.f32.xlu0 %v4818
    %v5133 = vpop.xlane.xlu0 %5132
    %5134 = vadd.xlane.f32.xlu0 %v4821
    %v5135 = vpop.xlane.xlu0 %5134
    %5136 = vadd.xlane.f32.xlu0 %v4826
    %v5137 = vpop.xlane.xlu0 %5136
    %5138 = vadd.xlane.f32.xlu0 %v4829
    %v5139 = vpop.xlane.xlu0 %5138
    %5140 = vadd.xlane.f32.xlu0 %v4834
    %v5141 = vpop.xlane.xlu0 %5140
    %5142 = vadd.xlane.f32.xlu0 %v4837
    %v5143 = vpop.xlane.xlu0 %5142
    %5144 = vadd.xlane.f32.xlu0 %v4842
    %v5145 = vpop.xlane.xlu0 %5144
    %5146 = vadd.xlane.f32.xlu0 %v4845
    %v5147 = vpop.xlane.xlu0 %5146
    %5148 = vadd.xlane.f32.xlu0 %v4850
    %v5149 = vpop.xlane.xlu0 %5148
    %5150 = vadd.xlane.f32.xlu0 %v4853
    %v5151 = vpop.xlane.xlu0 %5150
    %5152 = vadd.xlane.f32.xlu0 %v4858
    %v5153 = vpop.xlane.xlu0 %5152
    %5154 = vadd.xlane.f32.xlu0 %v4861
    %v5155 = vpop.xlane.xlu0 %5154
    %5156 = vadd.xlane.f32.xlu0 %v4866
    %v5157 = vpop.xlane.xlu0 %5156
    %5158 = vadd.xlane.f32.xlu0 %v4869
    %v5159 = vpop.xlane.xlu0 %5158
    %5160 = vadd.xlane.f32.xlu0 %v4874
    %v5161 = vpop.xlane.xlu0 %5160
    %5162 = vadd.xlane.f32.xlu0 %v4877
    %v5163 = vpop.xlane.xlu0 %5162
    %5164 = vadd.xlane.f32.xlu0 %v4882
    %v5165 = vpop.xlane.xlu0 %5164
    %5166 = vadd.xlane.f32.xlu0 %v4885
    %v5167 = vpop.xlane.xlu0 %5166
    %5168 = vadd.xlane.f32.xlu0 %v4890
    %v5169 = vpop.xlane.xlu0 %5168
    %5170 = vadd.xlane.f32.xlu0 %v4893
    %v5171 = vpop.xlane.xlu0 %5170
    %5172 = vadd.xlane.f32.xlu0 %v4898
    %v5173 = vpop.xlane.xlu0 %5172
    %5174 = vadd.xlane.f32.xlu0 %v4901
    %v5175 = vpop.xlane.xlu0 %5174
    %5176 = vadd.xlane.f32.xlu0 %v4906
    %v5177 = vpop.xlane.xlu0 %5176
    %5178 = vadd.xlane.f32.xlu0 %v4909
    %v5179 = vpop.xlane.xlu0 %5178
    %5180 = vadd.xlane.f32.xlu0 %v4914
    %v5181 = vpop.xlane.xlu0 %5180
    %5182 = vadd.xlane.f32.xlu0 %v4917
    %v5183 = vpop.xlane.xlu0 %5182
    %5184 = vadd.xlane.f32.xlu0 %v4922
    %v5185 = vpop.xlane.xlu0 %5184
    %5186 = vadd.xlane.f32.xlu0 %v4925
    %v5187 = vpop.xlane.xlu0 %5186
    %5188 = vadd.xlane.f32.xlu0 %v4930
    %v5189 = vpop.xlane.xlu0 %5188
    %5190 = vadd.xlane.f32.xlu0 %v4933
    %v5191 = vpop.xlane.xlu0 %5190
    %5192 = vadd.xlane.f32.xlu0 %v4938
    %v5193 = vpop.xlane.xlu0 %5192
    %5194 = vadd.xlane.f32.xlu0 %v4941
    %v5195 = vpop.xlane.xlu0 %5194
    %v5196 = vrcp.pop 128.0
    %v5197 = vmul.f32 %v4945, %v5196
    %v5198 = vmul.f32 %v4947, %v5196
    %v5199 = vmul.f32 %v4949, %v5196
    %v5200 = vmul.f32 %v4951, %v5196
    %v5201 = vmul.f32 %v4953, %v5196
    %v5202 = vmul.f32 %v4955, %v5196
    %v5203 = vmul.f32 %v4957, %v5196
    %v5204 = vmul.f32 %v4959, %v5196
    %v5205 = vmul.f32 %v4961, %v5196
    %v5206 = vmul.f32 %v4963, %v5196
    %v5207 = vmul.f32 %v4965, %v5196
    %v5208 = vmul.f32 %v4967, %v5196
    %v5209 = vmul.f32 %v4969, %v5196
    %v5210 = vmul.f32 %v4971, %v5196
    %v5211 = vmul.f32 %v4973, %v5196
    %v5212 = vmul.f32 %v4975, %v5196
    %v5213 = vmul.f32 %v4977, %v5196
    %v5214 = vmul.f32 %v4979, %v5196
    %v5215 = vmul.f32 %v4981, %v5196
    %v5216 = vmul.f32 %v4983, %v5196
    %v5217 = vmul.f32 %v4985, %v5196
    %v5218 = vmul.f32 %v4987, %v5196
    %v5219 = vmul.f32 %v4989, %v5196
    %v5220 = vmul.f32 %v4991, %v5196
    %v5221 = vmul.f32 %v4993, %v5196
    %v5222 = vmul.f32 %v4995, %v5196
    %v5223 = vmul.f32 %v4997, %v5196
    %v5224 = vmul.f32 %v4999, %v5196
    %v5225 = vmul.f32 %v5001, %v5196
    %v5226 = vmul.f32 %v5003, %v5196
    %v5227 = vmul.f32 %v5005, %v5196
    %v5228 = vmul.f32 %v5007, %v5196
    %v5229 = vmul.f32 %v5009, %v5196
    %v5230 = vmul.f32 %v5011, %v5196
    %v5231 = vmul.f32 %v5013, %v5196
    %v5232 = vmul.f32 %v5015, %v5196
    %v5233 = vmul.f32 %v5017, %v5196
    %v5234 = vmul.f32 %v5019, %v5196
    %v5235 = vmul.f32 %v5021, %v5196
    %v5236 = vmul.f32 %v5023, %v5196
    %v5237 = vmul.f32 %v5025, %v5196
    %v5238 = vmul.f32 %v5027, %v5196
    %v5239 = vmul.f32 %v5029, %v5196
    %v5240 = vmul.f32 %v5031, %v5196
    %v5241 = vmul.f32 %v5033, %v5196
    %v5242 = vmul.f32 %v5035, %v5196
    %v5243 = vmul.f32 %v5037, %v5196
    %v5244 = vmul.f32 %v5039, %v5196
    %v5245 = vmul.f32 %v5041, %v5196
    %v5246 = vmul.f32 %v5043, %v5196
    %v5247 = vmul.f32 %v5045, %v5196
    %v5248 = vmul.f32 %v5047, %v5196
    %v5249 = vmul.f32 %v5049, %v5196
    %v5250 = vmul.f32 %v5051, %v5196
    %v5251 = vmul.f32 %v5053, %v5196
    %v5252 = vmul.f32 %v5055, %v5196
    %v5253 = vmul.f32 %v5057, %v5196
    %v5254 = vmul.f32 %v5059, %v5196
    %v5255 = vmul.f32 %v5061, %v5196
    %v5256 = vmul.f32 %v5063, %v5196
    %v5257 = vmul.f32 %v5065, %v5196
    %v5258 = vmul.f32 %v5067, %v5196
    %v5259 = vmul.f32 %v5069, %v5196
    %v5260 = vmul.f32 %v5071, %v5196
    %v5261 = vmul.f32 %v5073, %v5196
    %v5262 = vmul.f32 %v5075, %v5196
    %v5263 = vmul.f32 %v5077, %v5196
    %v5264 = vmul.f32 %v5079, %v5196
    %v5265 = vmul.f32 %v5081, %v5196
    %v5266 = vmul.f32 %v5083, %v5196
    %v5267 = vmul.f32 %v5085, %v5196
    %v5268 = vmul.f32 %v5087, %v5196
    %v5269 = vmul.f32 %v5089, %v5196
    %v5270 = vmul.f32 %v5091, %v5196
    %v5271 = vmul.f32 %v5093, %v5196
    %v5272 = vmul.f32 %v5095, %v5196
    %v5273 = vmul.f32 %v5097, %v5196
    %v5274 = vmul.f32 %v5099, %v5196
    %v5275 = vmul.f32 %v5101, %v5196
    %v5276 = vmul.f32 %v5103, %v5196
    %v5277 = vmul.f32 %v5105, %v5196
    %v5278 = vmul.f32 %v5107, %v5196
    %v5279 = vmul.f32 %v5109, %v5196
    %v5280 = vmul.f32 %v5111, %v5196
    %v5281 = vmul.f32 %v5113, %v5196
    %v5282 = vmul.f32 %v5115, %v5196
    %v5283 = vmul.f32 %v5117, %v5196
    %v5284 = vmul.f32 %v5119, %v5196
    %v5285 = vmul.f32 %v5121, %v5196
    %v5286 = vmul.f32 %v5123, %v5196
    %v5287 = vmul.f32 %v5125, %v5196
    %v5288 = vmul.f32 %v5127, %v5196
    %v5289 = vmul.f32 %v5129, %v5196
    %v5290 = vmul.f32 %v5131, %v5196
    %v5291 = vmul.f32 %v5133, %v5196
    %v5292 = vmul.f32 %v5135, %v5196
    %v5293 = vmul.f32 %v5137, %v5196
    %v5294 = vmul.f32 %v5139, %v5196
    %v5295 = vmul.f32 %v5141, %v5196
    %v5296 = vmul.f32 %v5143, %v5196
    %v5297 = vmul.f32 %v5145, %v5196
    %v5298 = vmul.f32 %v5147, %v5196
    %v5299 = vmul.f32 %v5149, %v5196
    %v5300 = vmul.f32 %v5151, %v5196
    %v5301 = vmul.f32 %v5153, %v5196
    %v5302 = vmul.f32 %v5155, %v5196
    %v5303 = vmul.f32 %v5157, %v5196
    %v5304 = vmul.f32 %v5159, %v5196
    %v5305 = vmul.f32 %v5161, %v5196
    %v5306 = vmul.f32 %v5163, %v5196
    %v5307 = vmul.f32 %v5165, %v5196
    %v5308 = vmul.f32 %v5167, %v5196
    %v5309 = vmul.f32 %v5169, %v5196
    %v5310 = vmul.f32 %v5171, %v5196
    %v5311 = vmul.f32 %v5173, %v5196
    %v5312 = vmul.f32 %v5175, %v5196
    %v5313 = vmul.f32 %v5177, %v5196
    %v5314 = vmul.f32 %v5179, %v5196
    %v5315 = vmul.f32 %v5181, %v5196
    %v5316 = vmul.f32 %v5183, %v5196
    %v5317 = vmul.f32 %v5185, %v5196
    %v5318 = vmul.f32 %v5187, %v5196
    %v5319 = vmul.f32 %v5189, %v5196
    %v5320 = vmul.f32 %v5191, %v5196
    %v5321 = vmul.f32 %v5193, %v5196
    %v5322 = vmul.f32 %v5195, %v5196
    %v5323 = vmul.f32 %v4442, %v4442
    %v5324 = vmul.f32 %v4445, %v4445
    %v5325 = vmul.f32 %v4450, %v4450
    %v5326 = vmul.f32 %v4453, %v4453
    %v5327 = vmul.f32 %v4458, %v4458
    %v5328 = vmul.f32 %v4461, %v4461
    %v5329 = vmul.f32 %v4466, %v4466
    %v5330 = vmul.f32 %v4469, %v4469
    %v5331 = vmul.f32 %v4474, %v4474
    %v5332 = vmul.f32 %v4477, %v4477
    %v5333 = vmul.f32 %v4482, %v4482
    %v5334 = vmul.f32 %v4485, %v4485
    %v5335 = vmul.f32 %v4490, %v4490
    %v5336 = vmul.f32 %v4493, %v4493
    %v5337 = vmul.f32 %v4498, %v4498
    %v5338 = vmul.f32 %v4501, %v4501
    %v5339 = vmul.f32 %v4506, %v4506
    %v5340 = vmul.f32 %v4509, %v4509
    %v5341 = vmul.f32 %v4514, %v4514
    %v5342 = vmul.f32 %v4517, %v4517
    %v5343 = vmul.f32 %v4522, %v4522
    %v5344 = vmul.f32 %v4525, %v4525
    %v5345 = vmul.f32 %v4530, %v4530
    %v5346 = vmul.f32 %v4533, %v4533
    %v5347 = vmul.f32 %v4538, %v4538
    %v5348 = vmul.f32 %v4541, %v4541
    %v5349 = vmul.f32 %v4546, %v4546
    %v5350 = vmul.f32 %v4549, %v4549
    %v5351 = vmul.f32 %v4554, %v4554
    %v5352 = vmul.f32 %v4557, %v4557
    %v5353 = vmul.f32 %v4562, %v4562
    %v5354 = vmul.f32 %v4565, %v4565
    %v5355 = vmul.f32 %v4570, %v4570
    %v5356 = vmul.f32 %v4573, %v4573
    %v5357 = vmul.f32 %v4578, %v4578
    %v5358 = vmul.f32 %v4581, %v4581
    %v5359 = vmul.f32 %v4586, %v4586
    %v5360 = vmul.f32 %v4589, %v4589
    %v5361 = vmul.f32 %v4594, %v4594
    %v5362 = vmul.f32 %v4597, %v4597
    %v5363 = vmul.f32 %v4602, %v4602
    %v5364 = vmul.f32 %v4605, %v4605
    %v5365 = vmul.f32 %v4610, %v4610
    %v5366 = vmul.f32 %v4613, %v4613
    %v5367 = vmul.f32 %v4618, %v4618
    %v5368 = vmul.f32 %v4621, %v4621
    %v5369 = vmul.f32 %v4626, %v4626
    %v5370 = vmul.f32 %v4629, %v4629
    %v5371 = vmul.f32 %v4634, %v4634
    %v5372 = vmul.f32 %v4637, %v4637
    %v5373 = vmul.f32 %v4642, %v4642
    %v5374 = vmul.f32 %v4645, %v4645
    %v5375 = vmul.f32 %v4650, %v4650
    %v5376 = vmul.f32 %v4653, %v4653
    %v5377 = vmul.f32 %v4658, %v4658
    %v5378 = vmul.f32 %v4661, %v4661
    %v5379 = vmul.f32 %v4666, %v4666
    %v5380 = vmul.f32 %v4669, %v4669
    %v5381 = vmul.f32 %v4674, %v4674
    %v5382 = vmul.f32 %v4677, %v4677
    %v5383 = vmul.f32 %v4682, %v4682
    %v5384 = vmul.f32 %v4685, %v4685
    %v5385 = vmul.f32 %v4690, %v4690
    %v5386 = vmul.f32 %v4693, %v4693
    %v5387 = vmul.f32 %v4698, %v4698
    %v5388 = vmul.f32 %v4701, %v4701
    %v5389 = vmul.f32 %v4706, %v4706
    %v5390 = vmul.f32 %v4709, %v4709
    %v5391 = vmul.f32 %v4714, %v4714
    %v5392 = vmul.f32 %v4717, %v4717
    %v5393 = vmul.f32 %v4722, %v4722
    %v5394 = vmul.f32 %v4725, %v4725
    %v5395 = vmul.f32 %v4730, %v4730
    %v5396 = vmul.f32 %v4733, %v4733
    %v5397 = vmul.f32 %v4738, %v4738
    %v5398 = vmul.f32 %v4741, %v4741
    %v5399 = vmul.f32 %v4746, %v4746
    %v5400 = vmul.f32 %v4749, %v4749
    %v5401 = vmul.f32 %v4754, %v4754
    %v5402 = vmul.f32 %v4757, %v4757
    %v5403 = vmul.f32 %v4762, %v4762
    %v5404 = vmul.f32 %v4765, %v4765
    %v5405 = vmul.f32 %v4770, %v4770
    %v5406 = vmul.f32 %v4773, %v4773
    %v5407 = vmul.f32 %v4778, %v4778
    %v5408 = vmul.f32 %v4781, %v4781
    %v5409 = vmul.f32 %v4786, %v4786
    %v5410 = vmul.f32 %v4789, %v4789
    %v5411 = vmul.f32 %v4794, %v4794
    %v5412 = vmul.f32 %v4797, %v4797
    %v5413 = vmul.f32 %v4802, %v4802
    %v5414 = vmul.f32 %v4805, %v4805
    %v5415 = vmul.f32 %v4810, %v4810
    %v5416 = vmul.f32 %v4813, %v4813
    %v5417 = vmul.f32 %v4818, %v4818
    %v5418 = vmul.f32 %v4821, %v4821
    %v5419 = vmul.f32 %v4826, %v4826
    %v5420 = vmul.f32 %v4829, %v4829
    %v5421 = vmul.f32 %v4834, %v4834
    %v5422 = vmul.f32 %v4837, %v4837
    %v5423 = vmul.f32 %v4842, %v4842
    %v5424 = vmul.f32 %v4845, %v4845
    %v5425 = vmul.f32 %v4850, %v4850
    %v5426 = vmul.f32 %v4853, %v4853
    %v5427 = vmul.f32 %v4858, %v4858
    %v5428 = vmul.f32 %v4861, %v4861
    %v5429 = vmul.f32 %v4866, %v4866
    %v5430 = vmul.f32 %v4869, %v4869
    %v5431 = vmul.f32 %v4874, %v4874
    %v5432 = vmul.f32 %v4877, %v4877
    %v5433 = vmul.f32 %v4882, %v4882
    %v5434 = vmul.f32 %v4885, %v4885
    %v5435 = vmul.f32 %v4890, %v4890
    %v5436 = vmul.f32 %v4893, %v4893
    %v5437 = vmul.f32 %v4898, %v4898
    %v5438 = vmul.f32 %v4901, %v4901
    %v5439 = vmul.f32 %v4906, %v4906
    %v5440 = vmul.f32 %v4909, %v4909
    %v5441 = vmul.f32 %v4914, %v4914
    %v5442 = vmul.f32 %v4917, %v4917
    %v5443 = vmul.f32 %v4922, %v4922
    %v5444 = vmul.f32 %v4925, %v4925
    %v5445 = vmul.f32 %v4930, %v4930
    %v5446 = vmul.f32 %v4933, %v4933
    %v5447 = vmul.f32 %v4938, %v4938
    %v5448 = vmul.f32 %v4941, %v4941
    %5449 = vadd.xlane.f32.xlu0 %v5323
    %v5450 = vpop.xlane.xlu0 %5449
    %5451 = vadd.xlane.f32.xlu0 %v5324
    %v5452 = vpop.xlane.xlu0 %5451
    %5453 = vadd.xlane.f32.xlu0 %v5325
    %v5454 = vpop.xlane.xlu0 %5453
    %5455 = vadd.xlane.f32.xlu0 %v5326
    %v5456 = vpop.xlane.xlu0 %5455
    %5457 = vadd.xlane.f32.xlu0 %v5327
    %v5458 = vpop.xlane.xlu0 %5457
    %5459 = vadd.xlane.f32.xlu0 %v5328
    %v5460 = vpop.xlane.xlu0 %5459
    %5461 = vadd.xlane.f32.xlu0 %v5329
    %v5462 = vpop.xlane.xlu0 %5461
    %5463 = vadd.xlane.f32.xlu0 %v5330
    %v5464 = vpop.xlane.xlu0 %5463
    %5465 = vadd.xlane.f32.xlu0 %v5331
    %v5466 = vpop.xlane.xlu0 %5465
    %5467 = vadd.xlane.f32.xlu0 %v5332
    %v5468 = vpop.xlane.xlu0 %5467
    %5469 = vadd.xlane.f32.xlu0 %v5333
    %v5470 = vpop.xlane.xlu0 %5469
    %5471 = vadd.xlane.f32.xlu0 %v5334
    %v5472 = vpop.xlane.xlu0 %5471
    %5473 = vadd.xlane.f32.xlu0 %v5335
    %v5474 = vpop.xlane.xlu0 %5473
    %5475 = vadd.xlane.f32.xlu0 %v5336
    %v5476 = vpop.xlane.xlu0 %5475
    %5477 = vadd.xlane.f32.xlu0 %v5337
    %v5478 = vpop.xlane.xlu0 %5477
    %5479 = vadd.xlane.f32.xlu0 %v5338
    %v5480 = vpop.xlane.xlu0 %5479
    %5481 = vadd.xlane.f32.xlu0 %v5339
    %v5482 = vpop.xlane.xlu0 %5481
    %5483 = vadd.xlane.f32.xlu0 %v5340
    %v5484 = vpop.xlane.xlu0 %5483
    %5485 = vadd.xlane.f32.xlu0 %v5341
    %v5486 = vpop.xlane.xlu0 %5485
    %5487 = vadd.xlane.f32.xlu0 %v5342
    %v5488 = vpop.xlane.xlu0 %5487
    %5489 = vadd.xlane.f32.xlu0 %v5343
    %v5490 = vpop.xlane.xlu0 %5489
    %5491 = vadd.xlane.f32.xlu0 %v5344
    %v5492 = vpop.xlane.xlu0 %5491
    %5493 = vadd.xlane.f32.xlu0 %v5345
    %v5494 = vpop.xlane.xlu0 %5493
    %5495 = vadd.xlane.f32.xlu0 %v5346
    %v5496 = vpop.xlane.xlu0 %5495
    %5497 = vadd.xlane.f32.xlu0 %v5347
    %v5498 = vpop.xlane.xlu0 %5497
    %5499 = vadd.xlane.f32.xlu0 %v5348
    %v5500 = vpop.xlane.xlu0 %5499
    %5501 = vadd.xlane.f32.xlu0 %v5349
    %v5502 = vpop.xlane.xlu0 %5501
    %5503 = vadd.xlane.f32.xlu0 %v5350
    %v5504 = vpop.xlane.xlu0 %5503
    %5505 = vadd.xlane.f32.xlu0 %v5351
    %v5506 = vpop.xlane.xlu0 %5505
    %5507 = vadd.xlane.f32.xlu0 %v5352
    %v5508 = vpop.xlane.xlu0 %5507
    %5509 = vadd.xlane.f32.xlu0 %v5353
    %v5510 = vpop.xlane.xlu0 %5509
    %5511 = vadd.xlane.f32.xlu0 %v5354
    %v5512 = vpop.xlane.xlu0 %5511
    %5513 = vadd.xlane.f32.xlu0 %v5355
    %v5514 = vpop.xlane.xlu0 %5513
    %5515 = vadd.xlane.f32.xlu0 %v5356
    %v5516 = vpop.xlane.xlu0 %5515
    %5517 = vadd.xlane.f32.xlu0 %v5357
    %v5518 = vpop.xlane.xlu0 %5517
    %5519 = vadd.xlane.f32.xlu0 %v5358
    %v5520 = vpop.xlane.xlu0 %5519
    %5521 = vadd.xlane.f32.xlu0 %v5359
    %v5522 = vpop.xlane.xlu0 %5521
    %5523 = vadd.xlane.f32.xlu0 %v5360
    %v5524 = vpop.xlane.xlu0 %5523
    %5525 = vadd.xlane.f32.xlu0 %v5361
    %v5526 = vpop.xlane.xlu0 %5525
    %5527 = vadd.xlane.f32.xlu0 %v5362
    %v5528 = vpop.xlane.xlu0 %5527
    %5529 = vadd.xlane.f32.xlu0 %v5363
    %v5530 = vpop.xlane.xlu0 %5529
    %5531 = vadd.xlane.f32.xlu0 %v5364
    %v5532 = vpop.xlane.xlu0 %5531
    %5533 = vadd.xlane.f32.xlu0 %v5365
    %v5534 = vpop.xlane.xlu0 %5533
    %5535 = vadd.xlane.f32.xlu0 %v5366
    %v5536 = vpop.xlane.xlu0 %5535
    %5537 = vadd.xlane.f32.xlu0 %v5367
    %v5538 = vpop.xlane.xlu0 %5537
    %5539 = vadd.xlane.f32.xlu0 %v5368
    %v5540 = vpop.xlane.xlu0 %5539
    %5541 = vadd.xlane.f32.xlu0 %v5369
    %v5542 = vpop.xlane.xlu0 %5541
    %5543 = vadd.xlane.f32.xlu0 %v5370
    %v5544 = vpop.xlane.xlu0 %5543
    %5545 = vadd.xlane.f32.xlu0 %v5371
    %v5546 = vpop.xlane.xlu0 %5545
    %5547 = vadd.xlane.f32.xlu0 %v5372
    %v5548 = vpop.xlane.xlu0 %5547
    %5549 = vadd.xlane.f32.xlu0 %v5373
    %v5550 = vpop.xlane.xlu0 %5549
    %5551 = vadd.xlane.f32.xlu0 %v5374
    %v5552 = vpop.xlane.xlu0 %5551
    %5553 = vadd.xlane.f32.xlu0 %v5375
    %v5554 = vpop.xlane.xlu0 %5553
    %5555 = vadd.xlane.f32.xlu0 %v5376
    %v5556 = vpop.xlane.xlu0 %5555
    %5557 = vadd.xlane.f32.xlu0 %v5377
    %v5558 = vpop.xlane.xlu0 %5557
    %5559 = vadd.xlane.f32.xlu0 %v5378
    %v5560 = vpop.xlane.xlu0 %5559
    %5561 = vadd.xlane.f32.xlu0 %v5379
    %v5562 = vpop.xlane.xlu0 %5561
    %5563 = vadd.xlane.f32.xlu0 %v5380
    %v5564 = vpop.xlane.xlu0 %5563
    %5565 = vadd.xlane.f32.xlu0 %v5381
    %v5566 = vpop.xlane.xlu0 %5565
    %5567 = vadd.xlane.f32.xlu0 %v5382
    %v5568 = vpop.xlane.xlu0 %5567
    %5569 = vadd.xlane.f32.xlu0 %v5383
    %v5570 = vpop.xlane.xlu0 %5569
    %5571 = vadd.xlane.f32.xlu0 %v5384
    %v5572 = vpop.xlane.xlu0 %5571
    %5573 = vadd.xlane.f32.xlu0 %v5385
    %v5574 = vpop.xlane.xlu0 %5573
    %5575 = vadd.xlane.f32.xlu0 %v5386
    %v5576 = vpop.xlane.xlu0 %5575
    %5577 = vadd.xlane.f32.xlu0 %v5387
    %v5578 = vpop.xlane.xlu0 %5577
    %5579 = vadd.xlane.f32.xlu0 %v5388
    %v5580 = vpop.xlane.xlu0 %5579
    %5581 = vadd.xlane.f32.xlu0 %v5389
    %v5582 = vpop.xlane.xlu0 %5581
    %5583 = vadd.xlane.f32.xlu0 %v5390
    %v5584 = vpop.xlane.xlu0 %5583
    %5585 = vadd.xlane.f32.xlu0 %v5391
    %v5586 = vpop.xlane.xlu0 %5585
    %5587 = vadd.xlane.f32.xlu0 %v5392
    %v5588 = vpop.xlane.xlu0 %5587
    %5589 = vadd.xlane.f32.xlu0 %v5393
    %v5590 = vpop.xlane.xlu0 %5589
    %5591 = vadd.xlane.f32.xlu0 %v5394
    %v5592 = vpop.xlane.xlu0 %5591
    %5593 = vadd.xlane.f32.xlu0 %v5395
    %v5594 = vpop.xlane.xlu0 %5593
    %5595 = vadd.xlane.f32.xlu0 %v5396
    %v5596 = vpop.xlane.xlu0 %5595
    %5597 = vadd.xlane.f32.xlu0 %v5397
    %v5598 = vpop.xlane.xlu0 %5597
    %5599 = vadd.xlane.f32.xlu0 %v5398
    %v5600 = vpop.xlane.xlu0 %5599
    %5601 = vadd.xlane.f32.xlu0 %v5399
    %v5602 = vpop.xlane.xlu0 %5601
    %5603 = vadd.xlane.f32.xlu0 %v5400
    %v5604 = vpop.xlane.xlu0 %5603
    %5605 = vadd.xlane.f32.xlu0 %v5401
    %v5606 = vpop.xlane.xlu0 %5605
    %5607 = vadd.xlane.f32.xlu0 %v5402
    %v5608 = vpop.xlane.xlu0 %5607
    %5609 = vadd.xlane.f32.xlu0 %v5403
    %v5610 = vpop.xlane.xlu0 %5609
    %5611 = vadd.xlane.f32.xlu0 %v5404
    %v5612 = vpop.xlane.xlu0 %5611
    %5613 = vadd.xlane.f32.xlu0 %v5405
    %v5614 = vpop.xlane.xlu0 %5613
    %5615 = vadd.xlane.f32.xlu0 %v5406
    %v5616 = vpop.xlane.xlu0 %5615
    %5617 = vadd.xlane.f32.xlu0 %v5407
    %v5618 = vpop.xlane.xlu0 %5617
    %5619 = vadd.xlane.f32.xlu0 %v5408
    %v5620 = vpop.xlane.xlu0 %5619
    %5621 = vadd.xlane.f32.xlu0 %v5409
    %v5622 = vpop.xlane.xlu0 %5621
    %5623 = vadd.xlane.f32.xlu0 %v5410
    %v5624 = vpop.xlane.xlu0 %5623
    %5625 = vadd.xlane.f32.xlu0 %v5411
    %v5626 = vpop.xlane.xlu0 %5625
    %5627 = vadd.xlane.f32.xlu0 %v5412
    %v5628 = vpop.xlane.xlu0 %5627
    %5629 = vadd.xlane.f32.xlu0 %v5413
    %v5630 = vpop.xlane.xlu0 %5629
    %5631 = vadd.xlane.f32.xlu0 %v5414
    %v5632 = vpop.xlane.xlu0 %5631
    %5633 = vadd.xlane.f32.xlu0 %v5415
    %v5634 = vpop.xlane.xlu0 %5633
    %5635 = vadd.xlane.f32.xlu0 %v5416
    %v5636 = vpop.xlane.xlu0 %5635
    %5637 = vadd.xlane.f32.xlu0 %v5417
    %v5638 = vpop.xlane.xlu0 %5637
    %5639 = vadd.xlane.f32.xlu0 %v5418
    %v5640 = vpop.xlane.xlu0 %5639
    %5641 = vadd.xlane.f32.xlu0 %v5419
    %v5642 = vpop.xlane.xlu0 %5641
    %5643 = vadd.xlane.f32.xlu0 %v5420
    %v5644 = vpop.xlane.xlu0 %5643
    %5645 = vadd.xlane.f32.xlu0 %v5421
    %v5646 = vpop.xlane.xlu0 %5645
    %5647 = vadd.xlane.f32.xlu0 %v5422
    %v5648 = vpop.xlane.xlu0 %5647
    %5649 = vadd.xlane.f32.xlu0 %v5423
    %v5650 = vpop.xlane.xlu0 %5649
    %5651 = vadd.xlane.f32.xlu0 %v5424
    %v5652 = vpop.xlane.xlu0 %5651
    %5653 = vadd.xlane.f32.xlu0 %v5425
    %v5654 = vpop.xlane.xlu0 %5653
    %5655 = vadd.xlane.f32.xlu0 %v5426
    %v5656 = vpop.xlane.xlu0 %5655
    %5657 = vadd.xlane.f32.xlu0 %v5427
    %v5658 = vpop.xlane.xlu0 %5657
    %5659 = vadd.xlane.f32.xlu0 %v5428
    %v5660 = vpop.xlane.xlu0 %5659
    %5661 = vadd.xlane.f32.xlu0 %v5429
    %v5662 = vpop.xlane.xlu0 %5661
    %5663 = vadd.xlane.f32.xlu0 %v5430
    %v5664 = vpop.xlane.xlu0 %5663
    %5665 = vadd.xlane.f32.xlu0 %v5431
    %v5666 = vpop.xlane.xlu0 %5665
    %5667 = vadd.xlane.f32.xlu0 %v5432
    %v5668 = vpop.xlane.xlu0 %5667
    %5669 = vadd.xlane.f32.xlu0 %v5433
    %v5670 = vpop.xlane.xlu0 %5669
    %5671 = vadd.xlane.f32.xlu0 %v5434
    %v5672 = vpop.xlane.xlu0 %5671
    %5673 = vadd.xlane.f32.xlu0 %v5435
    %v5674 = vpop.xlane.xlu0 %5673
    %5675 = vadd.xlane.f32.xlu0 %v5436
    %v5676 = vpop.xlane.xlu0 %5675
    %5677 = vadd.xlane.f32.xlu0 %v5437
    %v5678 = vpop.xlane.xlu0 %5677
    %5679 = vadd.xlane.f32.xlu0 %v5438
    %v5680 = vpop.xlane.xlu0 %5679
    %5681 = vadd.xlane.f32.xlu0 %v5439
    %v5682 = vpop.xlane.xlu0 %5681
    %5683 = vadd.xlane.f32.xlu0 %v5440
    %v5684 = vpop.xlane.xlu0 %5683
    %5685 = vadd.xlane.f32.xlu0 %v5441
    %v5686 = vpop.xlane.xlu0 %5685
    %5687 = vadd.xlane.f32.xlu0 %v5442
    %v5688 = vpop.xlane.xlu0 %5687
    %5689 = vadd.xlane.f32.xlu0 %v5443
    %v5690 = vpop.xlane.xlu0 %5689
    %5691 = vadd.xlane.f32.xlu0 %v5444
    %v5692 = vpop.xlane.xlu0 %5691
    %5693 = vadd.xlane.f32.xlu0 %v5445
    %v5694 = vpop.xlane.xlu0 %5693
    %5695 = vadd.xlane.f32.xlu0 %v5446
    %v5696 = vpop.xlane.xlu0 %5695
    %5697 = vadd.xlane.f32.xlu0 %v5447
    %v5698 = vpop.xlane.xlu0 %5697
    %5699 = vadd.xlane.f32.xlu0 %v5448
    %v5700 = vpop.xlane.xlu0 %5699
    %v5701 = vmul.f32 %v5450, %v5196
    %v5702 = vmul.f32 %v5452, %v5196
    %v5703 = vmul.f32 %v5454, %v5196
    %v5704 = vmul.f32 %v5456, %v5196
    %v5705 = vmul.f32 %v5458, %v5196
    %v5706 = vmul.f32 %v5460, %v5196
    %v5707 = vmul.f32 %v5462, %v5196
    %v5708 = vmul.f32 %v5464, %v5196
    %v5709 = vmul.f32 %v5466, %v5196
    %v5710 = vmul.f32 %v5468, %v5196
    %v5711 = vmul.f32 %v5470, %v5196
    %v5712 = vmul.f32 %v5472, %v5196
    %v5713 = vmul.f32 %v5474, %v5196
    %v5714 = vmul.f32 %v5476, %v5196
    %v5715 = vmul.f32 %v5478, %v5196
    %v5716 = vmul.f32 %v5480, %v5196
    %v5717 = vmul.f32 %v5482, %v5196
    %v5718 = vmul.f32 %v5484, %v5196
    %v5719 = vmul.f32 %v5486, %v5196
    %v5720 = vmul.f32 %v5488, %v5196
    %v5721 = vmul.f32 %v5490, %v5196
    %v5722 = vmul.f32 %v5492, %v5196
    %v5723 = vmul.f32 %v5494, %v5196
    %v5724 = vmul.f32 %v5496, %v5196
    %v5725 = vmul.f32 %v5498, %v5196
    %v5726 = vmul.f32 %v5500, %v5196
    %v5727 = vmul.f32 %v5502, %v5196
    %v5728 = vmul.f32 %v5504, %v5196
    %v5729 = vmul.f32 %v5506, %v5196
    %v5730 = vmul.f32 %v5508, %v5196
    %v5731 = vmul.f32 %v5510, %v5196
    %v5732 = vmul.f32 %v5512, %v5196
    %v5733 = vmul.f32 %v5514, %v5196
    %v5734 = vmul.f32 %v5516, %v5196
    %v5735 = vmul.f32 %v5518, %v5196
    %v5736 = vmul.f32 %v5520, %v5196
    %v5737 = vmul.f32 %v5522, %v5196
    %v5738 = vmul.f32 %v5524, %v5196
    %v5739 = vmul.f32 %v5526, %v5196
    %v5740 = vmul.f32 %v5528, %v5196
    %v5741 = vmul.f32 %v5530, %v5196
    %v5742 = vmul.f32 %v5532, %v5196
    %v5743 = vmul.f32 %v5534, %v5196
    %v5744 = vmul.f32 %v5536, %v5196
    %v5745 = vmul.f32 %v5538, %v5196
    %v5746 = vmul.f32 %v5540, %v5196
    %v5747 = vmul.f32 %v5542, %v5196
    %v5748 = vmul.f32 %v5544, %v5196
    %v5749 = vmul.f32 %v5546, %v5196
    %v5750 = vmul.f32 %v5548, %v5196
    %v5751 = vmul.f32 %v5550, %v5196
    %v5752 = vmul.f32 %v5552, %v5196
    %v5753 = vmul.f32 %v5554, %v5196
    %v5754 = vmul.f32 %v5556, %v5196
    %v5755 = vmul.f32 %v5558, %v5196
    %v5756 = vmul.f32 %v5560, %v5196
    %v5757 = vmul.f32 %v5562, %v5196
    %v5758 = vmul.f32 %v5564, %v5196
    %v5759 = vmul.f32 %v5566, %v5196
    %v5760 = vmul.f32 %v5568, %v5196
    %v5761 = vmul.f32 %v5570, %v5196
    %v5762 = vmul.f32 %v5572, %v5196
    %v5763 = vmul.f32 %v5574, %v5196
    %v5764 = vmul.f32 %v5576, %v5196
    %v5765 = vmul.f32 %v5578, %v5196
    %v5766 = vmul.f32 %v5580, %v5196
    %v5767 = vmul.f32 %v5582, %v5196
    %v5768 = vmul.f32 %v5584, %v5196
    %v5769 = vmul.f32 %v5586, %v5196
    %v5770 = vmul.f32 %v5588, %v5196
    %v5771 = vmul.f32 %v5590, %v5196
    %v5772 = vmul.f32 %v5592, %v5196
    %v5773 = vmul.f32 %v5594, %v5196
    %v5774 = vmul.f32 %v5596, %v5196
    %v5775 = vmul.f32 %v5598, %v5196
    %v5776 = vmul.f32 %v5600, %v5196
    %v5777 = vmul.f32 %v5602, %v5196
    %v5778 = vmul.f32 %v5604, %v5196
    %v5779 = vmul.f32 %v5606, %v5196
    %v5780 = vmul.f32 %v5608, %v5196
    %v5781 = vmul.f32 %v5610, %v5196
    %v5782 = vmul.f32 %v5612, %v5196
    %v5783 = vmul.f32 %v5614, %v5196
    %v5784 = vmul.f32 %v5616, %v5196
    %v5785 = vmul.f32 %v5618, %v5196
    %v5786 = vmul.f32 %v5620, %v5196
    %v5787 = vmul.f32 %v5622, %v5196
    %v5788 = vmul.f32 %v5624, %v5196
    %v5789 = vmul.f32 %v5626, %v5196
    %v5790 = vmul.f32 %v5628, %v5196
    %v5791 = vmul.f32 %v5630, %v5196
    %v5792 = vmul.f32 %v5632, %v5196
    %v5793 = vmul.f32 %v5634, %v5196
    %v5794 = vmul.f32 %v5636, %v5196
    %v5795 = vmul.f32 %v5638, %v5196
    %v5796 = vmul.f32 %v5640, %v5196
    %v5797 = vmul.f32 %v5642, %v5196
    %v5798 = vmul.f32 %v5644, %v5196
    %v5799 = vmul.f32 %v5646, %v5196
    %v5800 = vmul.f32 %v5648, %v5196
    %v5801 = vmul.f32 %v5650, %v5196
    %v5802 = vmul.f32 %v5652, %v5196
    %v5803 = vmul.f32 %v5654, %v5196
    %v5804 = vmul.f32 %v5656, %v5196
    %v5805 = vmul.f32 %v5658, %v5196
    %v5806 = vmul.f32 %v5660, %v5196
    %v5807 = vmul.f32 %v5662, %v5196
    %v5808 = vmul.f32 %v5664, %v5196
    %v5809 = vmul.f32 %v5666, %v5196
    %v5810 = vmul.f32 %v5668, %v5196
    %v5811 = vmul.f32 %v5670, %v5196
    %v5812 = vmul.f32 %v5672, %v5196
    %v5813 = vmul.f32 %v5674, %v5196
    %v5814 = vmul.f32 %v5676, %v5196
    %v5815 = vmul.f32 %v5678, %v5196
    %v5816 = vmul.f32 %v5680, %v5196
    %v5817 = vmul.f32 %v5682, %v5196
    %v5818 = vmul.f32 %v5684, %v5196
    %v5819 = vmul.f32 %v5686, %v5196
    %v5820 = vmul.f32 %v5688, %v5196
    %v5821 = vmul.f32 %v5690, %v5196
    %v5822 = vmul.f32 %v5692, %v5196
    %v5823 = vmul.f32 %v5694, %v5196
    %v5824 = vmul.f32 %v5696, %v5196
    %v5825 = vmul.f32 %v5698, %v5196
    %v5826 = vmul.f32 %v5700, %v5196
    %v5827 = vmul.f32 %v5197, %v5197
    %v5828 = vmul.f32 %v5198, %v5198
    %v5829 = vmul.f32 %v5199, %v5199
    %v5830 = vmul.f32 %v5200, %v5200
    %v5831 = vmul.f32 %v5201, %v5201
    %v5832 = vmul.f32 %v5202, %v5202
    %v5833 = vmul.f32 %v5203, %v5203
    %v5834 = vmul.f32 %v5204, %v5204
    %v5835 = vmul.f32 %v5205, %v5205
    %v5836 = vmul.f32 %v5206, %v5206
    %v5837 = vmul.f32 %v5207, %v5207
    %v5838 = vmul.f32 %v5208, %v5208
    %v5839 = vmul.f32 %v5209, %v5209
    %v5840 = vmul.f32 %v5210, %v5210
    %v5841 = vmul.f32 %v5211, %v5211
    %v5842 = vmul.f32 %v5212, %v5212
    %v5843 = vmul.f32 %v5213, %v5213
    %v5844 = vmul.f32 %v5214, %v5214
    %v5845 = vmul.f32 %v5215, %v5215
    %v5846 = vmul.f32 %v5216, %v5216
    %v5847 = vmul.f32 %v5217, %v5217
    %v5848 = vmul.f32 %v5218, %v5218
    %v5849 = vmul.f32 %v5219, %v5219
    %v5850 = vmul.f32 %v5220, %v5220
    %v5851 = vmul.f32 %v5221, %v5221
    %v5852 = vmul.f32 %v5222, %v5222
    %v5853 = vmul.f32 %v5223, %v5223
    %v5854 = vmul.f32 %v5224, %v5224
    %v5855 = vmul.f32 %v5225, %v5225
    %v5856 = vmul.f32 %v5226, %v5226
    %v5857 = vmul.f32 %v5227, %v5227
    %v5858 = vmul.f32 %v5228, %v5228
    %v5859 = vmul.f32 %v5229, %v5229
    %v5860 = vmul.f32 %v5230, %v5230
    %v5861 = vmul.f32 %v5231, %v5231
    %v5862 = vmul.f32 %v5232, %v5232
    %v5863 = vmul.f32 %v5233, %v5233
    %v5864 = vmul.f32 %v5234, %v5234
    %v5865 = vmul.f32 %v5235, %v5235
    %v5866 = vmul.f32 %v5236, %v5236
    %v5867 = vmul.f32 %v5237, %v5237
    %v5868 = vmul.f32 %v5238, %v5238
    %v5869 = vmul.f32 %v5239, %v5239
    %v5870 = vmul.f32 %v5240, %v5240
    %v5871 = vmul.f32 %v5241, %v5241
    %v5872 = vmul.f32 %v5242, %v5242
    %v5873 = vmul.f32 %v5243, %v5243
    %v5874 = vmul.f32 %v5244, %v5244
    %v5875 = vmul.f32 %v5245, %v5245
    %v5876 = vmul.f32 %v5246, %v5246
    %v5877 = vmul.f32 %v5247, %v5247
    %v5878 = vmul.f32 %v5248, %v5248
    %v5879 = vmul.f32 %v5249, %v5249
    %v5880 = vmul.f32 %v5250, %v5250
    %v5881 = vmul.f32 %v5251, %v5251
    %v5882 = vmul.f32 %v5252, %v5252
    %v5883 = vmul.f32 %v5253, %v5253
    %v5884 = vmul.f32 %v5254, %v5254
    %v5885 = vmul.f32 %v5255, %v5255
    %v5886 = vmul.f32 %v5256, %v5256
    %v5887 = vmul.f32 %v5257, %v5257
    %v5888 = vmul.f32 %v5258, %v5258
    %v5889 = vmul.f32 %v5259, %v5259
    %v5890 = vmul.f32 %v5260, %v5260
    %v5891 = vmul.f32 %v5261, %v5261
    %v5892 = vmul.f32 %v5262, %v5262
    %v5893 = vmul.f32 %v5263, %v5263
    %v5894 = vmul.f32 %v5264, %v5264
    %v5895 = vmul.f32 %v5265, %v5265
    %v5896 = vmul.f32 %v5266, %v5266
    %v5897 = vmul.f32 %v5267, %v5267
    %v5898 = vmul.f32 %v5268, %v5268
    %v5899 = vmul.f32 %v5269, %v5269
    %v5900 = vmul.f32 %v5270, %v5270
    %v5901 = vmul.f32 %v5271, %v5271
    %v5902 = vmul.f32 %v5272, %v5272
    %v5903 = vmul.f32 %v5273, %v5273
    %v5904 = vmul.f32 %v5274, %v5274
    %v5905 = vmul.f32 %v5275, %v5275
    %v5906 = vmul.f32 %v5276, %v5276
    %v5907 = vmul.f32 %v5277, %v5277
    %v5908 = vmul.f32 %v5278, %v5278
    %v5909 = vmul.f32 %v5279, %v5279
    %v5910 = vmul.f32 %v5280, %v5280
    %v5911 = vmul.f32 %v5281, %v5281
    %v5912 = vmul.f32 %v5282, %v5282
    %v5913 = vmul.f32 %v5283, %v5283
    %v5914 = vmul.f32 %v5284, %v5284
    %v5915 = vmul.f32 %v5285, %v5285
    %v5916 = vmul.f32 %v5286, %v5286
    %v5917 = vmul.f32 %v5287, %v5287
    %v5918 = vmul.f32 %v5288, %v5288
    %v5919 = vmul.f32 %v5289, %v5289
    %v5920 = vmul.f32 %v5290, %v5290
    %v5921 = vmul.f32 %v5291, %v5291
    %v5922 = vmul.f32 %v5292, %v5292
    %v5923 = vmul.f32 %v5293, %v5293
    %v5924 = vmul.f32 %v5294, %v5294
    %v5925 = vmul.f32 %v5295, %v5295
    %v5926 = vmul.f32 %v5296, %v5296
    %v5927 = vmul.f32 %v5297, %v5297
    %v5928 = vmul.f32 %v5298, %v5298
    %v5929 = vmul.f32 %v5299, %v5299
    %v5930 = vmul.f32 %v5300, %v5300
    %v5931 = vmul.f32 %v5301, %v5301
    %v5932 = vmul.f32 %v5302, %v5302
    %v5933 = vmul.f32 %v5303, %v5303
    %v5934 = vmul.f32 %v5304, %v5304
    %v5935 = vmul.f32 %v5305, %v5305
    %v5936 = vmul.f32 %v5306, %v5306
    %v5937 = vmul.f32 %v5307, %v5307
    %v5938 = vmul.f32 %v5308, %v5308
    %v5939 = vmul.f32 %v5309, %v5309
    %v5940 = vmul.f32 %v5310, %v5310
    %v5941 = vmul.f32 %v5311, %v5311
    %v5942 = vmul.f32 %v5312, %v5312
    %v5943 = vmul.f32 %v5313, %v5313
    %v5944 = vmul.f32 %v5314, %v5314
    %v5945 = vmul.f32 %v5315, %v5315
    %v5946 = vmul.f32 %v5316, %v5316
    %v5947 = vmul.f32 %v5317, %v5317
    %v5948 = vmul.f32 %v5318, %v5318
    %v5949 = vmul.f32 %v5319, %v5319
    %v5950 = vmul.f32 %v5320, %v5320
    %v5951 = vmul.f32 %v5321, %v5321
    %v5952 = vmul.f32 %v5322, %v5322
    %v5953 = vsub.f32 %v5701, %v5827
    %v5954 = vsub.f32 %v5702, %v5828
    %v5955 = vsub.f32 %v5703, %v5829
    %v5956 = vsub.f32 %v5704, %v5830
    %v5957 = vsub.f32 %v5705, %v5831
    %v5958 = vsub.f32 %v5706, %v5832
    %v5959 = vsub.f32 %v5707, %v5833
    %v5960 = vsub.f32 %v5708, %v5834
    %v5961 = vsub.f32 %v5709, %v5835
    %v5962 = vsub.f32 %v5710, %v5836
    %v5963 = vsub.f32 %v5711, %v5837
    %v5964 = vsub.f32 %v5712, %v5838
    %v5965 = vsub.f32 %v5713, %v5839
    %v5966 = vsub.f32 %v5714, %v5840
    %v5967 = vsub.f32 %v5715, %v5841
    %v5968 = vsub.f32 %v5716, %v5842
    %v5969 = vsub.f32 %v5717, %v5843
    %v5970 = vsub.f32 %v5718, %v5844
    %v5971 = vsub.f32 %v5719, %v5845
    %v5972 = vsub.f32 %v5720, %v5846
    %v5973 = vsub.f32 %v5721, %v5847
    %v5974 = vsub.f32 %v5722, %v5848
    %v5975 = vsub.f32 %v5723, %v5849
    %v5976 = vsub.f32 %v5724, %v5850
    %v5977 = vsub.f32 %v5725, %v5851
    %v5978 = vsub.f32 %v5726, %v5852
    %v5979 = vsub.f32 %v5727, %v5853
    %v5980 = vsub.f32 %v5728, %v5854
    %v5981 = vsub.f32 %v5729, %v5855
    %v5982 = vsub.f32 %v5730, %v5856
    %v5983 = vsub.f32 %v5731, %v5857
    %v5984 = vsub.f32 %v5732, %v5858
    %v5985 = vsub.f32 %v5733, %v5859
    %v5986 = vsub.f32 %v5734, %v5860
    %v5987 = vsub.f32 %v5735, %v5861
    %v5988 = vsub.f32 %v5736, %v5862
    %v5989 = vsub.f32 %v5737, %v5863
    %v5990 = vsub.f32 %v5738, %v5864
    %v5991 = vsub.f32 %v5739, %v5865
    %v5992 = vsub.f32 %v5740, %v5866
    %v5993 = vsub.f32 %v5741, %v5867
    %v5994 = vsub.f32 %v5742, %v5868
    %v5995 = vsub.f32 %v5743, %v5869
    %v5996 = vsub.f32 %v5744, %v5870
    %v5997 = vsub.f32 %v5745, %v5871
    %v5998 = vsub.f32 %v5746, %v5872
    %v5999 = vsub.f32 %v5747, %v5873
    %v6000 = vsub.f32 %v5748, %v5874
    %v6001 = vsub.f32 %v5749, %v5875
    %v6002 = vsub.f32 %v5750, %v5876
    %v6003 = vsub.f32 %v5751, %v5877
    %v6004 = vsub.f32 %v5752, %v5878
    %v6005 = vsub.f32 %v5753, %v5879
    %v6006 = vsub.f32 %v5754, %v5880
    %v6007 = vsub.f32 %v5755, %v5881
    %v6008 = vsub.f32 %v5756, %v5882
    %v6009 = vsub.f32 %v5757, %v5883
    %v6010 = vsub.f32 %v5758, %v5884
    %v6011 = vsub.f32 %v5759, %v5885
    %v6012 = vsub.f32 %v5760, %v5886
    %v6013 = vsub.f32 %v5761, %v5887
    %v6014 = vsub.f32 %v5762, %v5888
    %v6015 = vsub.f32 %v5763, %v5889
    %v6016 = vsub.f32 %v5764, %v5890
    %v6017 = vsub.f32 %v5765, %v5891
    %v6018 = vsub.f32 %v5766, %v5892
    %v6019 = vsub.f32 %v5767, %v5893
    %v6020 = vsub.f32 %v5768, %v5894
    %v6021 = vsub.f32 %v5769, %v5895
    %v6022 = vsub.f32 %v5770, %v5896
    %v6023 = vsub.f32 %v5771, %v5897
    %v6024 = vsub.f32 %v5772, %v5898
    %v6025 = vsub.f32 %v5773, %v5899
    %v6026 = vsub.f32 %v5774, %v5900
    %v6027 = vsub.f32 %v5775, %v5901
    %v6028 = vsub.f32 %v5776, %v5902
    %v6029 = vsub.f32 %v5777, %v5903
    %v6030 = vsub.f32 %v5778, %v5904
    %v6031 = vsub.f32 %v5779, %v5905
    %v6032 = vsub.f32 %v5780, %v5906
    %v6033 = vsub.f32 %v5781, %v5907
    %v6034 = vsub.f32 %v5782, %v5908
    %v6035 = vsub.f32 %v5783, %v5909
    %v6036 = vsub.f32 %v5784, %v5910
    %v6037 = vsub.f32 %v5785, %v5911
    %v6038 = vsub.f32 %v5786, %v5912
    %v6039 = vsub.f32 %v5787, %v5913
    %v6040 = vsub.f32 %v5788, %v5914
    %v6041 = vsub.f32 %v5789, %v5915
    %v6042 = vsub.f32 %v5790, %v5916
    %v6043 = vsub.f32 %v5791, %v5917
    %v6044 = vsub.f32 %v5792, %v5918
    %v6045 = vsub.f32 %v5793, %v5919
    %v6046 = vsub.f32 %v5794, %v5920
    %v6047 = vsub.f32 %v5795, %v5921
    %v6048 = vsub.f32 %v5796, %v5922
    %v6049 = vsub.f32 %v5797, %v5923
    %v6050 = vsub.f32 %v5798, %v5924
    %v6051 = vsub.f32 %v5799, %v5925
    %v6052 = vsub.f32 %v5800, %v5926
    %v6053 = vsub.f32 %v5801, %v5927
    %v6054 = vsub.f32 %v5802, %v5928
    %v6055 = vsub.f32 %v5803, %v5929
    %v6056 = vsub.f32 %v5804, %v5930
    %v6057 = vsub.f32 %v5805, %v5931
    %v6058 = vsub.f32 %v5806, %v5932
    %v6059 = vsub.f32 %v5807, %v5933
    %v6060 = vsub.f32 %v5808, %v5934
    %v6061 = vsub.f32 %v5809, %v5935
    %v6062 = vsub.f32 %v5810, %v5936
    %v6063 = vsub.f32 %v5811, %v5937
    %v6064 = vsub.f32 %v5812, %v5938
    %v6065 = vsub.f32 %v5813, %v5939
    %v6066 = vsub.f32 %v5814, %v5940
    %v6067 = vsub.f32 %v5815, %v5941
    %v6068 = vsub.f32 %v5816, %v5942
    %v6069 = vsub.f32 %v5817, %v5943
    %v6070 = vsub.f32 %v5818, %v5944
    %v6071 = vsub.f32 %v5819, %v5945
    %v6072 = vsub.f32 %v5820, %v5946
    %v6073 = vsub.f32 %v5821, %v5947
    %v6074 = vsub.f32 %v5822, %v5948
    %v6075 = vsub.f32 %v5823, %v5949
    %v6076 = vsub.f32 %v5824, %v5950
    %v6077 = vsub.f32 %v5825, %v5951
    %v6078 = vsub.f32 %v5826, %v5952
    %v6079 = vmax.f32 %v5953, 0.0
    %v6080 = vmax.f32 %v5954, 0.0
    %v6081 = vmax.f32 %v5955, 0.0
    %v6082 = vmax.f32 %v5956, 0.0
    %v6083 = vmax.f32 %v5957, 0.0
    %v6084 = vmax.f32 %v5958, 0.0
    %v6085 = vmax.f32 %v5959, 0.0
    %v6086 = vmax.f32 %v5960, 0.0
    %v6087 = vmax.f32 %v5961, 0.0
    %v6088 = vmax.f32 %v5962, 0.0
    %v6089 = vmax.f32 %v5963, 0.0
    %v6090 = vmax.f32 %v5964, 0.0
    %v6091 = vmax.f32 %v5965, 0.0
    %v6092 = vmax.f32 %v5966, 0.0
    %v6093 = vmax.f32 %v5967, 0.0
    %v6094 = vmax.f32 %v5968, 0.0
    %v6095 = vmax.f32 %v5969, 0.0
    %v6096 = vmax.f32 %v5970, 0.0
    %v6097 = vmax.f32 %v5971, 0.0
    %v6098 = vmax.f32 %v5972, 0.0
    %v6099 = vmax.f32 %v5973, 0.0
    %v6100 = vmax.f32 %v5974, 0.0
    %v6101 = vmax.f32 %v5975, 0.0
    %v6102 = vmax.f32 %v5976, 0.0
    %v6103 = vmax.f32 %v5977, 0.0
    %v6104 = vmax.f32 %v5978, 0.0
    %v6105 = vmax.f32 %v5979, 0.0
    %v6106 = vmax.f32 %v5980, 0.0
    %v6107 = vmax.f32 %v5981, 0.0
    %v6108 = vmax.f32 %v5982, 0.0
    %v6109 = vmax.f32 %v5983, 0.0
    %v6110 = vmax.f32 %v5984, 0.0
    %v6111 = vmax.f32 %v5985, 0.0
    %v6112 = vmax.f32 %v5986, 0.0
    %v6113 = vmax.f32 %v5987, 0.0
    %v6114 = vmax.f32 %v5988, 0.0
    %v6115 = vmax.f32 %v5989, 0.0
    %v6116 = vmax.f32 %v5990, 0.0
    %v6117 = vmax.f32 %v5991, 0.0
    %v6118 = vmax.f32 %v5992, 0.0
    %v6119 = vmax.f32 %v5993, 0.0
    %v6120 = vmax.f32 %v5994, 0.0
    %v6121 = vmax.f32 %v5995, 0.0
    %v6122 = vmax.f32 %v5996, 0.0
    %v6123 = vmax.f32 %v5997, 0.0
    %v6124 = vmax.f32 %v5998, 0.0
    %v6125 = vmax.f32 %v5999, 0.0
    %v6126 = vmax.f32 %v6000, 0.0
    %v6127 = vmax.f32 %v6001, 0.0
    %v6128 = vmax.f32 %v6002, 0.0
    %v6129 = vmax.f32 %v6003, 0.0
    %v6130 = vmax.f32 %v6004, 0.0
    %v6131 = vmax.f32 %v6005, 0.0
    %v6132 = vmax.f32 %v6006, 0.0
    %v6133 = vmax.f32 %v6007, 0.0
    %v6134 = vmax.f32 %v6008, 0.0
    %v6135 = vmax.f32 %v6009, 0.0
    %v6136 = vmax.f32 %v6010, 0.0
    %v6137 = vmax.f32 %v6011, 0.0
    %v6138 = vmax.f32 %v6012, 0.0
    %v6139 = vmax.f32 %v6013, 0.0
    %v6140 = vmax.f32 %v6014, 0.0
    %v6141 = vmax.f32 %v6015, 0.0
    %v6142 = vmax.f32 %v6016, 0.0
    %v6143 = vmax.f32 %v6017, 0.0
    %v6144 = vmax.f32 %v6018, 0.0
    %v6145 = vmax.f32 %v6019, 0.0
    %v6146 = vmax.f32 %v6020, 0.0
    %v6147 = vmax.f32 %v6021, 0.0
    %v6148 = vmax.f32 %v6022, 0.0
    %v6149 = vmax.f32 %v6023, 0.0
    %v6150 = vmax.f32 %v6024, 0.0
    %v6151 = vmax.f32 %v6025, 0.0
    %v6152 = vmax.f32 %v6026, 0.0
    %v6153 = vmax.f32 %v6027, 0.0
    %v6154 = vmax.f32 %v6028, 0.0
    %v6155 = vmax.f32 %v6029, 0.0
    %v6156 = vmax.f32 %v6030, 0.0
    %v6157 = vmax.f32 %v6031, 0.0
    %v6158 = vmax.f32 %v6032, 0.0
    %v6159 = vmax.f32 %v6033, 0.0
    %v6160 = vmax.f32 %v6034, 0.0
    %v6161 = vmax.f32 %v6035, 0.0
    %v6162 = vmax.f32 %v6036, 0.0
    %v6163 = vmax.f32 %v6037, 0.0
    %v6164 = vmax.f32 %v6038, 0.0
    %v6165 = vmax.f32 %v6039, 0.0
    %v6166 = vmax.f32 %v6040, 0.0
    %v6167 = vmax.f32 %v6041, 0.0
    %v6168 = vmax.f32 %v6042, 0.0
    %v6169 = vmax.f32 %v6043, 0.0
    %v6170 = vmax.f32 %v6044, 0.0
    %v6171 = vmax.f32 %v6045, 0.0
    %v6172 = vmax.f32 %v6046, 0.0
    %v6173 = vmax.f32 %v6047, 0.0
    %v6174 = vmax.f32 %v6048, 0.0
    %v6175 = vmax.f32 %v6049, 0.0
    %v6176 = vmax.f32 %v6050, 0.0
    %v6177 = vmax.f32 %v6051, 0.0
    %v6178 = vmax.f32 %v6052, 0.0
    %v6179 = vmax.f32 %v6053, 0.0
    %v6180 = vmax.f32 %v6054, 0.0
    %v6181 = vmax.f32 %v6055, 0.0
    %v6182 = vmax.f32 %v6056, 0.0
    %v6183 = vmax.f32 %v6057, 0.0
    %v6184 = vmax.f32 %v6058, 0.0
    %v6185 = vmax.f32 %v6059, 0.0
    %v6186 = vmax.f32 %v6060, 0.0
    %v6187 = vmax.f32 %v6061, 0.0
    %v6188 = vmax.f32 %v6062, 0.0
    %v6189 = vmax.f32 %v6063, 0.0
    %v6190 = vmax.f32 %v6064, 0.0
    %v6191 = vmax.f32 %v6065, 0.0
    %v6192 = vmax.f32 %v6066, 0.0
    %v6193 = vmax.f32 %v6067, 0.0
    %v6194 = vmax.f32 %v6068, 0.0
    %v6195 = vmax.f32 %v6069, 0.0
    %v6196 = vmax.f32 %v6070, 0.0
    %v6197 = vmax.f32 %v6071, 0.0
    %v6198 = vmax.f32 %v6072, 0.0
    %v6199 = vmax.f32 %v6073, 0.0
    %v6200 = vmax.f32 %v6074, 0.0
    %v6201 = vmax.f32 %v6075, 0.0
    %v6202 = vmax.f32 %v6076, 0.0
    %v6203 = vmax.f32 %v6077, 0.0
    %v6204 = vmax.f32 %v6078, 0.0
    %v6205 = vsub.f32 %v4442, %v5197
    %v6206 = vsub.f32 %v4445, %v5198
    %v6207 = vsub.f32 %v4450, %v5199
    %v6208 = vsub.f32 %v4453, %v5200
    %v6209 = vsub.f32 %v4458, %v5201
    %v6210 = vsub.f32 %v4461, %v5202
    %v6211 = vsub.f32 %v4466, %v5203
    %v6212 = vsub.f32 %v4469, %v5204
    %v6213 = vsub.f32 %v4474, %v5205
    %v6214 = vsub.f32 %v4477, %v5206
    %v6215 = vsub.f32 %v4482, %v5207
    %v6216 = vsub.f32 %v4485, %v5208
    %v6217 = vsub.f32 %v4490, %v5209
    %v6218 = vsub.f32 %v4493, %v5210
    %v6219 = vsub.f32 %v4498, %v5211
    %v6220 = vsub.f32 %v4501, %v5212
    %v6221 = vsub.f32 %v4506, %v5213
    %v6222 = vsub.f32 %v4509, %v5214
    %v6223 = vsub.f32 %v4514, %v5215
    %v6224 = vsub.f32 %v4517, %v5216
    %v6225 = vsub.f32 %v4522, %v5217
    %v6226 = vsub.f32 %v4525, %v5218
    %v6227 = vsub.f32 %v4530, %v5219
    %v6228 = vsub.f32 %v4533, %v5220
    %v6229 = vsub.f32 %v4538, %v5221
    %v6230 = vsub.f32 %v4541, %v5222
    %v6231 = vsub.f32 %v4546, %v5223
    %v6232 = vsub.f32 %v4549, %v5224
    %v6233 = vsub.f32 %v4554, %v5225
    %v6234 = vsub.f32 %v4557, %v5226
    %v6235 = vsub.f32 %v4562, %v5227
    %v6236 = vsub.f32 %v4565, %v5228
    %v6237 = vsub.f32 %v4570, %v5229
    %v6238 = vsub.f32 %v4573, %v5230
    %v6239 = vsub.f32 %v4578, %v5231
    %v6240 = vsub.f32 %v4581, %v5232
    %v6241 = vsub.f32 %v4586, %v5233
    %v6242 = vsub.f32 %v4589, %v5234
    %v6243 = vsub.f32 %v4594, %v5235
    %v6244 = vsub.f32 %v4597, %v5236
    %v6245 = vsub.f32 %v4602, %v5237
    %v6246 = vsub.f32 %v4605, %v5238
    %v6247 = vsub.f32 %v4610, %v5239
    %v6248 = vsub.f32 %v4613, %v5240
    %v6249 = vsub.f32 %v4618, %v5241
    %v6250 = vsub.f32 %v4621, %v5242
    %v6251 = vsub.f32 %v4626, %v5243
    %v6252 = vsub.f32 %v4629, %v5244
    %v6253 = vsub.f32 %v4634, %v5245
    %v6254 = vsub.f32 %v4637, %v5246
    %v6255 = vsub.f32 %v4642, %v5247
    %v6256 = vsub.f32 %v4645, %v5248
    %v6257 = vsub.f32 %v4650, %v5249
    %v6258 = vsub.f32 %v4653, %v5250
    %v6259 = vsub.f32 %v4658, %v5251
    %v6260 = vsub.f32 %v4661, %v5252
    %v6261 = vsub.f32 %v4666, %v5253
    %v6262 = vsub.f32 %v4669, %v5254
    %v6263 = vsub.f32 %v4674, %v5255
    %v6264 = vsub.f32 %v4677, %v5256
    %v6265 = vsub.f32 %v4682, %v5257
    %v6266 = vsub.f32 %v4685, %v5258
    %v6267 = vsub.f32 %v4690, %v5259
    %v6268 = vsub.f32 %v4693, %v5260
    %v6269 = vsub.f32 %v4698, %v5261
    %v6270 = vsub.f32 %v4701, %v5262
    %v6271 = vsub.f32 %v4706, %v5263
    %v6272 = vsub.f32 %v4709, %v5264
    %v6273 = vsub.f32 %v4714, %v5265
    %v6274 = vsub.f32 %v4717, %v5266
    %v6275 = vsub.f32 %v4722, %v5267
    %v6276 = vsub.f32 %v4725, %v5268
    %v6277 = vsub.f32 %v4730, %v5269
    %v6278 = vsub.f32 %v4733, %v5270
    %v6279 = vsub.f32 %v4738, %v5271
    %v6280 = vsub.f32 %v4741, %v5272
    %v6281 = vsub.f32 %v4746, %v5273
    %v6282 = vsub.f32 %v4749, %v5274
    %v6283 = vsub.f32 %v4754, %v5275
    %v6284 = vsub.f32 %v4757, %v5276
    %v6285 = vsub.f32 %v4762, %v5277
    %v6286 = vsub.f32 %v4765, %v5278
    %v6287 = vsub.f32 %v4770, %v5279
    %v6288 = vsub.f32 %v4773, %v5280
    %v6289 = vsub.f32 %v4778, %v5281
    %v6290 = vsub.f32 %v4781, %v5282
    %v6291 = vsub.f32 %v4786, %v5283
    %v6292 = vsub.f32 %v4789, %v5284
    %v6293 = vsub.f32 %v4794, %v5285
    %v6294 = vsub.f32 %v4797, %v5286
    %v6295 = vsub.f32 %v4802, %v5287
    %v6296 = vsub.f32 %v4805, %v5288
    %v6297 = vsub.f32 %v4810, %v5289
    %v6298 = vsub.f32 %v4813, %v5290
    %v6299 = vsub.f32 %v4818, %v5291
    %v6300 = vsub.f32 %v4821, %v5292
    %v6301 = vsub.f32 %v4826, %v5293
    %v6302 = vsub.f32 %v4829, %v5294
    %v6303 = vsub.f32 %v4834, %v5295
    %v6304 = vsub.f32 %v4837, %v5296
    %v6305 = vsub.f32 %v4842, %v5297
    %v6306 = vsub.f32 %v4845, %v5298
    %v6307 = vsub.f32 %v4850, %v5299
    %v6308 = vsub.f32 %v4853, %v5300
    %v6309 = vsub.f32 %v4858, %v5301
    %v6310 = vsub.f32 %v4861, %v5302
    %v6311 = vsub.f32 %v4866, %v5303
    %v6312 = vsub.f32 %v4869, %v5304
    %v6313 = vsub.f32 %v4874, %v5305
    %v6314 = vsub.f32 %v4877, %v5306
    %v6315 = vsub.f32 %v4882, %v5307
    %v6316 = vsub.f32 %v4885, %v5308
    %v6317 = vsub.f32 %v4890, %v5309
    %v6318 = vsub.f32 %v4893, %v5310
    %v6319 = vsub.f32 %v4898, %v5311
    %v6320 = vsub.f32 %v4901, %v5312
    %v6321 = vsub.f32 %v4906, %v5313
    %v6322 = vsub.f32 %v4909, %v5314
    %v6323 = vsub.f32 %v4914, %v5315
    %v6324 = vsub.f32 %v4917, %v5316
    %v6325 = vsub.f32 %v4922, %v5317
    %v6326 = vsub.f32 %v4925, %v5318
    %v6327 = vsub.f32 %v4930, %v5319
    %v6328 = vsub.f32 %v4933, %v5320
    %v6329 = vsub.f32 %v4938, %v5321
    %v6330 = vsub.f32 %v4941, %v5322
    %v6331 = vadd.f32 %v6079, 1e-05
    %v6332 = vadd.f32 %v6080, 1e-05
    %v6333 = vadd.f32 %v6081, 1e-05
    %v6334 = vadd.f32 %v6082, 1e-05
    %v6335 = vadd.f32 %v6083, 1e-05
    %v6336 = vadd.f32 %v6084, 1e-05
    %v6337 = vadd.f32 %v6085, 1e-05
    %v6338 = vadd.f32 %v6086, 1e-05
    %v6339 = vadd.f32 %v6087, 1e-05
    %v6340 = vadd.f32 %v6088, 1e-05
    %v6341 = vadd.f32 %v6089, 1e-05
    %v6342 = vadd.f32 %v6090, 1e-05
    %v6343 = vadd.f32 %v6091, 1e-05
    %v6344 = vadd.f32 %v6092, 1e-05
    %v6345 = vadd.f32 %v6093, 1e-05
    %v6346 = vadd.f32 %v6094, 1e-05
    %v6347 = vadd.f32 %v6095, 1e-05
    %v6348 = vadd.f32 %v6096, 1e-05
    %v6349 = vadd.f32 %v6097, 1e-05
    %v6350 = vadd.f32 %v6098, 1e-05
    %v6351 = vadd.f32 %v6099, 1e-05
    %v6352 = vadd.f32 %v6100, 1e-05
    %v6353 = vadd.f32 %v6101, 1e-05
    %v6354 = vadd.f32 %v6102, 1e-05
    %v6355 = vadd.f32 %v6103, 1e-05
    %v6356 = vadd.f32 %v6104, 1e-05
    %v6357 = vadd.f32 %v6105, 1e-05
    %v6358 = vadd.f32 %v6106, 1e-05
    %v6359 = vadd.f32 %v6107, 1e-05
    %v6360 = vadd.f32 %v6108, 1e-05
    %v6361 = vadd.f32 %v6109, 1e-05
    %v6362 = vadd.f32 %v6110, 1e-05
    %v6363 = vadd.f32 %v6111, 1e-05
    %v6364 = vadd.f32 %v6112, 1e-05
    %v6365 = vadd.f32 %v6113, 1e-05
    %v6366 = vadd.f32 %v6114, 1e-05
    %v6367 = vadd.f32 %v6115, 1e-05
    %v6368 = vadd.f32 %v6116, 1e-05
    %v6369 = vadd.f32 %v6117, 1e-05
    %v6370 = vadd.f32 %v6118, 1e-05
    %v6371 = vadd.f32 %v6119, 1e-05
    %v6372 = vadd.f32 %v6120, 1e-05
    %v6373 = vadd.f32 %v6121, 1e-05
    %v6374 = vadd.f32 %v6122, 1e-05
    %v6375 = vadd.f32 %v6123, 1e-05
    %v6376 = vadd.f32 %v6124, 1e-05
    %v6377 = vadd.f32 %v6125, 1e-05
    %v6378 = vadd.f32 %v6126, 1e-05
    %v6379 = vadd.f32 %v6127, 1e-05
    %v6380 = vadd.f32 %v6128, 1e-05
    %v6381 = vadd.f32 %v6129, 1e-05
    %v6382 = vadd.f32 %v6130, 1e-05
    %v6383 = vadd.f32 %v6131, 1e-05
    %v6384 = vadd.f32 %v6132, 1e-05
    %v6385 = vadd.f32 %v6133, 1e-05
    %v6386 = vadd.f32 %v6134, 1e-05
    %v6387 = vadd.f32 %v6135, 1e-05
    %v6388 = vadd.f32 %v6136, 1e-05
    %v6389 = vadd.f32 %v6137, 1e-05
    %v6390 = vadd.f32 %v6138, 1e-05
    %v6391 = vadd.f32 %v6139, 1e-05
    %v6392 = vadd.f32 %v6140, 1e-05
    %v6393 = vadd.f32 %v6141, 1e-05
    %v6394 = vadd.f32 %v6142, 1e-05
    %v6395 = vadd.f32 %v6143, 1e-05
    %v6396 = vadd.f32 %v6144, 1e-05
    %v6397 = vadd.f32 %v6145, 1e-05
    %v6398 = vadd.f32 %v6146, 1e-05
    %v6399 = vadd.f32 %v6147, 1e-05
    %v6400 = vadd.f32 %v6148, 1e-05
    %v6401 = vadd.f32 %v6149, 1e-05
    %v6402 = vadd.f32 %v6150, 1e-05
    %v6403 = vadd.f32 %v6151, 1e-05
    %v6404 = vadd.f32 %v6152, 1e-05
    %v6405 = vadd.f32 %v6153, 1e-05
    %v6406 = vadd.f32 %v6154, 1e-05
    %v6407 = vadd.f32 %v6155, 1e-05
    %v6408 = vadd.f32 %v6156, 1e-05
    %v6409 = vadd.f32 %v6157, 1e-05
    %v6410 = vadd.f32 %v6158, 1e-05
    %v6411 = vadd.f32 %v6159, 1e-05
    %v6412 = vadd.f32 %v6160, 1e-05
    %v6413 = vadd.f32 %v6161, 1e-05
    %v6414 = vadd.f32 %v6162, 1e-05
    %v6415 = vadd.f32 %v6163, 1e-05
    %v6416 = vadd.f32 %v6164, 1e-05
    %v6417 = vadd.f32 %v6165, 1e-05
    %v6418 = vadd.f32 %v6166, 1e-05
    %v6419 = vadd.f32 %v6167, 1e-05
    %v6420 = vadd.f32 %v6168, 1e-05
    %v6421 = vadd.f32 %v6169, 1e-05
    %v6422 = vadd.f32 %v6170, 1e-05
    %v6423 = vadd.f32 %v6171, 1e-05
    %v6424 = vadd.f32 %v6172, 1e-05
    %v6425 = vadd.f32 %v6173, 1e-05
    %v6426 = vadd.f32 %v6174, 1e-05
    %v6427 = vadd.f32 %v6175, 1e-05
    %v6428 = vadd.f32 %v6176, 1e-05
    %v6429 = vadd.f32 %v6177, 1e-05
    %v6430 = vadd.f32 %v6178, 1e-05
    %v6431 = vadd.f32 %v6179, 1e-05
    %v6432 = vadd.f32 %v6180, 1e-05
    %v6433 = vadd.f32 %v6181, 1e-05
    %v6434 = vadd.f32 %v6182, 1e-05
    %v6435 = vadd.f32 %v6183, 1e-05
    %v6436 = vadd.f32 %v6184, 1e-05
    %v6437 = vadd.f32 %v6185, 1e-05
    %v6438 = vadd.f32 %v6186, 1e-05
    %v6439 = vadd.f32 %v6187, 1e-05
    %v6440 = vadd.f32 %v6188, 1e-05
    %v6441 = vadd.f32 %v6189, 1e-05
    %v6442 = vadd.f32 %v6190, 1e-05
    %v6443 = vadd.f32 %v6191, 1e-05
    %v6444 = vadd.f32 %v6192, 1e-05
    %v6445 = vadd.f32 %v6193, 1e-05
    %v6446 = vadd.f32 %v6194, 1e-05
    %v6447 = vadd.f32 %v6195, 1e-05
    %v6448 = vadd.f32 %v6196, 1e-05
    %v6449 = vadd.f32 %v6197, 1e-05
    %v6450 = vadd.f32 %v6198, 1e-05
    %v6451 = vadd.f32 %v6199, 1e-05
    %v6452 = vadd.f32 %v6200, 1e-05
    %v6453 = vadd.f32 %v6201, 1e-05
    %v6454 = vadd.f32 %v6202, 1e-05
    %v6455 = vadd.f32 %v6203, 1e-05
    %v6456 = vadd.f32 %v6204, 1e-05
    %v6457 = vrsqrt.pop %v6331
    %v6458 = vrsqrt.pop %v6332
    %v6459 = vrsqrt.pop %v6333
    %v6460 = vrsqrt.pop %v6334
    %v6461 = vrsqrt.pop %v6335
    %v6462 = vrsqrt.pop %v6336
    %v6463 = vrsqrt.pop %v6337
    %v6464 = vrsqrt.pop %v6338
    %v6465 = vrsqrt.pop %v6339
    %v6466 = vrsqrt.pop %v6340
    %v6467 = vrsqrt.pop %v6341
    %v6468 = vrsqrt.pop %v6342
    %v6469 = vrsqrt.pop %v6343
    %v6470 = vrsqrt.pop %v6344
    %v6471 = vrsqrt.pop %v6345
    %v6472 = vrsqrt.pop %v6346
    %v6473 = vrsqrt.pop %v6347
    %v6474 = vrsqrt.pop %v6348
    %v6475 = vrsqrt.pop %v6349
    %v6476 = vrsqrt.pop %v6350
    %v6477 = vrsqrt.pop %v6351
    %v6478 = vrsqrt.pop %v6352
    %v6479 = vrsqrt.pop %v6353
    %v6480 = vrsqrt.pop %v6354
    %v6481 = vrsqrt.pop %v6355
    %v6482 = vrsqrt.pop %v6356
    %v6483 = vrsqrt.pop %v6357
    %v6484 = vrsqrt.pop %v6358
    %v6485 = vrsqrt.pop %v6359
    %v6486 = vrsqrt.pop %v6360
    %v6487 = vrsqrt.pop %v6361
    %v6488 = vrsqrt.pop %v6362
    %v6489 = vrsqrt.pop %v6363
    %v6490 = vrsqrt.pop %v6364
    %v6491 = vrsqrt.pop %v6365
    %v6492 = vrsqrt.pop %v6366
    %v6493 = vrsqrt.pop %v6367
    %v6494 = vrsqrt.pop %v6368
    %v6495 = vrsqrt.pop %v6369
    %v6496 = vrsqrt.pop %v6370
    %v6497 = vrsqrt.pop %v6371
    %v6498 = vrsqrt.pop %v6372
    %v6499 = vrsqrt.pop %v6373
    %v6500 = vrsqrt.pop %v6374
    %v6501 = vrsqrt.pop %v6375
    %v6502 = vrsqrt.pop %v6376
    %v6503 = vrsqrt.pop %v6377
    %v6504 = vrsqrt.pop %v6378
    %v6505 = vrsqrt.pop %v6379
    %v6506 = vrsqrt.pop %v6380
    %v6507 = vrsqrt.pop %v6381
    %v6508 = vrsqrt.pop %v6382
    %v6509 = vrsqrt.pop %v6383
    %v6510 = vrsqrt.pop %v6384
    %v6511 = vrsqrt.pop %v6385
    %v6512 = vrsqrt.pop %v6386
    %v6513 = vrsqrt.pop %v6387
    %v6514 = vrsqrt.pop %v6388
    %v6515 = vrsqrt.pop %v6389
    %v6516 = vrsqrt.pop %v6390
    %v6517 = vrsqrt.pop %v6391
    %v6518 = vrsqrt.pop %v6392
    %v6519 = vrsqrt.pop %v6393
    %v6520 = vrsqrt.pop %v6394
    %v6521 = vrsqrt.pop %v6395
    %v6522 = vrsqrt.pop %v6396
    %v6523 = vrsqrt.pop %v6397
    %v6524 = vrsqrt.pop %v6398
    %v6525 = vrsqrt.pop %v6399
    %v6526 = vrsqrt.pop %v6400
    %v6527 = vrsqrt.pop %v6401
    %v6528 = vrsqrt.pop %v6402
    %v6529 = vrsqrt.pop %v6403
    %v6530 = vrsqrt.pop %v6404
    %v6531 = vrsqrt.pop %v6405
    %v6532 = vrsqrt.pop %v6406
    %v6533 = vrsqrt.pop %v6407
    %v6534 = vrsqrt.pop %v6408
    %v6535 = vrsqrt.pop %v6409
    %v6536 = vrsqrt.pop %v6410
    %v6537 = vrsqrt.pop %v6411
    %v6538 = vrsqrt.pop %v6412
    %v6539 = vrsqrt.pop %v6413
    %v6540 = vrsqrt.pop %v6414
    %v6541 = vrsqrt.pop %v6415
    %v6542 = vrsqrt.pop %v6416
    %v6543 = vrsqrt.pop %v6417
    %v6544 = vrsqrt.pop %v6418
    %v6545 = vrsqrt.pop %v6419
    %v6546 = vrsqrt.pop %v6420
    %v6547 = vrsqrt.pop %v6421
    %v6548 = vrsqrt.pop %v6422
    %v6549 = vrsqrt.pop %v6423
    %v6550 = vrsqrt.pop %v6424
    %v6551 = vrsqrt.pop %v6425
    %v6552 = vrsqrt.pop %v6426
    %v6553 = vrsqrt.pop %v6427
    %v6554 = vrsqrt.pop %v6428
    %v6555 = vrsqrt.pop %v6429
    %v6556 = vrsqrt.pop %v6430
    %v6557 = vrsqrt.pop %v6431
    %v6558 = vrsqrt.pop %v6432
    %v6559 = vrsqrt.pop %v6433
    %v6560 = vrsqrt.pop %v6434
    %v6561 = vrsqrt.pop %v6435
    %v6562 = vrsqrt.pop %v6436
    %v6563 = vrsqrt.pop %v6437
    %v6564 = vrsqrt.pop %v6438
    %v6565 = vrsqrt.pop %v6439
    %v6566 = vrsqrt.pop %v6440
    %v6567 = vrsqrt.pop %v6441
    %v6568 = vrsqrt.pop %v6442
    %v6569 = vrsqrt.pop %v6443
    %v6570 = vrsqrt.pop %v6444
    %v6571 = vrsqrt.pop %v6445
    %v6572 = vrsqrt.pop %v6446
    %v6573 = vrsqrt.pop %v6447
    %v6574 = vrsqrt.pop %v6448
    %v6575 = vrsqrt.pop %v6449
    %v6576 = vrsqrt.pop %v6450
    %v6577 = vrsqrt.pop %v6451
    %v6578 = vrsqrt.pop %v6452
    %v6579 = vrsqrt.pop %v6453
    %v6580 = vrsqrt.pop %v6454
    %v6581 = vrsqrt.pop %v6455
    %v6582 = vrsqrt.pop %v6456
    %v6583 = vmul.f32 %v6205, %v6457
    %v6584 = vmul.f32 %v6206, %v6458
    %v6585 = vmul.f32 %v6207, %v6459
    %v6586 = vmul.f32 %v6208, %v6460
    %v6587 = vmul.f32 %v6209, %v6461
    %v6588 = vmul.f32 %v6210, %v6462
    %v6589 = vmul.f32 %v6211, %v6463
    %v6590 = vmul.f32 %v6212, %v6464
    %v6591 = vmul.f32 %v6213, %v6465
    %v6592 = vmul.f32 %v6214, %v6466
    %v6593 = vmul.f32 %v6215, %v6467
    %v6594 = vmul.f32 %v6216, %v6468
    %v6595 = vmul.f32 %v6217, %v6469
    %v6596 = vmul.f32 %v6218, %v6470
    %v6597 = vmul.f32 %v6219, %v6471
    %v6598 = vmul.f32 %v6220, %v6472
    %v6599 = vmul.f32 %v6221, %v6473
    %v6600 = vmul.f32 %v6222, %v6474
    %v6601 = vmul.f32 %v6223, %v6475
    %v6602 = vmul.f32 %v6224, %v6476
    %v6603 = vmul.f32 %v6225, %v6477
    %v6604 = vmul.f32 %v6226, %v6478
    %v6605 = vmul.f32 %v6227, %v6479
    %v6606 = vmul.f32 %v6228, %v6480
    %v6607 = vmul.f32 %v6229, %v6481
    %v6608 = vmul.f32 %v6230, %v6482
    %v6609 = vmul.f32 %v6231, %v6483
    %v6610 = vmul.f32 %v6232, %v6484
    %v6611 = vmul.f32 %v6233, %v6485
    %v6612 = vmul.f32 %v6234, %v6486
    %v6613 = vmul.f32 %v6235, %v6487
    %v6614 = vmul.f32 %v6236, %v6488
    %v6615 = vmul.f32 %v6237, %v6489
    %v6616 = vmul.f32 %v6238, %v6490
    %v6617 = vmul.f32 %v6239, %v6491
    %v6618 = vmul.f32 %v6240, %v6492
    %v6619 = vmul.f32 %v6241, %v6493
    %v6620 = vmul.f32 %v6242, %v6494
    %v6621 = vmul.f32 %v6243, %v6495
    %v6622 = vmul.f32 %v6244, %v6496
    %v6623 = vmul.f32 %v6245, %v6497
    %v6624 = vmul.f32 %v6246, %v6498
    %v6625 = vmul.f32 %v6247, %v6499
    %v6626 = vmul.f32 %v6248, %v6500
    %v6627 = vmul.f32 %v6249, %v6501
    %v6628 = vmul.f32 %v6250, %v6502
    %v6629 = vmul.f32 %v6251, %v6503
    %v6630 = vmul.f32 %v6252, %v6504
    %v6631 = vmul.f32 %v6253, %v6505
    %v6632 = vmul.f32 %v6254, %v6506
    %v6633 = vmul.f32 %v6255, %v6507
    %v6634 = vmul.f32 %v6256, %v6508
    %v6635 = vmul.f32 %v6257, %v6509
    %v6636 = vmul.f32 %v6258, %v6510
    %v6637 = vmul.f32 %v6259, %v6511
    %v6638 = vmul.f32 %v6260, %v6512
    %v6639 = vmul.f32 %v6261, %v6513
    %v6640 = vmul.f32 %v6262, %v6514
    %v6641 = vmul.f32 %v6263, %v6515
    %v6642 = vmul.f32 %v6264, %v6516
    %v6643 = vmul.f32 %v6265, %v6517
    %v6644 = vmul.f32 %v6266, %v6518
    %v6645 = vmul.f32 %v6267, %v6519
    %v6646 = vmul.f32 %v6268, %v6520
    %v6647 = vmul.f32 %v6269, %v6521
    %v6648 = vmul.f32 %v6270, %v6522
    %v6649 = vmul.f32 %v6271, %v6523
    %v6650 = vmul.f32 %v6272, %v6524
    %v6651 = vmul.f32 %v6273, %v6525
    %v6652 = vmul.f32 %v6274, %v6526
    %v6653 = vmul.f32 %v6275, %v6527
    %v6654 = vmul.f32 %v6276, %v6528
    %v6655 = vmul.f32 %v6277, %v6529
    %v6656 = vmul.f32 %v6278, %v6530
    %v6657 = vmul.f32 %v6279, %v6531
    %v6658 = vmul.f32 %v6280, %v6532
    %v6659 = vmul.f32 %v6281, %v6533
    %v6660 = vmul.f32 %v6282, %v6534
    %v6661 = vmul.f32 %v6283, %v6535
    %v6662 = vmul.f32 %v6284, %v6536
    %v6663 = vmul.f32 %v6285, %v6537
    %v6664 = vmul.f32 %v6286, %v6538
    %v6665 = vmul.f32 %v6287, %v6539
    %v6666 = vmul.f32 %v6288, %v6540
    %v6667 = vmul.f32 %v6289, %v6541
    %v6668 = vmul.f32 %v6290, %v6542
    %v6669 = vmul.f32 %v6291, %v6543
    %v6670 = vmul.f32 %v6292, %v6544
    %v6671 = vmul.f32 %v6293, %v6545
    %v6672 = vmul.f32 %v6294, %v6546
    %v6673 = vmul.f32 %v6295, %v6547
    %v6674 = vmul.f32 %v6296, %v6548
    %v6675 = vmul.f32 %v6297, %v6549
    %v6676 = vmul.f32 %v6298, %v6550
    %v6677 = vmul.f32 %v6299, %v6551
    %v6678 = vmul.f32 %v6300, %v6552
    %v6679 = vmul.f32 %v6301, %v6553
    %v6680 = vmul.f32 %v6302, %v6554
    %v6681 = vmul.f32 %v6303, %v6555
    %v6682 = vmul.f32 %v6304, %v6556
    %v6683 = vmul.f32 %v6305, %v6557
    %v6684 = vmul.f32 %v6306, %v6558
    %v6685 = vmul.f32 %v6307, %v6559
    %v6686 = vmul.f32 %v6308, %v6560
    %v6687 = vmul.f32 %v6309, %v6561
    %v6688 = vmul.f32 %v6310, %v6562
    %v6689 = vmul.f32 %v6311, %v6563
    %v6690 = vmul.f32 %v6312, %v6564
    %v6691 = vmul.f32 %v6313, %v6565
    %v6692 = vmul.f32 %v6314, %v6566
    %v6693 = vmul.f32 %v6315, %v6567
    %v6694 = vmul.f32 %v6316, %v6568
    %v6695 = vmul.f32 %v6317, %v6569
    %v6696 = vmul.f32 %v6318, %v6570
    %v6697 = vmul.f32 %v6319, %v6571
    %v6698 = vmul.f32 %v6320, %v6572
    %v6699 = vmul.f32 %v6321, %v6573
    %v6700 = vmul.f32 %v6322, %v6574
    %v6701 = vmul.f32 %v6323, %v6575
    %v6702 = vmul.f32 %v6324, %v6576
    %v6703 = vmul.f32 %v6325, %v6577
    %v6704 = vmul.f32 %v6326, %v6578
    %v6705 = vmul.f32 %v6327, %v6579
    %v6706 = vmul.f32 %v6328, %v6580
    %v6707 = vmul.f32 %v6329, %v6581
    %v6708 = vmul.f32 %v6330, %v6582
    %v6709 = vlaneseq
    %v6710 = vshrl.u32 %v6709, 7
    %v6711 = vsub.s32 0, %v6710
    %v6712 = vrot.slane %v148, %v6711
    %v6713 = vmul.f32 %v6583, %v6712
    %v6714 = vmul.f32 %v6584, %v6712
    %v6715 = vmul.f32 %v6585, %v6712
    %v6716 = vmul.f32 %v6586, %v6712
    %v6717 = vmul.f32 %v6587, %v6712
    %v6718 = vmul.f32 %v6588, %v6712
    %v6719 = vmul.f32 %v6589, %v6712
    %v6720 = vmul.f32 %v6590, %v6712
    %v6721 = vmul.f32 %v6591, %v6712
    %v6722 = vmul.f32 %v6592, %v6712
    %v6723 = vmul.f32 %v6593, %v6712
    %v6724 = vmul.f32 %v6594, %v6712
    %v6725 = vmul.f32 %v6595, %v6712
    %v6726 = vmul.f32 %v6596, %v6712
    %v6727 = vmul.f32 %v6597, %v6712
    %v6728 = vmul.f32 %v6598, %v6712
    %v6729 = vmul.f32 %v6599, %v6712
    %v6730 = vmul.f32 %v6600, %v6712
    %v6731 = vmul.f32 %v6601, %v6712
    %v6732 = vmul.f32 %v6602, %v6712
    %v6733 = vmul.f32 %v6603, %v6712
    %v6734 = vmul.f32 %v6604, %v6712
    %v6735 = vmul.f32 %v6605, %v6712
    %v6736 = vmul.f32 %v6606, %v6712
    %v6737 = vmul.f32 %v6607, %v6712
    %v6738 = vmul.f32 %v6608, %v6712
    %v6739 = vmul.f32 %v6609, %v6712
    %v6740 = vmul.f32 %v6610, %v6712
    %v6741 = vmul.f32 %v6611, %v6712
    %v6742 = vmul.f32 %v6612, %v6712
    %v6743 = vmul.f32 %v6613, %v6712
    %v6744 = vmul.f32 %v6614, %v6712
    %v6745 = vmul.f32 %v6615, %v6712
    %v6746 = vmul.f32 %v6616, %v6712
    %v6747 = vmul.f32 %v6617, %v6712
    %v6748 = vmul.f32 %v6618, %v6712
    %v6749 = vmul.f32 %v6619, %v6712
    %v6750 = vmul.f32 %v6620, %v6712
    %v6751 = vmul.f32 %v6621, %v6712
    %v6752 = vmul.f32 %v6622, %v6712
    %v6753 = vmul.f32 %v6623, %v6712
    %v6754 = vmul.f32 %v6624, %v6712
    %v6755 = vmul.f32 %v6625, %v6712
    %v6756 = vmul.f32 %v6626, %v6712
    %v6757 = vmul.f32 %v6627, %v6712
    %v6758 = vmul.f32 %v6628, %v6712
    %v6759 = vmul.f32 %v6629, %v6712
    %v6760 = vmul.f32 %v6630, %v6712
    %v6761 = vmul.f32 %v6631, %v6712
    %v6762 = vmul.f32 %v6632, %v6712
    %v6763 = vmul.f32 %v6633, %v6712
    %v6764 = vmul.f32 %v6634, %v6712
    %v6765 = vmul.f32 %v6635, %v6712
    %v6766 = vmul.f32 %v6636, %v6712
    %v6767 = vmul.f32 %v6637, %v6712
    %v6768 = vmul.f32 %v6638, %v6712
    %v6769 = vmul.f32 %v6639, %v6712
    %v6770 = vmul.f32 %v6640, %v6712
    %v6771 = vmul.f32 %v6641, %v6712
    %v6772 = vmul.f32 %v6642, %v6712
    %v6773 = vmul.f32 %v6643, %v6712
    %v6774 = vmul.f32 %v6644, %v6712
    %v6775 = vmul.f32 %v6645, %v6712
    %v6776 = vmul.f32 %v6646, %v6712
    %v6777 = vmul.f32 %v6647, %v6712
    %v6778 = vmul.f32 %v6648, %v6712
    %v6779 = vmul.f32 %v6649, %v6712
    %v6780 = vmul.f32 %v6650, %v6712
    %v6781 = vmul.f32 %v6651, %v6712
    %v6782 = vmul.f32 %v6652, %v6712
    %v6783 = vmul.f32 %v6653, %v6712
    %v6784 = vmul.f32 %v6654, %v6712
    %v6785 = vmul.f32 %v6655, %v6712
    %v6786 = vmul.f32 %v6656, %v6712
    %v6787 = vmul.f32 %v6657, %v6712
    %v6788 = vmul.f32 %v6658, %v6712
    %v6789 = vmul.f32 %v6659, %v6712
    %v6790 = vmul.f32 %v6660, %v6712
    %v6791 = vmul.f32 %v6661, %v6712
    %v6792 = vmul.f32 %v6662, %v6712
    %v6793 = vmul.f32 %v6663, %v6712
    %v6794 = vmul.f32 %v6664, %v6712
    %v6795 = vmul.f32 %v6665, %v6712
    %v6796 = vmul.f32 %v6666, %v6712
    %v6797 = vmul.f32 %v6667, %v6712
    %v6798 = vmul.f32 %v6668, %v6712
    %v6799 = vmul.f32 %v6669, %v6712
    %v6800 = vmul.f32 %v6670, %v6712
    %v6801 = vmul.f32 %v6671, %v6712
    %v6802 = vmul.f32 %v6672, %v6712
    %v6803 = vmul.f32 %v6673, %v6712
    %v6804 = vmul.f32 %v6674, %v6712
    %v6805 = vmul.f32 %v6675, %v6712
    %v6806 = vmul.f32 %v6676, %v6712
    %v6807 = vmul.f32 %v6677, %v6712
    %v6808 = vmul.f32 %v6678, %v6712
    %v6809 = vmul.f32 %v6679, %v6712
    %v6810 = vmul.f32 %v6680, %v6712
    %v6811 = vmul.f32 %v6681, %v6712
    %v6812 = vmul.f32 %v6682, %v6712
    %v6813 = vmul.f32 %v6683, %v6712
    %v6814 = vmul.f32 %v6684, %v6712
    %v6815 = vmul.f32 %v6685, %v6712
    %v6816 = vmul.f32 %v6686, %v6712
    %v6817 = vmul.f32 %v6687, %v6712
    %v6818 = vmul.f32 %v6688, %v6712
    %v6819 = vmul.f32 %v6689, %v6712
    %v6820 = vmul.f32 %v6690, %v6712
    %v6821 = vmul.f32 %v6691, %v6712
    %v6822 = vmul.f32 %v6692, %v6712
    %v6823 = vmul.f32 %v6693, %v6712
    %v6824 = vmul.f32 %v6694, %v6712
    %v6825 = vmul.f32 %v6695, %v6712
    %v6826 = vmul.f32 %v6696, %v6712
    %v6827 = vmul.f32 %v6697, %v6712
    %v6828 = vmul.f32 %v6698, %v6712
    %v6829 = vmul.f32 %v6699, %v6712
    %v6830 = vmul.f32 %v6700, %v6712
    %v6831 = vmul.f32 %v6701, %v6712
    %v6832 = vmul.f32 %v6702, %v6712
    %v6833 = vmul.f32 %v6703, %v6712
    %v6834 = vmul.f32 %v6704, %v6712
    %v6835 = vmul.f32 %v6705, %v6712
    %v6836 = vmul.f32 %v6706, %v6712
    %v6837 = vmul.f32 %v6707, %v6712
    %v6838 = vmul.f32 %v6708, %v6712
    %v6839 = vlaneseq
    %v6840 = vshrl.u32 %v6839, 7
    %v6841 = vsub.s32 0, %v6840
    %v6842 = vrot.slane %v149, %v6841
    %v6843 = vadd.f32 %v6713, %v6842
    %v6844 = vadd.f32 %v6714, %v6842
    %v6845 = vadd.f32 %v6715, %v6842
    %v6846 = vadd.f32 %v6716, %v6842
    %v6847 = vadd.f32 %v6717, %v6842
    %v6848 = vadd.f32 %v6718, %v6842
    %v6849 = vadd.f32 %v6719, %v6842
    %v6850 = vadd.f32 %v6720, %v6842
    %v6851 = vadd.f32 %v6721, %v6842
    %v6852 = vadd.f32 %v6722, %v6842
    %v6853 = vadd.f32 %v6723, %v6842
    %v6854 = vadd.f32 %v6724, %v6842
    %v6855 = vadd.f32 %v6725, %v6842
    %v6856 = vadd.f32 %v6726, %v6842
    %v6857 = vadd.f32 %v6727, %v6842
    %v6858 = vadd.f32 %v6728, %v6842
    %v6859 = vadd.f32 %v6729, %v6842
    %v6860 = vadd.f32 %v6730, %v6842
    %v6861 = vadd.f32 %v6731, %v6842
    %v6862 = vadd.f32 %v6732, %v6842
    %v6863 = vadd.f32 %v6733, %v6842
    %v6864 = vadd.f32 %v6734, %v6842
    %v6865 = vadd.f32 %v6735, %v6842
    %v6866 = vadd.f32 %v6736, %v6842
    %v6867 = vadd.f32 %v6737, %v6842
    %v6868 = vadd.f32 %v6738, %v6842
    %v6869 = vadd.f32 %v6739, %v6842
    %v6870 = vadd.f32 %v6740, %v6842
    %v6871 = vadd.f32 %v6741, %v6842
    %v6872 = vadd.f32 %v6742, %v6842
    %v6873 = vadd.f32 %v6743, %v6842
    %v6874 = vadd.f32 %v6744, %v6842
    %v6875 = vadd.f32 %v6745, %v6842
    %v6876 = vadd.f32 %v6746, %v6842
    %v6877 = vadd.f32 %v6747, %v6842
    %v6878 = vadd.f32 %v6748, %v6842
    %v6879 = vadd.f32 %v6749, %v6842
    %v6880 = vadd.f32 %v6750, %v6842
    %v6881 = vadd.f32 %v6751, %v6842
    %v6882 = vadd.f32 %v6752, %v6842
    %v6883 = vadd.f32 %v6753, %v6842
    %v6884 = vadd.f32 %v6754, %v6842
    %v6885 = vadd.f32 %v6755, %v6842
    %v6886 = vadd.f32 %v6756, %v6842
    %v6887 = vadd.f32 %v6757, %v6842
    %v6888 = vadd.f32 %v6758, %v6842
    %v6889 = vadd.f32 %v6759, %v6842
    %v6890 = vadd.f32 %v6760, %v6842
    %v6891 = vadd.f32 %v6761, %v6842
    %v6892 = vadd.f32 %v6762, %v6842
    %v6893 = vadd.f32 %v6763, %v6842
    %v6894 = vadd.f32 %v6764, %v6842
    %v6895 = vadd.f32 %v6765, %v6842
    %v6896 = vadd.f32 %v6766, %v6842
    %v6897 = vadd.f32 %v6767, %v6842
    %v6898 = vadd.f32 %v6768, %v6842
    %v6899 = vadd.f32 %v6769, %v6842
    %v6900 = vadd.f32 %v6770, %v6842
    %v6901 = vadd.f32 %v6771, %v6842
    %v6902 = vadd.f32 %v6772, %v6842
    %v6903 = vadd.f32 %v6773, %v6842
    %v6904 = vadd.f32 %v6774, %v6842
    %v6905 = vadd.f32 %v6775, %v6842
    %v6906 = vadd.f32 %v6776, %v6842
    %v6907 = vadd.f32 %v6777, %v6842
    %v6908 = vadd.f32 %v6778, %v6842
    %v6909 = vadd.f32 %v6779, %v6842
    %v6910 = vadd.f32 %v6780, %v6842
    %v6911 = vadd.f32 %v6781, %v6842
    %v6912 = vadd.f32 %v6782, %v6842
    %v6913 = vadd.f32 %v6783, %v6842
    %v6914 = vadd.f32 %v6784, %v6842
    %v6915 = vadd.f32 %v6785, %v6842
    %v6916 = vadd.f32 %v6786, %v6842
    %v6917 = vadd.f32 %v6787, %v6842
    %v6918 = vadd.f32 %v6788, %v6842
    %v6919 = vadd.f32 %v6789, %v6842
    %v6920 = vadd.f32 %v6790, %v6842
    %v6921 = vadd.f32 %v6791, %v6842
    %v6922 = vadd.f32 %v6792, %v6842
    %v6923 = vadd.f32 %v6793, %v6842
    %v6924 = vadd.f32 %v6794, %v6842
    %v6925 = vadd.f32 %v6795, %v6842
    %v6926 = vadd.f32 %v6796, %v6842
    %v6927 = vadd.f32 %v6797, %v6842
    %v6928 = vadd.f32 %v6798, %v6842
    %v6929 = vadd.f32 %v6799, %v6842
    %v6930 = vadd.f32 %v6800, %v6842
    %v6931 = vadd.f32 %v6801, %v6842
    %v6932 = vadd.f32 %v6802, %v6842
    %v6933 = vadd.f32 %v6803, %v6842
    %v6934 = vadd.f32 %v6804, %v6842
    %v6935 = vadd.f32 %v6805, %v6842
    %v6936 = vadd.f32 %v6806, %v6842
    %v6937 = vadd.f32 %v6807, %v6842
    %v6938 = vadd.f32 %v6808, %v6842
    %v6939 = vadd.f32 %v6809, %v6842
    %v6940 = vadd.f32 %v6810, %v6842
    %v6941 = vadd.f32 %v6811, %v6842
    %v6942 = vadd.f32 %v6812, %v6842
    %v6943 = vadd.f32 %v6813, %v6842
    %v6944 = vadd.f32 %v6814, %v6842
    %v6945 = vadd.f32 %v6815, %v6842
    %v6946 = vadd.f32 %v6816, %v6842
    %v6947 = vadd.f32 %v6817, %v6842
    %v6948 = vadd.f32 %v6818, %v6842
    %v6949 = vadd.f32 %v6819, %v6842
    %v6950 = vadd.f32 %v6820, %v6842
    %v6951 = vadd.f32 %v6821, %v6842
    %v6952 = vadd.f32 %v6822, %v6842
    %v6953 = vadd.f32 %v6823, %v6842
    %v6954 = vadd.f32 %v6824, %v6842
    %v6955 = vadd.f32 %v6825, %v6842
    %v6956 = vadd.f32 %v6826, %v6842
    %v6957 = vadd.f32 %v6827, %v6842
    %v6958 = vadd.f32 %v6828, %v6842
    %v6959 = vadd.f32 %v6829, %v6842
    %v6960 = vadd.f32 %v6830, %v6842
    %v6961 = vadd.f32 %v6831, %v6842
    %v6962 = vadd.f32 %v6832, %v6842
    %v6963 = vadd.f32 %v6833, %v6842
    %v6964 = vadd.f32 %v6834, %v6842
    %v6965 = vadd.f32 %v6835, %v6842
    %v6966 = vadd.f32 %v6836, %v6842
    %v6967 = vadd.f32 %v6837, %v6842
    %v6968 = vadd.f32 %v6838, %v6842
    %6969 = vst [vmem:[#allocation2] sm:$0xff] %v6843
    %6970 = vst [vmem:[#allocation2 + $0x8] sm:$0xff] %v6844
    %6971 = vst [vmem:[#allocation2 + $0x10] sm:$0xff] %v6845
    %6972 = vst [vmem:[#allocation2 + $0x18] sm:$0xff] %v6846
    %6973 = vst [vmem:[#allocation2 + $0x20] sm:$0xff] %v6847
    %6974 = vst [vmem:[#allocation2 + $0x28] sm:$0xff] %v6848
    %6975 = vst [vmem:[#allocation2 + $0x30] sm:$0xff] %v6849
    %6976 = vst [vmem:[#allocation2 + $0x38] sm:$0xff] %v6850
    %6977 = vst [vmem:[#allocation2 + $0x40] sm:$0xff] %v6851
    %6978 = vst [vmem:[#allocation2 + $0x48] sm:$0xff] %v6852
    %6979 = vst [vmem:[#allocation2 + $0x50] sm:$0xff] %v6853
    %6980 = vst [vmem:[#allocation2 + $0x58] sm:$0xff] %v6854
    %6981 = vst [vmem:[#allocation2 + $0x60] sm:$0xff] %v6855
    %6982 = vst [vmem:[#allocation2 + $0x68] sm:$0xff] %v6856
    %6983 = vst [vmem:[#allocation2 + $0x70] sm:$0xff] %v6857
    %6984 = vst [vmem:[#allocation2 + $0x78] sm:$0xff] %v6858
    %6985 = vst [vmem:[#allocation2 + $0x80] sm:$0xff] %v6859
    %6986 = vst [vmem:[#allocation2 + $0x88] sm:$0xff] %v6860
    %6987 = vst [vmem:[#allocation2 + $0x90] sm:$0xff] %v6861
    %6988 = vst [vmem:[#allocation2 + $0x98] sm:$0xff] %v6862
    %6989 = vst [vmem:[#allocation2 + $0xa0] sm:$0xff] %v6863
    %6990 = vst [vmem:[#allocation2 + $0xa8] sm:$0xff] %v6864
    %6991 = vst [vmem:[#allocation2 + $0xb0] sm:$0xff] %v6865
    %6992 = vst [vmem:[#allocation2 + $0xb8] sm:$0xff] %v6866
    %6993 = vst [vmem:[#allocation2 + $0xc0] sm:$0xff] %v6867
    %6994 = vst [vmem:[#allocation2 + $0xc8] sm:$0xff] %v6868
    %6995 = vst [vmem:[#allocation2 + $0xd0] sm:$0xff] %v6869
    %6996 = vst [vmem:[#allocation2 + $0xd8] sm:$0xff] %v6870
    %6997 = vst [vmem:[#allocation2 + $0xe0] sm:$0xff] %v6871
    %6998 = vst [vmem:[#allocation2 + $0xe8] sm:$0xff] %v6872
    %6999 = vst [vmem:[#allocation2 + $0xf0] sm:$0xff] %v6873
    %7000 = vst [vmem:[#allocation2 + $0xf8] sm:$0xff] %v6874
    %7001 = vst [vmem:[#allocation2 + $0x100] sm:$0xff] %v6875
    %7002 = vst [vmem:[#allocation2 + $0x108] sm:$0xff] %v6876
    %7003 = vst [vmem:[#allocation2 + $0x110] sm:$0xff] %v6877
    %7004 = vst [vmem:[#allocation2 + $0x118] sm:$0xff] %v6878
    %7005 = vst [vmem:[#allocation2 + $0x120] sm:$0xff] %v6879
    %7006 = vst [vmem:[#allocation2 + $0x128] sm:$0xff] %v6880
    %7007 = vst [vmem:[#allocation2 + $0x130] sm:$0xff] %v6881
    %7008 = vst [vmem:[#allocation2 + $0x138] sm:$0xff] %v6882
    %7009 = vst [vmem:[#allocation2 + $0x140] sm:$0xff] %v6883
    %7010 = vst [vmem:[#allocation2 + $0x148] sm:$0xff] %v6884
    %7011 = vst [vmem:[#allocation2 + $0x150] sm:$0xff] %v6885
    %7012 = vst [vmem:[#allocation2 + $0x158] sm:$0xff] %v6886
    %7013 = vst [vmem:[#allocation2 + $0x160] sm:$0xff] %v6887
    %7014 = vst [vmem:[#allocation2 + $0x168] sm:$0xff] %v6888
    %7015 = vst [vmem:[#allocation2 + $0x170] sm:$0xff] %v6889
    %7016 = vst [vmem:[#allocation2 + $0x178] sm:$0xff] %v6890
    %7017 = vst [vmem:[#allocation2 + $0x180] sm:$0xff] %v6891
    %7018 = vst [vmem:[#allocation2 + $0x188] sm:$0xff] %v6892
    %7019 = vst [vmem:[#allocation2 + $0x190] sm:$0xff] %v6893
    %7020 = vst [vmem:[#allocation2 + $0x198] sm:$0xff] %v6894
    %7021 = vst [vmem:[#allocation2 + $0x1a0] sm:$0xff] %v6895
    %7022 = vst [vmem:[#allocation2 + $0x1a8] sm:$0xff] %v6896
    %7023 = vst [vmem:[#allocation2 + $0x1b0] sm:$0xff] %v6897
    %7024 = vst [vmem:[#allocation2 + $0x1b8] sm:$0xff] %v6898
    %7025 = vst [vmem:[#allocation2 + $0x1c0] sm:$0xff] %v6899
    %7026 = vst [vmem:[#allocation2 + $0x1c8] sm:$0xff] %v6900
    %7027 = vst [vmem:[#allocation2 + $0x1d0] sm:$0xff] %v6901
    %7028 = vst [vmem:[#allocation2 + $0x1d8] sm:$0xff] %v6902
    %7029 = vst [vmem:[#allocation2 + $0x1e0] sm:$0xff] %v6903
    %7030 = vst [vmem:[#allocation2 + $0x1e8] sm:$0xff] %v6904
    %7031 = vst [vmem:[#allocation2 + $0x1f0] sm:$0xff] %v6905
    %7032 = vst [vmem:[#allocation2 + $0x1f8] sm:$0xff] %v6906
    %7033 = vst [vmem:[#allocation2 + $0x200] sm:$0xff] %v6907
    %7034 = vst [vmem:[#allocation2 + $0x208] sm:$0xff] %v6908
    %7035 = vst [vmem:[#allocation2 + $0x210] sm:$0xff] %v6909
    %7036 = vst [vmem:[#allocation2 + $0x218] sm:$0xff] %v6910
    %7037 = vst [vmem:[#allocation2 + $0x220] sm:$0xff] %v6911
    %7038 = vst [vmem:[#allocation2 + $0x228] sm:$0xff] %v6912
    %7039 = vst [vmem:[#allocation2 + $0x230] sm:$0xff] %v6913
    %7040 = vst [vmem:[#allocation2 + $0x238] sm:$0xff] %v6914
    %7041 = vst [vmem:[#allocation2 + $0x240] sm:$0xff] %v6915
    %7042 = vst [vmem:[#allocation2 + $0x248] sm:$0xff] %v6916
    %7043 = vst [vmem:[#allocation2 + $0x250] sm:$0xff] %v6917
    %7044 = vst [vmem:[#allocation2 + $0x258] sm:$0xff] %v6918
    %7045 = vst [vmem:[#allocation2 + $0x260] sm:$0xff] %v6919
    %7046 = vst [vmem:[#allocation2 + $0x268] sm:$0xff] %v6920
    %7047 = vst [vmem:[#allocation2 + $0x270] sm:$0xff] %v6921
    %7048 = vst [vmem:[#allocation2 + $0x278] sm:$0xff] %v6922
    %7049 = vst [vmem:[#allocation2 + $0x280] sm:$0xff] %v6923
    %7050 = vst [vmem:[#allocation2 + $0x288] sm:$0xff] %v6924
    %7051 = vst [vmem:[#allocation2 + $0x290] sm:$0xff] %v6925
    %7052 = vst [vmem:[#allocation2 + $0x298] sm:$0xff] %v6926
    %7053 = vst [vmem:[#allocation2 + $0x2a0] sm:$0xff] %v6927
    %7054 = vst [vmem:[#allocation2 + $0x2a8] sm:$0xff] %v6928
    %7055 = vst [vmem:[#allocation2 + $0x2b0] sm:$0xff] %v6929
    %7056 = vst [vmem:[#allocation2 + $0x2b8] sm:$0xff] %v6930
    %7057 = vst [vmem:[#allocation2 + $0x2c0] sm:$0xff] %v6931
    %7058 = vst [vmem:[#allocation2 + $0x2c8] sm:$0xff] %v6932
    %7059 = vst [vmem:[#allocation2 + $0x2d0] sm:$0xff] %v6933
    %7060 = vst [vmem:[#allocation2 + $0x2d8] sm:$0xff] %v6934
    %7061 = vst [vmem:[#allocation2 + $0x2e0] sm:$0xff] %v6935
    %7062 = vst [vmem:[#allocation2 + $0x2e8] sm:$0xff] %v6936
    %7063 = vst [vmem:[#allocation2 + $0x2f0] sm:$0xff] %v6937
    %7064 = vst [vmem:[#allocation2 + $0x2f8] sm:$0xff] %v6938
    %7065 = vst [vmem:[#allocation2 + $0x300] sm:$0xff] %v6939
    %7066 = vst [vmem:[#allocation2 + $0x308] sm:$0xff] %v6940
    %7067 = vst [vmem:[#allocation2 + $0x310] sm:$0xff] %v6941
    %7068 = vst [vmem:[#allocation2 + $0x318] sm:$0xff] %v6942
    %7069 = vst [vmem:[#allocation2 + $0x320] sm:$0xff] %v6943
    %7070 = vst [vmem:[#allocation2 + $0x328] sm:$0xff] %v6944
    %7071 = vst [vmem:[#allocation2 + $0x330] sm:$0xff] %v6945
    %7072 = vst [vmem:[#allocation2 + $0x338] sm:$0xff] %v6946
    %7073 = vst [vmem:[#allocation2 + $0x340] sm:$0xff] %v6947
    %7074 = vst [vmem:[#allocation2 + $0x348] sm:$0xff] %v6948
    %7075 = vst [vmem:[#allocation2 + $0x350] sm:$0xff] %v6949
    %7076 = vst [vmem:[#allocation2 + $0x358] sm:$0xff] %v6950
    %7077 = vst [vmem:[#allocation2 + $0x360] sm:$0xff] %v6951
    %7078 = vst [vmem:[#allocation2 + $0x368] sm:$0xff] %v6952
    %7079 = vst [vmem:[#allocation2 + $0x370] sm:$0xff] %v6953
    %7080 = vst [vmem:[#allocation2 + $0x378] sm:$0xff] %v6954
    %7081 = vst [vmem:[#allocation2 + $0x380] sm:$0xff] %v6955
    %7082 = vst [vmem:[#allocation2 + $0x388] sm:$0xff] %v6956
    %7083 = vst [vmem:[#allocation2 + $0x390] sm:$0xff] %v6957
    %7084 = vst [vmem:[#allocation2 + $0x398] sm:$0xff] %v6958
    %7085 = vst [vmem:[#allocation2 + $0x3a0] sm:$0xff] %v6959
    %7086 = vst [vmem:[#allocation2 + $0x3a8] sm:$0xff] %v6960
    %7087 = vst [vmem:[#allocation2 + $0x3b0] sm:$0xff] %v6961
    %7088 = vst [vmem:[#allocation2 + $0x3b8] sm:$0xff] %v6962
    %7089 = vst [vmem:[#allocation2 + $0x3c0] sm:$0xff] %v6963
    %7090 = vst [vmem:[#allocation2 + $0x3c8] sm:$0xff] %v6964
    %7091 = vst [vmem:[#allocation2 + $0x3d0] sm:$0xff] %v6965
    %7092 = vst [vmem:[#allocation2 + $0x3d8] sm:$0xff] %v6966
    %7093 = vst [vmem:[#allocation2 + $0x3e0] sm:$0xff] %v6967
    %7094 = vst [vmem:[#allocation2 + $0x3e8] sm:$0xff] %v6968
    // Predicated region
    $region14: #{tpu_custom_call.1} parent=1 // pred_check
      _
    $region15: #{tpu_custom_call.1} parent=1 // pred_check_branch
      %7096 = sbr.rel (0) target = $region17
    $region16: #{tpu_custom_call.1} parent=1 // pred_region
      %s7098 = ssub.s32 16128, 16128
      %7099 = vsyncadd [#allocation3], %s7098
      %s7100 = sshll.u32 [#allocation2], 4
      %s7101 = int_to_ptr.vmem [resolvable:$true] %s7100
      %7106 = dma.vmem_to_hbm [thread:$0]  %s7101, 16128, %s3, [#allocation3], 128, 128, 8
    $region17: #{tpu_custom_call.1} parent=1 // pred_fallthru
      _
    // Predicated region
    $region18: #{tpu_custom_call.1} parent=1 // pred_check
      _
    $region19: #{tpu_custom_call.1} parent=1 // pred_check_branch
      %7108 = sbr.rel (0) target = $region21
    $region20: #{tpu_custom_call.1} parent=1 // pred_region
      %7109 = dma.done [#allocation3], 16128
    $region21: #{tpu_custom_call.1} parent=1 // pred_fallthru
      _
    %7110 = vsyncpa [#allocation3], 1

</llo_original>
